<compile_context>
chip_gen: v7x
topology: tpu7x:2x2x1
jax: 0.10.0
libtpu: 0.0.40
codegen_flags: <defaults>
</compile_context>

<pallas_src>
import numpy as np

import jax
import jax.numpy as jnp
from jax.experimental import pallas as pl
from jax.experimental.pallas import tpu as pltpu

_BN_EPS = 1e-5
_LEAKY_SLOPE = 0.01          # nn.LeakyReLU default negative_slope
_PAD = 128                   # lane margin of the shared scratch line (>= W+1)


# ---------------------------------------------------------------------------
# Host-side constant builders (exact, built once at trace time)
# ---------------------------------------------------------------------------
def _border_masks(n, h, w):
    """(8, n*h*w) 0/1 validity masks for the 8 non-centre 3x3 taps.

    Row order matches the kernel's (di, dj) loop with the centre tap (1, 1) skipped.
    """
    L = n * h * w
    p = np.arange(L)
    wq = p % w
    hq = (p // w) % h
    rows = []
    for di in range(3):
        for dj in range(3):
            if (di, dj) == (1, 1):
                continue
            oi, oj = di - 1, dj - 1
            valid = ((hq + oi >= 0) & (hq + oi < h) &
                     (wq + oj >= 0) & (wq + oj < w))
            rows.append(valid.astype(np.float32))
    return jnp.asarray(np.stack(rows))


def _pool_block(h, w):
    """Per-image 0/1 matrix selecting the even-(i,j) corners: (h*w, (h/2)*(w/2))."""
    ho, wo = h // 2, w // 2
    m = np.zeros((h * w, ho * wo), np.float32)
    for i in range(ho):
        for j in range(wo):
            m[2 * i * w + 2 * j, i * wo + j] = 1.0
    return jnp.asarray(m)


def _bilinear_axis_matrix(size_in, size_out):
    """1-D bilinear interpolation matrix, align_corners=True (UpsamplingBilinear2d)."""
    a = np.zeros((size_out, size_in), np.float64)
    if size_in == 1:
        a[:, 0] = 1.0
        return a
    src = np.arange(size_out, dtype=np.float64) * (size_in - 1) / (size_out - 1)
    i0 = np.clip(np.floor(src).astype(np.int64), 0, size_in - 1)
    i1 = np.clip(i0 + 1, 0, size_in - 1)
    f = src - i0
    a[np.arange(size_out), i0] += 1.0 - f
    a[np.arange(size_out), i1] += f
    return a


def _upsample_block(h, w):
    """Per-image (h*w, 4*h*w) matrix of nn.UpsamplingBilinear2d(scale_factor=2)."""
    ah = _bilinear_axis_matrix(h, 2 * h)     # (2h, h)
    aw = _bilinear_axis_matrix(w, 2 * w)     # (2w, w)
    blk = np.einsum('ih,jw->hwij', ah, aw).reshape(h * w, 4 * h * w)
    return jnp.asarray(blk.astype(np.float32))


def _padded_vmem_bytes(shape):
    """f32 VMEM footprint of an array, padded to (8, 128) tiles."""
    r = 1
    for d in shape[:-1]:
        r *= int(d)
    c = int(shape[-1])
    return ((r + 7) // 8 * 8) * ((c + 127) // 128 * 128) * 4


# ---------------------------------------------------------------------------
# In-kernel building blocks (activations are (C, N*H*W) float32, lane-dense)
# ---------------------------------------------------------------------------
def _place(line_ref, x):
    """Drop x (C, L) into the shared padded line at lane offset _PAD."""
    c, l = x.shape
    line_ref[0:c, _PAD:_PAD + l] = x


def _conv3x3_bn_act(line_ref, col_ref, x, w_ref, g_ref, b_ref, mask_ref, *, w, slope):
    """Fused 3x3 conv (padding=1, bias-free) + training-mode BN + (leaky)ReLU.

    x        : (Cin, N*h*w)    activations, flat spatial on lanes
    w_ref    : (Cout, 9*Cin)   im2col-packed conv taps (column = tap*Cin + ci)
    g_ref,b_ref : (Cout, 1)    BatchNorm affine parameters
    mask_ref : (8, N*h*w)      host-precomputed border masks (non-centre taps)
    returns (Cout, N*h*w) float32
    """
    cin, l = x.shape
    _place(line_ref, x)

    # Build the (9*Cin, L) im2col slab: one masked shifted read per tap (centre
    # tap is always valid and skips the vmul).
    mi = 0
    for di in range(3):
        for dj in range(3):
            t = di * 3 + dj
            shift = (di - 1) * w + (dj - 1)
            tap = line_ref[0:cin, _PAD + shift:_PAD + shift + l]
            if (di, dj) != (1, 1):
                tap = tap * mask_ref[mi:mi + 1, 0:l]
                mi += 1
            col_ref[t * cin:(t + 1) * cin, 0:l] = tap

    # One deep MXU contraction instead of 9 shallow ones.
    acc = jnp.dot(w_ref[...], col_ref[0:9 * cin, 0:l],
                  preferred_element_type=jnp.float32)

    # Training-mode BatchNorm2d with a shifted (two-pass) variance.
    inv_l = 1.0 / l
    mean = jnp.sum(acc, axis=1, keepdims=True) * inv_l
    diff = acc - mean
    var = jnp.sum(diff * diff, axis=1, keepdims=True) * inv_l
    y = diff * (g_ref[...] * jax.lax.rsqrt(var + _BN_EPS)) + b_ref[...]
    if slope == 0.0:
        return jnp.maximum(y, 0.0)                 # ReLU
    return jnp.where(y > 0, y, slope * y)          # LeakyReLU


def _per_image_matmul(col_ref, x, blk, *, n, in_hw, out_hw):
    """Apply a per-image (in_hw, out_hw) constant to each batch image of x (C, n*in_hw).

    Per-image results are staged into col_ref lanes to form the lane-concatenated
    (C, n*out_hw) result (ref stores/loads only).
    """
    c = x.shape[0]
    if n == 1:
        return jnp.dot(x, blk, preferred_element_type=jnp.float32)
    for b in range(n):
        col_ref[0:c, b * out_hw:(b + 1) * out_hw] = jnp.dot(
            x[:, b * in_hw:(b + 1) * in_hw], blk,
            preferred_element_type=jnp.float32)
    return col_ref[0:c, 0:n * out_hw]


def _maxpool_2x2(line_ref, col_ref, x, blk_ref, *, n, h, w):
    """MaxPool2d(2): max of 4 shifted window reads + per-image 0/1 compaction matmul.

    Only even-(i,j) corner positions are selected by the compaction block, and for
    those all four reads stay inside the image, so no masking is needed.
    """
    c, l = x.shape
    _place(line_ref, x)
    s01 = line_ref[0:c, _PAD + 1:_PAD + 1 + l]
    s10 = line_ref[0:c, _PAD + w:_PAD + w + l]
    s11 = line_ref[0:c, _PAD + w + 1:_PAD + w + 1 + l]
    m = jnp.maximum(jnp.maximum(x, s01), jnp.maximum(s10, s11))
    return _per_image_matmul(col_ref, m, blk_ref[...],
                             n=n, in_hw=h * w, out_hw=(h // 2) * (w // 2))


def _upsample_2x(col_ref, x, blk_ref, *, n, h, w):
    """nn.UpsamplingBilinear2d(scale_factor=2) as an exact per-image matmul."""
    return _per_image_matmul(col_ref, x, blk_ref[...],
                             n=n, in_hw=h * w, out_hw=4 * h * w)


# ---------------------------------------------------------------------------
# Whole-network fused forward (ONE grid-less pallas_call)
# ---------------------------------------------------------------------------
def encoder_decoder_branch(x_nchw, params):
    """x_nchw: (N, C_in, H, W) float32.  Returns (out_nchw, features_nchw[:-2])."""
    n, c0, h0, w0 = x_nchw.shape
    encs, decs, cls = params['encoders'], params['decoders'], params['classifier']
    n_block = len(encs)
    assert h0 % (1 << n_block) == 0 and w0 % (1 << n_block) == 0
    assert _PAD >= w0 + 1

    # ---- static per-conv schedule & im2col-packed parameters -----------------
    def pack(cp):
        wt = cp['w']                                  # (3, 3, cin, cout)
        cin, cout = wt.shape[2], wt.shape[3]
        wp = jnp.transpose(wt.reshape(9, cin, cout), (2, 0, 1)).reshape(cout, 9 * cin)
        return wp, cp['gamma'].reshape(cout, 1), cp['beta'].reshape(cout, 1), cin, cout

    conv_w, conv_g, conv_b, conv_cfg = [], [], [], []
    for i, blk in enumerate(encs):
        for cname in ('conv1', 'conv2'):
            wp, g, b, cin, cout = pack(blk[cname])
            conv_w.append(wp); conv_g.append(g); conv_b.append(b)
            conv_cfg.append(dict(cin=cin, cout=cout, slope=_LEAKY_SLOPE, level=i))
    for j, blk in enumerate(decs):
        for cname in ('conv1', 'conv2'):
            wp, g, b, cin, cout = pack(blk[cname])
            conv_w.append(wp); conv_g.append(g); conv_b.append(b)
            conv_cfg.append(dict(cin=cin, cout=cout, slope=0.0, level=n_block - j))
    n_conv = len(conv_cfg)

    n_class = cls['w'].shape[0]
    cls_w = cls['w'].reshape(n_class, -1)
    cls_b = cls['b'].reshape(n_class, 1)

    levels = sorted({cfg['level'] for cfg in conv_cfg})
    level_pos = {lv: t for t, lv in enumerate(levels)}
    masks = [_border_masks(n, h0 >> lv, w0 >> lv) for lv in levels]
    pool_blks = [_pool_block(h0 >> i, w0 >> i) for i in range(n_block)]
    up_blks = [_upsample_block(h0 >> (n_block - j), w0 >> (n_block - j))
               for j in range(n_block)]

    # ---- flat input list & ref index map --------------------------------------
    L0 = n * h0 * w0
    x_flat = jnp.transpose(x_nchw, (1, 0, 2, 3)).reshape(c0, L0)
    inputs = [x_flat]
    for wp, g, b in zip(conv_w, conv_g, conv_b):
        inputs += [wp, g, b]
    inputs += [cls_w, cls_b]
    inputs += masks
    inputs += pool_blks
    inputs += up_blks

    i_conv = 1
    i_cls = i_conv + 3 * n_conv
    i_mask = i_cls + 2
    i_pool = i_mask + len(masks)
    i_up = i_pool + n_block
    n_in = i_up + n_block

    # ---- output geometry (lane-dense (C, N*H*W) slabs) -------------------------
    out_geo = []
    for i in range(n_block):               # encoder features (after pool)
        out_geo.append((conv_cfg[2 * i + 1]['cout'], h0 >> (i + 1), w0 >> (i + 1)))
    for j in range(n_block - 1):           # decoder features (after upsample)
        out_geo.append((conv_cfg[2 * n_block + 2 * j + 1]['cout'],
                        h0 >> (n_block - 1 - j), w0 >> (n_block - 1 - j)))
    out_geo.append((n_class, h0, w0))      # classifier output
    out_shape = tuple(jax.ShapeDtypeStruct((c, n * hh * ww), jnp.float32)
                      for c, hh, ww in out_geo)
    n_out = len(out_shape)

    max_c = max(max(cfg['cin'], cfg['cout']) for cfg in conv_cfg)
    max_cin = max(cfg['cin'] for cfg in conv_cfg)
    line_shape = (max_c, 2 * _PAD + L0)
    col_shape = (max(9 * max_cin, max_c), L0)

    i_line = n_in + n_out
    i_col = i_line + 1

    # ---- the single fused kernel -----------------------------------------------
    def kernel(*refs):
        line = refs[i_line]
        col = refs[i_col]
        # Zero the padded line once: margins must be 0 for shifted tap/pool reads and
        # interior zeros guarantee every masked stale read is 0 * finite.  The im2col
        # scratch needs no init (always fully overwritten before each read).
        line[...] = jnp.zeros(line.shape, jnp.float32)

        def conv(xval, k):
            cfg = conv_cfg[k]
            lvl = cfg['level']
            return _conv3x3_bn_act(
                line, col, xval,
                refs[i_conv + 3 * k], refs[i_conv + 3 * k + 1],
                refs[i_conv + 3 * k + 2],
                refs[i_mask + level_pos[lvl]],
                w=w0 >> lvl, slope=cfg['slope'])

        t_out = 0
        out = refs[0][...]
        for i in range(n_block):                              # encoder blocks
            out = conv(out, 2 * i)
            out = conv(out, 2 * i + 1)
            out = _maxpool_2x2(line, col, out, refs[i_pool + i],
                               n=n, h=h0 >> i, w=w0 >> i)
            refs[n_in + t_out][...] = out                     # immediate writeback
            t_out += 1
        for j in range(n_block):                              # decoder blocks
            k0 = 2 * n_block + 2 * j
            out = conv(out, k0)
            out = conv(out, k0 + 1)
            lvl = n_block - j
            out = _upsample_2x(col, out, refs[i_up + j],
                               n=n, h=h0 >> lvl, w=w0 >> lvl)
            if j < n_block - 1:
                refs[n_in + t_out][...] = out
                t_out += 1

        # 1x1 classifier: Cin==1 -> pure VPU broadcast, else a tiny matmul.
        wc = refs[i_cls][...]
        bc = refs[i_cls + 1][...]
        if wc.shape[1] == 1:
            cls_out = wc * out + bc
        else:
            cls_out = jnp.dot(wc, out, preferred_element_type=jnp.float32) + bc
        refs[n_in + t_out][...] = cls_out

    # ---- VMEM limit sized from the actual resident footprint --------------------
    footprint = sum(_padded_vmem_bytes(a.shape) for a in inputs)
    footprint += sum(_padded_vmem_bytes(s.shape) for s in out_shape)
    footprint += _padded_vmem_bytes(line_shape) + _padded_vmem_bytes(col_shape)
    vmem_limit = int(min(60 * 2**20, 16 * 2**20 + 2 * footprint))

    vmem = pl.BlockSpec(memory_space=pltpu.MemorySpace.VMEM)
    outs = pl.pallas_call(
        kernel,
        out_shape=out_shape,
        in_specs=[vmem] * len(inputs),
        out_specs=tuple([vmem] * n_out),
        scratch_shapes=[pltpu.VMEM(line_shape, jnp.float32),
                        pltpu.VMEM(col_shape, jnp.float32)],
        compiler_params=pltpu.CompilerParams(vmem_limit_bytes=vmem_limit),
    )(*inputs)

    # ---- back to PyTorch NCHW (tiny host-side reshapes) -------------------------
    def to_nchw(flat, c, hh, ww):
        return jnp.transpose(flat.reshape(c, n, hh, ww), (1, 0, 2, 3))

    feats = [to_nchw(o, c, hh, ww)
             for o, (c, hh, ww) in zip(outs[:-1], out_geo[:-1])]
    out_cls = to_nchw(outs[-1], n_class, h0, w0)
    return out_cls, feats


# ---------------------------------------------------------------------------
# Parameter init (deterministic, PyTorch-like structure)
# ---------------------------------------------------------------------------
def init_params(key, filters=8, in_channels=1, n_block=3, n_class=2):
    num_filters = [in_channels] + [filters * 2 ** i for i in range(n_block)]

    def conv_bn(k, cin, cout):
        k1, k2 = jax.random.split(k)
        # NOTE: the PyTorch convs carry a bias, but a conv bias immediately followed
        # by training-mode BatchNorm2d cancels exactly, so it is omitted here.
        return dict(
            w=0.1 * jax.random.normal(k1, (3, 3, cin, cout), jnp.float32),
            gamma=1.0 + 0.1 * jax.random.normal(k2, (cout,), jnp.float32),
            beta=jnp.linspace(-0.1, 0.1, cout, dtype=jnp.float32),
        )

    params = dict(encoders=[], decoders=[])
    for i in range(n_block):
        key, k1, k2 = jax.random.split(key, 3)
        cin, cout = num_filters[i], num_filters[i + 1]
        params['encoders'].append(
            dict(conv1=conv_bn(k1, cin, cout), conv2=conv_bn(k2, cout, cout)))
    for d in range(n_block, 0, -1):
        key, k1, k2 = jax.random.split(key, 3)
        cin, cout = num_filters[d], num_filters[d - 1]
        params['decoders'].append(
            dict(conv1=conv_bn(k1, cin, cout), conv2=conv_bn(k2, cout, cout)))
    key, k1, k2 = jax.random.split(key, 3)
    params['classifier'] = dict(
        w=0.1 * jax.random.normal(k1, (n_class, num_filters[0]), jnp.float32),
        b=0.05 * jax.random.normal(k2, (n_class,), jnp.float32))
    return params


# ---------------------------------------------------------------------------
if __name__ == "__main__":
    key = jax.random.PRNGKey(0)
    kx, kp = jax.random.split(key)

    x = jax.random.normal(kx, (2, 1, 16, 16), jnp.float32)   # NCHW, like PyTorch
    params = init_params(kp, filters=8, in_channels=1, n_block=3, n_class=2)

    fwd = jax.jit(encoder_decoder_branch)
    out, feats = fwd(x, params)
    out = jax.block_until_ready(out)
    feats = [jax.block_until_ready(f) for f in feats]

    assert out.shape == (2, 2, 16, 16)          # classifier output (N, n_class, H, W)
    assert len(feats) == 5                      # features[:-2]
    assert feats[0].shape == (2, 8, 8, 8)       # encoder block 1 output
    assert feats[2].shape == (2, 32, 2, 2)      # encoder block 3 output
    assert feats[-1].shape == (2, 8, 8, 8)      # decoder block 2 output
    assert bool(jnp.isfinite(out).all()) and all(bool(jnp.isfinite(f).all()) for f in feats)
    print("KERNEL_OK")
</pallas_src>

<mosaic_0001>
module attributes {stable_mosaic.version = 11 : i64} {
  func.func @kernel(%arg0: memref<1x512xf32, #tpu.memory_space<vmem>>, %arg1: memref<8x9xf32, #tpu.memory_space<vmem>>, %arg2: memref<8x1xf32, #tpu.memory_space<vmem>>, %arg3: memref<8x1xf32, #tpu.memory_space<vmem>>, %arg4: memref<8x72xf32, #tpu.memory_space<vmem>>, %arg5: memref<8x1xf32, #tpu.memory_space<vmem>>, %arg6: memref<8x1xf32, #tpu.memory_space<vmem>>, %arg7: memref<16x72xf32, #tpu.memory_space<vmem>>, %arg8: memref<16x1xf32, #tpu.memory_space<vmem>>, %arg9: memref<16x1xf32, #tpu.memory_space<vmem>>, %arg10: memref<16x144xf32, #tpu.memory_space<vmem>>, %arg11: memref<16x1xf32, #tpu.memory_space<vmem>>, %arg12: memref<16x1xf32, #tpu.memory_space<vmem>>, %arg13: memref<32x144xf32, #tpu.memory_space<vmem>>, %arg14: memref<32x1xf32, #tpu.memory_space<vmem>>, %arg15: memref<32x1xf32, #tpu.memory_space<vmem>>, %arg16: memref<32x288xf32, #tpu.memory_space<vmem>>, %arg17: memref<32x1xf32, #tpu.memory_space<vmem>>, %arg18: memref<32x1xf32, #tpu.memory_space<vmem>>, %arg19: memref<16x288xf32, #tpu.memory_space<vmem>>, %arg20: memref<16x1xf32, #tpu.memory_space<vmem>>, %arg21: memref<16x1xf32, #tpu.memory_space<vmem>>, %arg22: memref<16x144xf32, #tpu.memory_space<vmem>>, %arg23: memref<16x1xf32, #tpu.memory_space<vmem>>, %arg24: memref<16x1xf32, #tpu.memory_space<vmem>>, %arg25: memref<8x144xf32, #tpu.memory_space<vmem>>, %arg26: memref<8x1xf32, #tpu.memory_space<vmem>>, %arg27: memref<8x1xf32, #tpu.memory_space<vmem>>, %arg28: memref<8x72xf32, #tpu.memory_space<vmem>>, %arg29: memref<8x1xf32, #tpu.memory_space<vmem>>, %arg30: memref<8x1xf32, #tpu.memory_space<vmem>>, %arg31: memref<1x72xf32, #tpu.memory_space<vmem>>, %arg32: memref<1x1xf32, #tpu.memory_space<vmem>>, %arg33: memref<1x1xf32, #tpu.memory_space<vmem>>, %arg34: memref<1x9xf32, #tpu.memory_space<vmem>>, %arg35: memref<1x1xf32, #tpu.memory_space<vmem>>, %arg36: memref<1x1xf32, #tpu.memory_space<vmem>>, %arg37: memref<2x1xf32, #tpu.memory_space<vmem>>, %arg38: memref<2x1xf32, #tpu.memory_space<vmem>>, %arg39: memref<8x512xf32, #tpu.memory_space<vmem>>, %arg40: memref<8x128xf32, #tpu.memory_space<vmem>>, %arg41: memref<8x32xf32, #tpu.memory_space<vmem>>, %arg42: memref<8x8xf32, #tpu.memory_space<vmem>>, %arg43: memref<256x64xf32, #tpu.memory_space<vmem>>, %arg44: memref<64x16xf32, #tpu.memory_space<vmem>>, %arg45: memref<16x4xf32, #tpu.memory_space<vmem>>, %arg46: memref<4x16xf32, #tpu.memory_space<vmem>>, %arg47: memref<16x64xf32, #tpu.memory_space<vmem>>, %arg48: memref<64x256xf32, #tpu.memory_space<vmem>>, %arg49: memref<8x128xf32, #tpu.memory_space<vmem>>, %arg50: memref<16x32xf32, #tpu.memory_space<vmem>>, %arg51: memref<32x8xf32, #tpu.memory_space<vmem>>, %arg52: memref<16x32xf32, #tpu.memory_space<vmem>>, %arg53: memref<8x128xf32, #tpu.memory_space<vmem>>, %arg54: memref<2x512xf32, #tpu.memory_space<vmem>>, %arg55: memref<32x768xf32, #tpu.memory_space<vmem>>, %arg56: memref<288x512xf32, #tpu.memory_space<vmem>>) attributes {dimension_semantics = [], scalar_prefetch = 0 : i64, scratch_operands = 2 : i64, tpu.core_type = #tpu.core_type<tc>} {
    %cst = arith.constant 0.000000e+00 : f32
    %0 = vector.broadcast %cst : f32 to vector<32x768xf32>
    %c0 = arith.constant 0 : index
    %c0_0 = arith.constant 0 : index
    %1 = vector.load %arg55[%c0, %c0_0] : memref<32x768xf32, #tpu.memory_space<vmem>>, vector<32x768xf32>
    tpu.vector_store %arg55[%c0, %c0_0], %0 {strides = array<i32>} : memref<32x768xf32, #tpu.memory_space<vmem>>, vector<32x768xf32>,
    %c0_1 = arith.constant 0 : index
    %c0_2 = arith.constant 0 : index
    %2 = vector.load %arg0[%c0_1, %c0_2] : memref<1x512xf32, #tpu.memory_space<vmem>>, vector<1x512xf32>
    %c0_3 = arith.constant 0 : index
    %c128 = arith.constant 128 : index
    %3 = vector.load %arg55[%c0_3, %c128] : memref<32x768xf32, #tpu.memory_space<vmem>>, vector<1x512xf32>
    tpu.vector_store %arg55[%c0_3, %c128], %2 {strides = array<i32>} : memref<32x768xf32, #tpu.memory_space<vmem>>, vector<1x512xf32>,
    %c0_4 = arith.constant 0 : index
    %c111 = arith.constant 111 : index
    %4 = vector.load %arg55[%c0_4, %c111] : memref<32x768xf32, #tpu.memory_space<vmem>>, vector<1x512xf32>
    %c0_5 = arith.constant 0 : index
    %c0_6 = arith.constant 0 : index
    %5 = vector.load %arg39[%c0_5, %c0_6] : memref<8x512xf32, #tpu.memory_space<vmem>>, vector<1x512xf32>
    %6 = arith.mulf %4, %5 : vector<1x512xf32>
    %c0_7 = arith.constant 0 : index
    %c0_8 = arith.constant 0 : index
    %7 = vector.load %arg56[%c0_7, %c0_8] : memref<288x512xf32, #tpu.memory_space<vmem>>, vector<1x512xf32>
    tpu.vector_store %arg56[%c0_7, %c0_8], %6 {strides = array<i32>} : memref<288x512xf32, #tpu.memory_space<vmem>>, vector<1x512xf32>,
    %c0_9 = arith.constant 0 : index
    %c112 = arith.constant 112 : index
    %8 = vector.load %arg55[%c0_9, %c112] : memref<32x768xf32, #tpu.memory_space<vmem>>, vector<1x512xf32>
    %c1 = arith.constant 1 : index
    %c0_10 = arith.constant 0 : index
    %9 = vector.load %arg39[%c1, %c0_10] : memref<8x512xf32, #tpu.memory_space<vmem>>, vector<1x512xf32>
    %10 = arith.mulf %8, %9 : vector<1x512xf32>
    %c1_11 = arith.constant 1 : index
    %c0_12 = arith.constant 0 : index
    %11 = vector.load %arg56[%c1_11, %c0_12] : memref<288x512xf32, #tpu.memory_space<vmem>>, vector<1x512xf32>
    tpu.vector_store %arg56[%c1_11, %c0_12], %10 {strides = array<i32>} : memref<288x512xf32, #tpu.memory_space<vmem>>, vector<1x512xf32>,
    %c0_13 = arith.constant 0 : index
    %c113 = arith.constant 113 : index
    %12 = vector.load %arg55[%c0_13, %c113] : memref<32x768xf32, #tpu.memory_space<vmem>>, vector<1x512xf32>
    %c2 = arith.constant 2 : index
    %c0_14 = arith.constant 0 : index
    %13 = vector.load %arg39[%c2, %c0_14] : memref<8x512xf32, #tpu.memory_space<vmem>>, vector<1x512xf32>
    %14 = arith.mulf %12, %13 : vector<1x512xf32>
    %c2_15 = arith.constant 2 : index
    %c0_16 = arith.constant 0 : index
    %15 = vector.load %arg56[%c2_15, %c0_16] : memref<288x512xf32, #tpu.memory_space<vmem>>, vector<1x512xf32>
    tpu.vector_store %arg56[%c2_15, %c0_16], %14 {strides = array<i32>} : memref<288x512xf32, #tpu.memory_space<vmem>>, vector<1x512xf32>,
    %c0_17 = arith.constant 0 : index
    %c127 = arith.constant 127 : index
    %16 = vector.load %arg55[%c0_17, %c127] : memref<32x768xf32, #tpu.memory_space<vmem>>, vector<1x512xf32>
    %c3 = arith.constant 3 : index
    %c0_18 = arith.constant 0 : index
    %17 = vector.load %arg39[%c3, %c0_18] : memref<8x512xf32, #tpu.memory_space<vmem>>, vector<1x512xf32>
    %18 = arith.mulf %16, %17 : vector<1x512xf32>
    %c3_19 = arith.constant 3 : index
    %c0_20 = arith.constant 0 : index
    %19 = vector.load %arg56[%c3_19, %c0_20] : memref<288x512xf32, #tpu.memory_space<vmem>>, vector<1x512xf32>
    tpu.vector_store %arg56[%c3_19, %c0_20], %18 {strides = array<i32>} : memref<288x512xf32, #tpu.memory_space<vmem>>, vector<1x512xf32>,
    %c0_21 = arith.constant 0 : index
    %c128_22 = arith.constant 128 : index
    %20 = vector.load %arg55[%c0_21, %c128_22] : memref<32x768xf32, #tpu.memory_space<vmem>>, vector<1x512xf32>
    %c4 = arith.constant 4 : index
    %c0_23 = arith.constant 0 : index
    %21 = vector.load %arg56[%c4, %c0_23] : memref<288x512xf32, #tpu.memory_space<vmem>>, vector<1x512xf32>
    tpu.vector_store %arg56[%c4, %c0_23], %20 {strides = array<i32>} : memref<288x512xf32, #tpu.memory_space<vmem>>, vector<1x512xf32>,
    %c0_24 = arith.constant 0 : index
    %c129 = arith.constant 129 : index
    %22 = vector.load %arg55[%c0_24, %c129] : memref<32x768xf32, #tpu.memory_space<vmem>>, vector<1x512xf32>
    %c4_25 = arith.constant 4 : index
    %c0_26 = arith.constant 0 : index
    %23 = vector.load %arg39[%c4_25, %c0_26] : memref<8x512xf32, #tpu.memory_space<vmem>>, vector<1x512xf32>
    %24 = arith.mulf %22, %23 : vector<1x512xf32>
    %c5 = arith.constant 5 : index
    %c0_27 = arith.constant 0 : index
    %25 = vector.load %arg56[%c5, %c0_27] : memref<288x512xf32, #tpu.memory_space<vmem>>, vector<1x512xf32>
    tpu.vector_store %arg56[%c5, %c0_27], %24 {strides = array<i32>} : memref<288x512xf32, #tpu.memory_space<vmem>>, vector<1x512xf32>,
    %c0_28 = arith.constant 0 : index
    %c143 = arith.constant 143 : index
    %26 = vector.load %arg55[%c0_28, %c143] : memref<32x768xf32, #tpu.memory_space<vmem>>, vector<1x512xf32>
    %c5_29 = arith.constant 5 : index
    %c0_30 = arith.constant 0 : index
    %27 = vector.load %arg39[%c5_29, %c0_30] : memref<8x512xf32, #tpu.memory_space<vmem>>, vector<1x512xf32>
    %28 = arith.mulf %26, %27 : vector<1x512xf32>
    %c6 = arith.constant 6 : index
    %c0_31 = arith.constant 0 : index
    %29 = vector.load %arg56[%c6, %c0_31] : memref<288x512xf32, #tpu.memory_space<vmem>>, vector<1x512xf32>
    tpu.vector_store %arg56[%c6, %c0_31], %28 {strides = array<i32>} : memref<288x512xf32, #tpu.memory_space<vmem>>, vector<1x512xf32>,
    %c0_32 = arith.constant 0 : index
    %c144 = arith.constant 144 : index
    %30 = vector.load %arg55[%c0_32, %c144] : memref<32x768xf32, #tpu.memory_space<vmem>>, vector<1x512xf32>
    %c6_33 = arith.constant 6 : index
    %c0_34 = arith.constant 0 : index
    %31 = vector.load %arg39[%c6_33, %c0_34] : memref<8x512xf32, #tpu.memory_space<vmem>>, vector<1x512xf32>
    %32 = arith.mulf %30, %31 : vector<1x512xf32>
    %c7 = arith.constant 7 : index
    %c0_35 = arith.constant 0 : index
    %33 = vector.load %arg56[%c7, %c0_35] : memref<288x512xf32, #tpu.memory_space<vmem>>, vector<1x512xf32>
    tpu.vector_store %arg56[%c7, %c0_35], %32 {strides = array<i32>} : memref<288x512xf32, #tpu.memory_space<vmem>>, vector<1x512xf32>,
    %c0_36 = arith.constant 0 : index
    %c145 = arith.constant 145 : index
    %34 = vector.load %arg55[%c0_36, %c145] : memref<32x768xf32, #tpu.memory_space<vmem>>, vector<1x512xf32>
    %c7_37 = arith.constant 7 : index
    %c0_38 = arith.constant 0 : index
    %35 = vector.load %arg39[%c7_37, %c0_38] : memref<8x512xf32, #tpu.memory_space<vmem>>, vector<1x512xf32>
    %36 = arith.mulf %34, %35 : vector<1x512xf32>
    %c8 = arith.constant 8 : index
    %c0_39 = arith.constant 0 : index
    %37 = vector.load %arg56[%c8, %c0_39] : memref<288x512xf32, #tpu.memory_space<vmem>>, vector<1x512xf32>
    tpu.vector_store %arg56[%c8, %c0_39], %36 {strides = array<i32>} : memref<288x512xf32, #tpu.memory_space<vmem>>, vector<1x512xf32>,
    %c0_40 = arith.constant 0 : index
    %c0_41 = arith.constant 0 : index
    %38 = vector.load %arg1[%c0_40, %c0_41] : memref<8x9xf32, #tpu.memory_space<vmem>>, vector<8x9xf32>
    %c0_42 = arith.constant 0 : index
    %c0_43 = arith.constant 0 : index
    %39 = vector.load %arg56[%c0_42, %c0_43] : memref<288x512xf32, #tpu.memory_space<vmem>>, vector<9x512xf32>
    %cst_44 = arith.constant dense<0.000000e+00> : vector<8x512xf32>
    %40 = tpu.matmul %38, %39, %cst_44 {dimension_numbers = #tpu.dot_dimension_numbers<[1], [0], [0], [1], [0, 0, 1, 1], [], []>} : vector<8x9xf32>, vector<9x512xf32>, vector<8x512xf32> -> vector<8x512xf32>
    %cst_45 = arith.constant dense<0.000000e+00> : vector<8xf32>
    %41 = vector.multi_reduction <add>, %40, %cst_45 [1] : vector<8x512xf32> to vector<8xf32>
    %42 = vector.shape_cast %41 : vector<8xf32> to vector<8x1xf32>
    %cst_46 = arith.constant 0.001953125 : f32
    %43 = vector.broadcast %cst_46 : f32 to vector<8x1xf32>
    %44 = arith.mulf %42, %43 : vector<8x1xf32>
    %45 = vector.broadcast %44 : vector<8x1xf32> to vector<8x512xf32>
    %46 = arith.subf %40, %45 : vector<8x512xf32>
    %47 = arith.mulf %46, %46 : vector<8x512xf32>
    %cst_47 = arith.constant dense<0.000000e+00> : vector<8xf32>
    %48 = vector.multi_reduction <add>, %47, %cst_47 [1] : vector<8x512xf32> to vector<8xf32>
    %49 = vector.shape_cast %48 : vector<8xf32> to vector<8x1xf32>
    %cst_48 = arith.constant 0.001953125 : f32
    %50 = vector.broadcast %cst_48 : f32 to vector<8x1xf32>
    %51 = arith.mulf %49, %50 : vector<8x1xf32>
    %c0_49 = arith.constant 0 : index
    %c0_50 = arith.constant 0 : index
    %52 = vector.load %arg2[%c0_49, %c0_50] : memref<8x1xf32, #tpu.memory_space<vmem>>, vector<8x1xf32>
    %cst_51 = arith.constant 9.99999974E-6 : f32
    %53 = vector.broadcast %cst_51 : f32 to vector<8x1xf32>
    %54 = arith.addf %51, %53 : vector<8x1xf32>
    %55 = math.rsqrt %54 : vector<8x1xf32>
    %56 = arith.mulf %52, %55 : vector<8x1xf32>
    %57 = vector.broadcast %56 : vector<8x1xf32> to vector<8x512xf32>
    %58 = arith.mulf %46, %57 : vector<8x512xf32>
    %c0_52 = arith.constant 0 : index
    %c0_53 = arith.constant 0 : index
    %59 = vector.load %arg3[%c0_52, %c0_53] : memref<8x1xf32, #tpu.memory_space<vmem>>, vector<8x1xf32>
    %60 = vector.broadcast %59 : vector<8x1xf32> to vector<8x512xf32>
    %61 = arith.addf %58, %60 : vector<8x512xf32>
    %cst_54 = arith.constant 0.000000e+00 : f32
    %62 = vector.broadcast %cst_54 : f32 to vector<8x512xf32>
    %63 = arith.cmpf ogt, %61, %62 : vector<8x512xf32>
    %cst_55 = arith.constant 0.00999999977 : f32
    %64 = vector.broadcast %cst_55 : f32 to vector<8x512xf32>
    %65 = arith.mulf %64, %61 : vector<8x512xf32>
    %66 = arith.select %63, %61, %65 : vector<8x512xi1>, vector<8x512xf32>
    %c0_56 = arith.constant 0 : index
    %c128_57 = arith.constant 128 : index
    %67 = vector.load %arg55[%c0_56, %c128_57] : memref<32x768xf32, #tpu.memory_space<vmem>>, vector<8x512xf32>
    tpu.vector_store %arg55[%c0_56, %c128_57], %66 {strides = array<i32>} : memref<32x768xf32, #tpu.memory_space<vmem>>, vector<8x512xf32>,
    %c0_58 = arith.constant 0 : index
    %c111_59 = arith.constant 111 : index
    %68 = vector.load %arg55[%c0_58, %c111_59] : memref<32x768xf32, #tpu.memory_space<vmem>>, vector<8x512xf32>
    %c0_60 = arith.constant 0 : index
    %c0_61 = arith.constant 0 : index
    %69 = vector.load %arg39[%c0_60, %c0_61] : memref<8x512xf32, #tpu.memory_space<vmem>>, vector<1x512xf32>
    %70 = vector.broadcast %69 : vector<1x512xf32> to vector<8x512xf32>
    %71 = arith.mulf %68, %70 : vector<8x512xf32>
    %c0_62 = arith.constant 0 : index
    %c0_63 = arith.constant 0 : index
    %72 = vector.load %arg56[%c0_62, %c0_63] : memref<288x512xf32, #tpu.memory_space<vmem>>, vector<8x512xf32>
    tpu.vector_store %arg56[%c0_62, %c0_63], %71 {strides = array<i32>} : memref<288x512xf32, #tpu.memory_space<vmem>>, vector<8x512xf32>,
    %c0_64 = arith.constant 0 : index
    %c112_65 = arith.constant 112 : index
    %73 = vector.load %arg55[%c0_64, %c112_65] : memref<32x768xf32, #tpu.memory_space<vmem>>, vector<8x512xf32>
    %c1_66 = arith.constant 1 : index
    %c0_67 = arith.constant 0 : index
    %74 = vector.load %arg39[%c1_66, %c0_67] : memref<8x512xf32, #tpu.memory_space<vmem>>, vector<1x512xf32>
    %75 = vector.broadcast %74 : vector<1x512xf32> to vector<8x512xf32>
    %76 = arith.mulf %73, %75 : vector<8x512xf32>
    %c8_68 = arith.constant 8 : index
    %c0_69 = arith.constant 0 : index
    %77 = vector.load %arg56[%c8_68, %c0_69] : memref<288x512xf32, #tpu.memory_space<vmem>>, vector<8x512xf32>
    tpu.vector_store %arg56[%c8_68, %c0_69], %76 {strides = array<i32>} : memref<288x512xf32, #tpu.memory_space<vmem>>, vector<8x512xf32>,
    %c0_70 = arith.constant 0 : index
    %c113_71 = arith.constant 113 : index
    %78 = vector.load %arg55[%c0_70, %c113_71] : memref<32x768xf32, #tpu.memory_space<vmem>>, vector<8x512xf32>
    %c2_72 = arith.constant 2 : index
    %c0_73 = arith.constant 0 : index
    %79 = vector.load %arg39[%c2_72, %c0_73] : memref<8x512xf32, #tpu.memory_space<vmem>>, vector<1x512xf32>
    %80 = vector.broadcast %79 : vector<1x512xf32> to vector<8x512xf32>
    %81 = arith.mulf %78, %80 : vector<8x512xf32>
    %c16 = arith.constant 16 : index
    %c0_74 = arith.constant 0 : index
    %82 = vector.load %arg56[%c16, %c0_74] : memref<288x512xf32, #tpu.memory_space<vmem>>, vector<8x512xf32>
    tpu.vector_store %arg56[%c16, %c0_74], %81 {strides = array<i32>} : memref<288x512xf32, #tpu.memory_space<vmem>>, vector<8x512xf32>,
    %c0_75 = arith.constant 0 : index
    %c127_76 = arith.constant 127 : index
    %83 = vector.load %arg55[%c0_75, %c127_76] : memref<32x768xf32, #tpu.memory_space<vmem>>, vector<8x512xf32>
    %c3_77 = arith.constant 3 : index
    %c0_78 = arith.constant 0 : index
    %84 = vector.load %arg39[%c3_77, %c0_78] : memref<8x512xf32, #tpu.memory_space<vmem>>, vector<1x512xf32>
    %85 = vector.broadcast %84 : vector<1x512xf32> to vector<8x512xf32>
    %86 = arith.mulf %83, %85 : vector<8x512xf32>
    %c24 = arith.constant 24 : index
    %c0_79 = arith.constant 0 : index
    %87 = vector.load %arg56[%c24, %c0_79] : memref<288x512xf32, #tpu.memory_space<vmem>>, vector<8x512xf32>
    tpu.vector_store %arg56[%c24, %c0_79], %86 {strides = array<i32>} : memref<288x512xf32, #tpu.memory_space<vmem>>, vector<8x512xf32>,
    %c0_80 = arith.constant 0 : index
    %c128_81 = arith.constant 128 : index
    %88 = vector.load %arg55[%c0_80, %c128_81] : memref<32x768xf32, #tpu.memory_space<vmem>>, vector<8x512xf32>
    %c32 = arith.constant 32 : index
    %c0_82 = arith.constant 0 : index
    %89 = vector.load %arg56[%c32, %c0_82] : memref<288x512xf32, #tpu.memory_space<vmem>>, vector<8x512xf32>
    tpu.vector_store %arg56[%c32, %c0_82], %88 {strides = array<i32>} : memref<288x512xf32, #tpu.memory_space<vmem>>, vector<8x512xf32>,
    %c0_83 = arith.constant 0 : index
    %c129_84 = arith.constant 129 : index
    %90 = vector.load %arg55[%c0_83, %c129_84] : memref<32x768xf32, #tpu.memory_space<vmem>>, vector<8x512xf32>
    %c4_85 = arith.constant 4 : index
    %c0_86 = arith.constant 0 : index
    %91 = vector.load %arg39[%c4_85, %c0_86] : memref<8x512xf32, #tpu.memory_space<vmem>>, vector<1x512xf32>
    %92 = vector.broadcast %91 : vector<1x512xf32> to vector<8x512xf32>
    %93 = arith.mulf %90, %92 : vector<8x512xf32>
    %c40 = arith.constant 40 : index
    %c0_87 = arith.constant 0 : index
    %94 = vector.load %arg56[%c40, %c0_87] : memref<288x512xf32, #tpu.memory_space<vmem>>, vector<8x512xf32>
    tpu.vector_store %arg56[%c40, %c0_87], %93 {strides = array<i32>} : memref<288x512xf32, #tpu.memory_space<vmem>>, vector<8x512xf32>,
    %c0_88 = arith.constant 0 : index
    %c143_89 = arith.constant 143 : index
    %95 = vector.load %arg55[%c0_88, %c143_89] : memref<32x768xf32, #tpu.memory_space<vmem>>, vector<8x512xf32>
    %c5_90 = arith.constant 5 : index
    %c0_91 = arith.constant 0 : index
    %96 = vector.load %arg39[%c5_90, %c0_91] : memref<8x512xf32, #tpu.memory_space<vmem>>, vector<1x512xf32>
    %97 = vector.broadcast %96 : vector<1x512xf32> to vector<8x512xf32>
    %98 = arith.mulf %95, %97 : vector<8x512xf32>
    %c48 = arith.constant 48 : index
    %c0_92 = arith.constant 0 : index
    %99 = vector.load %arg56[%c48, %c0_92] : memref<288x512xf32, #tpu.memory_space<vmem>>, vector<8x512xf32>
    tpu.vector_store %arg56[%c48, %c0_92], %98 {strides = array<i32>} : memref<288x512xf32, #tpu.memory_space<vmem>>, vector<8x512xf32>,
    %c0_93 = arith.constant 0 : index
    %c144_94 = arith.constant 144 : index
    %100 = vector.load %arg55[%c0_93, %c144_94] : memref<32x768xf32, #tpu.memory_space<vmem>>, vector<8x512xf32>
    %c6_95 = arith.constant 6 : index
    %c0_96 = arith.constant 0 : index
    %101 = vector.load %arg39[%c6_95, %c0_96] : memref<8x512xf32, #tpu.memory_space<vmem>>, vector<1x512xf32>
    %102 = vector.broadcast %101 : vector<1x512xf32> to vector<8x512xf32>
    %103 = arith.mulf %100, %102 : vector<8x512xf32>
    %c56 = arith.constant 56 : index
    %c0_97 = arith.constant 0 : index
    %104 = vector.load %arg56[%c56, %c0_97] : memref<288x512xf32, #tpu.memory_space<vmem>>, vector<8x512xf32>
    tpu.vector_store %arg56[%c56, %c0_97], %103 {strides = array<i32>} : memref<288x512xf32, #tpu.memory_space<vmem>>, vector<8x512xf32>,
    %c0_98 = arith.constant 0 : index
    %c145_99 = arith.constant 145 : index
    %105 = vector.load %arg55[%c0_98, %c145_99] : memref<32x768xf32, #tpu.memory_space<vmem>>, vector<8x512xf32>
    %c7_100 = arith.constant 7 : index
    %c0_101 = arith.constant 0 : index
    %106 = vector.load %arg39[%c7_100, %c0_101] : memref<8x512xf32, #tpu.memory_space<vmem>>, vector<1x512xf32>
    %107 = vector.broadcast %106 : vector<1x512xf32> to vector<8x512xf32>
    %108 = arith.mulf %105, %107 : vector<8x512xf32>
    %c64 = arith.constant 64 : index
    %c0_102 = arith.constant 0 : index
    %109 = vector.load %arg56[%c64, %c0_102] : memref<288x512xf32, #tpu.memory_space<vmem>>, vector<8x512xf32>
    tpu.vector_store %arg56[%c64, %c0_102], %108 {strides = array<i32>} : memref<288x512xf32, #tpu.memory_space<vmem>>, vector<8x512xf32>,
    %c0_103 = arith.constant 0 : index
    %c0_104 = arith.constant 0 : index
    %110 = vector.load %arg4[%c0_103, %c0_104] : memref<8x72xf32, #tpu.memory_space<vmem>>, vector<8x72xf32>
    %c0_105 = arith.constant 0 : index
    %c0_106 = arith.constant 0 : index
    %111 = vector.load %arg56[%c0_105, %c0_106] : memref<288x512xf32, #tpu.memory_space<vmem>>, vector<72x512xf32>
    %cst_107 = arith.constant dense<0.000000e+00> : vector<8x512xf32>
    %112 = tpu.matmul %110, %111, %cst_107 {dimension_numbers = #tpu.dot_dimension_numbers<[1], [0], [0], [1], [0, 0, 1, 1], [], []>} : vector<8x72xf32>, vector<72x512xf32>, vector<8x512xf32> -> vector<8x512xf32>
    %cst_108 = arith.constant dense<0.000000e+00> : vector<8xf32>
    %113 = vector.multi_reduction <add>, %112, %cst_108 [1] : vector<8x512xf32> to vector<8xf32>
    %114 = vector.shape_cast %113 : vector<8xf32> to vector<8x1xf32>
    %cst_109 = arith.constant 0.001953125 : f32
    %115 = vector.broadcast %cst_109 : f32 to vector<8x1xf32>
    %116 = arith.mulf %114, %115 : vector<8x1xf32>
    %117 = vector.broadcast %116 : vector<8x1xf32> to vector<8x512xf32>
    %118 = arith.subf %112, %117 : vector<8x512xf32>
    %119 = arith.mulf %118, %118 : vector<8x512xf32>
    %cst_110 = arith.constant dense<0.000000e+00> : vector<8xf32>
    %120 = vector.multi_reduction <add>, %119, %cst_110 [1] : vector<8x512xf32> to vector<8xf32>
    %121 = vector.shape_cast %120 : vector<8xf32> to vector<8x1xf32>
    %cst_111 = arith.constant 0.001953125 : f32
    %122 = vector.broadcast %cst_111 : f32 to vector<8x1xf32>
    %123 = arith.mulf %121, %122 : vector<8x1xf32>
    %c0_112 = arith.constant 0 : index
    %c0_113 = arith.constant 0 : index
    %124 = vector.load %arg5[%c0_112, %c0_113] : memref<8x1xf32, #tpu.memory_space<vmem>>, vector<8x1xf32>
    %cst_114 = arith.constant 9.99999974E-6 : f32
    %125 = vector.broadcast %cst_114 : f32 to vector<8x1xf32>
    %126 = arith.addf %123, %125 : vector<8x1xf32>
    %127 = math.rsqrt %126 : vector<8x1xf32>
    %128 = arith.mulf %124, %127 : vector<8x1xf32>
    %129 = vector.broadcast %128 : vector<8x1xf32> to vector<8x512xf32>
    %130 = arith.mulf %118, %129 : vector<8x512xf32>
    %c0_115 = arith.constant 0 : index
    %c0_116 = arith.constant 0 : index
    %131 = vector.load %arg6[%c0_115, %c0_116] : memref<8x1xf32, #tpu.memory_space<vmem>>, vector<8x1xf32>
    %132 = vector.broadcast %131 : vector<8x1xf32> to vector<8x512xf32>
    %133 = arith.addf %130, %132 : vector<8x512xf32>
    %cst_117 = arith.constant 0.000000e+00 : f32
    %134 = vector.broadcast %cst_117 : f32 to vector<8x512xf32>
    %135 = arith.cmpf ogt, %133, %134 : vector<8x512xf32>
    %cst_118 = arith.constant 0.00999999977 : f32
    %136 = vector.broadcast %cst_118 : f32 to vector<8x512xf32>
    %137 = arith.mulf %136, %133 : vector<8x512xf32>
    %138 = arith.select %135, %133, %137 : vector<8x512xi1>, vector<8x512xf32>
    %c0_119 = arith.constant 0 : index
    %c128_120 = arith.constant 128 : index
    %139 = vector.load %arg55[%c0_119, %c128_120] : memref<32x768xf32, #tpu.memory_space<vmem>>, vector<8x512xf32>
    tpu.vector_store %arg55[%c0_119, %c128_120], %138 {strides = array<i32>} : memref<32x768xf32, #tpu.memory_space<vmem>>, vector<8x512xf32>,
    %c0_121 = arith.constant 0 : index
    %c129_122 = arith.constant 129 : index
    %140 = vector.load %arg55[%c0_121, %c129_122] : memref<32x768xf32, #tpu.memory_space<vmem>>, vector<8x512xf32>
    %c0_123 = arith.constant 0 : index
    %c144_124 = arith.constant 144 : index
    %141 = vector.load %arg55[%c0_123, %c144_124] : memref<32x768xf32, #tpu.memory_space<vmem>>, vector<8x512xf32>
    %c0_125 = arith.constant 0 : index
    %c145_126 = arith.constant 145 : index
    %142 = vector.load %arg55[%c0_125, %c145_126] : memref<32x768xf32, #tpu.memory_space<vmem>>, vector<8x512xf32>
    %143 = arith.maximumf %138, %140 : vector<8x512xf32>
    %144 = arith.maximumf %141, %142 : vector<8x512xf32>
    %145 = arith.maximumf %143, %144 : vector<8x512xf32>
    %c0_127 = arith.constant 0 : index
    %c0_128 = arith.constant 0 : index
    %146 = vector.load %arg43[%c0_127, %c0_128] : memref<256x64xf32, #tpu.memory_space<vmem>>, vector<256x64xf32>
    %147 = vector.extract_strided_slice %145 {offsets = [0, 0], sizes = [8, 256], strides = [1, 1]} : vector<8x512xf32> to vector<8x256xf32>
    %cst_129 = arith.constant dense<0.000000e+00> : vector<8x64xf32>
    %148 = tpu.matmul %147, %146, %cst_129 {dimension_numbers = #tpu.dot_dimension_numbers<[1], [0], [0], [1], [0, 0, 1, 1], [], []>} : vector<8x256xf32>, vector<256x64xf32>, vector<8x64xf32> -> vector<8x64xf32>
    %c0_130 = arith.constant 0 : index
    %c0_131 = arith.constant 0 : index
    %149 = vector.load %arg56[%c0_130, %c0_131] : memref<288x512xf32, #tpu.memory_space<vmem>>, vector<8x64xf32>
    tpu.vector_store %arg56[%c0_130, %c0_131], %148 {strides = array<i32>} : memref<288x512xf32, #tpu.memory_space<vmem>>, vector<8x64xf32>,
    %150 = vector.extract_strided_slice %145 {offsets = [0, 256], sizes = [8, 256], strides = [1, 1]} : vector<8x512xf32> to vector<8x256xf32>
    %cst_132 = arith.constant dense<0.000000e+00> : vector<8x64xf32>
    %151 = tpu.matmul %150, %146, %cst_132 {dimension_numbers = #tpu.dot_dimension_numbers<[1], [0], [0], [1], [0, 0, 1, 1], [], []>} : vector<8x256xf32>, vector<256x64xf32>, vector<8x64xf32> -> vector<8x64xf32>
    %c0_133 = arith.constant 0 : index
    %c64_134 = arith.constant 64 : index
    %152 = vector.load %arg56[%c0_133, %c64_134] : memref<288x512xf32, #tpu.memory_space<vmem>>, vector<8x64xf32>
    tpu.vector_store %arg56[%c0_133, %c64_134], %151 {strides = array<i32>} : memref<288x512xf32, #tpu.memory_space<vmem>>, vector<8x64xf32>,
    %c0_135 = arith.constant 0 : index
    %c0_136 = arith.constant 0 : index
    %153 = vector.load %arg56[%c0_135, %c0_136] : memref<288x512xf32, #tpu.memory_space<vmem>>, vector<8x128xf32>
    %c0_137 = arith.constant 0 : index
    %c0_138 = arith.constant 0 : index
    %154 = vector.load %arg49[%c0_137, %c0_138] : memref<8x128xf32, #tpu.memory_space<vmem>>, vector<8x128xf32>
    tpu.vector_store %arg49[%c0_137, %c0_138], %153 {strides = array<i32>} : memref<8x128xf32, #tpu.memory_space<vmem>>, vector<8x128xf32>,
    %c0_139 = arith.constant 0 : index
    %c128_140 = arith.constant 128 : index
    %155 = vector.load %arg55[%c0_139, %c128_140] : memref<32x768xf32, #tpu.memory_space<vmem>>, vector<8x128xf32>
    tpu.vector_store %arg55[%c0_139, %c128_140], %153 {strides = array<i32>} : memref<32x768xf32, #tpu.memory_space<vmem>>, vector<8x128xf32>,
    %c0_141 = arith.constant 0 : index
    %c119 = arith.constant 119 : index
    %156 = vector.load %arg55[%c0_141, %c119] : memref<32x768xf32, #tpu.memory_space<vmem>>, vector<8x128xf32>
    %c0_142 = arith.constant 0 : index
    %c0_143 = arith.constant 0 : index
    %157 = vector.load %arg40[%c0_142, %c0_143] : memref<8x128xf32, #tpu.memory_space<vmem>>, vector<1x128xf32>
    %158 = vector.broadcast %157 : vector<1x128xf32> to vector<8x128xf32>
    %159 = arith.mulf %156, %158 : vector<8x128xf32>
    %c0_144 = arith.constant 0 : index
    %c0_145 = arith.constant 0 : index
    %160 = vector.load %arg56[%c0_144, %c0_145] : memref<288x512xf32, #tpu.memory_space<vmem>>, vector<8x128xf32>
    tpu.vector_store %arg56[%c0_144, %c0_145], %159 {strides = array<i32>} : memref<288x512xf32, #tpu.memory_space<vmem>>, vector<8x128xf32>,
    %c0_146 = arith.constant 0 : index
    %c120 = arith.constant 120 : index
    %161 = vector.load %arg55[%c0_146, %c120] : memref<32x768xf32, #tpu.memory_space<vmem>>, vector<8x128xf32>
    %c1_147 = arith.constant 1 : index
    %c0_148 = arith.constant 0 : index
    %162 = vector.load %arg40[%c1_147, %c0_148] : memref<8x128xf32, #tpu.memory_space<vmem>>, vector<1x128xf32>
    %163 = vector.broadcast %162 : vector<1x128xf32> to vector<8x128xf32>
    %164 = arith.mulf %161, %163 : vector<8x128xf32>
    %c8_149 = arith.constant 8 : index
    %c0_150 = arith.constant 0 : index
    %165 = vector.load %arg56[%c8_149, %c0_150] : memref<288x512xf32, #tpu.memory_space<vmem>>, vector<8x128xf32>
    tpu.vector_store %arg56[%c8_149, %c0_150], %164 {strides = array<i32>} : memref<288x512xf32, #tpu.memory_space<vmem>>, vector<8x128xf32>,
    %c0_151 = arith.constant 0 : index
    %c121 = arith.constant 121 : index
    %166 = vector.load %arg55[%c0_151, %c121] : memref<32x768xf32, #tpu.memory_space<vmem>>, vector<8x128xf32>
    %c2_152 = arith.constant 2 : index
    %c0_153 = arith.constant 0 : index
    %167 = vector.load %arg40[%c2_152, %c0_153] : memref<8x128xf32, #tpu.memory_space<vmem>>, vector<1x128xf32>
    %168 = vector.broadcast %167 : vector<1x128xf32> to vector<8x128xf32>
    %169 = arith.mulf %166, %168 : vector<8x128xf32>
    %c16_154 = arith.constant 16 : index
    %c0_155 = arith.constant 0 : index
    %170 = vector.load %arg56[%c16_154, %c0_155] : memref<288x512xf32, #tpu.memory_space<vmem>>, vector<8x128xf32>
    tpu.vector_store %arg56[%c16_154, %c0_155], %169 {strides = array<i32>} : memref<288x512xf32, #tpu.memory_space<vmem>>, vector<8x128xf32>,
    %c0_156 = arith.constant 0 : index
    %c127_157 = arith.constant 127 : index
    %171 = vector.load %arg55[%c0_156, %c127_157] : memref<32x768xf32, #tpu.memory_space<vmem>>, vector<8x128xf32>
    %c3_158 = arith.constant 3 : index
    %c0_159 = arith.constant 0 : index
    %172 = vector.load %arg40[%c3_158, %c0_159] : memref<8x128xf32, #tpu.memory_space<vmem>>, vector<1x128xf32>
    %173 = vector.broadcast %172 : vector<1x128xf32> to vector<8x128xf32>
    %174 = arith.mulf %171, %173 : vector<8x128xf32>
    %c24_160 = arith.constant 24 : index
    %c0_161 = arith.constant 0 : index
    %175 = vector.load %arg56[%c24_160, %c0_161] : memref<288x512xf32, #tpu.memory_space<vmem>>, vector<8x128xf32>
    tpu.vector_store %arg56[%c24_160, %c0_161], %174 {strides = array<i32>} : memref<288x512xf32, #tpu.memory_space<vmem>>, vector<8x128xf32>,
    %c0_162 = arith.constant 0 : index
    %c128_163 = arith.constant 128 : index
    %176 = vector.load %arg55[%c0_162, %c128_163] : memref<32x768xf32, #tpu.memory_space<vmem>>, vector<8x128xf32>
    %c32_164 = arith.constant 32 : index
    %c0_165 = arith.constant 0 : index
    %177 = vector.load %arg56[%c32_164, %c0_165] : memref<288x512xf32, #tpu.memory_space<vmem>>, vector<8x128xf32>
    tpu.vector_store %arg56[%c32_164, %c0_165], %176 {strides = array<i32>} : memref<288x512xf32, #tpu.memory_space<vmem>>, vector<8x128xf32>,
    %c0_166 = arith.constant 0 : index
    %c129_167 = arith.constant 129 : index
    %178 = vector.load %arg55[%c0_166, %c129_167] : memref<32x768xf32, #tpu.memory_space<vmem>>, vector<8x128xf32>
    %c4_168 = arith.constant 4 : index
    %c0_169 = arith.constant 0 : index
    %179 = vector.load %arg40[%c4_168, %c0_169] : memref<8x128xf32, #tpu.memory_space<vmem>>, vector<1x128xf32>
    %180 = vector.broadcast %179 : vector<1x128xf32> to vector<8x128xf32>
    %181 = arith.mulf %178, %180 : vector<8x128xf32>
    %c40_170 = arith.constant 40 : index
    %c0_171 = arith.constant 0 : index
    %182 = vector.load %arg56[%c40_170, %c0_171] : memref<288x512xf32, #tpu.memory_space<vmem>>, vector<8x128xf32>
    tpu.vector_store %arg56[%c40_170, %c0_171], %181 {strides = array<i32>} : memref<288x512xf32, #tpu.memory_space<vmem>>, vector<8x128xf32>,
    %c0_172 = arith.constant 0 : index
    %c135 = arith.constant 135 : index
    %183 = vector.load %arg55[%c0_172, %c135] : memref<32x768xf32, #tpu.memory_space<vmem>>, vector<8x128xf32>
    %c5_173 = arith.constant 5 : index
    %c0_174 = arith.constant 0 : index
    %184 = vector.load %arg40[%c5_173, %c0_174] : memref<8x128xf32, #tpu.memory_space<vmem>>, vector<1x128xf32>
    %185 = vector.broadcast %184 : vector<1x128xf32> to vector<8x128xf32>
    %186 = arith.mulf %183, %185 : vector<8x128xf32>
    %c48_175 = arith.constant 48 : index
    %c0_176 = arith.constant 0 : index
    %187 = vector.load %arg56[%c48_175, %c0_176] : memref<288x512xf32, #tpu.memory_space<vmem>>, vector<8x128xf32>
    tpu.vector_store %arg56[%c48_175, %c0_176], %186 {strides = array<i32>} : memref<288x512xf32, #tpu.memory_space<vmem>>, vector<8x128xf32>,
    %c0_177 = arith.constant 0 : index
    %c136 = arith.constant 136 : index
    %188 = vector.load %arg55[%c0_177, %c136] : memref<32x768xf32, #tpu.memory_space<vmem>>, vector<8x128xf32>
    %c6_178 = arith.constant 6 : index
    %c0_179 = arith.constant 0 : index
    %189 = vector.load %arg40[%c6_178, %c0_179] : memref<8x128xf32, #tpu.memory_space<vmem>>, vector<1x128xf32>
    %190 = vector.broadcast %189 : vector<1x128xf32> to vector<8x128xf32>
    %191 = arith.mulf %188, %190 : vector<8x128xf32>
    %c56_180 = arith.constant 56 : index
    %c0_181 = arith.constant 0 : index
    %192 = vector.load %arg56[%c56_180, %c0_181] : memref<288x512xf32, #tpu.memory_space<vmem>>, vector<8x128xf32>
    tpu.vector_store %arg56[%c56_180, %c0_181], %191 {strides = array<i32>} : memref<288x512xf32, #tpu.memory_space<vmem>>, vector<8x128xf32>,
    %c0_182 = arith.constant 0 : index
    %c137 = arith.constant 137 : index
    %193 = vector.load %arg55[%c0_182, %c137] : memref<32x768xf32, #tpu.memory_space<vmem>>, vector<8x128xf32>
    %c7_183 = arith.constant 7 : index
    %c0_184 = arith.constant 0 : index
    %194 = vector.load %arg40[%c7_183, %c0_184] : memref<8x128xf32, #tpu.memory_space<vmem>>, vector<1x128xf32>
    %195 = vector.broadcast %194 : vector<1x128xf32> to vector<8x128xf32>
    %196 = arith.mulf %193, %195 : vector<8x128xf32>
    %c64_185 = arith.constant 64 : index
    %c0_186 = arith.constant 0 : index
    %197 = vector.load %arg56[%c64_185, %c0_186] : memref<288x512xf32, #tpu.memory_space<vmem>>, vector<8x128xf32>
    tpu.vector_store %arg56[%c64_185, %c0_186], %196 {strides = array<i32>} : memref<288x512xf32, #tpu.memory_space<vmem>>, vector<8x128xf32>,
    %c0_187 = arith.constant 0 : index
    %c0_188 = arith.constant 0 : index
    %198 = vector.load %arg7[%c0_187, %c0_188] : memref<16x72xf32, #tpu.memory_space<vmem>>, vector<16x72xf32>
    %c0_189 = arith.constant 0 : index
    %c0_190 = arith.constant 0 : index
    %199 = vector.load %arg56[%c0_189, %c0_190] : memref<288x512xf32, #tpu.memory_space<vmem>>, vector<72x128xf32>
    %cst_191 = arith.constant dense<0.000000e+00> : vector<16x128xf32>
    %200 = tpu.matmul %198, %199, %cst_191 {dimension_numbers = #tpu.dot_dimension_numbers<[1], [0], [0], [1], [0, 0, 1, 1], [], []>} : vector<16x72xf32>, vector<72x128xf32>, vector<16x128xf32> -> vector<16x128xf32>
    %cst_192 = arith.constant dense<0.000000e+00> : vector<16xf32>
    %201 = vector.multi_reduction <add>, %200, %cst_192 [1] : vector<16x128xf32> to vector<16xf32>
    %202 = vector.shape_cast %201 : vector<16xf32> to vector<16x1xf32>
    %cst_193 = arith.constant 7.812500e-03 : f32
    %203 = vector.broadcast %cst_193 : f32 to vector<16x1xf32>
    %204 = arith.mulf %202, %203 : vector<16x1xf32>
    %205 = vector.broadcast %204 : vector<16x1xf32> to vector<16x128xf32>
    %206 = arith.subf %200, %205 : vector<16x128xf32>
    %207 = arith.mulf %206, %206 : vector<16x128xf32>
    %cst_194 = arith.constant dense<0.000000e+00> : vector<16xf32>
    %208 = vector.multi_reduction <add>, %207, %cst_194 [1] : vector<16x128xf32> to vector<16xf32>
    %209 = vector.shape_cast %208 : vector<16xf32> to vector<16x1xf32>
    %cst_195 = arith.constant 7.812500e-03 : f32
    %210 = vector.broadcast %cst_195 : f32 to vector<16x1xf32>
    %211 = arith.mulf %209, %210 : vector<16x1xf32>
    %c0_196 = arith.constant 0 : index
    %c0_197 = arith.constant 0 : index
    %212 = vector.load %arg8[%c0_196, %c0_197] : memref<16x1xf32, #tpu.memory_space<vmem>>, vector<16x1xf32>
    %cst_198 = arith.constant 9.99999974E-6 : f32
    %213 = vector.broadcast %cst_198 : f32 to vector<16x1xf32>
    %214 = arith.addf %211, %213 : vector<16x1xf32>
    %215 = math.rsqrt %214 : vector<16x1xf32>
    %216 = arith.mulf %212, %215 : vector<16x1xf32>
    %217 = vector.broadcast %216 : vector<16x1xf32> to vector<16x128xf32>
    %218 = arith.mulf %206, %217 : vector<16x128xf32>
    %c0_199 = arith.constant 0 : index
    %c0_200 = arith.constant 0 : index
    %219 = vector.load %arg9[%c0_199, %c0_200] : memref<16x1xf32, #tpu.memory_space<vmem>>, vector<16x1xf32>
    %220 = vector.broadcast %219 : vector<16x1xf32> to vector<16x128xf32>
    %221 = arith.addf %218, %220 : vector<16x128xf32>
    %cst_201 = arith.constant 0.000000e+00 : f32
    %222 = vector.broadcast %cst_201 : f32 to vector<16x128xf32>
    %223 = arith.cmpf ogt, %221, %222 : vector<16x128xf32>
    %cst_202 = arith.constant 0.00999999977 : f32
    %224 = vector.broadcast %cst_202 : f32 to vector<16x128xf32>
    %225 = arith.mulf %224, %221 : vector<16x128xf32>
    %226 = arith.select %223, %221, %225 : vector<16x128xi1>, vector<16x128xf32>
    %c0_203 = arith.constant 0 : index
    %c128_204 = arith.constant 128 : index
    %227 = vector.load %arg55[%c0_203, %c128_204] : memref<32x768xf32, #tpu.memory_space<vmem>>, vector<16x128xf32>
    tpu.vector_store %arg55[%c0_203, %c128_204], %226 {strides = array<i32>} : memref<32x768xf32, #tpu.memory_space<vmem>>, vector<16x128xf32>,
    %c0_205 = arith.constant 0 : index
    %c119_206 = arith.constant 119 : index
    %228 = vector.load %arg55[%c0_205, %c119_206] : memref<32x768xf32, #tpu.memory_space<vmem>>, vector<16x128xf32>
    %c0_207 = arith.constant 0 : index
    %c0_208 = arith.constant 0 : index
    %229 = vector.load %arg40[%c0_207, %c0_208] : memref<8x128xf32, #tpu.memory_space<vmem>>, vector<1x128xf32>
    %230 = vector.broadcast %229 : vector<1x128xf32> to vector<16x128xf32>
    %231 = arith.mulf %228, %230 : vector<16x128xf32>
    %c0_209 = arith.constant 0 : index
    %c0_210 = arith.constant 0 : index
    %232 = vector.load %arg56[%c0_209, %c0_210] : memref<288x512xf32, #tpu.memory_space<vmem>>, vector<16x128xf32>
    tpu.vector_store %arg56[%c0_209, %c0_210], %231 {strides = array<i32>} : memref<288x512xf32, #tpu.memory_space<vmem>>, vector<16x128xf32>,
    %c0_211 = arith.constant 0 : index
    %c120_212 = arith.constant 120 : index
    %233 = vector.load %arg55[%c0_211, %c120_212] : memref<32x768xf32, #tpu.memory_space<vmem>>, vector<16x128xf32>
    %c1_213 = arith.constant 1 : index
    %c0_214 = arith.constant 0 : index
    %234 = vector.load %arg40[%c1_213, %c0_214] : memref<8x128xf32, #tpu.memory_space<vmem>>, vector<1x128xf32>
    %235 = vector.broadcast %234 : vector<1x128xf32> to vector<16x128xf32>
    %236 = arith.mulf %233, %235 : vector<16x128xf32>
    %c16_215 = arith.constant 16 : index
    %c0_216 = arith.constant 0 : index
    %237 = vector.load %arg56[%c16_215, %c0_216] : memref<288x512xf32, #tpu.memory_space<vmem>>, vector<16x128xf32>
    tpu.vector_store %arg56[%c16_215, %c0_216], %236 {strides = array<i32>} : memref<288x512xf32, #tpu.memory_space<vmem>>, vector<16x128xf32>,
    %c0_217 = arith.constant 0 : index
    %c121_218 = arith.constant 121 : index
    %238 = vector.load %arg55[%c0_217, %c121_218] : memref<32x768xf32, #tpu.memory_space<vmem>>, vector<16x128xf32>
    %c2_219 = arith.constant 2 : index
    %c0_220 = arith.constant 0 : index
    %239 = vector.load %arg40[%c2_219, %c0_220] : memref<8x128xf32, #tpu.memory_space<vmem>>, vector<1x128xf32>
    %240 = vector.broadcast %239 : vector<1x128xf32> to vector<16x128xf32>
    %241 = arith.mulf %238, %240 : vector<16x128xf32>
    %c32_221 = arith.constant 32 : index
    %c0_222 = arith.constant 0 : index
    %242 = vector.load %arg56[%c32_221, %c0_222] : memref<288x512xf32, #tpu.memory_space<vmem>>, vector<16x128xf32>
    tpu.vector_store %arg56[%c32_221, %c0_222], %241 {strides = array<i32>} : memref<288x512xf32, #tpu.memory_space<vmem>>, vector<16x128xf32>,
    %c0_223 = arith.constant 0 : index
    %c127_224 = arith.constant 127 : index
    %243 = vector.load %arg55[%c0_223, %c127_224] : memref<32x768xf32, #tpu.memory_space<vmem>>, vector<16x128xf32>
    %c3_225 = arith.constant 3 : index
    %c0_226 = arith.constant 0 : index
    %244 = vector.load %arg40[%c3_225, %c0_226] : memref<8x128xf32, #tpu.memory_space<vmem>>, vector<1x128xf32>
    %245 = vector.broadcast %244 : vector<1x128xf32> to vector<16x128xf32>
    %246 = arith.mulf %243, %245 : vector<16x128xf32>
    %c48_227 = arith.constant 48 : index
    %c0_228 = arith.constant 0 : index
    %247 = vector.load %arg56[%c48_227, %c0_228] : memref<288x512xf32, #tpu.memory_space<vmem>>, vector<16x128xf32>
    tpu.vector_store %arg56[%c48_227, %c0_228], %246 {strides = array<i32>} : memref<288x512xf32, #tpu.memory_space<vmem>>, vector<16x128xf32>,
    %c0_229 = arith.constant 0 : index
    %c128_230 = arith.constant 128 : index
    %248 = vector.load %arg55[%c0_229, %c128_230] : memref<32x768xf32, #tpu.memory_space<vmem>>, vector<16x128xf32>
    %c64_231 = arith.constant 64 : index
    %c0_232 = arith.constant 0 : index
    %249 = vector.load %arg56[%c64_231, %c0_232] : memref<288x512xf32, #tpu.memory_space<vmem>>, vector<16x128xf32>
    tpu.vector_store %arg56[%c64_231, %c0_232], %248 {strides = array<i32>} : memref<288x512xf32, #tpu.memory_space<vmem>>, vector<16x128xf32>,
    %c0_233 = arith.constant 0 : index
    %c129_234 = arith.constant 129 : index
    %250 = vector.load %arg55[%c0_233, %c129_234] : memref<32x768xf32, #tpu.memory_space<vmem>>, vector<16x128xf32>
    %c4_235 = arith.constant 4 : index
    %c0_236 = arith.constant 0 : index
    %251 = vector.load %arg40[%c4_235, %c0_236] : memref<8x128xf32, #tpu.memory_space<vmem>>, vector<1x128xf32>
    %252 = vector.broadcast %251 : vector<1x128xf32> to vector<16x128xf32>
    %253 = arith.mulf %250, %252 : vector<16x128xf32>
    %c80 = arith.constant 80 : index
    %c0_237 = arith.constant 0 : index
    %254 = vector.load %arg56[%c80, %c0_237] : memref<288x512xf32, #tpu.memory_space<vmem>>, vector<16x128xf32>
    tpu.vector_store %arg56[%c80, %c0_237], %253 {strides = array<i32>} : memref<288x512xf32, #tpu.memory_space<vmem>>, vector<16x128xf32>,
    %c0_238 = arith.constant 0 : index
    %c135_239 = arith.constant 135 : index
    %255 = vector.load %arg55[%c0_238, %c135_239] : memref<32x768xf32, #tpu.memory_space<vmem>>, vector<16x128xf32>
    %c5_240 = arith.constant 5 : index
    %c0_241 = arith.constant 0 : index
    %256 = vector.load %arg40[%c5_240, %c0_241] : memref<8x128xf32, #tpu.memory_space<vmem>>, vector<1x128xf32>
    %257 = vector.broadcast %256 : vector<1x128xf32> to vector<16x128xf32>
    %258 = arith.mulf %255, %257 : vector<16x128xf32>
    %c96 = arith.constant 96 : index
    %c0_242 = arith.constant 0 : index
    %259 = vector.load %arg56[%c96, %c0_242] : memref<288x512xf32, #tpu.memory_space<vmem>>, vector<16x128xf32>
    tpu.vector_store %arg56[%c96, %c0_242], %258 {strides = array<i32>} : memref<288x512xf32, #tpu.memory_space<vmem>>, vector<16x128xf32>,
    %c0_243 = arith.constant 0 : index
    %c136_244 = arith.constant 136 : index
    %260 = vector.load %arg55[%c0_243, %c136_244] : memref<32x768xf32, #tpu.memory_space<vmem>>, vector<16x128xf32>
    %c6_245 = arith.constant 6 : index
    %c0_246 = arith.constant 0 : index
    %261 = vector.load %arg40[%c6_245, %c0_246] : memref<8x128xf32, #tpu.memory_space<vmem>>, vector<1x128xf32>
    %262 = vector.broadcast %261 : vector<1x128xf32> to vector<16x128xf32>
    %263 = arith.mulf %260, %262 : vector<16x128xf32>
    %c112_247 = arith.constant 112 : index
    %c0_248 = arith.constant 0 : index
    %264 = vector.load %arg56[%c112_247, %c0_248] : memref<288x512xf32, #tpu.memory_space<vmem>>, vector<16x128xf32>
    tpu.vector_store %arg56[%c112_247, %c0_248], %263 {strides = array<i32>} : memref<288x512xf32, #tpu.memory_space<vmem>>, vector<16x128xf32>,
    %c0_249 = arith.constant 0 : index
    %c137_250 = arith.constant 137 : index
    %265 = vector.load %arg55[%c0_249, %c137_250] : memref<32x768xf32, #tpu.memory_space<vmem>>, vector<16x128xf32>
    %c7_251 = arith.constant 7 : index
    %c0_252 = arith.constant 0 : index
    %266 = vector.load %arg40[%c7_251, %c0_252] : memref<8x128xf32, #tpu.memory_space<vmem>>, vector<1x128xf32>
    %267 = vector.broadcast %266 : vector<1x128xf32> to vector<16x128xf32>
    %268 = arith.mulf %265, %267 : vector<16x128xf32>
    %c128_253 = arith.constant 128 : index
    %c0_254 = arith.constant 0 : index
    %269 = vector.load %arg56[%c128_253, %c0_254] : memref<288x512xf32, #tpu.memory_space<vmem>>, vector<16x128xf32>
    tpu.vector_store %arg56[%c128_253, %c0_254], %268 {strides = array<i32>} : memref<288x512xf32, #tpu.memory_space<vmem>>, vector<16x128xf32>,
    %c0_255 = arith.constant 0 : index
    %c0_256 = arith.constant 0 : index
    %270 = vector.load %arg10[%c0_255, %c0_256] : memref<16x144xf32, #tpu.memory_space<vmem>>, vector<16x144xf32>
    %c0_257 = arith.constant 0 : index
    %c0_258 = arith.constant 0 : index
    %271 = vector.load %arg56[%c0_257, %c0_258] : memref<288x512xf32, #tpu.memory_space<vmem>>, vector<144x128xf32>
    %cst_259 = arith.constant dense<0.000000e+00> : vector<16x128xf32>
    %272 = tpu.matmul %270, %271, %cst_259 {dimension_numbers = #tpu.dot_dimension_numbers<[1], [0], [0], [1], [0, 0, 1, 1], [], []>} : vector<16x144xf32>, vector<144x128xf32>, vector<16x128xf32> -> vector<16x128xf32>
    %cst_260 = arith.constant dense<0.000000e+00> : vector<16xf32>
    %273 = vector.multi_reduction <add>, %272, %cst_260 [1] : vector<16x128xf32> to vector<16xf32>
    %274 = vector.shape_cast %273 : vector<16xf32> to vector<16x1xf32>
    %cst_261 = arith.constant 7.812500e-03 : f32
    %275 = vector.broadcast %cst_261 : f32 to vector<16x1xf32>
    %276 = arith.mulf %274, %275 : vector<16x1xf32>
    %277 = vector.broadcast %276 : vector<16x1xf32> to vector<16x128xf32>
    %278 = arith.subf %272, %277 : vector<16x128xf32>
    %279 = arith.mulf %278, %278 : vector<16x128xf32>
    %cst_262 = arith.constant dense<0.000000e+00> : vector<16xf32>
    %280 = vector.multi_reduction <add>, %279, %cst_262 [1] : vector<16x128xf32> to vector<16xf32>
    %281 = vector.shape_cast %280 : vector<16xf32> to vector<16x1xf32>
    %cst_263 = arith.constant 7.812500e-03 : f32
    %282 = vector.broadcast %cst_263 : f32 to vector<16x1xf32>
    %283 = arith.mulf %281, %282 : vector<16x1xf32>
    %c0_264 = arith.constant 0 : index
    %c0_265 = arith.constant 0 : index
    %284 = vector.load %arg11[%c0_264, %c0_265] : memref<16x1xf32, #tpu.memory_space<vmem>>, vector<16x1xf32>
    %cst_266 = arith.constant 9.99999974E-6 : f32
    %285 = vector.broadcast %cst_266 : f32 to vector<16x1xf32>
    %286 = arith.addf %283, %285 : vector<16x1xf32>
    %287 = math.rsqrt %286 : vector<16x1xf32>
    %288 = arith.mulf %284, %287 : vector<16x1xf32>
    %289 = vector.broadcast %288 : vector<16x1xf32> to vector<16x128xf32>
    %290 = arith.mulf %278, %289 : vector<16x128xf32>
    %c0_267 = arith.constant 0 : index
    %c0_268 = arith.constant 0 : index
    %291 = vector.load %arg12[%c0_267, %c0_268] : memref<16x1xf32, #tpu.memory_space<vmem>>, vector<16x1xf32>
    %292 = vector.broadcast %291 : vector<16x1xf32> to vector<16x128xf32>
    %293 = arith.addf %290, %292 : vector<16x128xf32>
    %cst_269 = arith.constant 0.000000e+00 : f32
    %294 = vector.broadcast %cst_269 : f32 to vector<16x128xf32>
    %295 = arith.cmpf ogt, %293, %294 : vector<16x128xf32>
    %cst_270 = arith.constant 0.00999999977 : f32
    %296 = vector.broadcast %cst_270 : f32 to vector<16x128xf32>
    %297 = arith.mulf %296, %293 : vector<16x128xf32>
    %298 = arith.select %295, %293, %297 : vector<16x128xi1>, vector<16x128xf32>
    %c0_271 = arith.constant 0 : index
    %c128_272 = arith.constant 128 : index
    %299 = vector.load %arg55[%c0_271, %c128_272] : memref<32x768xf32, #tpu.memory_space<vmem>>, vector<16x128xf32>
    tpu.vector_store %arg55[%c0_271, %c128_272], %298 {strides = array<i32>} : memref<32x768xf32, #tpu.memory_space<vmem>>, vector<16x128xf32>,
    %c0_273 = arith.constant 0 : index
    %c129_274 = arith.constant 129 : index
    %300 = vector.load %arg55[%c0_273, %c129_274] : memref<32x768xf32, #tpu.memory_space<vmem>>, vector<16x128xf32>
    %c0_275 = arith.constant 0 : index
    %c136_276 = arith.constant 136 : index
    %301 = vector.load %arg55[%c0_275, %c136_276] : memref<32x768xf32, #tpu.memory_space<vmem>>, vector<16x128xf32>
    %c0_277 = arith.constant 0 : index
    %c137_278 = arith.constant 137 : index
    %302 = vector.load %arg55[%c0_277, %c137_278] : memref<32x768xf32, #tpu.memory_space<vmem>>, vector<16x128xf32>
    %303 = arith.maximumf %298, %300 : vector<16x128xf32>
    %304 = arith.maximumf %301, %302 : vector<16x128xf32>
    %305 = arith.maximumf %303, %304 : vector<16x128xf32>
    %c0_279 = arith.constant 0 : index
    %c0_280 = arith.constant 0 : index
    %306 = vector.load %arg44[%c0_279, %c0_280] : memref<64x16xf32, #tpu.memory_space<vmem>>, vector<64x16xf32>
    %307 = vector.extract_strided_slice %305 {offsets = [0, 0], sizes = [16, 64], strides = [1, 1]} : vector<16x128xf32> to vector<16x64xf32>
    %cst_281 = arith.constant dense<0.000000e+00> : vector<16x16xf32>
    %308 = tpu.matmul %307, %306, %cst_281 {dimension_numbers = #tpu.dot_dimension_numbers<[1], [0], [0], [1], [0, 0, 1, 1], [], []>} : vector<16x64xf32>, vector<64x16xf32>, vector<16x16xf32> -> vector<16x16xf32>
    %c0_282 = arith.constant 0 : index
    %c0_283 = arith.constant 0 : index
    %309 = vector.load %arg56[%c0_282, %c0_283] : memref<288x512xf32, #tpu.memory_space<vmem>>, vector<16x16xf32>
    tpu.vector_store %arg56[%c0_282, %c0_283], %308 {strides = array<i32>} : memref<288x512xf32, #tpu.memory_space<vmem>>, vector<16x16xf32>,
    %310 = vector.extract_strided_slice %305 {offsets = [0, 64], sizes = [16, 64], strides = [1, 1]} : vector<16x128xf32> to vector<16x64xf32>
    %cst_284 = arith.constant dense<0.000000e+00> : vector<16x16xf32>
    %311 = tpu.matmul %310, %306, %cst_284 {dimension_numbers = #tpu.dot_dimension_numbers<[1], [0], [0], [1], [0, 0, 1, 1], [], []>} : vector<16x64xf32>, vector<64x16xf32>, vector<16x16xf32> -> vector<16x16xf32>
    %c0_285 = arith.constant 0 : index
    %c16_286 = arith.constant 16 : index
    %312 = vector.load %arg56[%c0_285, %c16_286] : memref<288x512xf32, #tpu.memory_space<vmem>>, vector<16x16xf32>
    tpu.vector_store %arg56[%c0_285, %c16_286], %311 {strides = array<i32>} : memref<288x512xf32, #tpu.memory_space<vmem>>, vector<16x16xf32>,
    %c0_287 = arith.constant 0 : index
    %c0_288 = arith.constant 0 : index
    %313 = vector.load %arg56[%c0_287, %c0_288] : memref<288x512xf32, #tpu.memory_space<vmem>>, vector<16x32xf32>
    %c0_289 = arith.constant 0 : index
    %c0_290 = arith.constant 0 : index
    %314 = vector.load %arg50[%c0_289, %c0_290] : memref<16x32xf32, #tpu.memory_space<vmem>>, vector<16x32xf32>
    tpu.vector_store %arg50[%c0_289, %c0_290], %313 {strides = array<i32>} : memref<16x32xf32, #tpu.memory_space<vmem>>, vector<16x32xf32>,
    %c0_291 = arith.constant 0 : index
    %c128_292 = arith.constant 128 : index
    %315 = vector.load %arg55[%c0_291, %c128_292] : memref<32x768xf32, #tpu.memory_space<vmem>>, vector<16x32xf32>
    tpu.vector_store %arg55[%c0_291, %c128_292], %313 {strides = array<i32>} : memref<32x768xf32, #tpu.memory_space<vmem>>, vector<16x32xf32>,
    %c0_293 = arith.constant 0 : index
    %c123 = arith.constant 123 : index
    %316 = vector.load %arg55[%c0_293, %c123] : memref<32x768xf32, #tpu.memory_space<vmem>>, vector<16x32xf32>
    %c0_294 = arith.constant 0 : index
    %c0_295 = arith.constant 0 : index
    %317 = vector.load %arg41[%c0_294, %c0_295] : memref<8x32xf32, #tpu.memory_space<vmem>>, vector<1x32xf32>
    %318 = vector.broadcast %317 : vector<1x32xf32> to vector<16x32xf32>
    %319 = arith.mulf %316, %318 : vector<16x32xf32>
    %c0_296 = arith.constant 0 : index
    %c0_297 = arith.constant 0 : index
    %320 = vector.load %arg56[%c0_296, %c0_297] : memref<288x512xf32, #tpu.memory_space<vmem>>, vector<16x32xf32>
    tpu.vector_store %arg56[%c0_296, %c0_297], %319 {strides = array<i32>} : memref<288x512xf32, #tpu.memory_space<vmem>>, vector<16x32xf32>,
    %c0_298 = arith.constant 0 : index
    %c124 = arith.constant 124 : index
    %321 = vector.load %arg55[%c0_298, %c124] : memref<32x768xf32, #tpu.memory_space<vmem>>, vector<16x32xf32>
    %c1_299 = arith.constant 1 : index
    %c0_300 = arith.constant 0 : index
    %322 = vector.load %arg41[%c1_299, %c0_300] : memref<8x32xf32, #tpu.memory_space<vmem>>, vector<1x32xf32>
    %323 = vector.broadcast %322 : vector<1x32xf32> to vector<16x32xf32>
    %324 = arith.mulf %321, %323 : vector<16x32xf32>
    %c16_301 = arith.constant 16 : index
    %c0_302 = arith.constant 0 : index
    %325 = vector.load %arg56[%c16_301, %c0_302] : memref<288x512xf32, #tpu.memory_space<vmem>>, vector<16x32xf32>
    tpu.vector_store %arg56[%c16_301, %c0_302], %324 {strides = array<i32>} : memref<288x512xf32, #tpu.memory_space<vmem>>, vector<16x32xf32>,
    %c0_303 = arith.constant 0 : index
    %c125 = arith.constant 125 : index
    %326 = vector.load %arg55[%c0_303, %c125] : memref<32x768xf32, #tpu.memory_space<vmem>>, vector<16x32xf32>
    %c2_304 = arith.constant 2 : index
    %c0_305 = arith.constant 0 : index
    %327 = vector.load %arg41[%c2_304, %c0_305] : memref<8x32xf32, #tpu.memory_space<vmem>>, vector<1x32xf32>
    %328 = vector.broadcast %327 : vector<1x32xf32> to vector<16x32xf32>
    %329 = arith.mulf %326, %328 : vector<16x32xf32>
    %c32_306 = arith.constant 32 : index
    %c0_307 = arith.constant 0 : index
    %330 = vector.load %arg56[%c32_306, %c0_307] : memref<288x512xf32, #tpu.memory_space<vmem>>, vector<16x32xf32>
    tpu.vector_store %arg56[%c32_306, %c0_307], %329 {strides = array<i32>} : memref<288x512xf32, #tpu.memory_space<vmem>>, vector<16x32xf32>,
    %c0_308 = arith.constant 0 : index
    %c127_309 = arith.constant 127 : index
    %331 = vector.load %arg55[%c0_308, %c127_309] : memref<32x768xf32, #tpu.memory_space<vmem>>, vector<16x32xf32>
    %c3_310 = arith.constant 3 : index
    %c0_311 = arith.constant 0 : index
    %332 = vector.load %arg41[%c3_310, %c0_311] : memref<8x32xf32, #tpu.memory_space<vmem>>, vector<1x32xf32>
    %333 = vector.broadcast %332 : vector<1x32xf32> to vector<16x32xf32>
    %334 = arith.mulf %331, %333 : vector<16x32xf32>
    %c48_312 = arith.constant 48 : index
    %c0_313 = arith.constant 0 : index
    %335 = vector.load %arg56[%c48_312, %c0_313] : memref<288x512xf32, #tpu.memory_space<vmem>>, vector<16x32xf32>
    tpu.vector_store %arg56[%c48_312, %c0_313], %334 {strides = array<i32>} : memref<288x512xf32, #tpu.memory_space<vmem>>, vector<16x32xf32>,
    %c0_314 = arith.constant 0 : index
    %c128_315 = arith.constant 128 : index
    %336 = vector.load %arg55[%c0_314, %c128_315] : memref<32x768xf32, #tpu.memory_space<vmem>>, vector<16x32xf32>
    %c64_316 = arith.constant 64 : index
    %c0_317 = arith.constant 0 : index
    %337 = vector.load %arg56[%c64_316, %c0_317] : memref<288x512xf32, #tpu.memory_space<vmem>>, vector<16x32xf32>
    tpu.vector_store %arg56[%c64_316, %c0_317], %336 {strides = array<i32>} : memref<288x512xf32, #tpu.memory_space<vmem>>, vector<16x32xf32>,
    %c0_318 = arith.constant 0 : index
    %c129_319 = arith.constant 129 : index
    %338 = vector.load %arg55[%c0_318, %c129_319] : memref<32x768xf32, #tpu.memory_space<vmem>>, vector<16x32xf32>
    %c4_320 = arith.constant 4 : index
    %c0_321 = arith.constant 0 : index
    %339 = vector.load %arg41[%c4_320, %c0_321] : memref<8x32xf32, #tpu.memory_space<vmem>>, vector<1x32xf32>
    %340 = vector.broadcast %339 : vector<1x32xf32> to vector<16x32xf32>
    %341 = arith.mulf %338, %340 : vector<16x32xf32>
    %c80_322 = arith.constant 80 : index
    %c0_323 = arith.constant 0 : index
    %342 = vector.load %arg56[%c80_322, %c0_323] : memref<288x512xf32, #tpu.memory_space<vmem>>, vector<16x32xf32>
    tpu.vector_store %arg56[%c80_322, %c0_323], %341 {strides = array<i32>} : memref<288x512xf32, #tpu.memory_space<vmem>>, vector<16x32xf32>,
    %c0_324 = arith.constant 0 : index
    %c131 = arith.constant 131 : index
    %343 = vector.load %arg55[%c0_324, %c131] : memref<32x768xf32, #tpu.memory_space<vmem>>, vector<16x32xf32>
    %c5_325 = arith.constant 5 : index
    %c0_326 = arith.constant 0 : index
    %344 = vector.load %arg41[%c5_325, %c0_326] : memref<8x32xf32, #tpu.memory_space<vmem>>, vector<1x32xf32>
    %345 = vector.broadcast %344 : vector<1x32xf32> to vector<16x32xf32>
    %346 = arith.mulf %343, %345 : vector<16x32xf32>
    %c96_327 = arith.constant 96 : index
    %c0_328 = arith.constant 0 : index
    %347 = vector.load %arg56[%c96_327, %c0_328] : memref<288x512xf32, #tpu.memory_space<vmem>>, vector<16x32xf32>
    tpu.vector_store %arg56[%c96_327, %c0_328], %346 {strides = array<i32>} : memref<288x512xf32, #tpu.memory_space<vmem>>, vector<16x32xf32>,
    %c0_329 = arith.constant 0 : index
    %c132 = arith.constant 132 : index
    %348 = vector.load %arg55[%c0_329, %c132] : memref<32x768xf32, #tpu.memory_space<vmem>>, vector<16x32xf32>
    %c6_330 = arith.constant 6 : index
    %c0_331 = arith.constant 0 : index
    %349 = vector.load %arg41[%c6_330, %c0_331] : memref<8x32xf32, #tpu.memory_space<vmem>>, vector<1x32xf32>
    %350 = vector.broadcast %349 : vector<1x32xf32> to vector<16x32xf32>
    %351 = arith.mulf %348, %350 : vector<16x32xf32>
    %c112_332 = arith.constant 112 : index
    %c0_333 = arith.constant 0 : index
    %352 = vector.load %arg56[%c112_332, %c0_333] : memref<288x512xf32, #tpu.memory_space<vmem>>, vector<16x32xf32>
    tpu.vector_store %arg56[%c112_332, %c0_333], %351 {strides = array<i32>} : memref<288x512xf32, #tpu.memory_space<vmem>>, vector<16x32xf32>,
    %c0_334 = arith.constant 0 : index
    %c133 = arith.constant 133 : index
    %353 = vector.load %arg55[%c0_334, %c133] : memref<32x768xf32, #tpu.memory_space<vmem>>, vector<16x32xf32>
    %c7_335 = arith.constant 7 : index
    %c0_336 = arith.constant 0 : index
    %354 = vector.load %arg41[%c7_335, %c0_336] : memref<8x32xf32, #tpu.memory_space<vmem>>, vector<1x32xf32>
    %355 = vector.broadcast %354 : vector<1x32xf32> to vector<16x32xf32>
    %356 = arith.mulf %353, %355 : vector<16x32xf32>
    %c128_337 = arith.constant 128 : index
    %c0_338 = arith.constant 0 : index
    %357 = vector.load %arg56[%c128_337, %c0_338] : memref<288x512xf32, #tpu.memory_space<vmem>>, vector<16x32xf32>
    tpu.vector_store %arg56[%c128_337, %c0_338], %356 {strides = array<i32>} : memref<288x512xf32, #tpu.memory_space<vmem>>, vector<16x32xf32>,
    %c0_339 = arith.constant 0 : index
    %c0_340 = arith.constant 0 : index
    %358 = vector.load %arg13[%c0_339, %c0_340] : memref<32x144xf32, #tpu.memory_space<vmem>>, vector<32x144xf32>
    %c0_341 = arith.constant 0 : index
    %c0_342 = arith.constant 0 : index
    %359 = vector.load %arg56[%c0_341, %c0_342] : memref<288x512xf32, #tpu.memory_space<vmem>>, vector<144x32xf32>
    %cst_343 = arith.constant dense<0.000000e+00> : vector<32x32xf32>
    %360 = tpu.matmul %358, %359, %cst_343 {dimension_numbers = #tpu.dot_dimension_numbers<[1], [0], [0], [1], [0, 0, 1, 1], [], []>} : vector<32x144xf32>, vector<144x32xf32>, vector<32x32xf32> -> vector<32x32xf32>
    %cst_344 = arith.constant dense<0.000000e+00> : vector<32xf32>
    %361 = vector.multi_reduction <add>, %360, %cst_344 [1] : vector<32x32xf32> to vector<32xf32>
    %362 = vector.shape_cast %361 : vector<32xf32> to vector<32x1xf32>
    %cst_345 = arith.constant 3.125000e-02 : f32
    %363 = vector.broadcast %cst_345 : f32 to vector<32x1xf32>
    %364 = arith.mulf %362, %363 : vector<32x1xf32>
    %365 = vector.broadcast %364 : vector<32x1xf32> to vector<32x32xf32>
    %366 = arith.subf %360, %365 : vector<32x32xf32>
    %367 = arith.mulf %366, %366 : vector<32x32xf32>
    %cst_346 = arith.constant dense<0.000000e+00> : vector<32xf32>
    %368 = vector.multi_reduction <add>, %367, %cst_346 [1] : vector<32x32xf32> to vector<32xf32>
    %369 = vector.shape_cast %368 : vector<32xf32> to vector<32x1xf32>
    %cst_347 = arith.constant 3.125000e-02 : f32
    %370 = vector.broadcast %cst_347 : f32 to vector<32x1xf32>
    %371 = arith.mulf %369, %370 : vector<32x1xf32>
    %c0_348 = arith.constant 0 : index
    %c0_349 = arith.constant 0 : index
    %372 = vector.load %arg14[%c0_348, %c0_349] : memref<32x1xf32, #tpu.memory_space<vmem>>, vector<32x1xf32>
    %cst_350 = arith.constant 9.99999974E-6 : f32
    %373 = vector.broadcast %cst_350 : f32 to vector<32x1xf32>
    %374 = arith.addf %371, %373 : vector<32x1xf32>
    %375 = math.rsqrt %374 : vector<32x1xf32>
    %376 = arith.mulf %372, %375 : vector<32x1xf32>
    %377 = vector.broadcast %376 : vector<32x1xf32> to vector<32x32xf32>
    %378 = arith.mulf %366, %377 : vector<32x32xf32>
    %c0_351 = arith.constant 0 : index
    %c0_352 = arith.constant 0 : index
    %379 = vector.load %arg15[%c0_351, %c0_352] : memref<32x1xf32, #tpu.memory_space<vmem>>, vector<32x1xf32>
    %380 = vector.broadcast %379 : vector<32x1xf32> to vector<32x32xf32>
    %381 = arith.addf %378, %380 : vector<32x32xf32>
    %cst_353 = arith.constant 0.000000e+00 : f32
    %382 = vector.broadcast %cst_353 : f32 to vector<32x32xf32>
    %383 = arith.cmpf ogt, %381, %382 : vector<32x32xf32>
    %cst_354 = arith.constant 0.00999999977 : f32
    %384 = vector.broadcast %cst_354 : f32 to vector<32x32xf32>
    %385 = arith.mulf %384, %381 : vector<32x32xf32>
    %386 = arith.select %383, %381, %385 : vector<32x32xi1>, vector<32x32xf32>
    %c0_355 = arith.constant 0 : index
    %c128_356 = arith.constant 128 : index
    %387 = vector.load %arg55[%c0_355, %c128_356] : memref<32x768xf32, #tpu.memory_space<vmem>>, vector<32x32xf32>
    tpu.vector_store %arg55[%c0_355, %c128_356], %386 {strides = array<i32>} : memref<32x768xf32, #tpu.memory_space<vmem>>, vector<32x32xf32>,
    %c0_357 = arith.constant 0 : index
    %c123_358 = arith.constant 123 : index
    %388 = vector.load %arg55[%c0_357, %c123_358] : memref<32x768xf32, #tpu.memory_space<vmem>>, vector<32x32xf32>
    %c0_359 = arith.constant 0 : index
    %c0_360 = arith.constant 0 : index
    %389 = vector.load %arg41[%c0_359, %c0_360] : memref<8x32xf32, #tpu.memory_space<vmem>>, vector<1x32xf32>
    %390 = vector.broadcast %389 : vector<1x32xf32> to vector<32x32xf32>
    %391 = arith.mulf %388, %390 : vector<32x32xf32>
    %c0_361 = arith.constant 0 : index
    %c0_362 = arith.constant 0 : index
    %392 = vector.load %arg56[%c0_361, %c0_362] : memref<288x512xf32, #tpu.memory_space<vmem>>, vector<32x32xf32>
    tpu.vector_store %arg56[%c0_361, %c0_362], %391 {strides = array<i32>} : memref<288x512xf32, #tpu.memory_space<vmem>>, vector<32x32xf32>,
    %c0_363 = arith.constant 0 : index
    %c124_364 = arith.constant 124 : index
    %393 = vector.load %arg55[%c0_363, %c124_364] : memref<32x768xf32, #tpu.memory_space<vmem>>, vector<32x32xf32>
    %c1_365 = arith.constant 1 : index
    %c0_366 = arith.constant 0 : index
    %394 = vector.load %arg41[%c1_365, %c0_366] : memref<8x32xf32, #tpu.memory_space<vmem>>, vector<1x32xf32>
    %395 = vector.broadcast %394 : vector<1x32xf32> to vector<32x32xf32>
    %396 = arith.mulf %393, %395 : vector<32x32xf32>
    %c32_367 = arith.constant 32 : index
    %c0_368 = arith.constant 0 : index
    %397 = vector.load %arg56[%c32_367, %c0_368] : memref<288x512xf32, #tpu.memory_space<vmem>>, vector<32x32xf32>
    tpu.vector_store %arg56[%c32_367, %c0_368], %396 {strides = array<i32>} : memref<288x512xf32, #tpu.memory_space<vmem>>, vector<32x32xf32>,
    %c0_369 = arith.constant 0 : index
    %c125_370 = arith.constant 125 : index
    %398 = vector.load %arg55[%c0_369, %c125_370] : memref<32x768xf32, #tpu.memory_space<vmem>>, vector<32x32xf32>
    %c2_371 = arith.constant 2 : index
    %c0_372 = arith.constant 0 : index
    %399 = vector.load %arg41[%c2_371, %c0_372] : memref<8x32xf32, #tpu.memory_space<vmem>>, vector<1x32xf32>
    %400 = vector.broadcast %399 : vector<1x32xf32> to vector<32x32xf32>
    %401 = arith.mulf %398, %400 : vector<32x32xf32>
    %c64_373 = arith.constant 64 : index
    %c0_374 = arith.constant 0 : index
    %402 = vector.load %arg56[%c64_373, %c0_374] : memref<288x512xf32, #tpu.memory_space<vmem>>, vector<32x32xf32>
    tpu.vector_store %arg56[%c64_373, %c0_374], %401 {strides = array<i32>} : memref<288x512xf32, #tpu.memory_space<vmem>>, vector<32x32xf32>,
    %c0_375 = arith.constant 0 : index
    %c127_376 = arith.constant 127 : index
    %403 = vector.load %arg55[%c0_375, %c127_376] : memref<32x768xf32, #tpu.memory_space<vmem>>, vector<32x32xf32>
    %c3_377 = arith.constant 3 : index
    %c0_378 = arith.constant 0 : index
    %404 = vector.load %arg41[%c3_377, %c0_378] : memref<8x32xf32, #tpu.memory_space<vmem>>, vector<1x32xf32>
    %405 = vector.broadcast %404 : vector<1x32xf32> to vector<32x32xf32>
    %406 = arith.mulf %403, %405 : vector<32x32xf32>
    %c96_379 = arith.constant 96 : index
    %c0_380 = arith.constant 0 : index
    %407 = vector.load %arg56[%c96_379, %c0_380] : memref<288x512xf32, #tpu.memory_space<vmem>>, vector<32x32xf32>
    tpu.vector_store %arg56[%c96_379, %c0_380], %406 {strides = array<i32>} : memref<288x512xf32, #tpu.memory_space<vmem>>, vector<32x32xf32>,
    %c0_381 = arith.constant 0 : index
    %c128_382 = arith.constant 128 : index
    %408 = vector.load %arg55[%c0_381, %c128_382] : memref<32x768xf32, #tpu.memory_space<vmem>>, vector<32x32xf32>
    %c128_383 = arith.constant 128 : index
    %c0_384 = arith.constant 0 : index
    %409 = vector.load %arg56[%c128_383, %c0_384] : memref<288x512xf32, #tpu.memory_space<vmem>>, vector<32x32xf32>
    tpu.vector_store %arg56[%c128_383, %c0_384], %408 {strides = array<i32>} : memref<288x512xf32, #tpu.memory_space<vmem>>, vector<32x32xf32>,
    %c0_385 = arith.constant 0 : index
    %c129_386 = arith.constant 129 : index
    %410 = vector.load %arg55[%c0_385, %c129_386] : memref<32x768xf32, #tpu.memory_space<vmem>>, vector<32x32xf32>
    %c4_387 = arith.constant 4 : index
    %c0_388 = arith.constant 0 : index
    %411 = vector.load %arg41[%c4_387, %c0_388] : memref<8x32xf32, #tpu.memory_space<vmem>>, vector<1x32xf32>
    %412 = vector.broadcast %411 : vector<1x32xf32> to vector<32x32xf32>
    %413 = arith.mulf %410, %412 : vector<32x32xf32>
    %c160 = arith.constant 160 : index
    %c0_389 = arith.constant 0 : index
    %414 = vector.load %arg56[%c160, %c0_389] : memref<288x512xf32, #tpu.memory_space<vmem>>, vector<32x32xf32>
    tpu.vector_store %arg56[%c160, %c0_389], %413 {strides = array<i32>} : memref<288x512xf32, #tpu.memory_space<vmem>>, vector<32x32xf32>,
    %c0_390 = arith.constant 0 : index
    %c131_391 = arith.constant 131 : index
    %415 = vector.load %arg55[%c0_390, %c131_391] : memref<32x768xf32, #tpu.memory_space<vmem>>, vector<32x32xf32>
    %c5_392 = arith.constant 5 : index
    %c0_393 = arith.constant 0 : index
    %416 = vector.load %arg41[%c5_392, %c0_393] : memref<8x32xf32, #tpu.memory_space<vmem>>, vector<1x32xf32>
    %417 = vector.broadcast %416 : vector<1x32xf32> to vector<32x32xf32>
    %418 = arith.mulf %415, %417 : vector<32x32xf32>
    %c192 = arith.constant 192 : index
    %c0_394 = arith.constant 0 : index
    %419 = vector.load %arg56[%c192, %c0_394] : memref<288x512xf32, #tpu.memory_space<vmem>>, vector<32x32xf32>
    tpu.vector_store %arg56[%c192, %c0_394], %418 {strides = array<i32>} : memref<288x512xf32, #tpu.memory_space<vmem>>, vector<32x32xf32>,
    %c0_395 = arith.constant 0 : index
    %c132_396 = arith.constant 132 : index
    %420 = vector.load %arg55[%c0_395, %c132_396] : memref<32x768xf32, #tpu.memory_space<vmem>>, vector<32x32xf32>
    %c6_397 = arith.constant 6 : index
    %c0_398 = arith.constant 0 : index
    %421 = vector.load %arg41[%c6_397, %c0_398] : memref<8x32xf32, #tpu.memory_space<vmem>>, vector<1x32xf32>
    %422 = vector.broadcast %421 : vector<1x32xf32> to vector<32x32xf32>
    %423 = arith.mulf %420, %422 : vector<32x32xf32>
    %c224 = arith.constant 224 : index
    %c0_399 = arith.constant 0 : index
    %424 = vector.load %arg56[%c224, %c0_399] : memref<288x512xf32, #tpu.memory_space<vmem>>, vector<32x32xf32>
    tpu.vector_store %arg56[%c224, %c0_399], %423 {strides = array<i32>} : memref<288x512xf32, #tpu.memory_space<vmem>>, vector<32x32xf32>,
    %c0_400 = arith.constant 0 : index
    %c133_401 = arith.constant 133 : index
    %425 = vector.load %arg55[%c0_400, %c133_401] : memref<32x768xf32, #tpu.memory_space<vmem>>, vector<32x32xf32>
    %c7_402 = arith.constant 7 : index
    %c0_403 = arith.constant 0 : index
    %426 = vector.load %arg41[%c7_402, %c0_403] : memref<8x32xf32, #tpu.memory_space<vmem>>, vector<1x32xf32>
    %427 = vector.broadcast %426 : vector<1x32xf32> to vector<32x32xf32>
    %428 = arith.mulf %425, %427 : vector<32x32xf32>
    %c256 = arith.constant 256 : index
    %c0_404 = arith.constant 0 : index
    %429 = vector.load %arg56[%c256, %c0_404] : memref<288x512xf32, #tpu.memory_space<vmem>>, vector<32x32xf32>
    tpu.vector_store %arg56[%c256, %c0_404], %428 {strides = array<i32>} : memref<288x512xf32, #tpu.memory_space<vmem>>, vector<32x32xf32>,
    %c0_405 = arith.constant 0 : index
    %c0_406 = arith.constant 0 : index
    %430 = vector.load %arg16[%c0_405, %c0_406] : memref<32x288xf32, #tpu.memory_space<vmem>>, vector<32x288xf32>
    %c0_407 = arith.constant 0 : index
    %c0_408 = arith.constant 0 : index
    %431 = vector.load %arg56[%c0_407, %c0_408] : memref<288x512xf32, #tpu.memory_space<vmem>>, vector<288x32xf32>
    %cst_409 = arith.constant dense<0.000000e+00> : vector<32x32xf32>
    %432 = tpu.matmul %430, %431, %cst_409 {dimension_numbers = #tpu.dot_dimension_numbers<[1], [0], [0], [1], [0, 0, 1, 1], [], []>} : vector<32x288xf32>, vector<288x32xf32>, vector<32x32xf32> -> vector<32x32xf32>
    %cst_410 = arith.constant dense<0.000000e+00> : vector<32xf32>
    %433 = vector.multi_reduction <add>, %432, %cst_410 [1] : vector<32x32xf32> to vector<32xf32>
    %434 = vector.shape_cast %433 : vector<32xf32> to vector<32x1xf32>
    %cst_411 = arith.constant 3.125000e-02 : f32
    %435 = vector.broadcast %cst_411 : f32 to vector<32x1xf32>
    %436 = arith.mulf %434, %435 : vector<32x1xf32>
    %437 = vector.broadcast %436 : vector<32x1xf32> to vector<32x32xf32>
    %438 = arith.subf %432, %437 : vector<32x32xf32>
    %439 = arith.mulf %438, %438 : vector<32x32xf32>
    %cst_412 = arith.constant dense<0.000000e+00> : vector<32xf32>
    %440 = vector.multi_reduction <add>, %439, %cst_412 [1] : vector<32x32xf32> to vector<32xf32>
    %441 = vector.shape_cast %440 : vector<32xf32> to vector<32x1xf32>
    %cst_413 = arith.constant 3.125000e-02 : f32
    %442 = vector.broadcast %cst_413 : f32 to vector<32x1xf32>
    %443 = arith.mulf %441, %442 : vector<32x1xf32>
    %c0_414 = arith.constant 0 : index
    %c0_415 = arith.constant 0 : index
    %444 = vector.load %arg17[%c0_414, %c0_415] : memref<32x1xf32, #tpu.memory_space<vmem>>, vector<32x1xf32>
    %cst_416 = arith.constant 9.99999974E-6 : f32
    %445 = vector.broadcast %cst_416 : f32 to vector<32x1xf32>
    %446 = arith.addf %443, %445 : vector<32x1xf32>
    %447 = math.rsqrt %446 : vector<32x1xf32>
    %448 = arith.mulf %444, %447 : vector<32x1xf32>
    %449 = vector.broadcast %448 : vector<32x1xf32> to vector<32x32xf32>
    %450 = arith.mulf %438, %449 : vector<32x32xf32>
    %c0_417 = arith.constant 0 : index
    %c0_418 = arith.constant 0 : index
    %451 = vector.load %arg18[%c0_417, %c0_418] : memref<32x1xf32, #tpu.memory_space<vmem>>, vector<32x1xf32>
    %452 = vector.broadcast %451 : vector<32x1xf32> to vector<32x32xf32>
    %453 = arith.addf %450, %452 : vector<32x32xf32>
    %cst_419 = arith.constant 0.000000e+00 : f32
    %454 = vector.broadcast %cst_419 : f32 to vector<32x32xf32>
    %455 = arith.cmpf ogt, %453, %454 : vector<32x32xf32>
    %cst_420 = arith.constant 0.00999999977 : f32
    %456 = vector.broadcast %cst_420 : f32 to vector<32x32xf32>
    %457 = arith.mulf %456, %453 : vector<32x32xf32>
    %458 = arith.select %455, %453, %457 : vector<32x32xi1>, vector<32x32xf32>
    %c0_421 = arith.constant 0 : index
    %c128_422 = arith.constant 128 : index
    %459 = vector.load %arg55[%c0_421, %c128_422] : memref<32x768xf32, #tpu.memory_space<vmem>>, vector<32x32xf32>
    tpu.vector_store %arg55[%c0_421, %c128_422], %458 {strides = array<i32>} : memref<32x768xf32, #tpu.memory_space<vmem>>, vector<32x32xf32>,
    %c0_423 = arith.constant 0 : index
    %c129_424 = arith.constant 129 : index
    %460 = vector.load %arg55[%c0_423, %c129_424] : memref<32x768xf32, #tpu.memory_space<vmem>>, vector<32x32xf32>
    %c0_425 = arith.constant 0 : index
    %c132_426 = arith.constant 132 : index
    %461 = vector.load %arg55[%c0_425, %c132_426] : memref<32x768xf32, #tpu.memory_space<vmem>>, vector<32x32xf32>
    %c0_427 = arith.constant 0 : index
    %c133_428 = arith.constant 133 : index
    %462 = vector.load %arg55[%c0_427, %c133_428] : memref<32x768xf32, #tpu.memory_space<vmem>>, vector<32x32xf32>
    %463 = arith.maximumf %458, %460 : vector<32x32xf32>
    %464 = arith.maximumf %461, %462 : vector<32x32xf32>
    %465 = arith.maximumf %463, %464 : vector<32x32xf32>
    %c0_429 = arith.constant 0 : index
    %c0_430 = arith.constant 0 : index
    %466 = vector.load %arg45[%c0_429, %c0_430] : memref<16x4xf32, #tpu.memory_space<vmem>>, vector<16x4xf32>
    %467 = vector.extract_strided_slice %465 {offsets = [0, 0], sizes = [32, 16], strides = [1, 1]} : vector<32x32xf32> to vector<32x16xf32>
    %cst_431 = arith.constant dense<0.000000e+00> : vector<32x4xf32>
    %468 = tpu.matmul %467, %466, %cst_431 {dimension_numbers = #tpu.dot_dimension_numbers<[1], [0], [0], [1], [0, 0, 1, 1], [], []>} : vector<32x16xf32>, vector<16x4xf32>, vector<32x4xf32> -> vector<32x4xf32>
    %c0_432 = arith.constant 0 : index
    %c0_433 = arith.constant 0 : index
    %469 = vector.load %arg56[%c0_432, %c0_433] : memref<288x512xf32, #tpu.memory_space<vmem>>, vector<32x4xf32>
    tpu.vector_store %arg56[%c0_432, %c0_433], %468 {strides = array<i32>} : memref<288x512xf32, #tpu.memory_space<vmem>>, vector<32x4xf32>,
    %470 = vector.extract_strided_slice %465 {offsets = [0, 16], sizes = [32, 16], strides = [1, 1]} : vector<32x32xf32> to vector<32x16xf32>
    %cst_434 = arith.constant dense<0.000000e+00> : vector<32x4xf32>
    %471 = tpu.matmul %470, %466, %cst_434 {dimension_numbers = #tpu.dot_dimension_numbers<[1], [0], [0], [1], [0, 0, 1, 1], [], []>} : vector<32x16xf32>, vector<16x4xf32>, vector<32x4xf32> -> vector<32x4xf32>
    %c0_435 = arith.constant 0 : index
    %c4_436 = arith.constant 4 : index
    %472 = vector.load %arg56[%c0_435, %c4_436] : memref<288x512xf32, #tpu.memory_space<vmem>>, vector<32x4xf32>
    tpu.vector_store %arg56[%c0_435, %c4_436], %471 {strides = array<i32>} : memref<288x512xf32, #tpu.memory_space<vmem>>, vector<32x4xf32>,
    %c0_437 = arith.constant 0 : index
    %c0_438 = arith.constant 0 : index
    %473 = vector.load %arg56[%c0_437, %c0_438] : memref<288x512xf32, #tpu.memory_space<vmem>>, vector<32x8xf32>
    %c0_439 = arith.constant 0 : index
    %c0_440 = arith.constant 0 : index
    %474 = vector.load %arg51[%c0_439, %c0_440] : memref<32x8xf32, #tpu.memory_space<vmem>>, vector<32x8xf32>
    tpu.vector_store %arg51[%c0_439, %c0_440], %473 {strides = array<i32>} : memref<32x8xf32, #tpu.memory_space<vmem>>, vector<32x8xf32>,
    %c0_441 = arith.constant 0 : index
    %c128_442 = arith.constant 128 : index
    %475 = vector.load %arg55[%c0_441, %c128_442] : memref<32x768xf32, #tpu.memory_space<vmem>>, vector<32x8xf32>
    tpu.vector_store %arg55[%c0_441, %c128_442], %473 {strides = array<i32>} : memref<32x768xf32, #tpu.memory_space<vmem>>, vector<32x8xf32>,
    %c0_443 = arith.constant 0 : index
    %c125_444 = arith.constant 125 : index
    %476 = vector.load %arg55[%c0_443, %c125_444] : memref<32x768xf32, #tpu.memory_space<vmem>>, vector<32x8xf32>
    %c0_445 = arith.constant 0 : index
    %c0_446 = arith.constant 0 : index
    %477 = vector.load %arg42[%c0_445, %c0_446] : memref<8x8xf32, #tpu.memory_space<vmem>>, vector<1x8xf32>
    %478 = vector.broadcast %477 : vector<1x8xf32> to vector<32x8xf32>
    %479 = arith.mulf %476, %478 : vector<32x8xf32>
    %c0_447 = arith.constant 0 : index
    %c0_448 = arith.constant 0 : index
    %480 = vector.load %arg56[%c0_447, %c0_448] : memref<288x512xf32, #tpu.memory_space<vmem>>, vector<32x8xf32>
    tpu.vector_store %arg56[%c0_447, %c0_448], %479 {strides = array<i32>} : memref<288x512xf32, #tpu.memory_space<vmem>>, vector<32x8xf32>,
    %c0_449 = arith.constant 0 : index
    %c126 = arith.constant 126 : index
    %481 = vector.load %arg55[%c0_449, %c126] : memref<32x768xf32, #tpu.memory_space<vmem>>, vector<32x8xf32>
    %c1_450 = arith.constant 1 : index
    %c0_451 = arith.constant 0 : index
    %482 = vector.load %arg42[%c1_450, %c0_451] : memref<8x8xf32, #tpu.memory_space<vmem>>, vector<1x8xf32>
    %483 = vector.broadcast %482 : vector<1x8xf32> to vector<32x8xf32>
    %484 = arith.mulf %481, %483 : vector<32x8xf32>
    %c32_452 = arith.constant 32 : index
    %c0_453 = arith.constant 0 : index
    %485 = vector.load %arg56[%c32_452, %c0_453] : memref<288x512xf32, #tpu.memory_space<vmem>>, vector<32x8xf32>
    tpu.vector_store %arg56[%c32_452, %c0_453], %484 {strides = array<i32>} : memref<288x512xf32, #tpu.memory_space<vmem>>, vector<32x8xf32>,
    %c0_454 = arith.constant 0 : index
    %c127_455 = arith.constant 127 : index
    %486 = vector.load %arg55[%c0_454, %c127_455] : memref<32x768xf32, #tpu.memory_space<vmem>>, vector<32x8xf32>
    %c2_456 = arith.constant 2 : index
    %c0_457 = arith.constant 0 : index
    %487 = vector.load %arg42[%c2_456, %c0_457] : memref<8x8xf32, #tpu.memory_space<vmem>>, vector<1x8xf32>
    %488 = vector.broadcast %487 : vector<1x8xf32> to vector<32x8xf32>
    %489 = arith.mulf %486, %488 : vector<32x8xf32>
    %c64_458 = arith.constant 64 : index
    %c0_459 = arith.constant 0 : index
    %490 = vector.load %arg56[%c64_458, %c0_459] : memref<288x512xf32, #tpu.memory_space<vmem>>, vector<32x8xf32>
    tpu.vector_store %arg56[%c64_458, %c0_459], %489 {strides = array<i32>} : memref<288x512xf32, #tpu.memory_space<vmem>>, vector<32x8xf32>,
    %c0_460 = arith.constant 0 : index
    %c127_461 = arith.constant 127 : index
    %491 = vector.load %arg55[%c0_460, %c127_461] : memref<32x768xf32, #tpu.memory_space<vmem>>, vector<32x8xf32>
    %c3_462 = arith.constant 3 : index
    %c0_463 = arith.constant 0 : index
    %492 = vector.load %arg42[%c3_462, %c0_463] : memref<8x8xf32, #tpu.memory_space<vmem>>, vector<1x8xf32>
    %493 = vector.broadcast %492 : vector<1x8xf32> to vector<32x8xf32>
    %494 = arith.mulf %491, %493 : vector<32x8xf32>
    %c96_464 = arith.constant 96 : index
    %c0_465 = arith.constant 0 : index
    %495 = vector.load %arg56[%c96_464, %c0_465] : memref<288x512xf32, #tpu.memory_space<vmem>>, vector<32x8xf32>
    tpu.vector_store %arg56[%c96_464, %c0_465], %494 {strides = array<i32>} : memref<288x512xf32, #tpu.memory_space<vmem>>, vector<32x8xf32>,
    %c0_466 = arith.constant 0 : index
    %c128_467 = arith.constant 128 : index
    %496 = vector.load %arg55[%c0_466, %c128_467] : memref<32x768xf32, #tpu.memory_space<vmem>>, vector<32x8xf32>
    %c128_468 = arith.constant 128 : index
    %c0_469 = arith.constant 0 : index
    %497 = vector.load %arg56[%c128_468, %c0_469] : memref<288x512xf32, #tpu.memory_space<vmem>>, vector<32x8xf32>
    tpu.vector_store %arg56[%c128_468, %c0_469], %496 {strides = array<i32>} : memref<288x512xf32, #tpu.memory_space<vmem>>, vector<32x8xf32>,
    %c0_470 = arith.constant 0 : index
    %c129_471 = arith.constant 129 : index
    %498 = vector.load %arg55[%c0_470, %c129_471] : memref<32x768xf32, #tpu.memory_space<vmem>>, vector<32x8xf32>
    %c4_472 = arith.constant 4 : index
    %c0_473 = arith.constant 0 : index
    %499 = vector.load %arg42[%c4_472, %c0_473] : memref<8x8xf32, #tpu.memory_space<vmem>>, vector<1x8xf32>
    %500 = vector.broadcast %499 : vector<1x8xf32> to vector<32x8xf32>
    %501 = arith.mulf %498, %500 : vector<32x8xf32>
    %c160_474 = arith.constant 160 : index
    %c0_475 = arith.constant 0 : index
    %502 = vector.load %arg56[%c160_474, %c0_475] : memref<288x512xf32, #tpu.memory_space<vmem>>, vector<32x8xf32>
    tpu.vector_store %arg56[%c160_474, %c0_475], %501 {strides = array<i32>} : memref<288x512xf32, #tpu.memory_space<vmem>>, vector<32x8xf32>,
    %c0_476 = arith.constant 0 : index
    %c129_477 = arith.constant 129 : index
    %503 = vector.load %arg55[%c0_476, %c129_477] : memref<32x768xf32, #tpu.memory_space<vmem>>, vector<32x8xf32>
    %c5_478 = arith.constant 5 : index
    %c0_479 = arith.constant 0 : index
    %504 = vector.load %arg42[%c5_478, %c0_479] : memref<8x8xf32, #tpu.memory_space<vmem>>, vector<1x8xf32>
    %505 = vector.broadcast %504 : vector<1x8xf32> to vector<32x8xf32>
    %506 = arith.mulf %503, %505 : vector<32x8xf32>
    %c192_480 = arith.constant 192 : index
    %c0_481 = arith.constant 0 : index
    %507 = vector.load %arg56[%c192_480, %c0_481] : memref<288x512xf32, #tpu.memory_space<vmem>>, vector<32x8xf32>
    tpu.vector_store %arg56[%c192_480, %c0_481], %506 {strides = array<i32>} : memref<288x512xf32, #tpu.memory_space<vmem>>, vector<32x8xf32>,
    %c0_482 = arith.constant 0 : index
    %c130 = arith.constant 130 : index
    %508 = vector.load %arg55[%c0_482, %c130] : memref<32x768xf32, #tpu.memory_space<vmem>>, vector<32x8xf32>
    %c6_483 = arith.constant 6 : index
    %c0_484 = arith.constant 0 : index
    %509 = vector.load %arg42[%c6_483, %c0_484] : memref<8x8xf32, #tpu.memory_space<vmem>>, vector<1x8xf32>
    %510 = vector.broadcast %509 : vector<1x8xf32> to vector<32x8xf32>
    %511 = arith.mulf %508, %510 : vector<32x8xf32>
    %c224_485 = arith.constant 224 : index
    %c0_486 = arith.constant 0 : index
    %512 = vector.load %arg56[%c224_485, %c0_486] : memref<288x512xf32, #tpu.memory_space<vmem>>, vector<32x8xf32>
    tpu.vector_store %arg56[%c224_485, %c0_486], %511 {strides = array<i32>} : memref<288x512xf32, #tpu.memory_space<vmem>>, vector<32x8xf32>,
    %c0_487 = arith.constant 0 : index
    %c131_488 = arith.constant 131 : index
    %513 = vector.load %arg55[%c0_487, %c131_488] : memref<32x768xf32, #tpu.memory_space<vmem>>, vector<32x8xf32>
    %c7_489 = arith.constant 7 : index
    %c0_490 = arith.constant 0 : index
    %514 = vector.load %arg42[%c7_489, %c0_490] : memref<8x8xf32, #tpu.memory_space<vmem>>, vector<1x8xf32>
    %515 = vector.broadcast %514 : vector<1x8xf32> to vector<32x8xf32>
    %516 = arith.mulf %513, %515 : vector<32x8xf32>
    %c256_491 = arith.constant 256 : index
    %c0_492 = arith.constant 0 : index
    %517 = vector.load %arg56[%c256_491, %c0_492] : memref<288x512xf32, #tpu.memory_space<vmem>>, vector<32x8xf32>
    tpu.vector_store %arg56[%c256_491, %c0_492], %516 {strides = array<i32>} : memref<288x512xf32, #tpu.memory_space<vmem>>, vector<32x8xf32>,
    %c0_493 = arith.constant 0 : index
    %c0_494 = arith.constant 0 : index
    %518 = vector.load %arg19[%c0_493, %c0_494] : memref<16x288xf32, #tpu.memory_space<vmem>>, vector<16x288xf32>
    %c0_495 = arith.constant 0 : index
    %c0_496 = arith.constant 0 : index
    %519 = vector.load %arg56[%c0_495, %c0_496] : memref<288x512xf32, #tpu.memory_space<vmem>>, vector<288x8xf32>
    %cst_497 = arith.constant dense<0.000000e+00> : vector<16x8xf32>
    %520 = tpu.matmul %518, %519, %cst_497 {dimension_numbers = #tpu.dot_dimension_numbers<[1], [0], [0], [1], [0, 0, 1, 1], [], []>} : vector<16x288xf32>, vector<288x8xf32>, vector<16x8xf32> -> vector<16x8xf32>
    %cst_498 = arith.constant dense<0.000000e+00> : vector<16xf32>
    %521 = vector.multi_reduction <add>, %520, %cst_498 [1] : vector<16x8xf32> to vector<16xf32>
    %522 = vector.shape_cast %521 : vector<16xf32> to vector<16x1xf32>
    %cst_499 = arith.constant 1.250000e-01 : f32
    %523 = vector.broadcast %cst_499 : f32 to vector<16x1xf32>
    %524 = arith.mulf %522, %523 : vector<16x1xf32>
    %525 = vector.broadcast %524 : vector<16x1xf32> to vector<16x8xf32>
    %526 = arith.subf %520, %525 : vector<16x8xf32>
    %527 = arith.mulf %526, %526 : vector<16x8xf32>
    %cst_500 = arith.constant dense<0.000000e+00> : vector<16xf32>
    %528 = vector.multi_reduction <add>, %527, %cst_500 [1] : vector<16x8xf32> to vector<16xf32>
    %529 = vector.shape_cast %528 : vector<16xf32> to vector<16x1xf32>
    %cst_501 = arith.constant 1.250000e-01 : f32
    %530 = vector.broadcast %cst_501 : f32 to vector<16x1xf32>
    %531 = arith.mulf %529, %530 : vector<16x1xf32>
    %c0_502 = arith.constant 0 : index
    %c0_503 = arith.constant 0 : index
    %532 = vector.load %arg20[%c0_502, %c0_503] : memref<16x1xf32, #tpu.memory_space<vmem>>, vector<16x1xf32>
    %cst_504 = arith.constant 9.99999974E-6 : f32
    %533 = vector.broadcast %cst_504 : f32 to vector<16x1xf32>
    %534 = arith.addf %531, %533 : vector<16x1xf32>
    %535 = math.rsqrt %534 : vector<16x1xf32>
    %536 = arith.mulf %532, %535 : vector<16x1xf32>
    %537 = vector.broadcast %536 : vector<16x1xf32> to vector<16x8xf32>
    %538 = arith.mulf %526, %537 : vector<16x8xf32>
    %c0_505 = arith.constant 0 : index
    %c0_506 = arith.constant 0 : index
    %539 = vector.load %arg21[%c0_505, %c0_506] : memref<16x1xf32, #tpu.memory_space<vmem>>, vector<16x1xf32>
    %540 = vector.broadcast %539 : vector<16x1xf32> to vector<16x8xf32>
    %541 = arith.addf %538, %540 : vector<16x8xf32>
    %cst_507 = arith.constant 0.000000e+00 : f32
    %542 = vector.broadcast %cst_507 : f32 to vector<16x8xf32>
    %543 = arith.maximumf %541, %542 : vector<16x8xf32>
    %c0_508 = arith.constant 0 : index
    %c128_509 = arith.constant 128 : index
    %544 = vector.load %arg55[%c0_508, %c128_509] : memref<32x768xf32, #tpu.memory_space<vmem>>, vector<16x8xf32>
    tpu.vector_store %arg55[%c0_508, %c128_509], %543 {strides = array<i32>} : memref<32x768xf32, #tpu.memory_space<vmem>>, vector<16x8xf32>,
    %c0_510 = arith.constant 0 : index
    %c125_511 = arith.constant 125 : index
    %545 = vector.load %arg55[%c0_510, %c125_511] : memref<32x768xf32, #tpu.memory_space<vmem>>, vector<16x8xf32>
    %c0_512 = arith.constant 0 : index
    %c0_513 = arith.constant 0 : index
    %546 = vector.load %arg42[%c0_512, %c0_513] : memref<8x8xf32, #tpu.memory_space<vmem>>, vector<1x8xf32>
    %547 = vector.broadcast %546 : vector<1x8xf32> to vector<16x8xf32>
    %548 = arith.mulf %545, %547 : vector<16x8xf32>
    %c0_514 = arith.constant 0 : index
    %c0_515 = arith.constant 0 : index
    %549 = vector.load %arg56[%c0_514, %c0_515] : memref<288x512xf32, #tpu.memory_space<vmem>>, vector<16x8xf32>
    tpu.vector_store %arg56[%c0_514, %c0_515], %548 {strides = array<i32>} : memref<288x512xf32, #tpu.memory_space<vmem>>, vector<16x8xf32>,
    %c0_516 = arith.constant 0 : index
    %c126_517 = arith.constant 126 : index
    %550 = vector.load %arg55[%c0_516, %c126_517] : memref<32x768xf32, #tpu.memory_space<vmem>>, vector<16x8xf32>
    %c1_518 = arith.constant 1 : index
    %c0_519 = arith.constant 0 : index
    %551 = vector.load %arg42[%c1_518, %c0_519] : memref<8x8xf32, #tpu.memory_space<vmem>>, vector<1x8xf32>
    %552 = vector.broadcast %551 : vector<1x8xf32> to vector<16x8xf32>
    %553 = arith.mulf %550, %552 : vector<16x8xf32>
    %c16_520 = arith.constant 16 : index
    %c0_521 = arith.constant 0 : index
    %554 = vector.load %arg56[%c16_520, %c0_521] : memref<288x512xf32, #tpu.memory_space<vmem>>, vector<16x8xf32>
    tpu.vector_store %arg56[%c16_520, %c0_521], %553 {strides = array<i32>} : memref<288x512xf32, #tpu.memory_space<vmem>>, vector<16x8xf32>,
    %c0_522 = arith.constant 0 : index
    %c127_523 = arith.constant 127 : index
    %555 = vector.load %arg55[%c0_522, %c127_523] : memref<32x768xf32, #tpu.memory_space<vmem>>, vector<16x8xf32>
    %c2_524 = arith.constant 2 : index
    %c0_525 = arith.constant 0 : index
    %556 = vector.load %arg42[%c2_524, %c0_525] : memref<8x8xf32, #tpu.memory_space<vmem>>, vector<1x8xf32>
    %557 = vector.broadcast %556 : vector<1x8xf32> to vector<16x8xf32>
    %558 = arith.mulf %555, %557 : vector<16x8xf32>
    %c32_526 = arith.constant 32 : index
    %c0_527 = arith.constant 0 : index
    %559 = vector.load %arg56[%c32_526, %c0_527] : memref<288x512xf32, #tpu.memory_space<vmem>>, vector<16x8xf32>
    tpu.vector_store %arg56[%c32_526, %c0_527], %558 {strides = array<i32>} : memref<288x512xf32, #tpu.memory_space<vmem>>, vector<16x8xf32>,
    %c0_528 = arith.constant 0 : index
    %c127_529 = arith.constant 127 : index
    %560 = vector.load %arg55[%c0_528, %c127_529] : memref<32x768xf32, #tpu.memory_space<vmem>>, vector<16x8xf32>
    %c3_530 = arith.constant 3 : index
    %c0_531 = arith.constant 0 : index
    %561 = vector.load %arg42[%c3_530, %c0_531] : memref<8x8xf32, #tpu.memory_space<vmem>>, vector<1x8xf32>
    %562 = vector.broadcast %561 : vector<1x8xf32> to vector<16x8xf32>
    %563 = arith.mulf %560, %562 : vector<16x8xf32>
    %c48_532 = arith.constant 48 : index
    %c0_533 = arith.constant 0 : index
    %564 = vector.load %arg56[%c48_532, %c0_533] : memref<288x512xf32, #tpu.memory_space<vmem>>, vector<16x8xf32>
    tpu.vector_store %arg56[%c48_532, %c0_533], %563 {strides = array<i32>} : memref<288x512xf32, #tpu.memory_space<vmem>>, vector<16x8xf32>,
    %c0_534 = arith.constant 0 : index
    %c128_535 = arith.constant 128 : index
    %565 = vector.load %arg55[%c0_534, %c128_535] : memref<32x768xf32, #tpu.memory_space<vmem>>, vector<16x8xf32>
    %c64_536 = arith.constant 64 : index
    %c0_537 = arith.constant 0 : index
    %566 = vector.load %arg56[%c64_536, %c0_537] : memref<288x512xf32, #tpu.memory_space<vmem>>, vector<16x8xf32>
    tpu.vector_store %arg56[%c64_536, %c0_537], %565 {strides = array<i32>} : memref<288x512xf32, #tpu.memory_space<vmem>>, vector<16x8xf32>,
    %c0_538 = arith.constant 0 : index
    %c129_539 = arith.constant 129 : index
    %567 = vector.load %arg55[%c0_538, %c129_539] : memref<32x768xf32, #tpu.memory_space<vmem>>, vector<16x8xf32>
    %c4_540 = arith.constant 4 : index
    %c0_541 = arith.constant 0 : index
    %568 = vector.load %arg42[%c4_540, %c0_541] : memref<8x8xf32, #tpu.memory_space<vmem>>, vector<1x8xf32>
    %569 = vector.broadcast %568 : vector<1x8xf32> to vector<16x8xf32>
    %570 = arith.mulf %567, %569 : vector<16x8xf32>
    %c80_542 = arith.constant 80 : index
    %c0_543 = arith.constant 0 : index
    %571 = vector.load %arg56[%c80_542, %c0_543] : memref<288x512xf32, #tpu.memory_space<vmem>>, vector<16x8xf32>
    tpu.vector_store %arg56[%c80_542, %c0_543], %570 {strides = array<i32>} : memref<288x512xf32, #tpu.memory_space<vmem>>, vector<16x8xf32>,
    %c0_544 = arith.constant 0 : index
    %c129_545 = arith.constant 129 : index
    %572 = vector.load %arg55[%c0_544, %c129_545] : memref<32x768xf32, #tpu.memory_space<vmem>>, vector<16x8xf32>
    %c5_546 = arith.constant 5 : index
    %c0_547 = arith.constant 0 : index
    %573 = vector.load %arg42[%c5_546, %c0_547] : memref<8x8xf32, #tpu.memory_space<vmem>>, vector<1x8xf32>
    %574 = vector.broadcast %573 : vector<1x8xf32> to vector<16x8xf32>
    %575 = arith.mulf %572, %574 : vector<16x8xf32>
    %c96_548 = arith.constant 96 : index
    %c0_549 = arith.constant 0 : index
    %576 = vector.load %arg56[%c96_548, %c0_549] : memref<288x512xf32, #tpu.memory_space<vmem>>, vector<16x8xf32>
    tpu.vector_store %arg56[%c96_548, %c0_549], %575 {strides = array<i32>} : memref<288x512xf32, #tpu.memory_space<vmem>>, vector<16x8xf32>,
    %c0_550 = arith.constant 0 : index
    %c130_551 = arith.constant 130 : index
    %577 = vector.load %arg55[%c0_550, %c130_551] : memref<32x768xf32, #tpu.memory_space<vmem>>, vector<16x8xf32>
    %c6_552 = arith.constant 6 : index
    %c0_553 = arith.constant 0 : index
    %578 = vector.load %arg42[%c6_552, %c0_553] : memref<8x8xf32, #tpu.memory_space<vmem>>, vector<1x8xf32>
    %579 = vector.broadcast %578 : vector<1x8xf32> to vector<16x8xf32>
    %580 = arith.mulf %577, %579 : vector<16x8xf32>
    %c112_554 = arith.constant 112 : index
    %c0_555 = arith.constant 0 : index
    %581 = vector.load %arg56[%c112_554, %c0_555] : memref<288x512xf32, #tpu.memory_space<vmem>>, vector<16x8xf32>
    tpu.vector_store %arg56[%c112_554, %c0_555], %580 {strides = array<i32>} : memref<288x512xf32, #tpu.memory_space<vmem>>, vector<16x8xf32>,
    %c0_556 = arith.constant 0 : index
    %c131_557 = arith.constant 131 : index
    %582 = vector.load %arg55[%c0_556, %c131_557] : memref<32x768xf32, #tpu.memory_space<vmem>>, vector<16x8xf32>
    %c7_558 = arith.constant 7 : index
    %c0_559 = arith.constant 0 : index
    %583 = vector.load %arg42[%c7_558, %c0_559] : memref<8x8xf32, #tpu.memory_space<vmem>>, vector<1x8xf32>
    %584 = vector.broadcast %583 : vector<1x8xf32> to vector<16x8xf32>
    %585 = arith.mulf %582, %584 : vector<16x8xf32>
    %c128_560 = arith.constant 128 : index
    %c0_561 = arith.constant 0 : index
    %586 = vector.load %arg56[%c128_560, %c0_561] : memref<288x512xf32, #tpu.memory_space<vmem>>, vector<16x8xf32>
    tpu.vector_store %arg56[%c128_560, %c0_561], %585 {strides = array<i32>} : memref<288x512xf32, #tpu.memory_space<vmem>>, vector<16x8xf32>,
    %c0_562 = arith.constant 0 : index
    %c0_563 = arith.constant 0 : index
    %587 = vector.load %arg22[%c0_562, %c0_563] : memref<16x144xf32, #tpu.memory_space<vmem>>, vector<16x144xf32>
    %c0_564 = arith.constant 0 : index
    %c0_565 = arith.constant 0 : index
    %588 = vector.load %arg56[%c0_564, %c0_565] : memref<288x512xf32, #tpu.memory_space<vmem>>, vector<144x8xf32>
    %cst_566 = arith.constant dense<0.000000e+00> : vector<16x8xf32>
    %589 = tpu.matmul %587, %588, %cst_566 {dimension_numbers = #tpu.dot_dimension_numbers<[1], [0], [0], [1], [0, 0, 1, 1], [], []>} : vector<16x144xf32>, vector<144x8xf32>, vector<16x8xf32> -> vector<16x8xf32>
    %cst_567 = arith.constant dense<0.000000e+00> : vector<16xf32>
    %590 = vector.multi_reduction <add>, %589, %cst_567 [1] : vector<16x8xf32> to vector<16xf32>
    %591 = vector.shape_cast %590 : vector<16xf32> to vector<16x1xf32>
    %cst_568 = arith.constant 1.250000e-01 : f32
    %592 = vector.broadcast %cst_568 : f32 to vector<16x1xf32>
    %593 = arith.mulf %591, %592 : vector<16x1xf32>
    %594 = vector.broadcast %593 : vector<16x1xf32> to vector<16x8xf32>
    %595 = arith.subf %589, %594 : vector<16x8xf32>
    %596 = arith.mulf %595, %595 : vector<16x8xf32>
    %cst_569 = arith.constant dense<0.000000e+00> : vector<16xf32>
    %597 = vector.multi_reduction <add>, %596, %cst_569 [1] : vector<16x8xf32> to vector<16xf32>
    %598 = vector.shape_cast %597 : vector<16xf32> to vector<16x1xf32>
    %cst_570 = arith.constant 1.250000e-01 : f32
    %599 = vector.broadcast %cst_570 : f32 to vector<16x1xf32>
    %600 = arith.mulf %598, %599 : vector<16x1xf32>
    %c0_571 = arith.constant 0 : index
    %c0_572 = arith.constant 0 : index
    %601 = vector.load %arg23[%c0_571, %c0_572] : memref<16x1xf32, #tpu.memory_space<vmem>>, vector<16x1xf32>
    %cst_573 = arith.constant 9.99999974E-6 : f32
    %602 = vector.broadcast %cst_573 : f32 to vector<16x1xf32>
    %603 = arith.addf %600, %602 : vector<16x1xf32>
    %604 = math.rsqrt %603 : vector<16x1xf32>
    %605 = arith.mulf %601, %604 : vector<16x1xf32>
    %606 = vector.broadcast %605 : vector<16x1xf32> to vector<16x8xf32>
    %607 = arith.mulf %595, %606 : vector<16x8xf32>
    %c0_574 = arith.constant 0 : index
    %c0_575 = arith.constant 0 : index
    %608 = vector.load %arg24[%c0_574, %c0_575] : memref<16x1xf32, #tpu.memory_space<vmem>>, vector<16x1xf32>
    %609 = vector.broadcast %608 : vector<16x1xf32> to vector<16x8xf32>
    %610 = arith.addf %607, %609 : vector<16x8xf32>
    %cst_576 = arith.constant 0.000000e+00 : f32
    %611 = vector.broadcast %cst_576 : f32 to vector<16x8xf32>
    %612 = arith.maximumf %610, %611 : vector<16x8xf32>
    %c0_577 = arith.constant 0 : index
    %c0_578 = arith.constant 0 : index
    %613 = vector.load %arg46[%c0_577, %c0_578] : memref<4x16xf32, #tpu.memory_space<vmem>>, vector<4x16xf32>
    %614 = vector.extract_strided_slice %612 {offsets = [0, 0], sizes = [16, 4], strides = [1, 1]} : vector<16x8xf32> to vector<16x4xf32>
    %cst_579 = arith.constant dense<0.000000e+00> : vector<16x16xf32>
    %615 = tpu.matmul %614, %613, %cst_579 {dimension_numbers = #tpu.dot_dimension_numbers<[1], [0], [0], [1], [0, 0, 1, 1], [], []>} : vector<16x4xf32>, vector<4x16xf32>, vector<16x16xf32> -> vector<16x16xf32>
    %c0_580 = arith.constant 0 : index
    %c0_581 = arith.constant 0 : index
    %616 = vector.load %arg56[%c0_580, %c0_581] : memref<288x512xf32, #tpu.memory_space<vmem>>, vector<16x16xf32>
    tpu.vector_store %arg56[%c0_580, %c0_581], %615 {strides = array<i32>} : memref<288x512xf32, #tpu.memory_space<vmem>>, vector<16x16xf32>,
    %617 = vector.extract_strided_slice %612 {offsets = [0, 4], sizes = [16, 4], strides = [1, 1]} : vector<16x8xf32> to vector<16x4xf32>
    %cst_582 = arith.constant dense<0.000000e+00> : vector<16x16xf32>
    %618 = tpu.matmul %617, %613, %cst_582 {dimension_numbers = #tpu.dot_dimension_numbers<[1], [0], [0], [1], [0, 0, 1, 1], [], []>} : vector<16x4xf32>, vector<4x16xf32>, vector<16x16xf32> -> vector<16x16xf32>
    %c0_583 = arith.constant 0 : index
    %c16_584 = arith.constant 16 : index
    %619 = vector.load %arg56[%c0_583, %c16_584] : memref<288x512xf32, #tpu.memory_space<vmem>>, vector<16x16xf32>
    tpu.vector_store %arg56[%c0_583, %c16_584], %618 {strides = array<i32>} : memref<288x512xf32, #tpu.memory_space<vmem>>, vector<16x16xf32>,
    %c0_585 = arith.constant 0 : index
    %c0_586 = arith.constant 0 : index
    %620 = vector.load %arg56[%c0_585, %c0_586] : memref<288x512xf32, #tpu.memory_space<vmem>>, vector<16x32xf32>
    %c0_587 = arith.constant 0 : index
    %c0_588 = arith.constant 0 : index
    %621 = vector.load %arg52[%c0_587, %c0_588] : memref<16x32xf32, #tpu.memory_space<vmem>>, vector<16x32xf32>
    tpu.vector_store %arg52[%c0_587, %c0_588], %620 {strides = array<i32>} : memref<16x32xf32, #tpu.memory_space<vmem>>, vector<16x32xf32>,
    %c0_589 = arith.constant 0 : index
    %c128_590 = arith.constant 128 : index
    %622 = vector.load %arg55[%c0_589, %c128_590] : memref<32x768xf32, #tpu.memory_space<vmem>>, vector<16x32xf32>
    tpu.vector_store %arg55[%c0_589, %c128_590], %620 {strides = array<i32>} : memref<32x768xf32, #tpu.memory_space<vmem>>, vector<16x32xf32>,
    %c0_591 = arith.constant 0 : index
    %c123_592 = arith.constant 123 : index
    %623 = vector.load %arg55[%c0_591, %c123_592] : memref<32x768xf32, #tpu.memory_space<vmem>>, vector<16x32xf32>
    %c0_593 = arith.constant 0 : index
    %c0_594 = arith.constant 0 : index
    %624 = vector.load %arg41[%c0_593, %c0_594] : memref<8x32xf32, #tpu.memory_space<vmem>>, vector<1x32xf32>
    %625 = vector.broadcast %624 : vector<1x32xf32> to vector<16x32xf32>
    %626 = arith.mulf %623, %625 : vector<16x32xf32>
    %c0_595 = arith.constant 0 : index
    %c0_596 = arith.constant 0 : index
    %627 = vector.load %arg56[%c0_595, %c0_596] : memref<288x512xf32, #tpu.memory_space<vmem>>, vector<16x32xf32>
    tpu.vector_store %arg56[%c0_595, %c0_596], %626 {strides = array<i32>} : memref<288x512xf32, #tpu.memory_space<vmem>>, vector<16x32xf32>,
    %c0_597 = arith.constant 0 : index
    %c124_598 = arith.constant 124 : index
    %628 = vector.load %arg55[%c0_597, %c124_598] : memref<32x768xf32, #tpu.memory_space<vmem>>, vector<16x32xf32>
    %c1_599 = arith.constant 1 : index
    %c0_600 = arith.constant 0 : index
    %629 = vector.load %arg41[%c1_599, %c0_600] : memref<8x32xf32, #tpu.memory_space<vmem>>, vector<1x32xf32>
    %630 = vector.broadcast %629 : vector<1x32xf32> to vector<16x32xf32>
    %631 = arith.mulf %628, %630 : vector<16x32xf32>
    %c16_601 = arith.constant 16 : index
    %c0_602 = arith.constant 0 : index
    %632 = vector.load %arg56[%c16_601, %c0_602] : memref<288x512xf32, #tpu.memory_space<vmem>>, vector<16x32xf32>
    tpu.vector_store %arg56[%c16_601, %c0_602], %631 {strides = array<i32>} : memref<288x512xf32, #tpu.memory_space<vmem>>, vector<16x32xf32>,
    %c0_603 = arith.constant 0 : index
    %c125_604 = arith.constant 125 : index
    %633 = vector.load %arg55[%c0_603, %c125_604] : memref<32x768xf32, #tpu.memory_space<vmem>>, vector<16x32xf32>
    %c2_605 = arith.constant 2 : index
    %c0_606 = arith.constant 0 : index
    %634 = vector.load %arg41[%c2_605, %c0_606] : memref<8x32xf32, #tpu.memory_space<vmem>>, vector<1x32xf32>
    %635 = vector.broadcast %634 : vector<1x32xf32> to vector<16x32xf32>
    %636 = arith.mulf %633, %635 : vector<16x32xf32>
    %c32_607 = arith.constant 32 : index
    %c0_608 = arith.constant 0 : index
    %637 = vector.load %arg56[%c32_607, %c0_608] : memref<288x512xf32, #tpu.memory_space<vmem>>, vector<16x32xf32>
    tpu.vector_store %arg56[%c32_607, %c0_608], %636 {strides = array<i32>} : memref<288x512xf32, #tpu.memory_space<vmem>>, vector<16x32xf32>,
    %c0_609 = arith.constant 0 : index
    %c127_610 = arith.constant 127 : index
    %638 = vector.load %arg55[%c0_609, %c127_610] : memref<32x768xf32, #tpu.memory_space<vmem>>, vector<16x32xf32>
    %c3_611 = arith.constant 3 : index
    %c0_612 = arith.constant 0 : index
    %639 = vector.load %arg41[%c3_611, %c0_612] : memref<8x32xf32, #tpu.memory_space<vmem>>, vector<1x32xf32>
    %640 = vector.broadcast %639 : vector<1x32xf32> to vector<16x32xf32>
    %641 = arith.mulf %638, %640 : vector<16x32xf32>
    %c48_613 = arith.constant 48 : index
    %c0_614 = arith.constant 0 : index
    %642 = vector.load %arg56[%c48_613, %c0_614] : memref<288x512xf32, #tpu.memory_space<vmem>>, vector<16x32xf32>
    tpu.vector_store %arg56[%c48_613, %c0_614], %641 {strides = array<i32>} : memref<288x512xf32, #tpu.memory_space<vmem>>, vector<16x32xf32>,
    %c0_615 = arith.constant 0 : index
    %c128_616 = arith.constant 128 : index
    %643 = vector.load %arg55[%c0_615, %c128_616] : memref<32x768xf32, #tpu.memory_space<vmem>>, vector<16x32xf32>
    %c64_617 = arith.constant 64 : index
    %c0_618 = arith.constant 0 : index
    %644 = vector.load %arg56[%c64_617, %c0_618] : memref<288x512xf32, #tpu.memory_space<vmem>>, vector<16x32xf32>
    tpu.vector_store %arg56[%c64_617, %c0_618], %643 {strides = array<i32>} : memref<288x512xf32, #tpu.memory_space<vmem>>, vector<16x32xf32>,
    %c0_619 = arith.constant 0 : index
    %c129_620 = arith.constant 129 : index
    %645 = vector.load %arg55[%c0_619, %c129_620] : memref<32x768xf32, #tpu.memory_space<vmem>>, vector<16x32xf32>
    %c4_621 = arith.constant 4 : index
    %c0_622 = arith.constant 0 : index
    %646 = vector.load %arg41[%c4_621, %c0_622] : memref<8x32xf32, #tpu.memory_space<vmem>>, vector<1x32xf32>
    %647 = vector.broadcast %646 : vector<1x32xf32> to vector<16x32xf32>
    %648 = arith.mulf %645, %647 : vector<16x32xf32>
    %c80_623 = arith.constant 80 : index
    %c0_624 = arith.constant 0 : index
    %649 = vector.load %arg56[%c80_623, %c0_624] : memref<288x512xf32, #tpu.memory_space<vmem>>, vector<16x32xf32>
    tpu.vector_store %arg56[%c80_623, %c0_624], %648 {strides = array<i32>} : memref<288x512xf32, #tpu.memory_space<vmem>>, vector<16x32xf32>,
    %c0_625 = arith.constant 0 : index
    %c131_626 = arith.constant 131 : index
    %650 = vector.load %arg55[%c0_625, %c131_626] : memref<32x768xf32, #tpu.memory_space<vmem>>, vector<16x32xf32>
    %c5_627 = arith.constant 5 : index
    %c0_628 = arith.constant 0 : index
    %651 = vector.load %arg41[%c5_627, %c0_628] : memref<8x32xf32, #tpu.memory_space<vmem>>, vector<1x32xf32>
    %652 = vector.broadcast %651 : vector<1x32xf32> to vector<16x32xf32>
    %653 = arith.mulf %650, %652 : vector<16x32xf32>
    %c96_629 = arith.constant 96 : index
    %c0_630 = arith.constant 0 : index
    %654 = vector.load %arg56[%c96_629, %c0_630] : memref<288x512xf32, #tpu.memory_space<vmem>>, vector<16x32xf32>
    tpu.vector_store %arg56[%c96_629, %c0_630], %653 {strides = array<i32>} : memref<288x512xf32, #tpu.memory_space<vmem>>, vector<16x32xf32>,
    %c0_631 = arith.constant 0 : index
    %c132_632 = arith.constant 132 : index
    %655 = vector.load %arg55[%c0_631, %c132_632] : memref<32x768xf32, #tpu.memory_space<vmem>>, vector<16x32xf32>
    %c6_633 = arith.constant 6 : index
    %c0_634 = arith.constant 0 : index
    %656 = vector.load %arg41[%c6_633, %c0_634] : memref<8x32xf32, #tpu.memory_space<vmem>>, vector<1x32xf32>
    %657 = vector.broadcast %656 : vector<1x32xf32> to vector<16x32xf32>
    %658 = arith.mulf %655, %657 : vector<16x32xf32>
    %c112_635 = arith.constant 112 : index
    %c0_636 = arith.constant 0 : index
    %659 = vector.load %arg56[%c112_635, %c0_636] : memref<288x512xf32, #tpu.memory_space<vmem>>, vector<16x32xf32>
    tpu.vector_store %arg56[%c112_635, %c0_636], %658 {strides = array<i32>} : memref<288x512xf32, #tpu.memory_space<vmem>>, vector<16x32xf32>,
    %c0_637 = arith.constant 0 : index
    %c133_638 = arith.constant 133 : index
    %660 = vector.load %arg55[%c0_637, %c133_638] : memref<32x768xf32, #tpu.memory_space<vmem>>, vector<16x32xf32>
    %c7_639 = arith.constant 7 : index
    %c0_640 = arith.constant 0 : index
    %661 = vector.load %arg41[%c7_639, %c0_640] : memref<8x32xf32, #tpu.memory_space<vmem>>, vector<1x32xf32>
    %662 = vector.broadcast %661 : vector<1x32xf32> to vector<16x32xf32>
    %663 = arith.mulf %660, %662 : vector<16x32xf32>
    %c128_641 = arith.constant 128 : index
    %c0_642 = arith.constant 0 : index
    %664 = vector.load %arg56[%c128_641, %c0_642] : memref<288x512xf32, #tpu.memory_space<vmem>>, vector<16x32xf32>
    tpu.vector_store %arg56[%c128_641, %c0_642], %663 {strides = array<i32>} : memref<288x512xf32, #tpu.memory_space<vmem>>, vector<16x32xf32>,
    %c0_643 = arith.constant 0 : index
    %c0_644 = arith.constant 0 : index
    %665 = vector.load %arg25[%c0_643, %c0_644] : memref<8x144xf32, #tpu.memory_space<vmem>>, vector<8x144xf32>
    %c0_645 = arith.constant 0 : index
    %c0_646 = arith.constant 0 : index
    %666 = vector.load %arg56[%c0_645, %c0_646] : memref<288x512xf32, #tpu.memory_space<vmem>>, vector<144x32xf32>
    %cst_647 = arith.constant dense<0.000000e+00> : vector<8x32xf32>
    %667 = tpu.matmul %665, %666, %cst_647 {dimension_numbers = #tpu.dot_dimension_numbers<[1], [0], [0], [1], [0, 0, 1, 1], [], []>} : vector<8x144xf32>, vector<144x32xf32>, vector<8x32xf32> -> vector<8x32xf32>
    %cst_648 = arith.constant dense<0.000000e+00> : vector<8xf32>
    %668 = vector.multi_reduction <add>, %667, %cst_648 [1] : vector<8x32xf32> to vector<8xf32>
    %669 = vector.shape_cast %668 : vector<8xf32> to vector<8x1xf32>
    %cst_649 = arith.constant 3.125000e-02 : f32
    %670 = vector.broadcast %cst_649 : f32 to vector<8x1xf32>
    %671 = arith.mulf %669, %670 : vector<8x1xf32>
    %672 = vector.broadcast %671 : vector<8x1xf32> to vector<8x32xf32>
    %673 = arith.subf %667, %672 : vector<8x32xf32>
    %674 = arith.mulf %673, %673 : vector<8x32xf32>
    %cst_650 = arith.constant dense<0.000000e+00> : vector<8xf32>
    %675 = vector.multi_reduction <add>, %674, %cst_650 [1] : vector<8x32xf32> to vector<8xf32>
    %676 = vector.shape_cast %675 : vector<8xf32> to vector<8x1xf32>
    %cst_651 = arith.constant 3.125000e-02 : f32
    %677 = vector.broadcast %cst_651 : f32 to vector<8x1xf32>
    %678 = arith.mulf %676, %677 : vector<8x1xf32>
    %c0_652 = arith.constant 0 : index
    %c0_653 = arith.constant 0 : index
    %679 = vector.load %arg26[%c0_652, %c0_653] : memref<8x1xf32, #tpu.memory_space<vmem>>, vector<8x1xf32>
    %cst_654 = arith.constant 9.99999974E-6 : f32
    %680 = vector.broadcast %cst_654 : f32 to vector<8x1xf32>
    %681 = arith.addf %678, %680 : vector<8x1xf32>
    %682 = math.rsqrt %681 : vector<8x1xf32>
    %683 = arith.mulf %679, %682 : vector<8x1xf32>
    %684 = vector.broadcast %683 : vector<8x1xf32> to vector<8x32xf32>
    %685 = arith.mulf %673, %684 : vector<8x32xf32>
    %c0_655 = arith.constant 0 : index
    %c0_656 = arith.constant 0 : index
    %686 = vector.load %arg27[%c0_655, %c0_656] : memref<8x1xf32, #tpu.memory_space<vmem>>, vector<8x1xf32>
    %687 = vector.broadcast %686 : vector<8x1xf32> to vector<8x32xf32>
    %688 = arith.addf %685, %687 : vector<8x32xf32>
    %cst_657 = arith.constant 0.000000e+00 : f32
    %689 = vector.broadcast %cst_657 : f32 to vector<8x32xf32>
    %690 = arith.maximumf %688, %689 : vector<8x32xf32>
    %c0_658 = arith.constant 0 : index
    %c128_659 = arith.constant 128 : index
    %691 = vector.load %arg55[%c0_658, %c128_659] : memref<32x768xf32, #tpu.memory_space<vmem>>, vector<8x32xf32>
    tpu.vector_store %arg55[%c0_658, %c128_659], %690 {strides = array<i32>} : memref<32x768xf32, #tpu.memory_space<vmem>>, vector<8x32xf32>,
    %c0_660 = arith.constant 0 : index
    %c123_661 = arith.constant 123 : index
    %692 = vector.load %arg55[%c0_660, %c123_661] : memref<32x768xf32, #tpu.memory_space<vmem>>, vector<8x32xf32>
    %c0_662 = arith.constant 0 : index
    %c0_663 = arith.constant 0 : index
    %693 = vector.load %arg41[%c0_662, %c0_663] : memref<8x32xf32, #tpu.memory_space<vmem>>, vector<1x32xf32>
    %694 = vector.broadcast %693 : vector<1x32xf32> to vector<8x32xf32>
    %695 = arith.mulf %692, %694 : vector<8x32xf32>
    %c0_664 = arith.constant 0 : index
    %c0_665 = arith.constant 0 : index
    %696 = vector.load %arg56[%c0_664, %c0_665] : memref<288x512xf32, #tpu.memory_space<vmem>>, vector<8x32xf32>
    tpu.vector_store %arg56[%c0_664, %c0_665], %695 {strides = array<i32>} : memref<288x512xf32, #tpu.memory_space<vmem>>, vector<8x32xf32>,
    %c0_666 = arith.constant 0 : index
    %c124_667 = arith.constant 124 : index
    %697 = vector.load %arg55[%c0_666, %c124_667] : memref<32x768xf32, #tpu.memory_space<vmem>>, vector<8x32xf32>
    %c1_668 = arith.constant 1 : index
    %c0_669 = arith.constant 0 : index
    %698 = vector.load %arg41[%c1_668, %c0_669] : memref<8x32xf32, #tpu.memory_space<vmem>>, vector<1x32xf32>
    %699 = vector.broadcast %698 : vector<1x32xf32> to vector<8x32xf32>
    %700 = arith.mulf %697, %699 : vector<8x32xf32>
    %c8_670 = arith.constant 8 : index
    %c0_671 = arith.constant 0 : index
    %701 = vector.load %arg56[%c8_670, %c0_671] : memref<288x512xf32, #tpu.memory_space<vmem>>, vector<8x32xf32>
    tpu.vector_store %arg56[%c8_670, %c0_671], %700 {strides = array<i32>} : memref<288x512xf32, #tpu.memory_space<vmem>>, vector<8x32xf32>,
    %c0_672 = arith.constant 0 : index
    %c125_673 = arith.constant 125 : index
    %702 = vector.load %arg55[%c0_672, %c125_673] : memref<32x768xf32, #tpu.memory_space<vmem>>, vector<8x32xf32>
    %c2_674 = arith.constant 2 : index
    %c0_675 = arith.constant 0 : index
    %703 = vector.load %arg41[%c2_674, %c0_675] : memref<8x32xf32, #tpu.memory_space<vmem>>, vector<1x32xf32>
    %704 = vector.broadcast %703 : vector<1x32xf32> to vector<8x32xf32>
    %705 = arith.mulf %702, %704 : vector<8x32xf32>
    %c16_676 = arith.constant 16 : index
    %c0_677 = arith.constant 0 : index
    %706 = vector.load %arg56[%c16_676, %c0_677] : memref<288x512xf32, #tpu.memory_space<vmem>>, vector<8x32xf32>
    tpu.vector_store %arg56[%c16_676, %c0_677], %705 {strides = array<i32>} : memref<288x512xf32, #tpu.memory_space<vmem>>, vector<8x32xf32>,
    %c0_678 = arith.constant 0 : index
    %c127_679 = arith.constant 127 : index
    %707 = vector.load %arg55[%c0_678, %c127_679] : memref<32x768xf32, #tpu.memory_space<vmem>>, vector<8x32xf32>
    %c3_680 = arith.constant 3 : index
    %c0_681 = arith.constant 0 : index
    %708 = vector.load %arg41[%c3_680, %c0_681] : memref<8x32xf32, #tpu.memory_space<vmem>>, vector<1x32xf32>
    %709 = vector.broadcast %708 : vector<1x32xf32> to vector<8x32xf32>
    %710 = arith.mulf %707, %709 : vector<8x32xf32>
    %c24_682 = arith.constant 24 : index
    %c0_683 = arith.constant 0 : index
    %711 = vector.load %arg56[%c24_682, %c0_683] : memref<288x512xf32, #tpu.memory_space<vmem>>, vector<8x32xf32>
    tpu.vector_store %arg56[%c24_682, %c0_683], %710 {strides = array<i32>} : memref<288x512xf32, #tpu.memory_space<vmem>>, vector<8x32xf32>,
    %c0_684 = arith.constant 0 : index
    %c128_685 = arith.constant 128 : index
    %712 = vector.load %arg55[%c0_684, %c128_685] : memref<32x768xf32, #tpu.memory_space<vmem>>, vector<8x32xf32>
    %c32_686 = arith.constant 32 : index
    %c0_687 = arith.constant 0 : index
    %713 = vector.load %arg56[%c32_686, %c0_687] : memref<288x512xf32, #tpu.memory_space<vmem>>, vector<8x32xf32>
    tpu.vector_store %arg56[%c32_686, %c0_687], %712 {strides = array<i32>} : memref<288x512xf32, #tpu.memory_space<vmem>>, vector<8x32xf32>,
    %c0_688 = arith.constant 0 : index
    %c129_689 = arith.constant 129 : index
    %714 = vector.load %arg55[%c0_688, %c129_689] : memref<32x768xf32, #tpu.memory_space<vmem>>, vector<8x32xf32>
    %c4_690 = arith.constant 4 : index
    %c0_691 = arith.constant 0 : index
    %715 = vector.load %arg41[%c4_690, %c0_691] : memref<8x32xf32, #tpu.memory_space<vmem>>, vector<1x32xf32>
    %716 = vector.broadcast %715 : vector<1x32xf32> to vector<8x32xf32>
    %717 = arith.mulf %714, %716 : vector<8x32xf32>
    %c40_692 = arith.constant 40 : index
    %c0_693 = arith.constant 0 : index
    %718 = vector.load %arg56[%c40_692, %c0_693] : memref<288x512xf32, #tpu.memory_space<vmem>>, vector<8x32xf32>
    tpu.vector_store %arg56[%c40_692, %c0_693], %717 {strides = array<i32>} : memref<288x512xf32, #tpu.memory_space<vmem>>, vector<8x32xf32>,
    %c0_694 = arith.constant 0 : index
    %c131_695 = arith.constant 131 : index
    %719 = vector.load %arg55[%c0_694, %c131_695] : memref<32x768xf32, #tpu.memory_space<vmem>>, vector<8x32xf32>
    %c5_696 = arith.constant 5 : index
    %c0_697 = arith.constant 0 : index
    %720 = vector.load %arg41[%c5_696, %c0_697] : memref<8x32xf32, #tpu.memory_space<vmem>>, vector<1x32xf32>
    %721 = vector.broadcast %720 : vector<1x32xf32> to vector<8x32xf32>
    %722 = arith.mulf %719, %721 : vector<8x32xf32>
    %c48_698 = arith.constant 48 : index
    %c0_699 = arith.constant 0 : index
    %723 = vector.load %arg56[%c48_698, %c0_699] : memref<288x512xf32, #tpu.memory_space<vmem>>, vector<8x32xf32>
    tpu.vector_store %arg56[%c48_698, %c0_699], %722 {strides = array<i32>} : memref<288x512xf32, #tpu.memory_space<vmem>>, vector<8x32xf32>,
    %c0_700 = arith.constant 0 : index
    %c132_701 = arith.constant 132 : index
    %724 = vector.load %arg55[%c0_700, %c132_701] : memref<32x768xf32, #tpu.memory_space<vmem>>, vector<8x32xf32>
    %c6_702 = arith.constant 6 : index
    %c0_703 = arith.constant 0 : index
    %725 = vector.load %arg41[%c6_702, %c0_703] : memref<8x32xf32, #tpu.memory_space<vmem>>, vector<1x32xf32>
    %726 = vector.broadcast %725 : vector<1x32xf32> to vector<8x32xf32>
    %727 = arith.mulf %724, %726 : vector<8x32xf32>
    %c56_704 = arith.constant 56 : index
    %c0_705 = arith.constant 0 : index
    %728 = vector.load %arg56[%c56_704, %c0_705] : memref<288x512xf32, #tpu.memory_space<vmem>>, vector<8x32xf32>
    tpu.vector_store %arg56[%c56_704, %c0_705], %727 {strides = array<i32>} : memref<288x512xf32, #tpu.memory_space<vmem>>, vector<8x32xf32>,
    %c0_706 = arith.constant 0 : index
    %c133_707 = arith.constant 133 : index
    %729 = vector.load %arg55[%c0_706, %c133_707] : memref<32x768xf32, #tpu.memory_space<vmem>>, vector<8x32xf32>
    %c7_708 = arith.constant 7 : index
    %c0_709 = arith.constant 0 : index
    %730 = vector.load %arg41[%c7_708, %c0_709] : memref<8x32xf32, #tpu.memory_space<vmem>>, vector<1x32xf32>
    %731 = vector.broadcast %730 : vector<1x32xf32> to vector<8x32xf32>
    %732 = arith.mulf %729, %731 : vector<8x32xf32>
    %c64_710 = arith.constant 64 : index
    %c0_711 = arith.constant 0 : index
    %733 = vector.load %arg56[%c64_710, %c0_711] : memref<288x512xf32, #tpu.memory_space<vmem>>, vector<8x32xf32>
    tpu.vector_store %arg56[%c64_710, %c0_711], %732 {strides = array<i32>} : memref<288x512xf32, #tpu.memory_space<vmem>>, vector<8x32xf32>,
    %c0_712 = arith.constant 0 : index
    %c0_713 = arith.constant 0 : index
    %734 = vector.load %arg28[%c0_712, %c0_713] : memref<8x72xf32, #tpu.memory_space<vmem>>, vector<8x72xf32>
    %c0_714 = arith.constant 0 : index
    %c0_715 = arith.constant 0 : index
    %735 = vector.load %arg56[%c0_714, %c0_715] : memref<288x512xf32, #tpu.memory_space<vmem>>, vector<72x32xf32>
    %cst_716 = arith.constant dense<0.000000e+00> : vector<8x32xf32>
    %736 = tpu.matmul %734, %735, %cst_716 {dimension_numbers = #tpu.dot_dimension_numbers<[1], [0], [0], [1], [0, 0, 1, 1], [], []>} : vector<8x72xf32>, vector<72x32xf32>, vector<8x32xf32> -> vector<8x32xf32>
    %cst_717 = arith.constant dense<0.000000e+00> : vector<8xf32>
    %737 = vector.multi_reduction <add>, %736, %cst_717 [1] : vector<8x32xf32> to vector<8xf32>
    %738 = vector.shape_cast %737 : vector<8xf32> to vector<8x1xf32>
    %cst_718 = arith.constant 3.125000e-02 : f32
    %739 = vector.broadcast %cst_718 : f32 to vector<8x1xf32>
    %740 = arith.mulf %738, %739 : vector<8x1xf32>
    %741 = vector.broadcast %740 : vector<8x1xf32> to vector<8x32xf32>
    %742 = arith.subf %736, %741 : vector<8x32xf32>
    %743 = arith.mulf %742, %742 : vector<8x32xf32>
    %cst_719 = arith.constant dense<0.000000e+00> : vector<8xf32>
    %744 = vector.multi_reduction <add>, %743, %cst_719 [1] : vector<8x32xf32> to vector<8xf32>
    %745 = vector.shape_cast %744 : vector<8xf32> to vector<8x1xf32>
    %cst_720 = arith.constant 3.125000e-02 : f32
    %746 = vector.broadcast %cst_720 : f32 to vector<8x1xf32>
    %747 = arith.mulf %745, %746 : vector<8x1xf32>
    %c0_721 = arith.constant 0 : index
    %c0_722 = arith.constant 0 : index
    %748 = vector.load %arg29[%c0_721, %c0_722] : memref<8x1xf32, #tpu.memory_space<vmem>>, vector<8x1xf32>
    %cst_723 = arith.constant 9.99999974E-6 : f32
    %749 = vector.broadcast %cst_723 : f32 to vector<8x1xf32>
    %750 = arith.addf %747, %749 : vector<8x1xf32>
    %751 = math.rsqrt %750 : vector<8x1xf32>
    %752 = arith.mulf %748, %751 : vector<8x1xf32>
    %753 = vector.broadcast %752 : vector<8x1xf32> to vector<8x32xf32>
    %754 = arith.mulf %742, %753 : vector<8x32xf32>
    %c0_724 = arith.constant 0 : index
    %c0_725 = arith.constant 0 : index
    %755 = vector.load %arg30[%c0_724, %c0_725] : memref<8x1xf32, #tpu.memory_space<vmem>>, vector<8x1xf32>
    %756 = vector.broadcast %755 : vector<8x1xf32> to vector<8x32xf32>
    %757 = arith.addf %754, %756 : vector<8x32xf32>
    %cst_726 = arith.constant 0.000000e+00 : f32
    %758 = vector.broadcast %cst_726 : f32 to vector<8x32xf32>
    %759 = arith.maximumf %757, %758 : vector<8x32xf32>
    %c0_727 = arith.constant 0 : index
    %c0_728 = arith.constant 0 : index
    %760 = vector.load %arg47[%c0_727, %c0_728] : memref<16x64xf32, #tpu.memory_space<vmem>>, vector<16x64xf32>
    %761 = vector.extract_strided_slice %759 {offsets = [0, 0], sizes = [8, 16], strides = [1, 1]} : vector<8x32xf32> to vector<8x16xf32>
    %cst_729 = arith.constant dense<0.000000e+00> : vector<8x64xf32>
    %762 = tpu.matmul %761, %760, %cst_729 {dimension_numbers = #tpu.dot_dimension_numbers<[1], [0], [0], [1], [0, 0, 1, 1], [], []>} : vector<8x16xf32>, vector<16x64xf32>, vector<8x64xf32> -> vector<8x64xf32>
    %c0_730 = arith.constant 0 : index
    %c0_731 = arith.constant 0 : index
    %763 = vector.load %arg56[%c0_730, %c0_731] : memref<288x512xf32, #tpu.memory_space<vmem>>, vector<8x64xf32>
    tpu.vector_store %arg56[%c0_730, %c0_731], %762 {strides = array<i32>} : memref<288x512xf32, #tpu.memory_space<vmem>>, vector<8x64xf32>,
    %764 = vector.extract_strided_slice %759 {offsets = [0, 16], sizes = [8, 16], strides = [1, 1]} : vector<8x32xf32> to vector<8x16xf32>
    %cst_732 = arith.constant dense<0.000000e+00> : vector<8x64xf32>
    %765 = tpu.matmul %764, %760, %cst_732 {dimension_numbers = #tpu.dot_dimension_numbers<[1], [0], [0], [1], [0, 0, 1, 1], [], []>} : vector<8x16xf32>, vector<16x64xf32>, vector<8x64xf32> -> vector<8x64xf32>
    %c0_733 = arith.constant 0 : index
    %c64_734 = arith.constant 64 : index
    %766 = vector.load %arg56[%c0_733, %c64_734] : memref<288x512xf32, #tpu.memory_space<vmem>>, vector<8x64xf32>
    tpu.vector_store %arg56[%c0_733, %c64_734], %765 {strides = array<i32>} : memref<288x512xf32, #tpu.memory_space<vmem>>, vector<8x64xf32>,
    %c0_735 = arith.constant 0 : index
    %c0_736 = arith.constant 0 : index
    %767 = vector.load %arg56[%c0_735, %c0_736] : memref<288x512xf32, #tpu.memory_space<vmem>>, vector<8x128xf32>
    %c0_737 = arith.constant 0 : index
    %c0_738 = arith.constant 0 : index
    %768 = vector.load %arg53[%c0_737, %c0_738] : memref<8x128xf32, #tpu.memory_space<vmem>>, vector<8x128xf32>
    tpu.vector_store %arg53[%c0_737, %c0_738], %767 {strides = array<i32>} : memref<8x128xf32, #tpu.memory_space<vmem>>, vector<8x128xf32>,
    %c0_739 = arith.constant 0 : index
    %c128_740 = arith.constant 128 : index
    %769 = vector.load %arg55[%c0_739, %c128_740] : memref<32x768xf32, #tpu.memory_space<vmem>>, vector<8x128xf32>
    tpu.vector_store %arg55[%c0_739, %c128_740], %767 {strides = array<i32>} : memref<32x768xf32, #tpu.memory_space<vmem>>, vector<8x128xf32>,
    %c0_741 = arith.constant 0 : index
    %c119_742 = arith.constant 119 : index
    %770 = vector.load %arg55[%c0_741, %c119_742] : memref<32x768xf32, #tpu.memory_space<vmem>>, vector<8x128xf32>
    %c0_743 = arith.constant 0 : index
    %c0_744 = arith.constant 0 : index
    %771 = vector.load %arg40[%c0_743, %c0_744] : memref<8x128xf32, #tpu.memory_space<vmem>>, vector<1x128xf32>
    %772 = vector.broadcast %771 : vector<1x128xf32> to vector<8x128xf32>
    %773 = arith.mulf %770, %772 : vector<8x128xf32>
    %c0_745 = arith.constant 0 : index
    %c0_746 = arith.constant 0 : index
    %774 = vector.load %arg56[%c0_745, %c0_746] : memref<288x512xf32, #tpu.memory_space<vmem>>, vector<8x128xf32>
    tpu.vector_store %arg56[%c0_745, %c0_746], %773 {strides = array<i32>} : memref<288x512xf32, #tpu.memory_space<vmem>>, vector<8x128xf32>,
    %c0_747 = arith.constant 0 : index
    %c120_748 = arith.constant 120 : index
    %775 = vector.load %arg55[%c0_747, %c120_748] : memref<32x768xf32, #tpu.memory_space<vmem>>, vector<8x128xf32>
    %c1_749 = arith.constant 1 : index
    %c0_750 = arith.constant 0 : index
    %776 = vector.load %arg40[%c1_749, %c0_750] : memref<8x128xf32, #tpu.memory_space<vmem>>, vector<1x128xf32>
    %777 = vector.broadcast %776 : vector<1x128xf32> to vector<8x128xf32>
    %778 = arith.mulf %775, %777 : vector<8x128xf32>
    %c8_751 = arith.constant 8 : index
    %c0_752 = arith.constant 0 : index
    %779 = vector.load %arg56[%c8_751, %c0_752] : memref<288x512xf32, #tpu.memory_space<vmem>>, vector<8x128xf32>
    tpu.vector_store %arg56[%c8_751, %c0_752], %778 {strides = array<i32>} : memref<288x512xf32, #tpu.memory_space<vmem>>, vector<8x128xf32>,
    %c0_753 = arith.constant 0 : index
    %c121_754 = arith.constant 121 : index
    %780 = vector.load %arg55[%c0_753, %c121_754] : memref<32x768xf32, #tpu.memory_space<vmem>>, vector<8x128xf32>
    %c2_755 = arith.constant 2 : index
    %c0_756 = arith.constant 0 : index
    %781 = vector.load %arg40[%c2_755, %c0_756] : memref<8x128xf32, #tpu.memory_space<vmem>>, vector<1x128xf32>
    %782 = vector.broadcast %781 : vector<1x128xf32> to vector<8x128xf32>
    %783 = arith.mulf %780, %782 : vector<8x128xf32>
    %c16_757 = arith.constant 16 : index
    %c0_758 = arith.constant 0 : index
    %784 = vector.load %arg56[%c16_757, %c0_758] : memref<288x512xf32, #tpu.memory_space<vmem>>, vector<8x128xf32>
    tpu.vector_store %arg56[%c16_757, %c0_758], %783 {strides = array<i32>} : memref<288x512xf32, #tpu.memory_space<vmem>>, vector<8x128xf32>,
    %c0_759 = arith.constant 0 : index
    %c127_760 = arith.constant 127 : index
    %785 = vector.load %arg55[%c0_759, %c127_760] : memref<32x768xf32, #tpu.memory_space<vmem>>, vector<8x128xf32>
    %c3_761 = arith.constant 3 : index
    %c0_762 = arith.constant 0 : index
    %786 = vector.load %arg40[%c3_761, %c0_762] : memref<8x128xf32, #tpu.memory_space<vmem>>, vector<1x128xf32>
    %787 = vector.broadcast %786 : vector<1x128xf32> to vector<8x128xf32>
    %788 = arith.mulf %785, %787 : vector<8x128xf32>
    %c24_763 = arith.constant 24 : index
    %c0_764 = arith.constant 0 : index
    %789 = vector.load %arg56[%c24_763, %c0_764] : memref<288x512xf32, #tpu.memory_space<vmem>>, vector<8x128xf32>
    tpu.vector_store %arg56[%c24_763, %c0_764], %788 {strides = array<i32>} : memref<288x512xf32, #tpu.memory_space<vmem>>, vector<8x128xf32>,
    %c0_765 = arith.constant 0 : index
    %c128_766 = arith.constant 128 : index
    %790 = vector.load %arg55[%c0_765, %c128_766] : memref<32x768xf32, #tpu.memory_space<vmem>>, vector<8x128xf32>
    %c32_767 = arith.constant 32 : index
    %c0_768 = arith.constant 0 : index
    %791 = vector.load %arg56[%c32_767, %c0_768] : memref<288x512xf32, #tpu.memory_space<vmem>>, vector<8x128xf32>
    tpu.vector_store %arg56[%c32_767, %c0_768], %790 {strides = array<i32>} : memref<288x512xf32, #tpu.memory_space<vmem>>, vector<8x128xf32>,
    %c0_769 = arith.constant 0 : index
    %c129_770 = arith.constant 129 : index
    %792 = vector.load %arg55[%c0_769, %c129_770] : memref<32x768xf32, #tpu.memory_space<vmem>>, vector<8x128xf32>
    %c4_771 = arith.constant 4 : index
    %c0_772 = arith.constant 0 : index
    %793 = vector.load %arg40[%c4_771, %c0_772] : memref<8x128xf32, #tpu.memory_space<vmem>>, vector<1x128xf32>
    %794 = vector.broadcast %793 : vector<1x128xf32> to vector<8x128xf32>
    %795 = arith.mulf %792, %794 : vector<8x128xf32>
    %c40_773 = arith.constant 40 : index
    %c0_774 = arith.constant 0 : index
    %796 = vector.load %arg56[%c40_773, %c0_774] : memref<288x512xf32, #tpu.memory_space<vmem>>, vector<8x128xf32>
    tpu.vector_store %arg56[%c40_773, %c0_774], %795 {strides = array<i32>} : memref<288x512xf32, #tpu.memory_space<vmem>>, vector<8x128xf32>,
    %c0_775 = arith.constant 0 : index
    %c135_776 = arith.constant 135 : index
    %797 = vector.load %arg55[%c0_775, %c135_776] : memref<32x768xf32, #tpu.memory_space<vmem>>, vector<8x128xf32>
    %c5_777 = arith.constant 5 : index
    %c0_778 = arith.constant 0 : index
    %798 = vector.load %arg40[%c5_777, %c0_778] : memref<8x128xf32, #tpu.memory_space<vmem>>, vector<1x128xf32>
    %799 = vector.broadcast %798 : vector<1x128xf32> to vector<8x128xf32>
    %800 = arith.mulf %797, %799 : vector<8x128xf32>
    %c48_779 = arith.constant 48 : index
    %c0_780 = arith.constant 0 : index
    %801 = vector.load %arg56[%c48_779, %c0_780] : memref<288x512xf32, #tpu.memory_space<vmem>>, vector<8x128xf32>
    tpu.vector_store %arg56[%c48_779, %c0_780], %800 {strides = array<i32>} : memref<288x512xf32, #tpu.memory_space<vmem>>, vector<8x128xf32>,
    %c0_781 = arith.constant 0 : index
    %c136_782 = arith.constant 136 : index
    %802 = vector.load %arg55[%c0_781, %c136_782] : memref<32x768xf32, #tpu.memory_space<vmem>>, vector<8x128xf32>
    %c6_783 = arith.constant 6 : index
    %c0_784 = arith.constant 0 : index
    %803 = vector.load %arg40[%c6_783, %c0_784] : memref<8x128xf32, #tpu.memory_space<vmem>>, vector<1x128xf32>
    %804 = vector.broadcast %803 : vector<1x128xf32> to vector<8x128xf32>
    %805 = arith.mulf %802, %804 : vector<8x128xf32>
    %c56_785 = arith.constant 56 : index
    %c0_786 = arith.constant 0 : index
    %806 = vector.load %arg56[%c56_785, %c0_786] : memref<288x512xf32, #tpu.memory_space<vmem>>, vector<8x128xf32>
    tpu.vector_store %arg56[%c56_785, %c0_786], %805 {strides = array<i32>} : memref<288x512xf32, #tpu.memory_space<vmem>>, vector<8x128xf32>,
    %c0_787 = arith.constant 0 : index
    %c137_788 = arith.constant 137 : index
    %807 = vector.load %arg55[%c0_787, %c137_788] : memref<32x768xf32, #tpu.memory_space<vmem>>, vector<8x128xf32>
    %c7_789 = arith.constant 7 : index
    %c0_790 = arith.constant 0 : index
    %808 = vector.load %arg40[%c7_789, %c0_790] : memref<8x128xf32, #tpu.memory_space<vmem>>, vector<1x128xf32>
    %809 = vector.broadcast %808 : vector<1x128xf32> to vector<8x128xf32>
    %810 = arith.mulf %807, %809 : vector<8x128xf32>
    %c64_791 = arith.constant 64 : index
    %c0_792 = arith.constant 0 : index
    %811 = vector.load %arg56[%c64_791, %c0_792] : memref<288x512xf32, #tpu.memory_space<vmem>>, vector<8x128xf32>
    tpu.vector_store %arg56[%c64_791, %c0_792], %810 {strides = array<i32>} : memref<288x512xf32, #tpu.memory_space<vmem>>, vector<8x128xf32>,
    %c0_793 = arith.constant 0 : index
    %c0_794 = arith.constant 0 : index
    %812 = vector.load %arg31[%c0_793, %c0_794] : memref<1x72xf32, #tpu.memory_space<vmem>>, vector<1x72xf32>
    %c0_795 = arith.constant 0 : index
    %c0_796 = arith.constant 0 : index
    %813 = vector.load %arg56[%c0_795, %c0_796] : memref<288x512xf32, #tpu.memory_space<vmem>>, vector<72x128xf32>
    %cst_797 = arith.constant dense<0.000000e+00> : vector<1x128xf32>
    %814 = tpu.matmul %812, %813, %cst_797 {dimension_numbers = #tpu.dot_dimension_numbers<[1], [0], [0], [1], [0, 0, 1, 1], [], []>} : vector<1x72xf32>, vector<72x128xf32>, vector<1x128xf32> -> vector<1x128xf32>
    %cst_798 = arith.constant dense<0.000000e+00> : vector<1xf32>
    %815 = vector.multi_reduction <add>, %814, %cst_798 [1] : vector<1x128xf32> to vector<1xf32>
    %816 = vector.shape_cast %815 : vector<1xf32> to vector<1x1xf32>
    %cst_799 = arith.constant 7.812500e-03 : f32
    %817 = vector.broadcast %cst_799 : f32 to vector<1x1xf32>
    %818 = arith.mulf %816, %817 : vector<1x1xf32>
    %819 = vector.broadcast %818 : vector<1x1xf32> to vector<1x128xf32>
    %820 = arith.subf %814, %819 : vector<1x128xf32>
    %821 = arith.mulf %820, %820 : vector<1x128xf32>
    %cst_800 = arith.constant dense<0.000000e+00> : vector<1xf32>
    %822 = vector.multi_reduction <add>, %821, %cst_800 [1] : vector<1x128xf32> to vector<1xf32>
    %823 = vector.shape_cast %822 : vector<1xf32> to vector<1x1xf32>
    %cst_801 = arith.constant 7.812500e-03 : f32
    %824 = vector.broadcast %cst_801 : f32 to vector<1x1xf32>
    %825 = arith.mulf %823, %824 : vector<1x1xf32>
    %c0_802 = arith.constant 0 : index
    %c0_803 = arith.constant 0 : index
    %826 = vector.load %arg32[%c0_802, %c0_803] : memref<1x1xf32, #tpu.memory_space<vmem>>, vector<1x1xf32>
    %cst_804 = arith.constant 9.99999974E-6 : f32
    %827 = vector.broadcast %cst_804 : f32 to vector<1x1xf32>
    %828 = arith.addf %825, %827 : vector<1x1xf32>
    %829 = math.rsqrt %828 : vector<1x1xf32>
    %830 = arith.mulf %826, %829 : vector<1x1xf32>
    %831 = vector.broadcast %830 : vector<1x1xf32> to vector<1x128xf32>
    %832 = arith.mulf %820, %831 : vector<1x128xf32>
    %c0_805 = arith.constant 0 : index
    %c0_806 = arith.constant 0 : index
    %833 = vector.load %arg33[%c0_805, %c0_806] : memref<1x1xf32, #tpu.memory_space<vmem>>, vector<1x1xf32>
    %834 = vector.broadcast %833 : vector<1x1xf32> to vector<1x128xf32>
    %835 = arith.addf %832, %834 : vector<1x128xf32>
    %cst_807 = arith.constant 0.000000e+00 : f32
    %836 = vector.broadcast %cst_807 : f32 to vector<1x128xf32>
    %837 = arith.maximumf %835, %836 : vector<1x128xf32>
    %c0_808 = arith.constant 0 : index
    %c128_809 = arith.constant 128 : index
    %838 = vector.load %arg55[%c0_808, %c128_809] : memref<32x768xf32, #tpu.memory_space<vmem>>, vector<1x128xf32>
    tpu.vector_store %arg55[%c0_808, %c128_809], %837 {strides = array<i32>} : memref<32x768xf32, #tpu.memory_space<vmem>>, vector<1x128xf32>,
    %c0_810 = arith.constant 0 : index
    %c119_811 = arith.constant 119 : index
    %839 = vector.load %arg55[%c0_810, %c119_811] : memref<32x768xf32, #tpu.memory_space<vmem>>, vector<1x128xf32>
    %c0_812 = arith.constant 0 : index
    %c0_813 = arith.constant 0 : index
    %840 = vector.load %arg40[%c0_812, %c0_813] : memref<8x128xf32, #tpu.memory_space<vmem>>, vector<1x128xf32>
    %841 = arith.mulf %839, %840 : vector<1x128xf32>
    %c0_814 = arith.constant 0 : index
    %c0_815 = arith.constant 0 : index
    %842 = vector.load %arg56[%c0_814, %c0_815] : memref<288x512xf32, #tpu.memory_space<vmem>>, vector<1x128xf32>
    tpu.vector_store %arg56[%c0_814, %c0_815], %841 {strides = array<i32>} : memref<288x512xf32, #tpu.memory_space<vmem>>, vector<1x128xf32>,
    %c0_816 = arith.constant 0 : index
    %c120_817 = arith.constant 120 : index
    %843 = vector.load %arg55[%c0_816, %c120_817] : memref<32x768xf32, #tpu.memory_space<vmem>>, vector<1x128xf32>
    %c1_818 = arith.constant 1 : index
    %c0_819 = arith.constant 0 : index
    %844 = vector.load %arg40[%c1_818, %c0_819] : memref<8x128xf32, #tpu.memory_space<vmem>>, vector<1x128xf32>
    %845 = arith.mulf %843, %844 : vector<1x128xf32>
    %c1_820 = arith.constant 1 : index
    %c0_821 = arith.constant 0 : index
    %846 = vector.load %arg56[%c1_820, %c0_821] : memref<288x512xf32, #tpu.memory_space<vmem>>, vector<1x128xf32>
    tpu.vector_store %arg56[%c1_820, %c0_821], %845 {strides = array<i32>} : memref<288x512xf32, #tpu.memory_space<vmem>>, vector<1x128xf32>,
    %c0_822 = arith.constant 0 : index
    %c121_823 = arith.constant 121 : index
    %847 = vector.load %arg55[%c0_822, %c121_823] : memref<32x768xf32, #tpu.memory_space<vmem>>, vector<1x128xf32>
    %c2_824 = arith.constant 2 : index
    %c0_825 = arith.constant 0 : index
    %848 = vector.load %arg40[%c2_824, %c0_825] : memref<8x128xf32, #tpu.memory_space<vmem>>, vector<1x128xf32>
    %849 = arith.mulf %847, %848 : vector<1x128xf32>
    %c2_826 = arith.constant 2 : index
    %c0_827 = arith.constant 0 : index
    %850 = vector.load %arg56[%c2_826, %c0_827] : memref<288x512xf32, #tpu.memory_space<vmem>>, vector<1x128xf32>
    tpu.vector_store %arg56[%c2_826, %c0_827], %849 {strides = array<i32>} : memref<288x512xf32, #tpu.memory_space<vmem>>, vector<1x128xf32>,
    %c0_828 = arith.constant 0 : index
    %c127_829 = arith.constant 127 : index
    %851 = vector.load %arg55[%c0_828, %c127_829] : memref<32x768xf32, #tpu.memory_space<vmem>>, vector<1x128xf32>
    %c3_830 = arith.constant 3 : index
    %c0_831 = arith.constant 0 : index
    %852 = vector.load %arg40[%c3_830, %c0_831] : memref<8x128xf32, #tpu.memory_space<vmem>>, vector<1x128xf32>
    %853 = arith.mulf %851, %852 : vector<1x128xf32>
    %c3_832 = arith.constant 3 : index
    %c0_833 = arith.constant 0 : index
    %854 = vector.load %arg56[%c3_832, %c0_833] : memref<288x512xf32, #tpu.memory_space<vmem>>, vector<1x128xf32>
    tpu.vector_store %arg56[%c3_832, %c0_833], %853 {strides = array<i32>} : memref<288x512xf32, #tpu.memory_space<vmem>>, vector<1x128xf32>,
    %c0_834 = arith.constant 0 : index
    %c128_835 = arith.constant 128 : index
    %855 = vector.load %arg55[%c0_834, %c128_835] : memref<32x768xf32, #tpu.memory_space<vmem>>, vector<1x128xf32>
    %c4_836 = arith.constant 4 : index
    %c0_837 = arith.constant 0 : index
    %856 = vector.load %arg56[%c4_836, %c0_837] : memref<288x512xf32, #tpu.memory_space<vmem>>, vector<1x128xf32>
    tpu.vector_store %arg56[%c4_836, %c0_837], %855 {strides = array<i32>} : memref<288x512xf32, #tpu.memory_space<vmem>>, vector<1x128xf32>,
    %c0_838 = arith.constant 0 : index
    %c129_839 = arith.constant 129 : index
    %857 = vector.load %arg55[%c0_838, %c129_839] : memref<32x768xf32, #tpu.memory_space<vmem>>, vector<1x128xf32>
    %c4_840 = arith.constant 4 : index
    %c0_841 = arith.constant 0 : index
    %858 = vector.load %arg40[%c4_840, %c0_841] : memref<8x128xf32, #tpu.memory_space<vmem>>, vector<1x128xf32>
    %859 = arith.mulf %857, %858 : vector<1x128xf32>
    %c5_842 = arith.constant 5 : index
    %c0_843 = arith.constant 0 : index
    %860 = vector.load %arg56[%c5_842, %c0_843] : memref<288x512xf32, #tpu.memory_space<vmem>>, vector<1x128xf32>
    tpu.vector_store %arg56[%c5_842, %c0_843], %859 {strides = array<i32>} : memref<288x512xf32, #tpu.memory_space<vmem>>, vector<1x128xf32>,
    %c0_844 = arith.constant 0 : index
    %c135_845 = arith.constant 135 : index
    %861 = vector.load %arg55[%c0_844, %c135_845] : memref<32x768xf32, #tpu.memory_space<vmem>>, vector<1x128xf32>
    %c5_846 = arith.constant 5 : index
    %c0_847 = arith.constant 0 : index
    %862 = vector.load %arg40[%c5_846, %c0_847] : memref<8x128xf32, #tpu.memory_space<vmem>>, vector<1x128xf32>
    %863 = arith.mulf %861, %862 : vector<1x128xf32>
    %c6_848 = arith.constant 6 : index
    %c0_849 = arith.constant 0 : index
    %864 = vector.load %arg56[%c6_848, %c0_849] : memref<288x512xf32, #tpu.memory_space<vmem>>, vector<1x128xf32>
    tpu.vector_store %arg56[%c6_848, %c0_849], %863 {strides = array<i32>} : memref<288x512xf32, #tpu.memory_space<vmem>>, vector<1x128xf32>,
    %c0_850 = arith.constant 0 : index
    %c136_851 = arith.constant 136 : index
    %865 = vector.load %arg55[%c0_850, %c136_851] : memref<32x768xf32, #tpu.memory_space<vmem>>, vector<1x128xf32>
    %c6_852 = arith.constant 6 : index
    %c0_853 = arith.constant 0 : index
    %866 = vector.load %arg40[%c6_852, %c0_853] : memref<8x128xf32, #tpu.memory_space<vmem>>, vector<1x128xf32>
    %867 = arith.mulf %865, %866 : vector<1x128xf32>
    %c7_854 = arith.constant 7 : index
    %c0_855 = arith.constant 0 : index
    %868 = vector.load %arg56[%c7_854, %c0_855] : memref<288x512xf32, #tpu.memory_space<vmem>>, vector<1x128xf32>
    tpu.vector_store %arg56[%c7_854, %c0_855], %867 {strides = array<i32>} : memref<288x512xf32, #tpu.memory_space<vmem>>, vector<1x128xf32>,
    %c0_856 = arith.constant 0 : index
    %c137_857 = arith.constant 137 : index
    %869 = vector.load %arg55[%c0_856, %c137_857] : memref<32x768xf32, #tpu.memory_space<vmem>>, vector<1x128xf32>
    %c7_858 = arith.constant 7 : index
    %c0_859 = arith.constant 0 : index
    %870 = vector.load %arg40[%c7_858, %c0_859] : memref<8x128xf32, #tpu.memory_space<vmem>>, vector<1x128xf32>
    %871 = arith.mulf %869, %870 : vector<1x128xf32>
    %c8_860 = arith.constant 8 : index
    %c0_861 = arith.constant 0 : index
    %872 = vector.load %arg56[%c8_860, %c0_861] : memref<288x512xf32, #tpu.memory_space<vmem>>, vector<1x128xf32>
    tpu.vector_store %arg56[%c8_860, %c0_861], %871 {strides = array<i32>} : memref<288x512xf32, #tpu.memory_space<vmem>>, vector<1x128xf32>,
    %c0_862 = arith.constant 0 : index
    %c0_863 = arith.constant 0 : index
    %873 = vector.load %arg34[%c0_862, %c0_863] : memref<1x9xf32, #tpu.memory_space<vmem>>, vector<1x9xf32>
    %c0_864 = arith.constant 0 : index
    %c0_865 = arith.constant 0 : index
    %874 = vector.load %arg56[%c0_864, %c0_865] : memref<288x512xf32, #tpu.memory_space<vmem>>, vector<9x128xf32>
    %cst_866 = arith.constant dense<0.000000e+00> : vector<1x128xf32>
    %875 = tpu.matmul %873, %874, %cst_866 {dimension_numbers = #tpu.dot_dimension_numbers<[1], [0], [0], [1], [0, 0, 1, 1], [], []>} : vector<1x9xf32>, vector<9x128xf32>, vector<1x128xf32> -> vector<1x128xf32>
    %cst_867 = arith.constant dense<0.000000e+00> : vector<1xf32>
    %876 = vector.multi_reduction <add>, %875, %cst_867 [1] : vector<1x128xf32> to vector<1xf32>
    %877 = vector.shape_cast %876 : vector<1xf32> to vector<1x1xf32>
    %cst_868 = arith.constant 7.812500e-03 : f32
    %878 = vector.broadcast %cst_868 : f32 to vector<1x1xf32>
    %879 = arith.mulf %877, %878 : vector<1x1xf32>
    %880 = vector.broadcast %879 : vector<1x1xf32> to vector<1x128xf32>
    %881 = arith.subf %875, %880 : vector<1x128xf32>
    %882 = arith.mulf %881, %881 : vector<1x128xf32>
    %cst_869 = arith.constant dense<0.000000e+00> : vector<1xf32>
    %883 = vector.multi_reduction <add>, %882, %cst_869 [1] : vector<1x128xf32> to vector<1xf32>
    %884 = vector.shape_cast %883 : vector<1xf32> to vector<1x1xf32>
    %cst_870 = arith.constant 7.812500e-03 : f32
    %885 = vector.broadcast %cst_870 : f32 to vector<1x1xf32>
    %886 = arith.mulf %884, %885 : vector<1x1xf32>
    %c0_871 = arith.constant 0 : index
    %c0_872 = arith.constant 0 : index
    %887 = vector.load %arg35[%c0_871, %c0_872] : memref<1x1xf32, #tpu.memory_space<vmem>>, vector<1x1xf32>
    %cst_873 = arith.constant 9.99999974E-6 : f32
    %888 = vector.broadcast %cst_873 : f32 to vector<1x1xf32>
    %889 = arith.addf %886, %888 : vector<1x1xf32>
    %890 = math.rsqrt %889 : vector<1x1xf32>
    %891 = arith.mulf %887, %890 : vector<1x1xf32>
    %892 = vector.broadcast %891 : vector<1x1xf32> to vector<1x128xf32>
    %893 = arith.mulf %881, %892 : vector<1x128xf32>
    %c0_874 = arith.constant 0 : index
    %c0_875 = arith.constant 0 : index
    %894 = vector.load %arg36[%c0_874, %c0_875] : memref<1x1xf32, #tpu.memory_space<vmem>>, vector<1x1xf32>
    %895 = vector.broadcast %894 : vector<1x1xf32> to vector<1x128xf32>
    %896 = arith.addf %893, %895 : vector<1x128xf32>
    %cst_876 = arith.constant 0.000000e+00 : f32
    %897 = vector.broadcast %cst_876 : f32 to vector<1x128xf32>
    %898 = arith.maximumf %896, %897 : vector<1x128xf32>
    %c0_877 = arith.constant 0 : index
    %c0_878 = arith.constant 0 : index
    %899 = vector.load %arg48[%c0_877, %c0_878] : memref<64x256xf32, #tpu.memory_space<vmem>>, vector<64x256xf32>
    %900 = vector.extract_strided_slice %898 {offsets = [0, 0], sizes = [1, 64], strides = [1, 1]} : vector<1x128xf32> to vector<1x64xf32>
    %cst_879 = arith.constant dense<0.000000e+00> : vector<1x256xf32>
    %901 = tpu.matmul %900, %899, %cst_879 {dimension_numbers = #tpu.dot_dimension_numbers<[1], [0], [0], [1], [0, 0, 1, 1], [], []>} : vector<1x64xf32>, vector<64x256xf32>, vector<1x256xf32> -> vector<1x256xf32>
    %c0_880 = arith.constant 0 : index
    %c0_881 = arith.constant 0 : index
    %902 = vector.load %arg56[%c0_880, %c0_881] : memref<288x512xf32, #tpu.memory_space<vmem>>, vector<1x256xf32>
    tpu.vector_store %arg56[%c0_880, %c0_881], %901 {strides = array<i32>} : memref<288x512xf32, #tpu.memory_space<vmem>>, vector<1x256xf32>,
    %903 = vector.extract_strided_slice %898 {offsets = [0, 64], sizes = [1, 64], strides = [1, 1]} : vector<1x128xf32> to vector<1x64xf32>
    %cst_882 = arith.constant dense<0.000000e+00> : vector<1x256xf32>
    %904 = tpu.matmul %903, %899, %cst_882 {dimension_numbers = #tpu.dot_dimension_numbers<[1], [0], [0], [1], [0, 0, 1, 1], [], []>} : vector<1x64xf32>, vector<64x256xf32>, vector<1x256xf32> -> vector<1x256xf32>
    %c0_883 = arith.constant 0 : index
    %c256_884 = arith.constant 256 : index
    %905 = vector.load %arg56[%c0_883, %c256_884] : memref<288x512xf32, #tpu.memory_space<vmem>>, vector<1x256xf32>
    tpu.vector_store %arg56[%c0_883, %c256_884], %904 {strides = array<i32>} : memref<288x512xf32, #tpu.memory_space<vmem>>, vector<1x256xf32>,
    %c0_885 = arith.constant 0 : index
    %c0_886 = arith.constant 0 : index
    %906 = vector.load %arg56[%c0_885, %c0_886] : memref<288x512xf32, #tpu.memory_space<vmem>>, vector<1x512xf32>
    %c0_887 = arith.constant 0 : index
    %c0_888 = arith.constant 0 : index
    %907 = vector.load %arg37[%c0_887, %c0_888] : memref<2x1xf32, #tpu.memory_space<vmem>>, vector<2x1xf32>
    %c0_889 = arith.constant 0 : index
    %c0_890 = arith.constant 0 : index
    %908 = vector.load %arg38[%c0_889, %c0_890] : memref<2x1xf32, #tpu.memory_space<vmem>>, vector<2x1xf32>
    %909 = vector.broadcast %907 : vector<2x1xf32> to vector<2x512xf32>
    %910 = vector.broadcast %906 : vector<1x512xf32> to vector<2x512xf32>
    %911 = arith.mulf %909, %910 : vector<2x512xf32>
    %912 = vector.broadcast %908 : vector<2x1xf32> to vector<2x512xf32>
    %913 = arith.addf %911, %912 : vector<2x512xf32>
    %c0_891 = arith.constant 0 : index
    %c0_892 = arith.constant 0 : index
    %914 = vector.load %arg54[%c0_891, %c0_892] : memref<2x512xf32, #tpu.memory_space<vmem>>, vector<2x512xf32>
    tpu.vector_store %arg54[%c0_891, %c0_892], %913 {strides = array<i32>} : memref<2x512xf32, #tpu.memory_space<vmem>>, vector<2x512xf32>,
    return
  }
}

</mosaic_0001>

<llo_original>
// kernel: encoder_decoder_branch.1
$region0: #{encoder_decoder_branch.1}
  #allocation0 [shape = 'u32[]', space=smem, size = 0x4, offset = 0x4, fixed_abs, tag = 'smem constant byte address 0x4 - core index']
  #allocation1 [shape = 'u32[144,128]{1,0:T(1,128)}', space=vmem, size = 0x12000, scoped, tag = 'internal scratch']
  #allocation2 [shape = 'f32[32,768]{1,0:T(8,128)}', space=vmem, size = 0x18000, scoped, tag = 'scratch operand']
  #allocation3 [shape = 'f32[288,512]{1,0:T(8,128)}', space=vmem, size = 0x90000, scoped, tag = 'scratch operand']
  #allocation4 [shape = 'f32[1,1]{1,0:T(1,128)S(1)}', space=vmem, size = 0x200, scoped, tag = 'scoped memory for encoder_decoder_branch.1']
  #allocation5 [shape = 'f32[1,1]{1,0:T(1,128)S(1)}', space=vmem, size = 0x200, scoped, tag = 'scoped memory for encoder_decoder_branch.1']
  #allocation6 [shape = 'f32[1,1]{1,0:T(1,128)S(1)}', space=vmem, size = 0x200, scoped, tag = 'scoped memory for encoder_decoder_branch.1']
  #allocation7 [shape = 'f32[1,1]{1,0:T(1,128)S(1)}', space=vmem, size = 0x200, scoped, tag = 'scoped memory for encoder_decoder_branch.1']
  %s0 = inlined_call_operand.smem [shape: u32[55], index: -1, kind: input, shape index: {}]
  %s1 = sld [smem:[%s0]]
  %s2 = scalar_lea.smem %s0, 1
  %s3 = sld [smem:[%s2]]
  %s4 = scalar_lea.smem %s0, 2
  %s5 = sld [smem:[%s4]]
  %s6 = scalar_lea.smem %s0, 3
  %s7 = sld [smem:[%s6]]
  %s8 = scalar_lea.smem %s0, 4
  %s9 = sld [smem:[%s8]]
  %s10 = scalar_lea.smem %s0, 5
  %s11 = sld [smem:[%s10]]
  %s12 = scalar_lea.smem %s0, 6
  %s13 = sld [smem:[%s12]]
  %s14 = scalar_lea.smem %s0, 7
  %s15 = sld [smem:[%s14]]
  %s16 = scalar_lea.smem %s0, 8
  %s17 = sld [smem:[%s16]]
  %s18 = scalar_lea.smem %s0, 9
  %s19 = sld [smem:[%s18]]
  %s20 = scalar_lea.smem %s0, 10
  %s21 = sld [smem:[%s20]]
  %s22 = scalar_lea.smem %s0, 11
  %s23 = sld [smem:[%s22]]
  %s24 = scalar_lea.smem %s0, 12
  %s25 = sld [smem:[%s24]]
  %s26 = scalar_lea.smem %s0, 13
  %s27 = sld [smem:[%s26]]
  %s28 = scalar_lea.smem %s0, 14
  %s29 = sld [smem:[%s28]]
  %s30 = scalar_lea.smem %s0, 15
  %s31 = sld [smem:[%s30]]
  %s32 = scalar_lea.smem %s0, 16
  %s33 = sld [smem:[%s32]]
  %s34 = scalar_lea.smem %s0, 17
  %s35 = sld [smem:[%s34]]
  %s36 = scalar_lea.smem %s0, 18
  %s37 = sld [smem:[%s36]]
  %s38 = scalar_lea.smem %s0, 19
  %s39 = sld [smem:[%s38]]
  %s40 = scalar_lea.smem %s0, 20
  %s41 = sld [smem:[%s40]]
  %s42 = scalar_lea.smem %s0, 21
  %s43 = sld [smem:[%s42]]
  %s44 = scalar_lea.smem %s0, 22
  %s45 = sld [smem:[%s44]]
  %s46 = scalar_lea.smem %s0, 23
  %s47 = sld [smem:[%s46]]
  %s48 = scalar_lea.smem %s0, 24
  %s49 = sld [smem:[%s48]]
  %s50 = scalar_lea.smem %s0, 25
  %s51 = sld [smem:[%s50]]
  %s52 = scalar_lea.smem %s0, 26
  %s53 = sld [smem:[%s52]]
  %s54 = scalar_lea.smem %s0, 27
  %s55 = sld [smem:[%s54]]
  %s56 = scalar_lea.smem %s0, 28
  %s57 = sld [smem:[%s56]]
  %s58 = scalar_lea.smem %s0, 29
  %s59 = sld [smem:[%s58]]
  %s60 = scalar_lea.smem %s0, 30
  %s61 = sld [smem:[%s60]]
  %s62 = scalar_lea.smem %s0, 31
  %s63 = sld [smem:[%s62]]
  %s64 = scalar_lea.smem %s0, 32
  %s65 = sld [smem:[%s64]]
  %s66 = scalar_lea.smem %s0, 33
  %s67 = sld [smem:[%s66]]
  %s68 = scalar_lea.smem %s0, 34
  %s69 = sld [smem:[%s68]]
  %s70 = scalar_lea.smem %s0, 35
  %s71 = sld [smem:[%s70]]
  %s72 = scalar_lea.smem %s0, 36
  %s73 = sld [smem:[%s72]]
  %s74 = scalar_lea.smem %s0, 37
  %s75 = sld [smem:[%s74]]
  %s76 = scalar_lea.smem %s0, 38
  %s77 = sld [smem:[%s76]]
  %s78 = scalar_lea.smem %s0, 39
  %s79 = sld [smem:[%s78]]
  %s80 = scalar_lea.smem %s0, 40
  %s81 = sld [smem:[%s80]]
  %s82 = scalar_lea.smem %s0, 41
  %s83 = sld [smem:[%s82]]
  %s84 = scalar_lea.smem %s0, 42
  %s85 = sld [smem:[%s84]]
  %s86 = scalar_lea.smem %s0, 43
  %s87 = sld [smem:[%s86]]
  %s88 = scalar_lea.smem %s0, 44
  %s89 = sld [smem:[%s88]]
  %s90 = scalar_lea.smem %s0, 45
  %s91 = sld [smem:[%s90]]
  %s92 = scalar_lea.smem %s0, 46
  %s93 = sld [smem:[%s92]]
  %s94 = scalar_lea.smem %s0, 47
  %s95 = sld [smem:[%s94]]
  %s96 = scalar_lea.smem %s0, 48
  %s97 = sld [smem:[%s96]]
  %s98 = scalar_lea.smem %s0, 49
  %s99 = sld [smem:[%s98]]
  %s100 = scalar_lea.smem %s0, 50
  %s101 = sld [smem:[%s100]]
  %s102 = scalar_lea.smem %s0, 51
  %s103 = sld [smem:[%s102]]
  %s104 = scalar_lea.smem %s0, 52
  %s105 = sld [smem:[%s104]]
  %s106 = scalar_lea.smem %s0, 53
  %s107 = sld [smem:[%s106]]
  %s108 = scalar_lea.smem %s0, 54
  %s109 = sld [smem:[%s108]]
  %110 = xla_tuple %s99, %s101, %s103, %s105, %s107, %s109
  %s111 = sld [smem:[#allocation0]]
  $region246: #{encoder_decoder_branch.1} parent=0
    _
  %s113 = ssub.s32 1, %s111
  %s114 = scalar_select 0, %s113, %s111
  %v115 = vstv %s65
  %116 = vst [vmem:[#allocation4] sm:$0x1] %v115
  %v117 = vstv %s67
  %118 = vst [vmem:[#allocation5] sm:$0x1] %v117
  %v119 = vstv %s71
  %120 = vst [vmem:[#allocation6] sm:$0x1] %v119
  %v121 = vstv %s73
  %122 = vst [vmem:[#allocation7] sm:$0x1] %v121
  // Predicated region
  $region2: #{encoder_decoder_branch.1} parent=0 // pred_check
    _
  $region3: #{encoder_decoder_branch.1} parent=0 // pred_check_branch
    %124 = sbr.rel (0) target = $region5
  $region4: #{encoder_decoder_branch.1} parent=0 // pred_region
    _
  $region5: #{encoder_decoder_branch.1} parent=0 // pred_fallthru
    _
  // Predicated region
  $region6: #{encoder_decoder_branch.1} parent=0 // pred_check
    _
  $region7: #{encoder_decoder_branch.1} parent=0 // pred_check_branch
    %126 = sbr.rel (0) target = $region9
  $region8: #{encoder_decoder_branch.1} parent=0 // pred_region
    _
  $region9: #{encoder_decoder_branch.1} parent=0 // pred_fallthru
    _
  // Predicated region
  $region10: #{encoder_decoder_branch.1} parent=0 // pred_check
    _
  $region11: #{encoder_decoder_branch.1} parent=0 // pred_check_branch
    %128 = sbr.rel (0) target = $region13
  $region12: #{encoder_decoder_branch.1} parent=0 // pred_region
    _
  $region13: #{encoder_decoder_branch.1} parent=0 // pred_fallthru
    _
  // Predicated region
  $region14: #{encoder_decoder_branch.1} parent=0 // pred_check
    _
  $region15: #{encoder_decoder_branch.1} parent=0 // pred_check_branch
    %130 = sbr.rel (0) target = $region17
  $region16: #{encoder_decoder_branch.1} parent=0 // pred_region
    _
  $region17: #{encoder_decoder_branch.1} parent=0 // pred_fallthru
    _
  // Predicated region
  $region18: #{encoder_decoder_branch.1} parent=0 // pred_check
    _
  $region19: #{encoder_decoder_branch.1} parent=0 // pred_check_branch
    %132 = sbr.rel (0) target = $region21
  $region20: #{encoder_decoder_branch.1} parent=0 // pred_region
    _
  $region21: #{encoder_decoder_branch.1} parent=0 // pred_fallthru
    _
  // Predicated region
  $region22: #{encoder_decoder_branch.1} parent=0 // pred_check
    _
  $region23: #{encoder_decoder_branch.1} parent=0 // pred_check_branch
    %134 = sbr.rel (0) target = $region25
  $region24: #{encoder_decoder_branch.1} parent=0 // pred_region
    _
  $region25: #{encoder_decoder_branch.1} parent=0 // pred_fallthru
    _
  // Predicated region
  $region26: #{encoder_decoder_branch.1} parent=0 // pred_check
    _
  $region27: #{encoder_decoder_branch.1} parent=0 // pred_check_branch
    %136 = sbr.rel (0) target = $region29
  $region28: #{encoder_decoder_branch.1} parent=0 // pred_region
    _
  $region29: #{encoder_decoder_branch.1} parent=0 // pred_fallthru
    _
  // Predicated region
  $region30: #{encoder_decoder_branch.1} parent=0 // pred_check
    _
  $region31: #{encoder_decoder_branch.1} parent=0 // pred_check_branch
    %138 = sbr.rel (0) target = $region33
  $region32: #{encoder_decoder_branch.1} parent=0 // pred_region
    _
  $region33: #{encoder_decoder_branch.1} parent=0 // pred_fallthru
    _
  // Predicated region
  $region34: #{encoder_decoder_branch.1} parent=0 // pred_check
    _
  $region35: #{encoder_decoder_branch.1} parent=0 // pred_check_branch
    %140 = sbr.rel (0) target = $region37
  $region36: #{encoder_decoder_branch.1} parent=0 // pred_region
    _
  $region37: #{encoder_decoder_branch.1} parent=0 // pred_fallthru
    _
  // Predicated region
  $region38: #{encoder_decoder_branch.1} parent=0 // pred_check
    _
  $region39: #{encoder_decoder_branch.1} parent=0 // pred_check_branch
    %142 = sbr.rel (0) target = $region41
  $region40: #{encoder_decoder_branch.1} parent=0 // pred_region
    _
  $region41: #{encoder_decoder_branch.1} parent=0 // pred_fallthru
    _
  // Predicated region
  $region42: #{encoder_decoder_branch.1} parent=0 // pred_check
    _
  $region43: #{encoder_decoder_branch.1} parent=0 // pred_check_branch
    %144 = sbr.rel (0) target = $region45
  $region44: #{encoder_decoder_branch.1} parent=0 // pred_region
    _
  $region45: #{encoder_decoder_branch.1} parent=0 // pred_fallthru
    _
  // Predicated region
  $region46: #{encoder_decoder_branch.1} parent=0 // pred_check
    _
  $region47: #{encoder_decoder_branch.1} parent=0 // pred_check_branch
    %146 = sbr.rel (0) target = $region49
  $region48: #{encoder_decoder_branch.1} parent=0 // pred_region
    _
  $region49: #{encoder_decoder_branch.1} parent=0 // pred_fallthru
    _
  // Predicated region
  $region50: #{encoder_decoder_branch.1} parent=0 // pred_check
    _
  $region51: #{encoder_decoder_branch.1} parent=0 // pred_check_branch
    %148 = sbr.rel (0) target = $region53
  $region52: #{encoder_decoder_branch.1} parent=0 // pred_region
    _
  $region53: #{encoder_decoder_branch.1} parent=0 // pred_fallthru
    _
  // Predicated region
  $region54: #{encoder_decoder_branch.1} parent=0 // pred_check
    _
  $region55: #{encoder_decoder_branch.1} parent=0 // pred_check_branch
    %150 = sbr.rel (0) target = $region57
  $region56: #{encoder_decoder_branch.1} parent=0 // pred_region
    _
  $region57: #{encoder_decoder_branch.1} parent=0 // pred_fallthru
    _
  // Predicated region
  $region58: #{encoder_decoder_branch.1} parent=0 // pred_check
    _
  $region59: #{encoder_decoder_branch.1} parent=0 // pred_check_branch
    %152 = sbr.rel (0) target = $region61
  $region60: #{encoder_decoder_branch.1} parent=0 // pred_region
    _
  $region61: #{encoder_decoder_branch.1} parent=0 // pred_fallthru
    _
  // Predicated region
  $region62: #{encoder_decoder_branch.1} parent=0 // pred_check
    _
  $region63: #{encoder_decoder_branch.1} parent=0 // pred_check_branch
    %154 = sbr.rel (0) target = $region65
  $region64: #{encoder_decoder_branch.1} parent=0 // pred_region
    _
  $region65: #{encoder_decoder_branch.1} parent=0 // pred_fallthru
    _
  // Predicated region
  $region66: #{encoder_decoder_branch.1} parent=0 // pred_check
    _
  $region67: #{encoder_decoder_branch.1} parent=0 // pred_check_branch
    %156 = sbr.rel (0) target = $region69
  $region68: #{encoder_decoder_branch.1} parent=0 // pred_region
    _
  $region69: #{encoder_decoder_branch.1} parent=0 // pred_fallthru
    _
  // Predicated region
  $region70: #{encoder_decoder_branch.1} parent=0 // pred_check
    _
  $region71: #{encoder_decoder_branch.1} parent=0 // pred_check_branch
    %158 = sbr.rel (0) target = $region73
  $region72: #{encoder_decoder_branch.1} parent=0 // pred_region
    _
  $region73: #{encoder_decoder_branch.1} parent=0 // pred_fallthru
    _
  // Predicated region
  $region74: #{encoder_decoder_branch.1} parent=0 // pred_check
    _
  $region75: #{encoder_decoder_branch.1} parent=0 // pred_check_branch
    %160 = sbr.rel (0) target = $region77
  $region76: #{encoder_decoder_branch.1} parent=0 // pred_region
    _
  $region77: #{encoder_decoder_branch.1} parent=0 // pred_fallthru
    _
  // Predicated region
  $region78: #{encoder_decoder_branch.1} parent=0 // pred_check
    _
  $region79: #{encoder_decoder_branch.1} parent=0 // pred_check_branch
    %162 = sbr.rel (0) target = $region81
  $region80: #{encoder_decoder_branch.1} parent=0 // pred_region
    _
  $region81: #{encoder_decoder_branch.1} parent=0 // pred_fallthru
    _
  // Predicated region
  $region82: #{encoder_decoder_branch.1} parent=0 // pred_check
    _
  $region83: #{encoder_decoder_branch.1} parent=0 // pred_check_branch
    %164 = sbr.rel (0) target = $region85
  $region84: #{encoder_decoder_branch.1} parent=0 // pred_region
    _
  $region85: #{encoder_decoder_branch.1} parent=0 // pred_fallthru
    _
  // Predicated region
  $region86: #{encoder_decoder_branch.1} parent=0 // pred_check
    _
  $region87: #{encoder_decoder_branch.1} parent=0 // pred_check_branch
    %166 = sbr.rel (0) target = $region89
  $region88: #{encoder_decoder_branch.1} parent=0 // pred_region
    _
  $region89: #{encoder_decoder_branch.1} parent=0 // pred_fallthru
    _
  // Predicated region
  $region90: #{encoder_decoder_branch.1} parent=0 // pred_check
    _
  $region91: #{encoder_decoder_branch.1} parent=0 // pred_check_branch
    %168 = sbr.rel (0) target = $region93
  $region92: #{encoder_decoder_branch.1} parent=0 // pred_region
    _
  $region93: #{encoder_decoder_branch.1} parent=0 // pred_fallthru
    _
  // Predicated region
  $region94: #{encoder_decoder_branch.1} parent=0 // pred_check
    _
  $region95: #{encoder_decoder_branch.1} parent=0 // pred_check_branch
    %170 = sbr.rel (0) target = $region97
  $region96: #{encoder_decoder_branch.1} parent=0 // pred_region
    _
  $region97: #{encoder_decoder_branch.1} parent=0 // pred_fallthru
    _
  // Predicated region
  $region98: #{encoder_decoder_branch.1} parent=0 // pred_check
    _
  $region99: #{encoder_decoder_branch.1} parent=0 // pred_check_branch
    %172 = sbr.rel (0) target = $region101
  $region100: #{encoder_decoder_branch.1} parent=0 // pred_region
    _
  $region101: #{encoder_decoder_branch.1} parent=0 // pred_fallthru
    _
  // Predicated region
  $region102: #{encoder_decoder_branch.1} parent=0 // pred_check
    _
  $region103: #{encoder_decoder_branch.1} parent=0 // pred_check_branch
    %174 = sbr.rel (0) target = $region105
  $region104: #{encoder_decoder_branch.1} parent=0 // pred_region
    _
  $region105: #{encoder_decoder_branch.1} parent=0 // pred_fallthru
    _
  // Predicated region
  $region106: #{encoder_decoder_branch.1} parent=0 // pred_check
    _
  $region107: #{encoder_decoder_branch.1} parent=0 // pred_check_branch
    %176 = sbr.rel (0) target = $region109
  $region108: #{encoder_decoder_branch.1} parent=0 // pred_region
    _
  $region109: #{encoder_decoder_branch.1} parent=0 // pred_fallthru
    _
  // Predicated region
  $region110: #{encoder_decoder_branch.1} parent=0 // pred_check
    _
  $region111: #{encoder_decoder_branch.1} parent=0 // pred_check_branch
    %178 = sbr.rel (0) target = $region113
  $region112: #{encoder_decoder_branch.1} parent=0 // pred_region
    _
  $region113: #{encoder_decoder_branch.1} parent=0 // pred_fallthru
    _
  // Predicated region
  $region114: #{encoder_decoder_branch.1} parent=0 // pred_check
    _
  $region115: #{encoder_decoder_branch.1} parent=0 // pred_check_branch
    %180 = sbr.rel (0) target = $region117
  $region116: #{encoder_decoder_branch.1} parent=0 // pred_region
    _
  $region117: #{encoder_decoder_branch.1} parent=0 // pred_fallthru
    _
  // Predicated region
  $region118: #{encoder_decoder_branch.1} parent=0 // pred_check
    _
  $region119: #{encoder_decoder_branch.1} parent=0 // pred_check_branch
    %182 = sbr.rel (0) target = $region121
  $region120: #{encoder_decoder_branch.1} parent=0 // pred_region
    _
  $region121: #{encoder_decoder_branch.1} parent=0 // pred_fallthru
    _
  // Predicated region
  $region122: #{encoder_decoder_branch.1} parent=0 // pred_check
    _
  $region123: #{encoder_decoder_branch.1} parent=0 // pred_check_branch
    %184 = sbr.rel (0) target = $region125
  $region124: #{encoder_decoder_branch.1} parent=0 // pred_region
    _
  $region125: #{encoder_decoder_branch.1} parent=0 // pred_fallthru
    _
  // Predicated region
  $region126: #{encoder_decoder_branch.1} parent=0 // pred_check
    _
  $region127: #{encoder_decoder_branch.1} parent=0 // pred_check_branch
    %186 = sbr.rel (0) target = $region129
  $region128: #{encoder_decoder_branch.1} parent=0 // pred_region
    _
  $region129: #{encoder_decoder_branch.1} parent=0 // pred_fallthru
    _
  // Predicated region
  $region130: #{encoder_decoder_branch.1} parent=0 // pred_check
    _
  $region131: #{encoder_decoder_branch.1} parent=0 // pred_check_branch
    %188 = sbr.rel (0) target = $region133
  $region132: #{encoder_decoder_branch.1} parent=0 // pred_region
    _
  $region133: #{encoder_decoder_branch.1} parent=0 // pred_fallthru
    _
  // Predicated region
  $region134: #{encoder_decoder_branch.1} parent=0 // pred_check
    _
  $region135: #{encoder_decoder_branch.1} parent=0 // pred_check_branch
    %190 = sbr.rel (0) target = $region137
  $region136: #{encoder_decoder_branch.1} parent=0 // pred_region
    _
  $region137: #{encoder_decoder_branch.1} parent=0 // pred_fallthru
    _
  // Predicated region
  $region138: #{encoder_decoder_branch.1} parent=0 // pred_check
    _
  $region139: #{encoder_decoder_branch.1} parent=0 // pred_check_branch
    %192 = sbr.rel (0) target = $region141
  $region140: #{encoder_decoder_branch.1} parent=0 // pred_region
    _
  $region141: #{encoder_decoder_branch.1} parent=0 // pred_fallthru
    _
  // Predicated region
  $region142: #{encoder_decoder_branch.1} parent=0 // pred_check
    _
  $region143: #{encoder_decoder_branch.1} parent=0 // pred_check_branch
    %194 = sbr.rel (0) target = $region145
  $region144: #{encoder_decoder_branch.1} parent=0 // pred_region
    _
  $region145: #{encoder_decoder_branch.1} parent=0 // pred_fallthru
    _
  // Predicated region
  $region146: #{encoder_decoder_branch.1} parent=0 // pred_check
    _
  $region147: #{encoder_decoder_branch.1} parent=0 // pred_check_branch
    %196 = sbr.rel (0) target = $region149
  $region148: #{encoder_decoder_branch.1} parent=0 // pred_region
    _
  $region149: #{encoder_decoder_branch.1} parent=0 // pred_fallthru
    _
  // Predicated region
  $region150: #{encoder_decoder_branch.1} parent=0 // pred_check
    _
  $region151: #{encoder_decoder_branch.1} parent=0 // pred_check_branch
    %198 = sbr.rel (0) target = $region153
  $region152: #{encoder_decoder_branch.1} parent=0 // pred_region
    _
  $region153: #{encoder_decoder_branch.1} parent=0 // pred_fallthru
    _
  // Predicated region
  $region154: #{encoder_decoder_branch.1} parent=0 // pred_check
    _
  $region155: #{encoder_decoder_branch.1} parent=0 // pred_check_branch
    %200 = sbr.rel (0) target = $region157
  $region156: #{encoder_decoder_branch.1} parent=0 // pred_region
    _
  $region157: #{encoder_decoder_branch.1} parent=0 // pred_fallthru
    _
  // Predicated region
  $region158: #{encoder_decoder_branch.1} parent=0 // pred_check
    _
  $region159: #{encoder_decoder_branch.1} parent=0 // pred_check_branch
    %202 = sbr.rel (0) target = $region161
  $region160: #{encoder_decoder_branch.1} parent=0 // pred_region
    _
  $region161: #{encoder_decoder_branch.1} parent=0 // pred_fallthru
    _
  // Predicated region
  $region162: #{encoder_decoder_branch.1} parent=0 // pred_check
    _
  $region163: #{encoder_decoder_branch.1} parent=0 // pred_check_branch
    %204 = sbr.rel (0) target = $region165
  $region164: #{encoder_decoder_branch.1} parent=0 // pred_region
    _
  $region165: #{encoder_decoder_branch.1} parent=0 // pred_fallthru
    _
  // Predicated region
  $region166: #{encoder_decoder_branch.1} parent=0 // pred_check
    _
  $region167: #{encoder_decoder_branch.1} parent=0 // pred_check_branch
    %206 = sbr.rel (0) target = $region169
  $region168: #{encoder_decoder_branch.1} parent=0 // pred_region
    _
  $region169: #{encoder_decoder_branch.1} parent=0 // pred_fallthru
    _
  // Predicated region
  $region170: #{encoder_decoder_branch.1} parent=0 // pred_check
    _
  $region171: #{encoder_decoder_branch.1} parent=0 // pred_check_branch
    %208 = sbr.rel (0) target = $region173
  $region172: #{encoder_decoder_branch.1} parent=0 // pred_region
    _
  $region173: #{encoder_decoder_branch.1} parent=0 // pred_fallthru
    _
  // Predicated region
  $region174: #{encoder_decoder_branch.1} parent=0 // pred_check
    _
  $region175: #{encoder_decoder_branch.1} parent=0 // pred_check_branch
    %210 = sbr.rel (0) target = $region177
  $region176: #{encoder_decoder_branch.1} parent=0 // pred_region
    _
  $region177: #{encoder_decoder_branch.1} parent=0 // pred_fallthru
    _
  // Predicated region
  $region178: #{encoder_decoder_branch.1} parent=0 // pred_check
    _
  $region179: #{encoder_decoder_branch.1} parent=0 // pred_check_branch
    %212 = sbr.rel (0) target = $region181
  $region180: #{encoder_decoder_branch.1} parent=0 // pred_region
    _
  $region181: #{encoder_decoder_branch.1} parent=0 // pred_fallthru
    _
  // Predicated region
  $region182: #{encoder_decoder_branch.1} parent=0 // pred_check
    _
  $region183: #{encoder_decoder_branch.1} parent=0 // pred_check_branch
    %214 = sbr.rel (0) target = $region185
  $region184: #{encoder_decoder_branch.1} parent=0 // pred_region
    _
  $region185: #{encoder_decoder_branch.1} parent=0 // pred_fallthru
    _
  // Predicated region
  $region186: #{encoder_decoder_branch.1} parent=0 // pred_check
    _
  $region187: #{encoder_decoder_branch.1} parent=0 // pred_check_branch
    %216 = sbr.rel (0) target = $region189
  $region188: #{encoder_decoder_branch.1} parent=0 // pred_region
    _
  $region189: #{encoder_decoder_branch.1} parent=0 // pred_fallthru
    _
  // Predicated region
  $region190: #{encoder_decoder_branch.1} parent=0 // pred_check
    _
  $region191: #{encoder_decoder_branch.1} parent=0 // pred_check_branch
    %218 = sbr.rel (0) target = $region193
  $region192: #{encoder_decoder_branch.1} parent=0 // pred_region
    _
  $region193: #{encoder_decoder_branch.1} parent=0 // pred_fallthru
    _
  // Predicated region
  $region194: #{encoder_decoder_branch.1} parent=0 // pred_check
    _
  $region195: #{encoder_decoder_branch.1} parent=0 // pred_check_branch
    %220 = sbr.rel (0) target = $region197
  $region196: #{encoder_decoder_branch.1} parent=0 // pred_region
    _
  $region197: #{encoder_decoder_branch.1} parent=0 // pred_fallthru
    _
  %221 = vst [vmem:[#allocation2] sm:$0xff] 0.0
  %222 = vst [vmem:[#allocation2 + $0x8] sm:$0xff] 0.0
  %223 = vst [vmem:[#allocation2 + $0x10] sm:$0xff] 0.0
  %224 = vst [vmem:[#allocation2 + $0x18] sm:$0xff] 0.0
  %225 = vst [vmem:[#allocation2 + $0x20] sm:$0xff] 0.0
  %226 = vst [vmem:[#allocation2 + $0x28] sm:$0xff] 0.0
  %227 = vst [vmem:[#allocation2 + $0x30] sm:$0xff] 0.0
  %228 = vst [vmem:[#allocation2 + $0x38] sm:$0xff] 0.0
  %229 = vst [vmem:[#allocation2 + $0x40] sm:$0xff] 0.0
  %230 = vst [vmem:[#allocation2 + $0x48] sm:$0xff] 0.0
  %231 = vst [vmem:[#allocation2 + $0x50] sm:$0xff] 0.0
  %232 = vst [vmem:[#allocation2 + $0x58] sm:$0xff] 0.0
  %233 = vst [vmem:[#allocation2 + $0x60] sm:$0xff] 0.0
  %234 = vst [vmem:[#allocation2 + $0x68] sm:$0xff] 0.0
  %235 = vst [vmem:[#allocation2 + $0x70] sm:$0xff] 0.0
  %236 = vst [vmem:[#allocation2 + $0x78] sm:$0xff] 0.0
  %237 = vst [vmem:[#allocation2 + $0x80] sm:$0xff] 0.0
  %238 = vst [vmem:[#allocation2 + $0x88] sm:$0xff] 0.0
  %239 = vst [vmem:[#allocation2 + $0x90] sm:$0xff] 0.0
  %240 = vst [vmem:[#allocation2 + $0x98] sm:$0xff] 0.0
  %241 = vst [vmem:[#allocation2 + $0xa0] sm:$0xff] 0.0
  %242 = vst [vmem:[#allocation2 + $0xa8] sm:$0xff] 0.0
  %243 = vst [vmem:[#allocation2 + $0xb0] sm:$0xff] 0.0
  %244 = vst [vmem:[#allocation2 + $0xb8] sm:$0xff] 0.0
  %v245 = vld [vmem:[%s1] sm:$0xf]
  %v246 = vlaneseq
  %vm247 = vcmp.ge.s32.totalorder %v246, 0
  %vm248 = vcmp.lt.s32.totalorder %v246, 512
  %vm249 = vmand %vm247, %vm248
  %s250 = scalar_lea.vmem [#allocation2], 8
  %251 = vst.msk [vmem:[%s250] ss:$8 sm:$0xf] %vm249, %v245
  %252 = vst.msk [vmem:[%s250] ss:$8 sm:$0x0] %vm249, %v245
  %v253 = vld [vmem:[#allocation2] ss:$8 sm:$0xf]
  %v254 = vld [vmem:[#allocation2] ss:$8 sm:$0x10]
  %v255 = vor.u32 %v253, %v254
  %v256 = vld [vmem:[%s79] ss:$8 sm:$0xf]
  %258 = vrot.lane.b32.xlu0 %v256, 111
  %v259 = vpop.permute.xlu0 %258
  %v260 = vrot.slane %v259, 7
  %vm261 = vcmask 908288
  %v262 = vsel %vm261, %v260, %v259
  %v264 = vmul.f32 %v255, %v262
  %266 = vrot.lane.b32.xlu0 %v264, 17
  %v267 = vpop.permute.xlu0 %266
  %v268 = vrot.slane %v267, 1
  %vm269 = vcmask 138240
  %v270 = vsel %vm269, %v267, %v268
  %272 = vst.msk [vmem:[#allocation3] ss:$8 sm:$0xf] %vm249, %v270
  %273 = vst.msk [vmem:[#allocation3] ss:$8 sm:$0x0] %vm249, %v270
  %v274 = vld [vmem:[#allocation2] ss:$8 sm:$0xf]
  %v275 = vld [vmem:[#allocation2] ss:$8 sm:$0x10]
  %v276 = vor.u32 %v274, %v275
  %s277 = scalar_lea.vmem %s79, 1
  %v278 = vld [vmem:[%s277] ss:$8 sm:$0xf]
  %280 = vrot.lane.b32.xlu0 %v278, 112
  %v281 = vpop.permute.xlu0 %280
  %v282 = vrot.slane %v281, 7
  %vm283 = vcmask 916480
  %v284 = vsel %vm283, %v282, %v281
  %v286 = vmul.f32 %v276, %v284
  %288 = vrot.lane.b32.xlu0 %v286, 16
  %v289 = vpop.permute.xlu0 %288
  %v290 = vrot.slane %v289, 1
  %vm291 = vcmask 130048
  %v292 = vsel %vm291, %v289, %v290
  %s294 = scalar_lea.vmem [#allocation3], 1
  %295 = vst.msk [vmem:[%s294] ss:$8 sm:$0xf] %vm249, %v292
  %296 = vst.msk [vmem:[%s294] ss:$8 sm:$0x0] %vm249, %v292
  %v297 = vld [vmem:[#allocation2] ss:$8 sm:$0xf]
  %v298 = vld [vmem:[#allocation2] ss:$8 sm:$0x10]
  %v299 = vor.u32 %v297, %v298
  %s300 = scalar_lea.vmem %s79, 2
  %v301 = vld [vmem:[%s300] ss:$8 sm:$0xf]
  %303 = vrot.lane.b32.xlu0 %v301, 113
  %v304 = vpop.permute.xlu0 %303
  %v305 = vrot.slane %v304, 7
  %vm306 = vcmask 924672
  %v307 = vsel %vm306, %v305, %v304
  %v309 = vmul.f32 %v299, %v307
  %311 = vrot.lane.b32.xlu0 %v309, 15
  %v312 = vpop.permute.xlu0 %311
  %v313 = vrot.slane %v312, 1
  %vm314 = vcmask 121856
  %v315 = vsel %vm314, %v312, %v313
  %s317 = scalar_lea.vmem [#allocation3], 2
  %318 = vst.msk [vmem:[%s317] ss:$8 sm:$0xf] %vm249, %v315
  %319 = vst.msk [vmem:[%s317] ss:$8 sm:$0x0] %vm249, %v315
  %v320 = vld [vmem:[#allocation2] ss:$8 sm:$0xf]
  %v321 = vld [vmem:[#allocation2] ss:$8 sm:$0x10]
  %v322 = vor.u32 %v320, %v321
  %s323 = scalar_lea.vmem %s79, 3
  %v324 = vld [vmem:[%s323] ss:$8 sm:$0xf]
  %326 = vrot.lane.b32.xlu0 %v324, 127
  %v327 = vpop.permute.xlu0 %326
  %v328 = vrot.slane %v327, 7
  %vm329 = vcmask 1039360
  %v330 = vsel %vm329, %v328, %v327
  %v332 = vmul.f32 %v322, %v330
  %334 = vrot.lane.b32.xlu0 %v332, 1
  %v335 = vpop.permute.xlu0 %334
  %v336 = vrot.slane %v335, 1
  %vm337 = vcmask 7168
  %v338 = vsel %vm337, %v335, %v336
  %s340 = scalar_lea.vmem [#allocation3], 3
  %341 = vst.msk [vmem:[%s340] ss:$8 sm:$0xf] %vm249, %v338
  %342 = vst.msk [vmem:[%s340] ss:$8 sm:$0x0] %vm249, %v338
  %v343 = vld [vmem:[%s250] ss:$8 sm:$0xf]
  %s344 = scalar_lea.vmem [#allocation3], 4
  %345 = vst.msk [vmem:[%s344] ss:$8 sm:$0xf] %vm249, %v343
  %346 = vst.msk [vmem:[%s344] ss:$8 sm:$0x0] %vm249, %v343
  %v347 = vld [vmem:[%s250] ss:$8 sm:$0xf]
  %v348 = vld [vmem:[%s250] ss:$8 sm:$0x10]
  %v349 = vor.u32 %v347, %v348
  %s350 = scalar_lea.vmem %s79, 4
  %v351 = vld [vmem:[%s350] ss:$8 sm:$0xf]
  %353 = vrot.lane.b32.xlu0 %v351, 1
  %v354 = vpop.permute.xlu0 %353
  %v355 = vrot.slane %v354, 7
  %v356 = vsel %vm337, %v355, %v354
  %v358 = vmul.f32 %v349, %v356
  %360 = vrot.lane.b32.xlu0 %v358, 127
  %v361 = vpop.permute.xlu0 %360
  %v362 = vrot.slane %v361, 1
  %v363 = vsel %vm329, %v361, %v362
  %s365 = scalar_lea.vmem [#allocation3], 5
  %366 = vst.msk [vmem:[%s365] ss:$8 sm:$0xf] %vm249, %v363
  %367 = vst.msk [vmem:[%s365] ss:$8 sm:$0x0] %vm249, %v363
  %v368 = vld [vmem:[%s250] ss:$8 sm:$0xf]
  %v369 = vld [vmem:[%s250] ss:$8 sm:$0x10]
  %v370 = vor.u32 %v368, %v369
  %s371 = scalar_lea.vmem %s79, 5
  %v372 = vld [vmem:[%s371] ss:$8 sm:$0xf]
  %374 = vrot.lane.b32.xlu0 %v372, 15
  %v375 = vpop.permute.xlu0 %374
  %v376 = vrot.slane %v375, 7
  %v377 = vsel %vm314, %v376, %v375
  %v379 = vmul.f32 %v370, %v377
  %381 = vrot.lane.b32.xlu0 %v379, 113
  %v382 = vpop.permute.xlu0 %381
  %v383 = vrot.slane %v382, 1
  %v384 = vsel %vm306, %v382, %v383
  %s386 = scalar_lea.vmem [#allocation3], 6
  %387 = vst.msk [vmem:[%s386] ss:$8 sm:$0xf] %vm249, %v384
  %388 = vst.msk [vmem:[%s386] ss:$8 sm:$0x0] %vm249, %v384
  %v389 = vld [vmem:[%s250] ss:$8 sm:$0xf]
  %v390 = vld [vmem:[%s250] ss:$8 sm:$0x10]
  %v391 = vor.u32 %v389, %v390
  %s392 = scalar_lea.vmem %s79, 6
  %v393 = vld [vmem:[%s392] ss:$8 sm:$0xf]
  %395 = vrot.lane.b32.xlu0 %v393, 16
  %v396 = vpop.permute.xlu0 %395
  %v397 = vrot.slane %v396, 7
  %v398 = vsel %vm291, %v397, %v396
  %v400 = vmul.f32 %v391, %v398
  %402 = vrot.lane.b32.xlu0 %v400, 112
  %v403 = vpop.permute.xlu0 %402
  %v404 = vrot.slane %v403, 1
  %v405 = vsel %vm283, %v403, %v404
  %s407 = scalar_lea.vmem [#allocation3], 7
  %408 = vst.msk [vmem:[%s407] ss:$8 sm:$0xf] %vm249, %v405
  %409 = vst.msk [vmem:[%s407] ss:$8 sm:$0x0] %vm249, %v405
  %v410 = vld [vmem:[%s250] ss:$8 sm:$0xf]
  %v411 = vld [vmem:[%s250] ss:$8 sm:$0x10]
  %v412 = vor.u32 %v410, %v411
  %s413 = scalar_lea.vmem %s79, 7
  %v414 = vld [vmem:[%s413] ss:$8 sm:$0xf]
  %416 = vrot.lane.b32.xlu0 %v414, 17
  %v417 = vpop.permute.xlu0 %416
  %v418 = vrot.slane %v417, 7
  %v419 = vsel %vm269, %v418, %v417
  %v421 = vmul.f32 %v412, %v419
  %423 = vrot.lane.b32.xlu0 %v421, 111
  %v424 = vpop.permute.xlu0 %423
  %v425 = vrot.slane %v424, 1
  %v426 = vsel %vm261, %v424, %v425
  %s428 = scalar_lea.vmem [#allocation3], 32
  %429 = vst.msk [vmem:[%s428] ss:$8 sm:$0xf] %vm249, %v426
  %430 = vst.msk [vmem:[%s428] ss:$8 sm:$0x0] %vm249, %v426
  %v431 = vld [vmem:[%s3] sm:$0xff]
  %v432 = vld [vmem:[#allocation3] sm:$0xff]
  %v433 = vld [vmem:[#allocation3 + $0x8] sm:$0xff]
  %v434 = vld [vmem:[#allocation3 + $0x10] sm:$0xff]
  %v435 = vld [vmem:[#allocation3 + $0x18] sm:$0xff]
  %v436 = vld [vmem:[#allocation3 + $0x20] sm:$0x1]
  %v437 = vld [vmem:[#allocation3 + $0x28] sm:$0x1]
  %v438 = vld [vmem:[#allocation3 + $0x30] sm:$0x1]
  %v439 = vld [vmem:[#allocation3 + $0x38] sm:$0x1]
  %vm440 = vcmask 72704
  %v442 = vsel %vm440, %v431, 0
  %vm444 = vcmask 1040384
  %v446 = vsel %vm444, %v436, 0
  %v449 = vsel %vm444, %v437, 0
  %v452 = vsel %vm444, %v438, 0
  %v455 = vsel %vm444, %v439, 0
  %457 = vmatprep.subr.mxu0 %v433
  %458 = vmatpush1.msra.mxu0 %v432
  %459 = vmatprep.subr.mxu0 %v449
  %460 = vmatpush1.msra.mxu0 %v446
  %461 = vmatprep.subr.mxu0 0.0
  %462 = vmatpush1.msra.mxu0 0.0
  %463 = vmatprep.subr.mxu0 0.0
  %464 = vmatpush1.msra.mxu0 0.0
  %465 = vmatprep.subr.mxu0 0.0
  %466 = vmatpush1.msra.mxu0 0.0
  %467 = vmatprep.subr.mxu0 0.0
  %468 = vmatpush1.msra.mxu0 0.0
  %469 = vmatprep.subr.mxu0 0.0
  %470 = vmatpush1.msra.mxu0 0.0
  %471 = vmatprep.subr.mxu0 0.0
  %472 = vmatpush1.msra.mxu0 0.0
  %473 = vmatprep.subr.mxu0 0.0
  %474 = vmatpush1.msra.mxu0 0.0
  %475 = vmatprep.subr.mxu0 0.0
  %476 = vmatpush1.msra.mxu0 0.0
  %477 = vmatprep.subr.mxu0 0.0
  %478 = vmatpush1.msra.mxu0 0.0
  %479 = vmatprep.subr.mxu0 0.0
  %480 = vmatpush1.msra.mxu0 0.0
  %481 = vmatprep.subr.mxu0 0.0
  %482 = vmatpush1.msra.mxu0 0.0
  %483 = vmatprep.subr.mxu0 0.0
  %484 = vmatpush1.msra.mxu0 0.0
  %485 = vmatprep.subr.mxu0 0.0
  %486 = vmatpush1.msra.mxu0 0.0
  %487 = vmatprep.subr.mxu0 0.0
  %488 = vmatpush1.msra.mxu0 0.0
  %489 = vmatprep.subr.mxu0 0.0
  %490 = vmatpush1.msra.mxu0 0.0
  %491 = vmatprep.subr.mxu0 0.0
  %492 = vmatpush1.msra.mxu0 0.0
  %493 = vmatprep.subr.mxu0 0.0
  %494 = vmatpush1.msra.mxu0 0.0
  %495 = vmatprep.subr.mxu0 0.0
  %496 = vmatpush1.msra.mxu0 0.0
  %497 = vmatprep.subr.mxu0 0.0
  %498 = vmatpush1.msra.mxu0 0.0
  %499 = vmatprep.subr.mxu0 0.0
  %500 = vmatpush1.msra.mxu0 0.0
  %501 = vmatprep.subr.mxu0 0.0
  %502 = vmatpush1.msra.mxu0 0.0
  %503 = vmatprep.subr.mxu0 0.0
  %504 = vmatpush1.msra.mxu0 0.0
  %505 = vmatprep.subr.mxu0 0.0
  %506 = vmatpush1.msra.mxu0 0.0
  %507 = vmatprep.subr.mxu0 0.0
  %508 = vmatpush1.msra.mxu0 0.0
  %509 = vmatprep.subr.mxu0 0.0
  %510 = vmatpush1.msra.mxu0 0.0
  %511 = vmatprep.subr.mxu0 0.0
  %512 = vmatpush1.msra.mxu0 0.0
  %513 = vmatprep.subr.mxu0 0.0
  %514 = vmatpush1.msra.mxu0 0.0
  %515 = vmatprep.subr.mxu0 0.0
  %516 = vmatpush1.msra.mxu0 0.0
  %517 = vmatprep.subr.mxu0 0.0
  %518 = vmatpush1.msra.mxu0 0.0
  %519 = vmatprep.subr.mxu0 0.0
  %520 = vmatpush1.msra.mxu0 0.0
  %521 = vmatprep.mubr.f32.mxu0 0.0
  %522 = vmatmul.mubr.f32.gmra.mrb[0].mxu0 %v442
  %v523 = vpop.f32.mrb[0].mxu0
  %v524 = vadd.f32 0.0, %v523
  %v525 = vpop.f32.mrb[0].mxu0
  %v526 = vadd.f32 0.0, %v525
  %527 = vdwg.mxu0
  %528 = vmatprep.subr.mxu0 %v435
  %529 = vmatpush1.msra.mxu0 %v434
  %530 = vmatprep.subr.mxu0 %v455
  %531 = vmatpush1.msra.mxu0 %v452
  %532 = vmatprep.subr.mxu0 0.0
  %533 = vmatpush1.msra.mxu0 0.0
  %534 = vmatprep.subr.mxu0 0.0
  %535 = vmatpush1.msra.mxu0 0.0
  %536 = vmatprep.subr.mxu0 0.0
  %537 = vmatpush1.msra.mxu0 0.0
  %538 = vmatprep.subr.mxu0 0.0
  %539 = vmatpush1.msra.mxu0 0.0
  %540 = vmatprep.subr.mxu0 0.0
  %541 = vmatpush1.msra.mxu0 0.0
  %542 = vmatprep.subr.mxu0 0.0
  %543 = vmatpush1.msra.mxu0 0.0
  %544 = vmatprep.subr.mxu0 0.0
  %545 = vmatpush1.msra.mxu0 0.0
  %546 = vmatprep.subr.mxu0 0.0
  %547 = vmatpush1.msra.mxu0 0.0
  %548 = vmatprep.subr.mxu0 0.0
  %549 = vmatpush1.msra.mxu0 0.0
  %550 = vmatprep.subr.mxu0 0.0
  %551 = vmatpush1.msra.mxu0 0.0
  %552 = vmatprep.subr.mxu0 0.0
  %553 = vmatpush1.msra.mxu0 0.0
  %554 = vmatprep.subr.mxu0 0.0
  %555 = vmatpush1.msra.mxu0 0.0
  %556 = vmatprep.subr.mxu0 0.0
  %557 = vmatpush1.msra.mxu0 0.0
  %558 = vmatprep.subr.mxu0 0.0
  %559 = vmatpush1.msra.mxu0 0.0
  %560 = vmatprep.subr.mxu0 0.0
  %561 = vmatpush1.msra.mxu0 0.0
  %562 = vmatprep.subr.mxu0 0.0
  %563 = vmatpush1.msra.mxu0 0.0
  %564 = vmatprep.subr.mxu0 0.0
  %565 = vmatpush1.msra.mxu0 0.0
  %566 = vmatprep.subr.mxu0 0.0
  %567 = vmatpush1.msra.mxu0 0.0
  %568 = vmatprep.subr.mxu0 0.0
  %569 = vmatpush1.msra.mxu0 0.0
  %570 = vmatprep.subr.mxu0 0.0
  %571 = vmatpush1.msra.mxu0 0.0
  %572 = vmatprep.subr.mxu0 0.0
  %573 = vmatpush1.msra.mxu0 0.0
  %574 = vmatprep.subr.mxu0 0.0
  %575 = vmatpush1.msra.mxu0 0.0
  %576 = vmatprep.subr.mxu0 0.0
  %577 = vmatpush1.msra.mxu0 0.0
  %578 = vmatprep.subr.mxu0 0.0
  %579 = vmatpush1.msra.mxu0 0.0
  %580 = vmatprep.subr.mxu0 0.0
  %581 = vmatpush1.msra.mxu0 0.0
  %582 = vmatprep.subr.mxu0 0.0
  %583 = vmatpush1.msra.mxu0 0.0
  %584 = vmatprep.subr.mxu0 0.0
  %585 = vmatpush1.msra.mxu0 0.0
  %586 = vmatprep.subr.mxu0 0.0
  %587 = vmatpush1.msra.mxu0 0.0
  %588 = vmatprep.subr.mxu0 0.0
  %589 = vmatpush1.msra.mxu0 0.0
  %590 = vmatprep.subr.mxu0 0.0
  %591 = vmatpush1.msra.mxu0 0.0
  %592 = vmatprep.mubr.f32.mxu0 0.0
  %593 = vmatmul.mubr.f32.gmra.mrb[0].mxu0 %v442
  %v594 = vpop.f32.mrb[0].mxu0
  %v595 = vadd.f32 0.0, %v594
  %v596 = vpop.f32.mrb[0].mxu0
  %v597 = vadd.f32 0.0, %v596
  %598 = vdwg.mxu0
  %v599 = vadd.f32 %v524, %v526
  %v600 = vadd.f32 %v599, %v595
  %v601 = vadd.f32 %v600, %v597
  %602 = vadd.xlane.f32.xlu0 %v601
  %v603 = vpop.xlane.xlu0 %602
  %v604 = vmul.f32 %v603, 0.001953125
  %v605 = vsub.f32 %v524, %v604
  %v606 = vsub.f32 %v526, %v604
  %v607 = vsub.f32 %v595, %v604
  %v608 = vsub.f32 %v597, %v604
  %v609 = vmul.f32 %v605, %v605
  %v610 = vmul.f32 %v606, %v606
  %v611 = vmul.f32 %v607, %v607
  %v612 = vmul.f32 %v608, %v608
  %v613 = vadd.f32 %v609, %v610
  %v614 = vadd.f32 %v613, %v611
  %v615 = vadd.f32 %v614, %v612
  %616 = vadd.xlane.f32.xlu0 %v615
  %v617 = vpop.xlane.xlu0 %616
  %v618 = vmul.f32 %v617, 0.001953125
  %v619 = vld [vmem:[%s5] sm:$0xff]
  %v620 = vadd.f32 %v618, 1e-05
  %v621 = vrsqrt.pop %v620
  %v622 = vmul.f32 %v619, %v621
  %624 = vset.pattern.permute.xlu0 0
  %625 = vperm.xlu0 %624, %v622
  %v626 = vpop.permute.xlu0 %625
  %v628 = vmul.f32 %v605, %v626
  %v629 = vmul.f32 %v606, %v626
  %v630 = vmul.f32 %v607, %v626
  %v631 = vmul.f32 %v608, %v626
  %v632 = vld [vmem:[%s7] sm:$0xff]
  %634 = vset.pattern.permute.xlu0 0
  %635 = vperm.xlu0 %634, %v632
  %v636 = vpop.permute.xlu0 %635
  %v638 = vadd.f32 %v628, %v636
  %v639 = vadd.f32 %v629, %v636
  %v640 = vadd.f32 %v630, %v636
  %v641 = vadd.f32 %v631, %v636
  %vm642 = vcmp.gt.f32.partialorder %v638, 0.0
  %vm643 = vcmp.gt.f32.partialorder %v639, 0.0
  %vm644 = vcmp.gt.f32.partialorder %v640, 0.0
  %vm645 = vcmp.gt.f32.partialorder %v641, 0.0
  %v646 = vmul.f32 %v638, 0.01
  %v647 = vmul.f32 %v639, 0.01
  %v648 = vmul.f32 %v640, 0.01
  %v649 = vmul.f32 %v641, 0.01
  %v650 = vsel %vm642, %v638, %v646
  %v651 = vsel %vm643, %v639, %v647
  %v652 = vsel %vm644, %v640, %v648
  %v653 = vsel %vm645, %v641, %v649
  %654 = vst [vmem:[#allocation2 + $0x8] sm:$0xff] %v650
  %655 = vst [vmem:[#allocation2 + $0x10] sm:$0xff] %v651
  %656 = vst [vmem:[#allocation2 + $0x18] sm:$0xff] %v652
  %657 = vst [vmem:[#allocation2 + $0x20] sm:$0xff] %v653
  %v658 = vld [vmem:[#allocation2] sm:$0xff]
  %v659 = vld [vmem:[#allocation2 + $0x8] sm:$0xff]
  %v660 = vld [vmem:[#allocation2 + $0x10] sm:$0xff]
  %v661 = vld [vmem:[#allocation2 + $0x18] sm:$0xff]
  %v662 = vld [vmem:[#allocation2 + $0x20] sm:$0xff]
  %v663 = vld [vmem:[%s79] ss:$8 sm:$0xf]
  %v665 = vlaneseq
  %v666 = vshrl.u32 %v665, 7
  %v667 = vsub.s32 0, %v666
  %v668 = vrot.slane %v663, %v667
  %v669 = vlaneseq
  %v670 = vshrl.u32 %v669, 7
  %v671 = vsub.s32 1, %v670
  %v672 = vrot.slane %v663, %v671
  %v673 = vlaneseq
  %v674 = vshrl.u32 %v673, 7
  %v675 = vsub.s32 2, %v674
  %v676 = vrot.slane %v663, %v675
  %v677 = vlaneseq
  %v678 = vshrl.u32 %v677, 7
  %v679 = vsub.s32 3, %v678
  %v680 = vrot.slane %v663, %v679
  %681 = vrot.lane.b32.xlu0 %v668, 111
  %v682 = vpop.permute.xlu0 %681
  %683 = vrot.lane.b32.xlu0 %v672, 111
  %v684 = vpop.permute.xlu0 %683
  %685 = vrot.lane.b32.xlu0 %v676, 111
  %v686 = vpop.permute.xlu0 %685
  %687 = vrot.lane.b32.xlu0 %v680, 111
  %v688 = vpop.permute.xlu0 %687
  %v689 = vsel %vm261, %v682, %v684
  %v690 = vsel %vm261, %v684, %v686
  %v691 = vsel %vm261, %v686, %v688
  %v697 = vmul.f32 %v658, %v682
  %v698 = vmul.f32 %v659, %v689
  %v699 = vmul.f32 %v660, %v690
  %v700 = vmul.f32 %v661, %v691
  %v701 = vmul.f32 %v662, %v688
  %707 = vrot.lane.b32.xlu0 %v697, 17
  %v708 = vpop.permute.xlu0 %707
  %709 = vrot.lane.b32.xlu0 %v698, 17
  %v710 = vpop.permute.xlu0 %709
  %711 = vrot.lane.b32.xlu0 %v699, 17
  %v712 = vpop.permute.xlu0 %711
  %713 = vrot.lane.b32.xlu0 %v700, 17
  %v714 = vpop.permute.xlu0 %713
  %715 = vrot.lane.b32.xlu0 %v701, 17
  %v716 = vpop.permute.xlu0 %715
  %v717 = vsel %vm269, %v708, %v710
  %v718 = vsel %vm269, %v710, %v712
  %v719 = vsel %vm269, %v712, %v714
  %v720 = vsel %vm269, %v714, %v716
  %725 = vst [vmem:[#allocation3] sm:$0xff] %v717
  %726 = vst [vmem:[#allocation3 + $0x8] sm:$0xff] %v718
  %727 = vst [vmem:[#allocation3 + $0x10] sm:$0xff] %v719
  %728 = vst [vmem:[#allocation3 + $0x18] sm:$0xff] %v720
  %v729 = vld [vmem:[#allocation2] sm:$0xff]
  %v730 = vld [vmem:[#allocation2 + $0x8] sm:$0xff]
  %v731 = vld [vmem:[#allocation2 + $0x10] sm:$0xff]
  %v732 = vld [vmem:[#allocation2 + $0x18] sm:$0xff]
  %v733 = vld [vmem:[#allocation2 + $0x20] sm:$0xff]
  %v734 = vld [vmem:[%s277] ss:$8 sm:$0xf]
  %v736 = vlaneseq
  %v737 = vshrl.u32 %v736, 7
  %v738 = vsub.s32 0, %v737
  %v739 = vrot.slane %v734, %v738
  %v740 = vlaneseq
  %v741 = vshrl.u32 %v740, 7
  %v742 = vsub.s32 1, %v741
  %v743 = vrot.slane %v734, %v742
  %v744 = vlaneseq
  %v745 = vshrl.u32 %v744, 7
  %v746 = vsub.s32 2, %v745
  %v747 = vrot.slane %v734, %v746
  %v748 = vlaneseq
  %v749 = vshrl.u32 %v748, 7
  %v750 = vsub.s32 3, %v749
  %v751 = vrot.slane %v734, %v750
  %752 = vrot.lane.b32.xlu0 %v739, 112
  %v753 = vpop.permute.xlu0 %752
  %754 = vrot.lane.b32.xlu0 %v743, 112
  %v755 = vpop.permute.xlu0 %754
  %756 = vrot.lane.b32.xlu0 %v747, 112
  %v757 = vpop.permute.xlu0 %756
  %758 = vrot.lane.b32.xlu0 %v751, 112
  %v759 = vpop.permute.xlu0 %758
  %v760 = vsel %vm283, %v753, %v755
  %v761 = vsel %vm283, %v755, %v757
  %v762 = vsel %vm283, %v757, %v759
  %v768 = vmul.f32 %v729, %v753
  %v769 = vmul.f32 %v730, %v760
  %v770 = vmul.f32 %v731, %v761
  %v771 = vmul.f32 %v732, %v762
  %v772 = vmul.f32 %v733, %v759
  %778 = vrot.lane.b32.xlu0 %v768, 16
  %v779 = vpop.permute.xlu0 %778
  %780 = vrot.lane.b32.xlu0 %v769, 16
  %v781 = vpop.permute.xlu0 %780
  %782 = vrot.lane.b32.xlu0 %v770, 16
  %v783 = vpop.permute.xlu0 %782
  %784 = vrot.lane.b32.xlu0 %v771, 16
  %v785 = vpop.permute.xlu0 %784
  %786 = vrot.lane.b32.xlu0 %v772, 16
  %v787 = vpop.permute.xlu0 %786
  %v788 = vsel %vm291, %v779, %v781
  %v789 = vsel %vm291, %v781, %v783
  %v790 = vsel %vm291, %v783, %v785
  %v791 = vsel %vm291, %v785, %v787
  %796 = vst [vmem:[#allocation3 + $0x20] sm:$0xff] %v788
  %797 = vst [vmem:[#allocation3 + $0x28] sm:$0xff] %v789
  %798 = vst [vmem:[#allocation3 + $0x30] sm:$0xff] %v790
  %799 = vst [vmem:[#allocation3 + $0x38] sm:$0xff] %v791
  %v800 = vld [vmem:[#allocation2] sm:$0xff]
  %v801 = vld [vmem:[#allocation2 + $0x8] sm:$0xff]
  %v802 = vld [vmem:[#allocation2 + $0x10] sm:$0xff]
  %v803 = vld [vmem:[#allocation2 + $0x18] sm:$0xff]
  %v804 = vld [vmem:[#allocation2 + $0x20] sm:$0xff]
  %v805 = vld [vmem:[%s300] ss:$8 sm:$0xf]
  %v807 = vlaneseq
  %v808 = vshrl.u32 %v807, 7
  %v809 = vsub.s32 0, %v808
  %v810 = vrot.slane %v805, %v809
  %v811 = vlaneseq
  %v812 = vshrl.u32 %v811, 7
  %v813 = vsub.s32 1, %v812
  %v814 = vrot.slane %v805, %v813
  %v815 = vlaneseq
  %v816 = vshrl.u32 %v815, 7
  %v817 = vsub.s32 2, %v816
  %v818 = vrot.slane %v805, %v817
  %v819 = vlaneseq
  %v820 = vshrl.u32 %v819, 7
  %v821 = vsub.s32 3, %v820
  %v822 = vrot.slane %v805, %v821
  %823 = vrot.lane.b32.xlu0 %v810, 113
  %v824 = vpop.permute.xlu0 %823
  %825 = vrot.lane.b32.xlu0 %v814, 113
  %v826 = vpop.permute.xlu0 %825
  %827 = vrot.lane.b32.xlu0 %v818, 113
  %v828 = vpop.permute.xlu0 %827
  %829 = vrot.lane.b32.xlu0 %v822, 113
  %v830 = vpop.permute.xlu0 %829
  %v831 = vsel %vm306, %v824, %v826
  %v832 = vsel %vm306, %v826, %v828
  %v833 = vsel %vm306, %v828, %v830
  %v839 = vmul.f32 %v800, %v824
  %v840 = vmul.f32 %v801, %v831
  %v841 = vmul.f32 %v802, %v832
  %v842 = vmul.f32 %v803, %v833
  %v843 = vmul.f32 %v804, %v830
  %849 = vrot.lane.b32.xlu0 %v839, 15
  %v850 = vpop.permute.xlu0 %849
  %851 = vrot.lane.b32.xlu0 %v840, 15
  %v852 = vpop.permute.xlu0 %851
  %853 = vrot.lane.b32.xlu0 %v841, 15
  %v854 = vpop.permute.xlu0 %853
  %855 = vrot.lane.b32.xlu0 %v842, 15
  %v856 = vpop.permute.xlu0 %855
  %857 = vrot.lane.b32.xlu0 %v843, 15
  %v858 = vpop.permute.xlu0 %857
  %v859 = vsel %vm314, %v850, %v852
  %v860 = vsel %vm314, %v852, %v854
  %v861 = vsel %vm314, %v854, %v856
  %v862 = vsel %vm314, %v856, %v858
  %867 = vst [vmem:[#allocation3 + $0x40] sm:$0xff] %v859
  %868 = vst [vmem:[#allocation3 + $0x48] sm:$0xff] %v860
  %869 = vst [vmem:[#allocation3 + $0x50] sm:$0xff] %v861
  %870 = vst [vmem:[#allocation3 + $0x58] sm:$0xff] %v862
  %v871 = vld [vmem:[#allocation2] sm:$0xff]
  %v872 = vld [vmem:[#allocation2 + $0x8] sm:$0xff]
  %v873 = vld [vmem:[#allocation2 + $0x10] sm:$0xff]
  %v874 = vld [vmem:[#allocation2 + $0x18] sm:$0xff]
  %v875 = vld [vmem:[#allocation2 + $0x20] sm:$0xff]
  %v876 = vld [vmem:[%s323] ss:$8 sm:$0xf]
  %v878 = vlaneseq
  %v879 = vshrl.u32 %v878, 7
  %v880 = vsub.s32 0, %v879
  %v881 = vrot.slane %v876, %v880
  %v882 = vlaneseq
  %v883 = vshrl.u32 %v882, 7
  %v884 = vsub.s32 1, %v883
  %v885 = vrot.slane %v876, %v884
  %v886 = vlaneseq
  %v887 = vshrl.u32 %v886, 7
  %v888 = vsub.s32 2, %v887
  %v889 = vrot.slane %v876, %v888
  %v890 = vlaneseq
  %v891 = vshrl.u32 %v890, 7
  %v892 = vsub.s32 3, %v891
  %v893 = vrot.slane %v876, %v892
  %894 = vrot.lane.b32.xlu0 %v881, 127
  %v895 = vpop.permute.xlu0 %894
  %896 = vrot.lane.b32.xlu0 %v885, 127
  %v897 = vpop.permute.xlu0 %896
  %898 = vrot.lane.b32.xlu0 %v889, 127
  %v899 = vpop.permute.xlu0 %898
  %900 = vrot.lane.b32.xlu0 %v893, 127
  %v901 = vpop.permute.xlu0 %900
  %v902 = vsel %vm329, %v895, %v897
  %v903 = vsel %vm329, %v897, %v899
  %v904 = vsel %vm329, %v899, %v901
  %v910 = vmul.f32 %v871, %v895
  %v911 = vmul.f32 %v872, %v902
  %v912 = vmul.f32 %v873, %v903
  %v913 = vmul.f32 %v874, %v904
  %v914 = vmul.f32 %v875, %v901
  %920 = vrot.lane.b32.xlu0 %v910, 1
  %v921 = vpop.permute.xlu0 %920
  %922 = vrot.lane.b32.xlu0 %v911, 1
  %v923 = vpop.permute.xlu0 %922
  %924 = vrot.lane.b32.xlu0 %v912, 1
  %v925 = vpop.permute.xlu0 %924
  %926 = vrot.lane.b32.xlu0 %v913, 1
  %v927 = vpop.permute.xlu0 %926
  %928 = vrot.lane.b32.xlu0 %v914, 1
  %v929 = vpop.permute.xlu0 %928
  %v930 = vsel %vm337, %v921, %v923
  %v931 = vsel %vm337, %v923, %v925
  %v932 = vsel %vm337, %v925, %v927
  %v933 = vsel %vm337, %v927, %v929
  %938 = vst [vmem:[#allocation3 + $0x60] sm:$0xff] %v930
  %939 = vst [vmem:[#allocation3 + $0x68] sm:$0xff] %v931
  %940 = vst [vmem:[#allocation3 + $0x70] sm:$0xff] %v932
  %941 = vst [vmem:[#allocation3 + $0x78] sm:$0xff] %v933
  %v942 = vld [vmem:[#allocation2 + $0x8] sm:$0xff]
  %v943 = vld [vmem:[#allocation2 + $0x10] sm:$0xff]
  %v944 = vld [vmem:[#allocation2 + $0x18] sm:$0xff]
  %v945 = vld [vmem:[#allocation2 + $0x20] sm:$0xff]
  %946 = vst [vmem:[#allocation3 + $0x80] sm:$0xff] %v942
  %947 = vst [vmem:[#allocation3 + $0x88] sm:$0xff] %v943
  %948 = vst [vmem:[#allocation3 + $0x90] sm:$0xff] %v944
  %949 = vst [vmem:[#allocation3 + $0x98] sm:$0xff] %v945
  %v950 = vld [vmem:[#allocation2 + $0x8] sm:$0xff]
  %v951 = vld [vmem:[#allocation2 + $0x10] sm:$0xff]
  %v952 = vld [vmem:[#allocation2 + $0x18] sm:$0xff]
  %v953 = vld [vmem:[#allocation2 + $0x20] sm:$0xff]
  %v954 = vld [vmem:[#allocation2 + $0x28] sm:$0xff]
  %v955 = vld [vmem:[%s350] ss:$8 sm:$0xf]
  %v957 = vlaneseq
  %v958 = vshrl.u32 %v957, 7
  %v959 = vsub.s32 0, %v958
  %v960 = vrot.slane %v955, %v959
  %v961 = vlaneseq
  %v962 = vshrl.u32 %v961, 7
  %v963 = vsub.s32 1, %v962
  %v964 = vrot.slane %v955, %v963
  %v965 = vlaneseq
  %v966 = vshrl.u32 %v965, 7
  %v967 = vsub.s32 2, %v966
  %v968 = vrot.slane %v955, %v967
  %v969 = vlaneseq
  %v970 = vshrl.u32 %v969, 7
  %v971 = vsub.s32 3, %v970
  %v972 = vrot.slane %v955, %v971
  %973 = vrot.lane.b32.xlu0 %v960, 1
  %v974 = vpop.permute.xlu0 %973
  %975 = vrot.lane.b32.xlu0 %v964, 1
  %v976 = vpop.permute.xlu0 %975
  %977 = vrot.lane.b32.xlu0 %v968, 1
  %v978 = vpop.permute.xlu0 %977
  %979 = vrot.lane.b32.xlu0 %v972, 1
  %v980 = vpop.permute.xlu0 %979
  %v981 = vsel %vm337, %v974, %v976
  %v982 = vsel %vm337, %v976, %v978
  %v983 = vsel %vm337, %v978, %v980
  %v989 = vmul.f32 %v950, %v974
  %v990 = vmul.f32 %v951, %v981
  %v991 = vmul.f32 %v952, %v982
  %v992 = vmul.f32 %v953, %v983
  %v993 = vmul.f32 %v954, %v980
  %999 = vrot.lane.b32.xlu0 %v989, 127
  %v1000 = vpop.permute.xlu0 %999
  %1001 = vrot.lane.b32.xlu0 %v990, 127
  %v1002 = vpop.permute.xlu0 %1001
  %1003 = vrot.lane.b32.xlu0 %v991, 127
  %v1004 = vpop.permute.xlu0 %1003
  %1005 = vrot.lane.b32.xlu0 %v992, 127
  %v1006 = vpop.permute.xlu0 %1005
  %1007 = vrot.lane.b32.xlu0 %v993, 127
  %v1008 = vpop.permute.xlu0 %1007
  %v1009 = vsel %vm329, %v1000, %v1002
  %v1010 = vsel %vm329, %v1002, %v1004
  %v1011 = vsel %vm329, %v1004, %v1006
  %v1012 = vsel %vm329, %v1006, %v1008
  %1017 = vst [vmem:[#allocation3 + $0xa0] sm:$0xff] %v1009
  %1018 = vst [vmem:[#allocation3 + $0xa8] sm:$0xff] %v1010
  %1019 = vst [vmem:[#allocation3 + $0xb0] sm:$0xff] %v1011
  %1020 = vst [vmem:[#allocation3 + $0xb8] sm:$0xff] %v1012
  %v1021 = vld [vmem:[#allocation2 + $0x8] sm:$0xff]
  %v1022 = vld [vmem:[#allocation2 + $0x10] sm:$0xff]
  %v1023 = vld [vmem:[#allocation2 + $0x18] sm:$0xff]
  %v1024 = vld [vmem:[#allocation2 + $0x20] sm:$0xff]
  %v1025 = vld [vmem:[#allocation2 + $0x28] sm:$0xff]
  %v1026 = vld [vmem:[%s371] ss:$8 sm:$0xf]
  %v1028 = vlaneseq
  %v1029 = vshrl.u32 %v1028, 7
  %v1030 = vsub.s32 0, %v1029
  %v1031 = vrot.slane %v1026, %v1030
  %v1032 = vlaneseq
  %v1033 = vshrl.u32 %v1032, 7
  %v1034 = vsub.s32 1, %v1033
  %v1035 = vrot.slane %v1026, %v1034
  %v1036 = vlaneseq
  %v1037 = vshrl.u32 %v1036, 7
  %v1038 = vsub.s32 2, %v1037
  %v1039 = vrot.slane %v1026, %v1038
  %v1040 = vlaneseq
  %v1041 = vshrl.u32 %v1040, 7
  %v1042 = vsub.s32 3, %v1041
  %v1043 = vrot.slane %v1026, %v1042
  %1044 = vrot.lane.b32.xlu0 %v1031, 15
  %v1045 = vpop.permute.xlu0 %1044
  %1046 = vrot.lane.b32.xlu0 %v1035, 15
  %v1047 = vpop.permute.xlu0 %1046
  %1048 = vrot.lane.b32.xlu0 %v1039, 15
  %v1049 = vpop.permute.xlu0 %1048
  %1050 = vrot.lane.b32.xlu0 %v1043, 15
  %v1051 = vpop.permute.xlu0 %1050
  %v1052 = vsel %vm314, %v1045, %v1047
  %v1053 = vsel %vm314, %v1047, %v1049
  %v1054 = vsel %vm314, %v1049, %v1051
  %v1060 = vmul.f32 %v1021, %v1045
  %v1061 = vmul.f32 %v1022, %v1052
  %v1062 = vmul.f32 %v1023, %v1053
  %v1063 = vmul.f32 %v1024, %v1054
  %v1064 = vmul.f32 %v1025, %v1051
  %1070 = vrot.lane.b32.xlu0 %v1060, 113
  %v1071 = vpop.permute.xlu0 %1070
  %1072 = vrot.lane.b32.xlu0 %v1061, 113
  %v1073 = vpop.permute.xlu0 %1072
  %1074 = vrot.lane.b32.xlu0 %v1062, 113
  %v1075 = vpop.permute.xlu0 %1074
  %1076 = vrot.lane.b32.xlu0 %v1063, 113
  %v1077 = vpop.permute.xlu0 %1076
  %1078 = vrot.lane.b32.xlu0 %v1064, 113
  %v1079 = vpop.permute.xlu0 %1078
  %v1080 = vsel %vm306, %v1071, %v1073
  %v1081 = vsel %vm306, %v1073, %v1075
  %v1082 = vsel %vm306, %v1075, %v1077
  %v1083 = vsel %vm306, %v1077, %v1079
  %1088 = vst [vmem:[#allocation3 + $0xc0] sm:$0xff] %v1080
  %1089 = vst [vmem:[#allocation3 + $0xc8] sm:$0xff] %v1081
  %1090 = vst [vmem:[#allocation3 + $0xd0] sm:$0xff] %v1082
  %1091 = vst [vmem:[#allocation3 + $0xd8] sm:$0xff] %v1083
  %v1092 = vld [vmem:[#allocation2 + $0x8] sm:$0xff]
  %v1093 = vld [vmem:[#allocation2 + $0x10] sm:$0xff]
  %v1094 = vld [vmem:[#allocation2 + $0x18] sm:$0xff]
  %v1095 = vld [vmem:[#allocation2 + $0x20] sm:$0xff]
  %v1096 = vld [vmem:[#allocation2 + $0x28] sm:$0xff]
  %v1097 = vld [vmem:[%s392] ss:$8 sm:$0xf]
  %v1099 = vlaneseq
  %v1100 = vshrl.u32 %v1099, 7
  %v1101 = vsub.s32 0, %v1100
  %v1102 = vrot.slane %v1097, %v1101
  %v1103 = vlaneseq
  %v1104 = vshrl.u32 %v1103, 7
  %v1105 = vsub.s32 1, %v1104
  %v1106 = vrot.slane %v1097, %v1105
  %v1107 = vlaneseq
  %v1108 = vshrl.u32 %v1107, 7
  %v1109 = vsub.s32 2, %v1108
  %v1110 = vrot.slane %v1097, %v1109
  %v1111 = vlaneseq
  %v1112 = vshrl.u32 %v1111, 7
  %v1113 = vsub.s32 3, %v1112
  %v1114 = vrot.slane %v1097, %v1113
  %1115 = vrot.lane.b32.xlu0 %v1102, 16
  %v1116 = vpop.permute.xlu0 %1115
  %1117 = vrot.lane.b32.xlu0 %v1106, 16
  %v1118 = vpop.permute.xlu0 %1117
  %1119 = vrot.lane.b32.xlu0 %v1110, 16
  %v1120 = vpop.permute.xlu0 %1119
  %1121 = vrot.lane.b32.xlu0 %v1114, 16
  %v1122 = vpop.permute.xlu0 %1121
  %v1123 = vsel %vm291, %v1116, %v1118
  %v1124 = vsel %vm291, %v1118, %v1120
  %v1125 = vsel %vm291, %v1120, %v1122
  %v1131 = vmul.f32 %v1092, %v1116
  %v1132 = vmul.f32 %v1093, %v1123
  %v1133 = vmul.f32 %v1094, %v1124
  %v1134 = vmul.f32 %v1095, %v1125
  %v1135 = vmul.f32 %v1096, %v1122
  %1141 = vrot.lane.b32.xlu0 %v1131, 112
  %v1142 = vpop.permute.xlu0 %1141
  %1143 = vrot.lane.b32.xlu0 %v1132, 112
  %v1144 = vpop.permute.xlu0 %1143
  %1145 = vrot.lane.b32.xlu0 %v1133, 112
  %v1146 = vpop.permute.xlu0 %1145
  %1147 = vrot.lane.b32.xlu0 %v1134, 112
  %v1148 = vpop.permute.xlu0 %1147
  %1149 = vrot.lane.b32.xlu0 %v1135, 112
  %v1150 = vpop.permute.xlu0 %1149
  %v1151 = vsel %vm283, %v1142, %v1144
  %v1152 = vsel %vm283, %v1144, %v1146
  %v1153 = vsel %vm283, %v1146, %v1148
  %v1154 = vsel %vm283, %v1148, %v1150
  %1159 = vst [vmem:[#allocation3 + $0xe0] sm:$0xff] %v1151
  %1160 = vst [vmem:[#allocation3 + $0xe8] sm:$0xff] %v1152
  %1161 = vst [vmem:[#allocation3 + $0xf0] sm:$0xff] %v1153
  %1162 = vst [vmem:[#allocation3 + $0xf8] sm:$0xff] %v1154
  %v1163 = vld [vmem:[#allocation2 + $0x8] sm:$0xff]
  %v1164 = vld [vmem:[#allocation2 + $0x10] sm:$0xff]
  %v1165 = vld [vmem:[#allocation2 + $0x18] sm:$0xff]
  %v1166 = vld [vmem:[#allocation2 + $0x20] sm:$0xff]
  %v1167 = vld [vmem:[#allocation2 + $0x28] sm:$0xff]
  %v1168 = vld [vmem:[%s413] ss:$8 sm:$0xf]
  %v1170 = vlaneseq
  %v1171 = vshrl.u32 %v1170, 7
  %v1172 = vsub.s32 0, %v1171
  %v1173 = vrot.slane %v1168, %v1172
  %v1174 = vlaneseq
  %v1175 = vshrl.u32 %v1174, 7
  %v1176 = vsub.s32 1, %v1175
  %v1177 = vrot.slane %v1168, %v1176
  %v1178 = vlaneseq
  %v1179 = vshrl.u32 %v1178, 7
  %v1180 = vsub.s32 2, %v1179
  %v1181 = vrot.slane %v1168, %v1180
  %v1182 = vlaneseq
  %v1183 = vshrl.u32 %v1182, 7
  %v1184 = vsub.s32 3, %v1183
  %v1185 = vrot.slane %v1168, %v1184
  %1186 = vrot.lane.b32.xlu0 %v1173, 17
  %v1187 = vpop.permute.xlu0 %1186
  %1188 = vrot.lane.b32.xlu0 %v1177, 17
  %v1189 = vpop.permute.xlu0 %1188
  %1190 = vrot.lane.b32.xlu0 %v1181, 17
  %v1191 = vpop.permute.xlu0 %1190
  %1192 = vrot.lane.b32.xlu0 %v1185, 17
  %v1193 = vpop.permute.xlu0 %1192
  %v1194 = vsel %vm269, %v1187, %v1189
  %v1195 = vsel %vm269, %v1189, %v1191
  %v1196 = vsel %vm269, %v1191, %v1193
  %v1202 = vmul.f32 %v1163, %v1187
  %v1203 = vmul.f32 %v1164, %v1194
  %v1204 = vmul.f32 %v1165, %v1195
  %v1205 = vmul.f32 %v1166, %v1196
  %v1206 = vmul.f32 %v1167, %v1193
  %1212 = vrot.lane.b32.xlu0 %v1202, 111
  %v1213 = vpop.permute.xlu0 %1212
  %1214 = vrot.lane.b32.xlu0 %v1203, 111
  %v1215 = vpop.permute.xlu0 %1214
  %1216 = vrot.lane.b32.xlu0 %v1204, 111
  %v1217 = vpop.permute.xlu0 %1216
  %1218 = vrot.lane.b32.xlu0 %v1205, 111
  %v1219 = vpop.permute.xlu0 %1218
  %1220 = vrot.lane.b32.xlu0 %v1206, 111
  %v1221 = vpop.permute.xlu0 %1220
  %v1222 = vsel %vm261, %v1213, %v1215
  %v1223 = vsel %vm261, %v1215, %v1217
  %v1224 = vsel %vm261, %v1217, %v1219
  %v1225 = vsel %vm261, %v1219, %v1221
  %1230 = vst [vmem:[#allocation3 + $0x100] sm:$0xff] %v1222
  %1231 = vst [vmem:[#allocation3 + $0x108] sm:$0xff] %v1223
  %1232 = vst [vmem:[#allocation3 + $0x110] sm:$0xff] %v1224
  %1233 = vst [vmem:[#allocation3 + $0x118] sm:$0xff] %v1225
  %v1234 = vld [vmem:[%s9] sm:$0xff]
  %v1235 = vld [vmem:[#allocation3] sm:$0xff]
  %v1236 = vld [vmem:[#allocation3 + $0x8] sm:$0xff]
  %v1237 = vld [vmem:[#allocation3 + $0x10] sm:$0xff]
  %v1238 = vld [vmem:[#allocation3 + $0x18] sm:$0xff]
  %v1239 = vld [vmem:[#allocation3 + $0x20] sm:$0xff]
  %v1240 = vld [vmem:[#allocation3 + $0x28] sm:$0xff]
  %v1241 = vld [vmem:[#allocation3 + $0x30] sm:$0xff]
  %v1242 = vld [vmem:[#allocation3 + $0x38] sm:$0xff]
  %v1243 = vld [vmem:[#allocation3 + $0x40] sm:$0xff]
  %v1244 = vld [vmem:[#allocation3 + $0x48] sm:$0xff]
  %v1245 = vld [vmem:[#allocation3 + $0x50] sm:$0xff]
  %v1246 = vld [vmem:[#allocation3 + $0x58] sm:$0xff]
  %v1247 = vld [vmem:[#allocation3 + $0x60] sm:$0xff]
  %v1248 = vld [vmem:[#allocation3 + $0x68] sm:$0xff]
  %v1249 = vld [vmem:[#allocation3 + $0x70] sm:$0xff]
  %v1250 = vld [vmem:[#allocation3 + $0x78] sm:$0xff]
  %v1251 = vld [vmem:[#allocation3 + $0x80] sm:$0xff]
  %v1252 = vld [vmem:[#allocation3 + $0x88] sm:$0xff]
  %v1253 = vld [vmem:[#allocation3 + $0x90] sm:$0xff]
  %v1254 = vld [vmem:[#allocation3 + $0x98] sm:$0xff]
  %v1255 = vld [vmem:[#allocation3 + $0xa0] sm:$0xff]
  %v1256 = vld [vmem:[#allocation3 + $0xa8] sm:$0xff]
  %v1257 = vld [vmem:[#allocation3 + $0xb0] sm:$0xff]
  %v1258 = vld [vmem:[#allocation3 + $0xb8] sm:$0xff]
  %v1259 = vld [vmem:[#allocation3 + $0xc0] sm:$0xff]
  %v1260 = vld [vmem:[#allocation3 + $0xc8] sm:$0xff]
  %v1261 = vld [vmem:[#allocation3 + $0xd0] sm:$0xff]
  %v1262 = vld [vmem:[#allocation3 + $0xd8] sm:$0xff]
  %v1263 = vld [vmem:[#allocation3 + $0xe0] sm:$0xff]
  %v1264 = vld [vmem:[#allocation3 + $0xe8] sm:$0xff]
  %v1265 = vld [vmem:[#allocation3 + $0xf0] sm:$0xff]
  %v1266 = vld [vmem:[#allocation3 + $0xf8] sm:$0xff]
  %v1267 = vld [vmem:[#allocation3 + $0x100] sm:$0xff]
  %v1268 = vld [vmem:[#allocation3 + $0x108] sm:$0xff]
  %v1269 = vld [vmem:[#allocation3 + $0x110] sm:$0xff]
  %v1270 = vld [vmem:[#allocation3 + $0x118] sm:$0xff]
  %vm1271 = vcmask 588800
  %v1273 = vsel %vm1271, %v1234, 0
  %1275 = vmatprep.subr.mxu0 %v1236
  %1276 = vmatpush1.msra.mxu0 %v1235
  %1277 = vmatprep.subr.mxu0 %v1240
  %1278 = vmatpush1.msra.mxu0 %v1239
  %1279 = vmatprep.subr.mxu0 %v1244
  %1280 = vmatpush1.msra.mxu0 %v1243
  %1281 = vmatprep.subr.mxu0 %v1248
  %1282 = vmatpush1.msra.mxu0 %v1247
  %1283 = vmatprep.subr.mxu0 %v1252
  %1284 = vmatpush1.msra.mxu0 %v1251
  %1285 = vmatprep.subr.mxu0 %v1256
  %1286 = vmatpush1.msra.mxu0 %v1255
  %1287 = vmatprep.subr.mxu0 %v1260
  %1288 = vmatpush1.msra.mxu0 %v1259
  %1289 = vmatprep.subr.mxu0 %v1264
  %1290 = vmatpush1.msra.mxu0 %v1263
  %1291 = vmatprep.subr.mxu0 %v1268
  %1292 = vmatpush1.msra.mxu0 %v1267
  %1293 = vmatprep.subr.mxu0 0.0
  %1294 = vmatpush1.msra.mxu0 0.0
  %1295 = vmatprep.subr.mxu0 0.0
  %1296 = vmatpush1.msra.mxu0 0.0
  %1297 = vmatprep.subr.mxu0 0.0
  %1298 = vmatpush1.msra.mxu0 0.0
  %1299 = vmatprep.subr.mxu0 0.0
  %1300 = vmatpush1.msra.mxu0 0.0
  %1301 = vmatprep.subr.mxu0 0.0
  %1302 = vmatpush1.msra.mxu0 0.0
  %1303 = vmatprep.subr.mxu0 0.0
  %1304 = vmatpush1.msra.mxu0 0.0
  %1305 = vmatprep.subr.mxu0 0.0
  %1306 = vmatpush1.msra.mxu0 0.0
  %1307 = vmatprep.subr.mxu0 0.0
  %1308 = vmatpush1.msra.mxu0 0.0
  %1309 = vmatprep.subr.mxu0 0.0
  %1310 = vmatpush1.msra.mxu0 0.0
  %1311 = vmatprep.subr.mxu0 0.0
  %1312 = vmatpush1.msra.mxu0 0.0
  %1313 = vmatprep.subr.mxu0 0.0
  %1314 = vmatpush1.msra.mxu0 0.0
  %1315 = vmatprep.subr.mxu0 0.0
  %1316 = vmatpush1.msra.mxu0 0.0
  %1317 = vmatprep.subr.mxu0 0.0
  %1318 = vmatpush1.msra.mxu0 0.0
  %1319 = vmatprep.subr.mxu0 0.0
  %1320 = vmatpush1.msra.mxu0 0.0
  %1321 = vmatprep.subr.mxu0 0.0
  %1322 = vmatpush1.msra.mxu0 0.0
  %1323 = vmatprep.subr.mxu0 0.0
  %1324 = vmatpush1.msra.mxu0 0.0
  %1325 = vmatprep.subr.mxu0 0.0
  %1326 = vmatpush1.msra.mxu0 0.0
  %1327 = vmatprep.subr.mxu0 0.0
  %1328 = vmatpush1.msra.mxu0 0.0
  %1329 = vmatprep.subr.mxu0 0.0
  %1330 = vmatpush1.msra.mxu0 0.0
  %1331 = vmatprep.subr.mxu0 0.0
  %1332 = vmatpush1.msra.mxu0 0.0
  %1333 = vmatprep.subr.mxu0 0.0
  %1334 = vmatpush1.msra.mxu0 0.0
  %1335 = vmatprep.subr.mxu0 0.0
  %1336 = vmatpush1.msra.mxu0 0.0
  %1337 = vmatprep.subr.mxu0 0.0
  %1338 = vmatpush1.msra.mxu0 0.0
  %1339 = vmatprep.mubr.f32.mxu0 0.0
  %1340 = vmatmul.mubr.f32.gmra.mrb[0].mxu0 %v1273
  %v1341 = vpop.f32.mrb[0].mxu0
  %v1342 = vadd.f32 0.0, %v1341
  %v1343 = vpop.f32.mrb[0].mxu0
  %v1344 = vadd.f32 0.0, %v1343
  %1345 = vdwg.mxu0
  %1346 = vmatprep.subr.mxu0 %v1238
  %1347 = vmatpush1.msra.mxu0 %v1237
  %1348 = vmatprep.subr.mxu0 %v1242
  %1349 = vmatpush1.msra.mxu0 %v1241
  %1350 = vmatprep.subr.mxu0 %v1246
  %1351 = vmatpush1.msra.mxu0 %v1245
  %1352 = vmatprep.subr.mxu0 %v1250
  %1353 = vmatpush1.msra.mxu0 %v1249
  %1354 = vmatprep.subr.mxu0 %v1254
  %1355 = vmatpush1.msra.mxu0 %v1253
  %1356 = vmatprep.subr.mxu0 %v1258
  %1357 = vmatpush1.msra.mxu0 %v1257
  %1358 = vmatprep.subr.mxu0 %v1262
  %1359 = vmatpush1.msra.mxu0 %v1261
  %1360 = vmatprep.subr.mxu0 %v1266
  %1361 = vmatpush1.msra.mxu0 %v1265
  %1362 = vmatprep.subr.mxu0 %v1270
  %1363 = vmatpush1.msra.mxu0 %v1269
  %1364 = vmatprep.subr.mxu0 0.0
  %1365 = vmatpush1.msra.mxu0 0.0
  %1366 = vmatprep.subr.mxu0 0.0
  %1367 = vmatpush1.msra.mxu0 0.0
  %1368 = vmatprep.subr.mxu0 0.0
  %1369 = vmatpush1.msra.mxu0 0.0
  %1370 = vmatprep.subr.mxu0 0.0
  %1371 = vmatpush1.msra.mxu0 0.0
  %1372 = vmatprep.subr.mxu0 0.0
  %1373 = vmatpush1.msra.mxu0 0.0
  %1374 = vmatprep.subr.mxu0 0.0
  %1375 = vmatpush1.msra.mxu0 0.0
  %1376 = vmatprep.subr.mxu0 0.0
  %1377 = vmatpush1.msra.mxu0 0.0
  %1378 = vmatprep.subr.mxu0 0.0
  %1379 = vmatpush1.msra.mxu0 0.0
  %1380 = vmatprep.subr.mxu0 0.0
  %1381 = vmatpush1.msra.mxu0 0.0
  %1382 = vmatprep.subr.mxu0 0.0
  %1383 = vmatpush1.msra.mxu0 0.0
  %1384 = vmatprep.subr.mxu0 0.0
  %1385 = vmatpush1.msra.mxu0 0.0
  %1386 = vmatprep.subr.mxu0 0.0
  %1387 = vmatpush1.msra.mxu0 0.0
  %1388 = vmatprep.subr.mxu0 0.0
  %1389 = vmatpush1.msra.mxu0 0.0
  %1390 = vmatprep.subr.mxu0 0.0
  %1391 = vmatpush1.msra.mxu0 0.0
  %1392 = vmatprep.subr.mxu0 0.0
  %1393 = vmatpush1.msra.mxu0 0.0
  %1394 = vmatprep.subr.mxu0 0.0
  %1395 = vmatpush1.msra.mxu0 0.0
  %1396 = vmatprep.subr.mxu0 0.0
  %1397 = vmatpush1.msra.mxu0 0.0
  %1398 = vmatprep.subr.mxu0 0.0
  %1399 = vmatpush1.msra.mxu0 0.0
  %1400 = vmatprep.subr.mxu0 0.0
  %1401 = vmatpush1.msra.mxu0 0.0
  %1402 = vmatprep.subr.mxu0 0.0
  %1403 = vmatpush1.msra.mxu0 0.0
  %1404 = vmatprep.subr.mxu0 0.0
  %1405 = vmatpush1.msra.mxu0 0.0
  %1406 = vmatprep.subr.mxu0 0.0
  %1407 = vmatpush1.msra.mxu0 0.0
  %1408 = vmatprep.subr.mxu0 0.0
  %1409 = vmatpush1.msra.mxu0 0.0
  %1410 = vmatprep.mubr.f32.mxu0 0.0
  %1411 = vmatmul.mubr.f32.gmra.mrb[0].mxu0 %v1273
  %v1412 = vpop.f32.mrb[0].mxu0
  %v1413 = vadd.f32 0.0, %v1412
  %v1414 = vpop.f32.mrb[0].mxu0
  %v1415 = vadd.f32 0.0, %v1414
  %1416 = vdwg.mxu0
  %v1417 = vadd.f32 %v1342, %v1344
  %v1418 = vadd.f32 %v1417, %v1413
  %v1419 = vadd.f32 %v1418, %v1415
  %1420 = vadd.xlane.f32.xlu0 %v1419
  %v1421 = vpop.xlane.xlu0 %1420
  %v1422 = vmul.f32 %v1421, 0.001953125
  %v1423 = vsub.f32 %v1342, %v1422
  %v1424 = vsub.f32 %v1344, %v1422
  %v1425 = vsub.f32 %v1413, %v1422
  %v1426 = vsub.f32 %v1415, %v1422
  %v1427 = vmul.f32 %v1423, %v1423
  %v1428 = vmul.f32 %v1424, %v1424
  %v1429 = vmul.f32 %v1425, %v1425
  %v1430 = vmul.f32 %v1426, %v1426
  %v1431 = vadd.f32 %v1427, %v1428
  %v1432 = vadd.f32 %v1431, %v1429
  %v1433 = vadd.f32 %v1432, %v1430
  %1434 = vadd.xlane.f32.xlu0 %v1433
  %v1435 = vpop.xlane.xlu0 %1434
  %v1436 = vmul.f32 %v1435, 0.001953125
  %v1437 = vld [vmem:[%s11] sm:$0xff]
  %v1438 = vadd.f32 %v1436, 1e-05
  %v1439 = vrsqrt.pop %v1438
  %v1440 = vmul.f32 %v1437, %v1439
  %1442 = vset.pattern.permute.xlu0 0
  %1443 = vperm.xlu0 %1442, %v1440
  %v1444 = vpop.permute.xlu0 %1443
  %v1446 = vmul.f32 %v1423, %v1444
  %v1447 = vmul.f32 %v1424, %v1444
  %v1448 = vmul.f32 %v1425, %v1444
  %v1449 = vmul.f32 %v1426, %v1444
  %v1450 = vld [vmem:[%s13] sm:$0xff]
  %1452 = vset.pattern.permute.xlu0 0
  %1453 = vperm.xlu0 %1452, %v1450
  %v1454 = vpop.permute.xlu0 %1453
  %v1456 = vadd.f32 %v1446, %v1454
  %v1457 = vadd.f32 %v1447, %v1454
  %v1458 = vadd.f32 %v1448, %v1454
  %v1459 = vadd.f32 %v1449, %v1454
  %vm1460 = vcmp.gt.f32.partialorder %v1456, 0.0
  %vm1461 = vcmp.gt.f32.partialorder %v1457, 0.0
  %vm1462 = vcmp.gt.f32.partialorder %v1458, 0.0
  %vm1463 = vcmp.gt.f32.partialorder %v1459, 0.0
  %v1464 = vmul.f32 %v1456, 0.01
  %v1465 = vmul.f32 %v1457, 0.01
  %v1466 = vmul.f32 %v1458, 0.01
  %v1467 = vmul.f32 %v1459, 0.01
  %v1468 = vsel %vm1460, %v1456, %v1464
  %v1469 = vsel %vm1461, %v1457, %v1465
  %v1470 = vsel %vm1462, %v1458, %v1466
  %v1471 = vsel %vm1463, %v1459, %v1467
  %1472 = vst [vmem:[#allocation2 + $0x8] sm:$0xff] %v1468
  %1473 = vst [vmem:[#allocation2 + $0x10] sm:$0xff] %v1469
  %1474 = vst [vmem:[#allocation2 + $0x18] sm:$0xff] %v1470
  %1475 = vst [vmem:[#allocation2 + $0x20] sm:$0xff] %v1471
  %v1476 = vld [vmem:[#allocation2 + $0x8] sm:$0xff]
  %v1477 = vld [vmem:[#allocation2 + $0x10] sm:$0xff]
  %v1478 = vld [vmem:[#allocation2 + $0x18] sm:$0xff]
  %v1479 = vld [vmem:[#allocation2 + $0x20] sm:$0xff]
  %v1480 = vld [vmem:[#allocation2 + $0x28] sm:$0xff]
  %1486 = vrot.lane.b32.xlu0 %v1476, 127
  %v1487 = vpop.permute.xlu0 %1486
  %1488 = vrot.lane.b32.xlu0 %v1477, 127
  %v1489 = vpop.permute.xlu0 %1488
  %1490 = vrot.lane.b32.xlu0 %v1478, 127
  %v1491 = vpop.permute.xlu0 %1490
  %1492 = vrot.lane.b32.xlu0 %v1479, 127
  %v1493 = vpop.permute.xlu0 %1492
  %1494 = vrot.lane.b32.xlu0 %v1480, 127
  %v1495 = vpop.permute.xlu0 %1494
  %v1496 = vsel %vm329, %v1487, %v1489
  %v1497 = vsel %vm329, %v1489, %v1491
  %v1498 = vsel %vm329, %v1491, %v1493
  %v1499 = vsel %vm329, %v1493, %v1495
  %v1504 = vmax.f32 %v1468, %v1496
  %v1505 = vmax.f32 %v1469, %v1497
  %v1506 = vmax.f32 %v1470, %v1498
  %v1507 = vmax.f32 %v1471, %v1499
  %v1509 = vmax.f32 %v1476, %v1496
  %v1510 = vmax.f32 %v1477, %v1497
  %v1511 = vmax.f32 %v1478, %v1498
  %v1512 = vmax.f32 %v1479, %v1499
  %v1513 = vmax.f32 %v1480, %v1495
  %1519 = vrot.lane.b32.xlu0 %v1509, 112
  %v1520 = vpop.permute.xlu0 %1519
  %1521 = vrot.lane.b32.xlu0 %v1510, 112
  %v1522 = vpop.permute.xlu0 %1521
  %1523 = vrot.lane.b32.xlu0 %v1511, 112
  %v1524 = vpop.permute.xlu0 %1523
  %1525 = vrot.lane.b32.xlu0 %v1512, 112
  %v1526 = vpop.permute.xlu0 %1525
  %1527 = vrot.lane.b32.xlu0 %v1513, 112
  %v1528 = vpop.permute.xlu0 %1527
  %v1529 = vsel %vm283, %v1520, %v1522
  %v1530 = vsel %vm283, %v1522, %v1524
  %v1531 = vsel %vm283, %v1524, %v1526
  %v1532 = vsel %vm283, %v1526, %v1528
  %v1537 = vmax.f32 %v1504, %v1529
  %v1538 = vmax.f32 %v1505, %v1530
  %v1539 = vmax.f32 %v1506, %v1531
  %v1540 = vmax.f32 %v1507, %v1532
  %v1541 = vld [vmem:[%s87] sm:$0xff]
  %v1542 = vld [vmem:[%s87 + $0x8] sm:$0xff]
  %v1543 = vld [vmem:[%s87 + $0x10] sm:$0xff]
  %v1544 = vld [vmem:[%s87 + $0x18] sm:$0xff]
  %v1545 = vld [vmem:[%s87 + $0x20] sm:$0xff]
  %v1546 = vld [vmem:[%s87 + $0x28] sm:$0xff]
  %v1547 = vld [vmem:[%s87 + $0x30] sm:$0xff]
  %v1548 = vld [vmem:[%s87 + $0x38] sm:$0xff]
  %v1549 = vld [vmem:[%s87 + $0x40] sm:$0xff]
  %v1550 = vld [vmem:[%s87 + $0x48] sm:$0xff]
  %v1551 = vld [vmem:[%s87 + $0x50] sm:$0xff]
  %v1552 = vld [vmem:[%s87 + $0x58] sm:$0xff]
  %v1553 = vld [vmem:[%s87 + $0x60] sm:$0xff]
  %v1554 = vld [vmem:[%s87 + $0x68] sm:$0xff]
  %v1555 = vld [vmem:[%s87 + $0x70] sm:$0xff]
  %v1556 = vld [vmem:[%s87 + $0x78] sm:$0xff]
  %v1557 = vld [vmem:[%s87 + $0x80] sm:$0xff]
  %v1558 = vld [vmem:[%s87 + $0x88] sm:$0xff]
  %v1559 = vld [vmem:[%s87 + $0x90] sm:$0xff]
  %v1560 = vld [vmem:[%s87 + $0x98] sm:$0xff]
  %v1561 = vld [vmem:[%s87 + $0xa0] sm:$0xff]
  %v1562 = vld [vmem:[%s87 + $0xa8] sm:$0xff]
  %v1563 = vld [vmem:[%s87 + $0xb0] sm:$0xff]
  %v1564 = vld [vmem:[%s87 + $0xb8] sm:$0xff]
  %v1565 = vld [vmem:[%s87 + $0xc0] sm:$0xff]
  %v1566 = vld [vmem:[%s87 + $0xc8] sm:$0xff]
  %v1567 = vld [vmem:[%s87 + $0xd0] sm:$0xff]
  %v1568 = vld [vmem:[%s87 + $0xd8] sm:$0xff]
  %v1569 = vld [vmem:[%s87 + $0xe0] sm:$0xff]
  %v1570 = vld [vmem:[%s87 + $0xe8] sm:$0xff]
  %v1571 = vld [vmem:[%s87 + $0xf0] sm:$0xff]
  %v1572 = vld [vmem:[%s87 + $0xf8] sm:$0xff]
  %1573 = vmatprep.subr.mxu0 0.0
  %1574 = vmatpush1.msra.mxu0 %v1541
  %1575 = vmatprep.subr.mxu0 0.0
  %1576 = vmatpush1.msra.mxu0 %v1542
  %1577 = vmatprep.subr.mxu0 0.0
  %1578 = vmatpush1.msra.mxu0 %v1543
  %1579 = vmatprep.subr.mxu0 0.0
  %1580 = vmatpush1.msra.mxu0 %v1544
  %1581 = vmatprep.subr.mxu0 0.0
  %1582 = vmatpush1.msra.mxu0 %v1545
  %1583 = vmatprep.subr.mxu0 0.0
  %1584 = vmatpush1.msra.mxu0 %v1546
  %1585 = vmatprep.subr.mxu0 0.0
  %1586 = vmatpush1.msra.mxu0 %v1547
  %1587 = vmatprep.subr.mxu0 0.0
  %1588 = vmatpush1.msra.mxu0 %v1548
  %1589 = vmatprep.subr.mxu0 0.0
  %1590 = vmatpush1.msra.mxu0 %v1549
  %1591 = vmatprep.subr.mxu0 0.0
  %1592 = vmatpush1.msra.mxu0 %v1550
  %1593 = vmatprep.subr.mxu0 0.0
  %1594 = vmatpush1.msra.mxu0 %v1551
  %1595 = vmatprep.subr.mxu0 0.0
  %1596 = vmatpush1.msra.mxu0 %v1552
  %1597 = vmatprep.subr.mxu0 0.0
  %1598 = vmatpush1.msra.mxu0 %v1553
  %1599 = vmatprep.subr.mxu0 0.0
  %1600 = vmatpush1.msra.mxu0 %v1554
  %1601 = vmatprep.subr.mxu0 0.0
  %1602 = vmatpush1.msra.mxu0 %v1555
  %1603 = vmatprep.subr.mxu0 0.0
  %1604 = vmatpush1.msra.mxu0 %v1556
  %1605 = vmatprep.subr.mxu0 0.0
  %1606 = vmatpush1.msra.mxu0 %v1557
  %1607 = vmatprep.subr.mxu0 0.0
  %1608 = vmatpush1.msra.mxu0 %v1558
  %1609 = vmatprep.subr.mxu0 0.0
  %1610 = vmatpush1.msra.mxu0 %v1559
  %1611 = vmatprep.subr.mxu0 0.0
  %1612 = vmatpush1.msra.mxu0 %v1560
  %1613 = vmatprep.subr.mxu0 0.0
  %1614 = vmatpush1.msra.mxu0 %v1561
  %1615 = vmatprep.subr.mxu0 0.0
  %1616 = vmatpush1.msra.mxu0 %v1562
  %1617 = vmatprep.subr.mxu0 0.0
  %1618 = vmatpush1.msra.mxu0 %v1563
  %1619 = vmatprep.subr.mxu0 0.0
  %1620 = vmatpush1.msra.mxu0 %v1564
  %1621 = vmatprep.subr.mxu0 0.0
  %1622 = vmatpush1.msra.mxu0 %v1565
  %1623 = vmatprep.subr.mxu0 0.0
  %1624 = vmatpush1.msra.mxu0 %v1566
  %1625 = vmatprep.subr.mxu0 0.0
  %1626 = vmatpush1.msra.mxu0 %v1567
  %1627 = vmatprep.subr.mxu0 0.0
  %1628 = vmatpush1.msra.mxu0 %v1568
  %1629 = vmatprep.subr.mxu0 0.0
  %1630 = vmatpush1.msra.mxu0 %v1569
  %1631 = vmatprep.subr.mxu0 0.0
  %1632 = vmatpush1.msra.mxu0 %v1570
  %1633 = vmatprep.subr.mxu0 0.0
  %1634 = vmatpush1.msra.mxu0 %v1571
  %1635 = vmatprep.subr.mxu0 0.0
  %1636 = vmatpush1.msra.mxu0 %v1572
  %1637 = vmatprep.mubr.f32.mxu0 %v1538
  %1638 = vmatmul.mubr.f32.gmra.mrb[0].mxu0 %v1537
  %v1639 = vpop.f32.mrb[0].mxu0
  %v1640 = vadd.f32 0.0, %v1639
  %v1641 = vpop.f32.mrb[0].mxu0
  %1642 = vdwg.mxu0
  %vm1643 = vcmask 523264
  %1644 = vst.msk [vmem:[#allocation3] sm:$0xff] %vm1643, %v1640
  %1645 = vmatprep.subr.mxu0 0.0
  %1646 = vmatpush1.msra.mxu0 %v1541
  %1647 = vmatprep.subr.mxu0 0.0
  %1648 = vmatpush1.msra.mxu0 %v1542
  %1649 = vmatprep.subr.mxu0 0.0
  %1650 = vmatpush1.msra.mxu0 %v1543
  %1651 = vmatprep.subr.mxu0 0.0
  %1652 = vmatpush1.msra.mxu0 %v1544
  %1653 = vmatprep.subr.mxu0 0.0
  %1654 = vmatpush1.msra.mxu0 %v1545
  %1655 = vmatprep.subr.mxu0 0.0
  %1656 = vmatpush1.msra.mxu0 %v1546
  %1657 = vmatprep.subr.mxu0 0.0
  %1658 = vmatpush1.msra.mxu0 %v1547
  %1659 = vmatprep.subr.mxu0 0.0
  %1660 = vmatpush1.msra.mxu0 %v1548
  %1661 = vmatprep.subr.mxu0 0.0
  %1662 = vmatpush1.msra.mxu0 %v1549
  %1663 = vmatprep.subr.mxu0 0.0
  %1664 = vmatpush1.msra.mxu0 %v1550
  %1665 = vmatprep.subr.mxu0 0.0
  %1666 = vmatpush1.msra.mxu0 %v1551
  %1667 = vmatprep.subr.mxu0 0.0
  %1668 = vmatpush1.msra.mxu0 %v1552
  %1669 = vmatprep.subr.mxu0 0.0
  %1670 = vmatpush1.msra.mxu0 %v1553
  %1671 = vmatprep.subr.mxu0 0.0
  %1672 = vmatpush1.msra.mxu0 %v1554
  %1673 = vmatprep.subr.mxu0 0.0
  %1674 = vmatpush1.msra.mxu0 %v1555
  %1675 = vmatprep.subr.mxu0 0.0
  %1676 = vmatpush1.msra.mxu0 %v1556
  %1677 = vmatprep.subr.mxu0 0.0
  %1678 = vmatpush1.msra.mxu0 %v1557
  %1679 = vmatprep.subr.mxu0 0.0
  %1680 = vmatpush1.msra.mxu0 %v1558
  %1681 = vmatprep.subr.mxu0 0.0
  %1682 = vmatpush1.msra.mxu0 %v1559
  %1683 = vmatprep.subr.mxu0 0.0
  %1684 = vmatpush1.msra.mxu0 %v1560
  %1685 = vmatprep.subr.mxu0 0.0
  %1686 = vmatpush1.msra.mxu0 %v1561
  %1687 = vmatprep.subr.mxu0 0.0
  %1688 = vmatpush1.msra.mxu0 %v1562
  %1689 = vmatprep.subr.mxu0 0.0
  %1690 = vmatpush1.msra.mxu0 %v1563
  %1691 = vmatprep.subr.mxu0 0.0
  %1692 = vmatpush1.msra.mxu0 %v1564
  %1693 = vmatprep.subr.mxu0 0.0
  %1694 = vmatpush1.msra.mxu0 %v1565
  %1695 = vmatprep.subr.mxu0 0.0
  %1696 = vmatpush1.msra.mxu0 %v1566
  %1697 = vmatprep.subr.mxu0 0.0
  %1698 = vmatpush1.msra.mxu0 %v1567
  %1699 = vmatprep.subr.mxu0 0.0
  %1700 = vmatpush1.msra.mxu0 %v1568
  %1701 = vmatprep.subr.mxu0 0.0
  %1702 = vmatpush1.msra.mxu0 %v1569
  %1703 = vmatprep.subr.mxu0 0.0
  %1704 = vmatpush1.msra.mxu0 %v1570
  %1705 = vmatprep.subr.mxu0 0.0
  %1706 = vmatpush1.msra.mxu0 %v1571
  %1707 = vmatprep.subr.mxu0 0.0
  %1708 = vmatpush1.msra.mxu0 %v1572
  %1709 = vmatprep.mubr.f32.mxu0 %v1540
  %1710 = vmatmul.mubr.f32.gmra.mrb[0].mxu0 %v1539
  %v1711 = vpop.f32.mrb[0].mxu0
  %v1712 = vadd.f32 0.0, %v1711
  %v1713 = vpop.f32.mrb[0].mxu0
  %1714 = vdwg.mxu0
  %1716 = vrot.lane.b32.xlu0 %v1712, 64
  %v1717 = vpop.permute.xlu0 %1716
  %vm1719 = vcmask 1048064
  %1720 = vst.msk [vmem:[#allocation3] sm:$0xff] %vm1719, %v1717
  %v1721 = vld [vmem:[#allocation3] sm:$0xff]
  %1722 = vst [vmem:[%s99] sm:$0xff] %v1721
  %1723 = vst [vmem:[#allocation2 + $0x8] sm:$0xff] %v1721
  %v1724 = vld [vmem:[#allocation2] sm:$0xff]
  %v1725 = vld [vmem:[#allocation2 + $0x8] sm:$0xff]
  %v1726 = vld [vmem:[%s81] sm:$0x1]
  %v1727 = vlaneseq
  %v1728 = vshrl.u32 %v1727, 7
  %v1729 = vsub.s32 0, %v1728
  %v1730 = vrot.slane %v1726, %v1729
  %1732 = vrot.lane.b32.xlu0 %v1730, 119
  %v1733 = vpop.permute.xlu0 %1732
  %v1735 = vmul.f32 %v1724, %v1733
  %v1736 = vmul.f32 %v1725, %v1733
  %1739 = vrot.lane.b32.xlu0 %v1735, 9
  %v1740 = vpop.permute.xlu0 %1739
  %1741 = vrot.lane.b32.xlu0 %v1736, 9
  %v1742 = vpop.permute.xlu0 %1741
  %v1743 = vsel %vm440, %v1740, %v1742
  %1745 = vst [vmem:[#allocation3] sm:$0xff] %v1743
  %v1746 = vld [vmem:[#allocation2] sm:$0xff]
  %v1747 = vld [vmem:[#allocation2 + $0x8] sm:$0xff]
  %v1748 = vld [vmem:[%s81 + $0x1] sm:$0x1]
  %v1749 = vlaneseq
  %v1750 = vshrl.u32 %v1749, 7
  %v1751 = vsub.s32 0, %v1750
  %v1752 = vrot.slane %v1748, %v1751
  %1754 = vrot.lane.b32.xlu0 %v1752, 120
  %v1755 = vpop.permute.xlu0 %1754
  %v1757 = vmul.f32 %v1746, %v1755
  %v1758 = vmul.f32 %v1747, %v1755
  %1761 = vrot.lane.b32.xlu0 %v1757, 8
  %v1762 = vpop.permute.xlu0 %1761
  %1763 = vrot.lane.b32.xlu0 %v1758, 8
  %v1764 = vpop.permute.xlu0 %1763
  %vm1765 = vcmask 64512
  %v1766 = vsel %vm1765, %v1762, %v1764
  %1768 = vst [vmem:[#allocation3 + $0x20] sm:$0xff] %v1766
  %v1769 = vld [vmem:[#allocation2] sm:$0xff]
  %v1770 = vld [vmem:[#allocation2 + $0x8] sm:$0xff]
  %v1771 = vld [vmem:[%s81 + $0x2] sm:$0x1]
  %v1772 = vlaneseq
  %v1773 = vshrl.u32 %v1772, 7
  %v1774 = vsub.s32 0, %v1773
  %v1775 = vrot.slane %v1771, %v1774
  %1777 = vrot.lane.b32.xlu0 %v1775, 121
  %v1778 = vpop.permute.xlu0 %1777
  %v1780 = vmul.f32 %v1769, %v1778
  %v1781 = vmul.f32 %v1770, %v1778
  %1784 = vrot.lane.b32.xlu0 %v1780, 7
  %v1785 = vpop.permute.xlu0 %1784
  %1786 = vrot.lane.b32.xlu0 %v1781, 7
  %v1787 = vpop.permute.xlu0 %1786
  %vm1788 = vcmask 56320
  %v1789 = vsel %vm1788, %v1785, %v1787
  %1791 = vst [vmem:[#allocation3 + $0x40] sm:$0xff] %v1789
  %v1792 = vld [vmem:[#allocation2] sm:$0xff]
  %v1793 = vld [vmem:[#allocation2 + $0x8] sm:$0xff]
  %v1794 = vld [vmem:[%s81 + $0x3] sm:$0x1]
  %v1795 = vlaneseq
  %v1796 = vshrl.u32 %v1795, 7
  %v1797 = vsub.s32 0, %v1796
  %v1798 = vrot.slane %v1794, %v1797
  %1800 = vrot.lane.b32.xlu0 %v1798, 127
  %v1801 = vpop.permute.xlu0 %1800
  %v1803 = vmul.f32 %v1792, %v1801
  %v1804 = vmul.f32 %v1793, %v1801
  %1807 = vrot.lane.b32.xlu0 %v1803, 1
  %v1808 = vpop.permute.xlu0 %1807
  %1809 = vrot.lane.b32.xlu0 %v1804, 1
  %v1810 = vpop.permute.xlu0 %1809
  %v1811 = vsel %vm337, %v1808, %v1810
  %1813 = vst [vmem:[#allocation3 + $0x60] sm:$0xff] %v1811
  %v1814 = vld [vmem:[#allocation2 + $0x8] sm:$0xff]
  %1815 = vst [vmem:[#allocation3 + $0x80] sm:$0xff] %v1814
  %v1816 = vld [vmem:[#allocation2 + $0x8] sm:$0xff]
  %v1817 = vld [vmem:[#allocation2 + $0x10] sm:$0xff]
  %v1818 = vld [vmem:[%s81 + $0x4] sm:$0x1]
  %v1819 = vlaneseq
  %v1820 = vshrl.u32 %v1819, 7
  %v1821 = vsub.s32 0, %v1820
  %v1822 = vrot.slane %v1818, %v1821
  %1824 = vrot.lane.b32.xlu0 %v1822, 1
  %v1825 = vpop.permute.xlu0 %1824
  %v1827 = vmul.f32 %v1816, %v1825
  %v1828 = vmul.f32 %v1817, %v1825
  %1831 = vrot.lane.b32.xlu0 %v1827, 127
  %v1832 = vpop.permute.xlu0 %1831
  %1833 = vrot.lane.b32.xlu0 %v1828, 127
  %v1834 = vpop.permute.xlu0 %1833
  %v1835 = vsel %vm329, %v1832, %v1834
  %1837 = vst [vmem:[#allocation3 + $0xa0] sm:$0xff] %v1835
  %v1838 = vld [vmem:[#allocation2 + $0x8] sm:$0xff]
  %v1839 = vld [vmem:[#allocation2 + $0x10] sm:$0xff]
  %v1840 = vld [vmem:[%s81 + $0x5] sm:$0x1]
  %v1841 = vlaneseq
  %v1842 = vshrl.u32 %v1841, 7
  %v1843 = vsub.s32 0, %v1842
  %v1844 = vrot.slane %v1840, %v1843
  %1846 = vrot.lane.b32.xlu0 %v1844, 7
  %v1847 = vpop.permute.xlu0 %1846
  %v1849 = vmul.f32 %v1838, %v1847
  %v1850 = vmul.f32 %v1839, %v1847
  %1853 = vrot.lane.b32.xlu0 %v1849, 121
  %v1854 = vpop.permute.xlu0 %1853
  %1855 = vrot.lane.b32.xlu0 %v1850, 121
  %v1856 = vpop.permute.xlu0 %1855
  %vm1857 = vcmask 990208
  %v1858 = vsel %vm1857, %v1854, %v1856
  %1860 = vst [vmem:[#allocation3 + $0xc0] sm:$0xff] %v1858
  %v1861 = vld [vmem:[#allocation2 + $0x8] sm:$0xff]
  %v1862 = vld [vmem:[#allocation2 + $0x10] sm:$0xff]
  %v1863 = vld [vmem:[%s81 + $0x6] sm:$0x1]
  %v1864 = vlaneseq
  %v1865 = vshrl.u32 %v1864, 7
  %v1866 = vsub.s32 0, %v1865
  %v1867 = vrot.slane %v1863, %v1866
  %1869 = vrot.lane.b32.xlu0 %v1867, 8
  %v1870 = vpop.permute.xlu0 %1869
  %v1872 = vmul.f32 %v1861, %v1870
  %v1873 = vmul.f32 %v1862, %v1870
  %1876 = vrot.lane.b32.xlu0 %v1872, 120
  %v1877 = vpop.permute.xlu0 %1876
  %1878 = vrot.lane.b32.xlu0 %v1873, 120
  %v1879 = vpop.permute.xlu0 %1878
  %vm1880 = vcmask 982016
  %v1881 = vsel %vm1880, %v1877, %v1879
  %1883 = vst [vmem:[#allocation3 + $0xe0] sm:$0xff] %v1881
  %v1884 = vld [vmem:[#allocation2 + $0x8] sm:$0xff]
  %v1885 = vld [vmem:[#allocation2 + $0x10] sm:$0xff]
  %v1886 = vld [vmem:[%s81 + $0x7] sm:$0x1]
  %v1887 = vlaneseq
  %v1888 = vshrl.u32 %v1887, 7
  %v1889 = vsub.s32 0, %v1888
  %v1890 = vrot.slane %v1886, %v1889
  %1892 = vrot.lane.b32.xlu0 %v1890, 9
  %v1893 = vpop.permute.xlu0 %1892
  %v1895 = vmul.f32 %v1884, %v1893
  %v1896 = vmul.f32 %v1885, %v1893
  %1899 = vrot.lane.b32.xlu0 %v1895, 119
  %v1900 = vpop.permute.xlu0 %1899
  %1901 = vrot.lane.b32.xlu0 %v1896, 119
  %v1902 = vpop.permute.xlu0 %1901
  %vm1903 = vcmask 973824
  %v1904 = vsel %vm1903, %v1900, %v1902
  %1906 = vst [vmem:[#allocation3 + $0x100] sm:$0xff] %v1904
  %v1907 = vld [vmem:[%s15] sm:$0xff]
  %v1908 = vld [vmem:[%s15 + $0x8] sm:$0xff]
  %v1909 = vld [vmem:[#allocation3] sm:$0xff]
  %v1910 = vld [vmem:[#allocation3 + $0x20] sm:$0xff]
  %v1911 = vld [vmem:[#allocation3 + $0x40] sm:$0xff]
  %v1912 = vld [vmem:[#allocation3 + $0x60] sm:$0xff]
  %v1913 = vld [vmem:[#allocation3 + $0x80] sm:$0xff]
  %v1914 = vld [vmem:[#allocation3 + $0xa0] sm:$0xff]
  %v1915 = vld [vmem:[#allocation3 + $0xc0] sm:$0xff]
  %v1916 = vld [vmem:[#allocation3 + $0xe0] sm:$0xff]
  %v1917 = vld [vmem:[#allocation3 + $0x100] sm:$0xff]
  %v1919 = vsel %vm1271, %v1907, 0
  %v1922 = vsel %vm1271, %v1908, 0
  %1924 = vmatprep.subr.mxu0 0.0
  %1925 = vmatpush1.msra.mxu0 %v1909
  %1926 = vmatprep.subr.mxu0 0.0
  %1927 = vmatpush1.msra.mxu0 %v1910
  %1928 = vmatprep.subr.mxu0 0.0
  %1929 = vmatpush1.msra.mxu0 %v1911
  %1930 = vmatprep.subr.mxu0 0.0
  %1931 = vmatpush1.msra.mxu0 %v1912
  %1932 = vmatprep.subr.mxu0 0.0
  %1933 = vmatpush1.msra.mxu0 %v1913
  %1934 = vmatprep.subr.mxu0 0.0
  %1935 = vmatpush1.msra.mxu0 %v1914
  %1936 = vmatprep.subr.mxu0 0.0
  %1937 = vmatpush1.msra.mxu0 %v1915
  %1938 = vmatprep.subr.mxu0 0.0
  %1939 = vmatpush1.msra.mxu0 %v1916
  %1940 = vmatprep.subr.mxu0 0.0
  %1941 = vmatpush1.msra.mxu0 %v1917
  %1942 = vmatprep.subr.mxu0 0.0
  %1943 = vmatpush1.msra.mxu0 0.0
  %1944 = vmatprep.subr.mxu0 0.0
  %1945 = vmatpush1.msra.mxu0 0.0
  %1946 = vmatprep.subr.mxu0 0.0
  %1947 = vmatpush1.msra.mxu0 0.0
  %1948 = vmatprep.subr.mxu0 0.0
  %1949 = vmatpush1.msra.mxu0 0.0
  %1950 = vmatprep.subr.mxu0 0.0
  %1951 = vmatpush1.msra.mxu0 0.0
  %1952 = vmatprep.subr.mxu0 0.0
  %1953 = vmatpush1.msra.mxu0 0.0
  %1954 = vmatprep.subr.mxu0 0.0
  %1955 = vmatpush1.msra.mxu0 0.0
  %1956 = vmatprep.subr.mxu0 0.0
  %1957 = vmatpush1.msra.mxu0 0.0
  %1958 = vmatprep.subr.mxu0 0.0
  %1959 = vmatpush1.msra.mxu0 0.0
  %1960 = vmatprep.subr.mxu0 0.0
  %1961 = vmatpush1.msra.mxu0 0.0
  %1962 = vmatprep.subr.mxu0 0.0
  %1963 = vmatpush1.msra.mxu0 0.0
  %1964 = vmatprep.subr.mxu0 0.0
  %1965 = vmatpush1.msra.mxu0 0.0
  %1966 = vmatprep.subr.mxu0 0.0
  %1967 = vmatpush1.msra.mxu0 0.0
  %1968 = vmatprep.subr.mxu0 0.0
  %1969 = vmatpush1.msra.mxu0 0.0
  %1970 = vmatprep.subr.mxu0 0.0
  %1971 = vmatpush1.msra.mxu0 0.0
  %1972 = vmatprep.subr.mxu0 0.0
  %1973 = vmatpush1.msra.mxu0 0.0
  %1974 = vmatprep.subr.mxu0 0.0
  %1975 = vmatpush1.msra.mxu0 0.0
  %1976 = vmatprep.subr.mxu0 0.0
  %1977 = vmatpush1.msra.mxu0 0.0
  %1978 = vmatprep.subr.mxu0 0.0
  %1979 = vmatpush1.msra.mxu0 0.0
  %1980 = vmatprep.subr.mxu0 0.0
  %1981 = vmatpush1.msra.mxu0 0.0
  %1982 = vmatprep.subr.mxu0 0.0
  %1983 = vmatpush1.msra.mxu0 0.0
  %1984 = vmatprep.subr.mxu0 0.0
  %1985 = vmatpush1.msra.mxu0 0.0
  %1986 = vmatprep.subr.mxu0 0.0
  %1987 = vmatpush1.msra.mxu0 0.0
  %1988 = vmatprep.mubr.f32.mxu0 0.0
  %1989 = vmatmul.mubr.f32.gmra.mrb[0].mxu0 %v1919
  %v1990 = vpop.f32.mrb[0].mxu0
  %v1991 = vadd.f32 0.0, %v1990
  %v1992 = vpop.f32.mrb[0].mxu0
  %1993 = vmatprep.mubr.f32.mxu0 0.0
  %1994 = vmatmul.mubr.f32.gmra.mrb[0].mxu0 %v1922
  %v1995 = vpop.f32.mrb[0].mxu0
  %v1996 = vadd.f32 0.0, %v1995
  %v1997 = vpop.f32.mrb[0].mxu0
  %1998 = vdwg.mxu0
  %1999 = vadd.xlane.f32.xlu0 %v1991
  %v2000 = vpop.xlane.xlu0 %1999
  %2001 = vadd.xlane.f32.xlu0 %v1996
  %v2002 = vpop.xlane.xlu0 %2001
  %v2003 = vmul.f32 %v2000, 0.0078125
  %v2004 = vmul.f32 %v2002, 0.0078125
  %v2005 = vsub.f32 %v1991, %v2003
  %v2006 = vsub.f32 %v1996, %v2004
  %v2007 = vmul.f32 %v2005, %v2005
  %v2008 = vmul.f32 %v2006, %v2006
  %2009 = vadd.xlane.f32.xlu0 %v2007
  %v2010 = vpop.xlane.xlu0 %2009
  %2011 = vadd.xlane.f32.xlu0 %v2008
  %v2012 = vpop.xlane.xlu0 %2011
  %v2013 = vmul.f32 %v2010, 0.0078125
  %v2014 = vmul.f32 %v2012, 0.0078125
  %v2015 = vld [vmem:[%s17] sm:$0xff]
  %v2016 = vld [vmem:[%s17 + $0x8] sm:$0xff]
  %v2017 = vadd.f32 %v2013, 1e-05
  %v2018 = vadd.f32 %v2014, 1e-05
  %v2019 = vrsqrt.pop %v2017
  %v2020 = vrsqrt.pop %v2018
  %v2021 = vmul.f32 %v2015, %v2019
  %v2022 = vmul.f32 %v2016, %v2020
  %2024 = vset.pattern.permute.xlu0 0
  %2025 = vperm.xlu0 %2024, %v2021
  %v2026 = vpop.permute.xlu0 %2025
  %2029 = vset.pattern.permute.xlu0 0
  %2030 = vperm.xlu0 %2029, %v2022
  %v2031 = vpop.permute.xlu0 %2030
  %v2033 = vmul.f32 %v2005, %v2026
  %v2034 = vmul.f32 %v2006, %v2031
  %v2035 = vld [vmem:[%s19] sm:$0xff]
  %v2036 = vld [vmem:[%s19 + $0x8] sm:$0xff]
  %2038 = vset.pattern.permute.xlu0 0
  %2039 = vperm.xlu0 %2038, %v2035
  %v2040 = vpop.permute.xlu0 %2039
  %2043 = vset.pattern.permute.xlu0 0
  %2044 = vperm.xlu0 %2043, %v2036
  %v2045 = vpop.permute.xlu0 %2044
  %v2047 = vadd.f32 %v2033, %v2040
  %v2048 = vadd.f32 %v2034, %v2045
  %vm2049 = vcmp.gt.f32.partialorder %v2047, 0.0
  %vm2050 = vcmp.gt.f32.partialorder %v2048, 0.0
  %v2051 = vmul.f32 %v2047, 0.01
  %v2052 = vmul.f32 %v2048, 0.01
  %v2053 = vsel %vm2049, %v2047, %v2051
  %v2054 = vsel %vm2050, %v2048, %v2052
  %2055 = vst [vmem:[#allocation2 + $0x8] sm:$0xff] %v2053
  %2056 = vst [vmem:[#allocation2 + $0x38] sm:$0xff] %v2054
  %v2057 = vld [vmem:[#allocation2] sm:$0xff]
  %v2058 = vld [vmem:[#allocation2 + $0x8] sm:$0xff]
  %v2059 = vld [vmem:[#allocation2 + $0x30] sm:$0xff]
  %v2060 = vld [vmem:[#allocation2 + $0x38] sm:$0xff]
  %v2061 = vld [vmem:[%s81] sm:$0x1]
  %v2062 = vlaneseq
  %v2063 = vshrl.u32 %v2062, 7
  %v2064 = vsub.s32 0, %v2063
  %v2065 = vrot.slane %v2061, %v2064
  %2067 = vrot.lane.b32.xlu0 %v2065, 119
  %v2068 = vpop.permute.xlu0 %2067
  %v2070 = vmul.f32 %v2057, %v2068
  %v2071 = vmul.f32 %v2058, %v2068
  %v2072 = vmul.f32 %v2059, %v2068
  %v2073 = vmul.f32 %v2060, %v2068
  %2078 = vrot.lane.b32.xlu0 %v2070, 9
  %v2079 = vpop.permute.xlu0 %2078
  %2080 = vrot.lane.b32.xlu0 %v2071, 9
  %v2081 = vpop.permute.xlu0 %2080
  %2082 = vrot.lane.b32.xlu0 %v2072, 9
  %v2083 = vpop.permute.xlu0 %2082
  %2084 = vrot.lane.b32.xlu0 %v2073, 9
  %v2085 = vpop.permute.xlu0 %2084
  %v2086 = vsel %vm440, %v2079, %v2081
  %v2087 = vsel %vm440, %v2083, %v2085
  %2090 = vst [vmem:[#allocation3] sm:$0xff] %v2086
  %2091 = vst [vmem:[#allocation3 + $0x20] sm:$0xff] %v2087
  %v2092 = vld [vmem:[#allocation2] sm:$0xff]
  %v2093 = vld [vmem:[#allocation2 + $0x8] sm:$0xff]
  %v2094 = vld [vmem:[#allocation2 + $0x30] sm:$0xff]
  %v2095 = vld [vmem:[#allocation2 + $0x38] sm:$0xff]
  %v2096 = vld [vmem:[%s81 + $0x1] sm:$0x1]
  %v2097 = vlaneseq
  %v2098 = vshrl.u32 %v2097, 7
  %v2099 = vsub.s32 0, %v2098
  %v2100 = vrot.slane %v2096, %v2099
  %2102 = vrot.lane.b32.xlu0 %v2100, 120
  %v2103 = vpop.permute.xlu0 %2102
  %v2105 = vmul.f32 %v2092, %v2103
  %v2106 = vmul.f32 %v2093, %v2103
  %v2107 = vmul.f32 %v2094, %v2103
  %v2108 = vmul.f32 %v2095, %v2103
  %2113 = vrot.lane.b32.xlu0 %v2105, 8
  %v2114 = vpop.permute.xlu0 %2113
  %2115 = vrot.lane.b32.xlu0 %v2106, 8
  %v2116 = vpop.permute.xlu0 %2115
  %2117 = vrot.lane.b32.xlu0 %v2107, 8
  %v2118 = vpop.permute.xlu0 %2117
  %2119 = vrot.lane.b32.xlu0 %v2108, 8
  %v2120 = vpop.permute.xlu0 %2119
  %v2121 = vsel %vm1765, %v2114, %v2116
  %v2122 = vsel %vm1765, %v2118, %v2120
  %2125 = vst [vmem:[#allocation3 + $0x40] sm:$0xff] %v2121
  %2126 = vst [vmem:[#allocation3 + $0x60] sm:$0xff] %v2122
  %v2127 = vld [vmem:[#allocation2] sm:$0xff]
  %v2128 = vld [vmem:[#allocation2 + $0x8] sm:$0xff]
  %v2129 = vld [vmem:[#allocation2 + $0x30] sm:$0xff]
  %v2130 = vld [vmem:[#allocation2 + $0x38] sm:$0xff]
  %v2131 = vld [vmem:[%s81 + $0x2] sm:$0x1]
  %v2132 = vlaneseq
  %v2133 = vshrl.u32 %v2132, 7
  %v2134 = vsub.s32 0, %v2133
  %v2135 = vrot.slane %v2131, %v2134
  %2137 = vrot.lane.b32.xlu0 %v2135, 121
  %v2138 = vpop.permute.xlu0 %2137
  %v2140 = vmul.f32 %v2127, %v2138
  %v2141 = vmul.f32 %v2128, %v2138
  %v2142 = vmul.f32 %v2129, %v2138
  %v2143 = vmul.f32 %v2130, %v2138
  %2148 = vrot.lane.b32.xlu0 %v2140, 7
  %v2149 = vpop.permute.xlu0 %2148
  %2150 = vrot.lane.b32.xlu0 %v2141, 7
  %v2151 = vpop.permute.xlu0 %2150
  %2152 = vrot.lane.b32.xlu0 %v2142, 7
  %v2153 = vpop.permute.xlu0 %2152
  %2154 = vrot.lane.b32.xlu0 %v2143, 7
  %v2155 = vpop.permute.xlu0 %2154
  %v2156 = vsel %vm1788, %v2149, %v2151
  %v2157 = vsel %vm1788, %v2153, %v2155
  %2160 = vst [vmem:[#allocation3 + $0x80] sm:$0xff] %v2156
  %2161 = vst [vmem:[#allocation3 + $0xa0] sm:$0xff] %v2157
  %v2162 = vld [vmem:[#allocation2] sm:$0xff]
  %v2163 = vld [vmem:[#allocation2 + $0x8] sm:$0xff]
  %v2164 = vld [vmem:[#allocation2 + $0x30] sm:$0xff]
  %v2165 = vld [vmem:[#allocation2 + $0x38] sm:$0xff]
  %v2166 = vld [vmem:[%s81 + $0x3] sm:$0x1]
  %v2167 = vlaneseq
  %v2168 = vshrl.u32 %v2167, 7
  %v2169 = vsub.s32 0, %v2168
  %v2170 = vrot.slane %v2166, %v2169
  %2172 = vrot.lane.b32.xlu0 %v2170, 127
  %v2173 = vpop.permute.xlu0 %2172
  %v2175 = vmul.f32 %v2162, %v2173
  %v2176 = vmul.f32 %v2163, %v2173
  %v2177 = vmul.f32 %v2164, %v2173
  %v2178 = vmul.f32 %v2165, %v2173
  %2183 = vrot.lane.b32.xlu0 %v2175, 1
  %v2184 = vpop.permute.xlu0 %2183
  %2185 = vrot.lane.b32.xlu0 %v2176, 1
  %v2186 = vpop.permute.xlu0 %2185
  %2187 = vrot.lane.b32.xlu0 %v2177, 1
  %v2188 = vpop.permute.xlu0 %2187
  %2189 = vrot.lane.b32.xlu0 %v2178, 1
  %v2190 = vpop.permute.xlu0 %2189
  %v2191 = vsel %vm337, %v2184, %v2186
  %v2192 = vsel %vm337, %v2188, %v2190
  %2195 = vst [vmem:[#allocation3 + $0xc0] sm:$0xff] %v2191
  %2196 = vst [vmem:[#allocation3 + $0xe0] sm:$0xff] %v2192
  %v2197 = vld [vmem:[#allocation2 + $0x8] sm:$0xff]
  %v2198 = vld [vmem:[#allocation2 + $0x38] sm:$0xff]
  %2199 = vst [vmem:[#allocation3 + $0x100] sm:$0xff] %v2197
  %2200 = vst [vmem:[#allocation3 + $0x120] sm:$0xff] %v2198
  %v2201 = vld [vmem:[#allocation2 + $0x8] sm:$0xff]
  %v2202 = vld [vmem:[#allocation2 + $0x10] sm:$0xff]
  %v2203 = vld [vmem:[#allocation2 + $0x38] sm:$0xff]
  %v2204 = vld [vmem:[#allocation2 + $0x40] sm:$0xff]
  %v2205 = vld [vmem:[%s81 + $0x4] sm:$0x1]
  %v2206 = vlaneseq
  %v2207 = vshrl.u32 %v2206, 7
  %v2208 = vsub.s32 0, %v2207
  %v2209 = vrot.slane %v2205, %v2208
  %2211 = vrot.lane.b32.xlu0 %v2209, 1
  %v2212 = vpop.permute.xlu0 %2211
  %v2214 = vmul.f32 %v2201, %v2212
  %v2215 = vmul.f32 %v2202, %v2212
  %v2216 = vmul.f32 %v2203, %v2212
  %v2217 = vmul.f32 %v2204, %v2212
  %2222 = vrot.lane.b32.xlu0 %v2214, 127
  %v2223 = vpop.permute.xlu0 %2222
  %2224 = vrot.lane.b32.xlu0 %v2215, 127
  %v2225 = vpop.permute.xlu0 %2224
  %2226 = vrot.lane.b32.xlu0 %v2216, 127
  %v2227 = vpop.permute.xlu0 %2226
  %2228 = vrot.lane.b32.xlu0 %v2217, 127
  %v2229 = vpop.permute.xlu0 %2228
  %v2230 = vsel %vm329, %v2223, %v2225
  %v2231 = vsel %vm329, %v2227, %v2229
  %2234 = vst [vmem:[#allocation3 + $0x140] sm:$0xff] %v2230
  %2235 = vst [vmem:[#allocation3 + $0x160] sm:$0xff] %v2231
  %v2236 = vld [vmem:[#allocation2 + $0x8] sm:$0xff]
  %v2237 = vld [vmem:[#allocation2 + $0x10] sm:$0xff]
  %v2238 = vld [vmem:[#allocation2 + $0x38] sm:$0xff]
  %v2239 = vld [vmem:[#allocation2 + $0x40] sm:$0xff]
  %v2240 = vld [vmem:[%s81 + $0x5] sm:$0x1]
  %v2241 = vlaneseq
  %v2242 = vshrl.u32 %v2241, 7
  %v2243 = vsub.s32 0, %v2242
  %v2244 = vrot.slane %v2240, %v2243
  %2246 = vrot.lane.b32.xlu0 %v2244, 7
  %v2247 = vpop.permute.xlu0 %2246
  %v2249 = vmul.f32 %v2236, %v2247
  %v2250 = vmul.f32 %v2237, %v2247
  %v2251 = vmul.f32 %v2238, %v2247
  %v2252 = vmul.f32 %v2239, %v2247
  %2257 = vrot.lane.b32.xlu0 %v2249, 121
  %v2258 = vpop.permute.xlu0 %2257
  %2259 = vrot.lane.b32.xlu0 %v2250, 121
  %v2260 = vpop.permute.xlu0 %2259
  %2261 = vrot.lane.b32.xlu0 %v2251, 121
  %v2262 = vpop.permute.xlu0 %2261
  %2263 = vrot.lane.b32.xlu0 %v2252, 121
  %v2264 = vpop.permute.xlu0 %2263
  %v2265 = vsel %vm1857, %v2258, %v2260
  %v2266 = vsel %vm1857, %v2262, %v2264
  %2269 = vst [vmem:[#allocation3 + $0x180] sm:$0xff] %v2265
  %2270 = vst [vmem:[#allocation3 + $0x1a0] sm:$0xff] %v2266
  %v2271 = vld [vmem:[#allocation2 + $0x8] sm:$0xff]
  %v2272 = vld [vmem:[#allocation2 + $0x10] sm:$0xff]
  %v2273 = vld [vmem:[#allocation2 + $0x38] sm:$0xff]
  %v2274 = vld [vmem:[#allocation2 + $0x40] sm:$0xff]
  %v2275 = vld [vmem:[%s81 + $0x6] sm:$0x1]
  %v2276 = vlaneseq
  %v2277 = vshrl.u32 %v2276, 7
  %v2278 = vsub.s32 0, %v2277
  %v2279 = vrot.slane %v2275, %v2278
  %2281 = vrot.lane.b32.xlu0 %v2279, 8
  %v2282 = vpop.permute.xlu0 %2281
  %v2284 = vmul.f32 %v2271, %v2282
  %v2285 = vmul.f32 %v2272, %v2282
  %v2286 = vmul.f32 %v2273, %v2282
  %v2287 = vmul.f32 %v2274, %v2282
  %2292 = vrot.lane.b32.xlu0 %v2284, 120
  %v2293 = vpop.permute.xlu0 %2292
  %2294 = vrot.lane.b32.xlu0 %v2285, 120
  %v2295 = vpop.permute.xlu0 %2294
  %2296 = vrot.lane.b32.xlu0 %v2286, 120
  %v2297 = vpop.permute.xlu0 %2296
  %2298 = vrot.lane.b32.xlu0 %v2287, 120
  %v2299 = vpop.permute.xlu0 %2298
  %v2300 = vsel %vm1880, %v2293, %v2295
  %v2301 = vsel %vm1880, %v2297, %v2299
  %2304 = vst [vmem:[#allocation3 + $0x1c0] sm:$0xff] %v2300
  %2305 = vst [vmem:[#allocation3 + $0x1e0] sm:$0xff] %v2301
  %v2306 = vld [vmem:[#allocation2 + $0x8] sm:$0xff]
  %v2307 = vld [vmem:[#allocation2 + $0x10] sm:$0xff]
  %v2308 = vld [vmem:[#allocation2 + $0x38] sm:$0xff]
  %v2309 = vld [vmem:[#allocation2 + $0x40] sm:$0xff]
  %v2310 = vld [vmem:[%s81 + $0x7] sm:$0x1]
  %v2311 = vlaneseq
  %v2312 = vshrl.u32 %v2311, 7
  %v2313 = vsub.s32 0, %v2312
  %v2314 = vrot.slane %v2310, %v2313
  %2316 = vrot.lane.b32.xlu0 %v2314, 9
  %v2317 = vpop.permute.xlu0 %2316
  %v2319 = vmul.f32 %v2306, %v2317
  %v2320 = vmul.f32 %v2307, %v2317
  %v2321 = vmul.f32 %v2308, %v2317
  %v2322 = vmul.f32 %v2309, %v2317
  %2327 = vrot.lane.b32.xlu0 %v2319, 119
  %v2328 = vpop.permute.xlu0 %2327
  %2329 = vrot.lane.b32.xlu0 %v2320, 119
  %v2330 = vpop.permute.xlu0 %2329
  %2331 = vrot.lane.b32.xlu0 %v2321, 119
  %v2332 = vpop.permute.xlu0 %2331
  %2333 = vrot.lane.b32.xlu0 %v2322, 119
  %v2334 = vpop.permute.xlu0 %2333
  %v2335 = vsel %vm1903, %v2328, %v2330
  %v2336 = vsel %vm1903, %v2332, %v2334
  %2339 = vst [vmem:[#allocation3 + $0x200] sm:$0xff] %v2335
  %2340 = vst [vmem:[#allocation3 + $0x220] sm:$0xff] %v2336
  %v2341 = vld [vmem:[%s21] sm:$0xff]
  %v2342 = vld [vmem:[%s21 + $0x8] sm:$0xff]
  %v2343 = vld [vmem:[%s21 + $0x10] sm:$0xff]
  %v2344 = vld [vmem:[%s21 + $0x18] sm:$0xff]
  %v2345 = vld [vmem:[#allocation3] sm:$0xff]
  %v2346 = vld [vmem:[#allocation3 + $0x20] sm:$0xff]
  %v2347 = vld [vmem:[#allocation3 + $0x40] sm:$0xff]
  %v2348 = vld [vmem:[#allocation3 + $0x60] sm:$0xff]
  %v2349 = vld [vmem:[#allocation3 + $0x80] sm:$0xff]
  %v2350 = vld [vmem:[#allocation3 + $0xa0] sm:$0xff]
  %v2351 = vld [vmem:[#allocation3 + $0xc0] sm:$0xff]
  %v2352 = vld [vmem:[#allocation3 + $0xe0] sm:$0xff]
  %v2353 = vld [vmem:[#allocation3 + $0x100] sm:$0xff]
  %v2354 = vld [vmem:[#allocation3 + $0x120] sm:$0xff]
  %v2355 = vld [vmem:[#allocation3 + $0x140] sm:$0xff]
  %v2356 = vld [vmem:[#allocation3 + $0x160] sm:$0xff]
  %v2357 = vld [vmem:[#allocation3 + $0x180] sm:$0xff]
  %v2358 = vld [vmem:[#allocation3 + $0x1a0] sm:$0xff]
  %v2359 = vld [vmem:[#allocation3 + $0x1c0] sm:$0xff]
  %v2360 = vld [vmem:[#allocation3 + $0x1e0] sm:$0xff]
  %v2361 = vld [vmem:[#allocation3 + $0x200] sm:$0xff]
  %v2362 = vld [vmem:[#allocation3 + $0x220] sm:$0xff]
  %v2364 = vsel %vm291, %v2342, 0
  %v2367 = vsel %vm291, %v2344, 0
  %2369 = vmatprep.subr.mxu0 0.0
  %2370 = vmatpush1.msra.mxu0 %v2345
  %2371 = vmatprep.subr.mxu0 0.0
  %2372 = vmatpush1.msra.mxu0 %v2346
  %2373 = vmatprep.subr.mxu0 0.0
  %2374 = vmatpush1.msra.mxu0 %v2347
  %2375 = vmatprep.subr.mxu0 0.0
  %2376 = vmatpush1.msra.mxu0 %v2348
  %2377 = vmatprep.subr.mxu0 0.0
  %2378 = vmatpush1.msra.mxu0 %v2349
  %2379 = vmatprep.subr.mxu0 0.0
  %2380 = vmatpush1.msra.mxu0 %v2350
  %2381 = vmatprep.subr.mxu0 0.0
  %2382 = vmatpush1.msra.mxu0 %v2351
  %2383 = vmatprep.subr.mxu0 0.0
  %2384 = vmatpush1.msra.mxu0 %v2352
  %2385 = vmatprep.subr.mxu0 0.0
  %2386 = vmatpush1.msra.mxu0 %v2353
  %2387 = vmatprep.subr.mxu0 0.0
  %2388 = vmatpush1.msra.mxu0 %v2354
  %2389 = vmatprep.subr.mxu0 0.0
  %2390 = vmatpush1.msra.mxu0 %v2355
  %2391 = vmatprep.subr.mxu0 0.0
  %2392 = vmatpush1.msra.mxu0 %v2356
  %2393 = vmatprep.subr.mxu0 0.0
  %2394 = vmatpush1.msra.mxu0 %v2357
  %2395 = vmatprep.subr.mxu0 0.0
  %2396 = vmatpush1.msra.mxu0 %v2358
  %2397 = vmatprep.subr.mxu0 0.0
  %2398 = vmatpush1.msra.mxu0 %v2359
  %2399 = vmatprep.subr.mxu0 0.0
  %2400 = vmatpush1.msra.mxu0 %v2360
  %2401 = vmatprep.subr.mxu0 0.0
  %2402 = vmatpush1.msra.mxu0 %v2361
  %2403 = vmatprep.subr.mxu0 0.0
  %2404 = vmatpush1.msra.mxu0 %v2362
  %2405 = vmatprep.subr.mxu0 0.0
  %2406 = vmatpush1.msra.mxu0 0.0
  %2407 = vmatprep.subr.mxu0 0.0
  %2408 = vmatpush1.msra.mxu0 0.0
  %2409 = vmatprep.subr.mxu0 0.0
  %2410 = vmatpush1.msra.mxu0 0.0
  %2411 = vmatprep.subr.mxu0 0.0
  %2412 = vmatpush1.msra.mxu0 0.0
  %2413 = vmatprep.subr.mxu0 0.0
  %2414 = vmatpush1.msra.mxu0 0.0
  %2415 = vmatprep.subr.mxu0 0.0
  %2416 = vmatpush1.msra.mxu0 0.0
  %2417 = vmatprep.subr.mxu0 0.0
  %2418 = vmatpush1.msra.mxu0 0.0
  %2419 = vmatprep.subr.mxu0 0.0
  %2420 = vmatpush1.msra.mxu0 0.0
  %2421 = vmatprep.subr.mxu0 0.0
  %2422 = vmatpush1.msra.mxu0 0.0
  %2423 = vmatprep.subr.mxu0 0.0
  %2424 = vmatpush1.msra.mxu0 0.0
  %2425 = vmatprep.subr.mxu0 0.0
  %2426 = vmatpush1.msra.mxu0 0.0
  %2427 = vmatprep.subr.mxu0 0.0
  %2428 = vmatpush1.msra.mxu0 0.0
  %2429 = vmatprep.subr.mxu0 0.0
  %2430 = vmatpush1.msra.mxu0 0.0
  %2431 = vmatprep.subr.mxu0 0.0
  %2432 = vmatpush1.msra.mxu0 0.0
  %2433 = vmatprep.mubr.f32.mxu0 %v2364
  %2434 = vmatmul.mubr.f32.gmra.mrb[0].mxu0 %v2341
  %v2435 = vpop.f32.mrb[0].mxu0
  %v2436 = vadd.f32 0.0, %v2435
  %v2437 = vpop.f32.mrb[0].mxu0
  %2438 = vmatprep.mubr.f32.mxu0 %v2367
  %2439 = vmatmul.mubr.f32.gmra.mrb[0].mxu0 %v2343
  %v2440 = vpop.f32.mrb[0].mxu0
  %v2441 = vadd.f32 0.0, %v2440
  %v2442 = vpop.f32.mrb[0].mxu0
  %2443 = vdwg.mxu0
  %2444 = vadd.xlane.f32.xlu0 %v2436
  %v2445 = vpop.xlane.xlu0 %2444
  %2446 = vadd.xlane.f32.xlu0 %v2441
  %v2447 = vpop.xlane.xlu0 %2446
  %v2448 = vmul.f32 %v2445, 0.0078125
  %v2449 = vmul.f32 %v2447, 0.0078125
  %v2450 = vsub.f32 %v2436, %v2448
  %v2451 = vsub.f32 %v2441, %v2449
  %v2452 = vmul.f32 %v2450, %v2450
  %v2453 = vmul.f32 %v2451, %v2451
  %2454 = vadd.xlane.f32.xlu0 %v2452
  %v2455 = vpop.xlane.xlu0 %2454
  %2456 = vadd.xlane.f32.xlu0 %v2453
  %v2457 = vpop.xlane.xlu0 %2456
  %v2458 = vmul.f32 %v2455, 0.0078125
  %v2459 = vmul.f32 %v2457, 0.0078125
  %v2460 = vld [vmem:[%s23] sm:$0xff]
  %v2461 = vld [vmem:[%s23 + $0x8] sm:$0xff]
  %v2462 = vadd.f32 %v2458, 1e-05
  %v2463 = vadd.f32 %v2459, 1e-05
  %v2464 = vrsqrt.pop %v2462
  %v2465 = vrsqrt.pop %v2463
  %v2466 = vmul.f32 %v2460, %v2464
  %v2467 = vmul.f32 %v2461, %v2465
  %2469 = vset.pattern.permute.xlu0 0
  %2470 = vperm.xlu0 %2469, %v2466
  %v2471 = vpop.permute.xlu0 %2470
  %2474 = vset.pattern.permute.xlu0 0
  %2475 = vperm.xlu0 %2474, %v2467
  %v2476 = vpop.permute.xlu0 %2475
  %v2478 = vmul.f32 %v2450, %v2471
  %v2479 = vmul.f32 %v2451, %v2476
  %v2480 = vld [vmem:[%s25] sm:$0xff]
  %v2481 = vld [vmem:[%s25 + $0x8] sm:$0xff]
  %2483 = vset.pattern.permute.xlu0 0
  %2484 = vperm.xlu0 %2483, %v2480
  %v2485 = vpop.permute.xlu0 %2484
  %2488 = vset.pattern.permute.xlu0 0
  %2489 = vperm.xlu0 %2488, %v2481
  %v2490 = vpop.permute.xlu0 %2489
  %v2492 = vadd.f32 %v2478, %v2485
  %v2493 = vadd.f32 %v2479, %v2490
  %vm2494 = vcmp.gt.f32.partialorder %v2492, 0.0
  %vm2495 = vcmp.gt.f32.partialorder %v2493, 0.0
  %v2496 = vmul.f32 %v2492, 0.01
  %v2497 = vmul.f32 %v2493, 0.01
  %v2498 = vsel %vm2494, %v2492, %v2496
  %v2499 = vsel %vm2495, %v2493, %v2497
  %2500 = vst [vmem:[#allocation2 + $0x8] sm:$0xff] %v2498
  %2501 = vst [vmem:[#allocation2 + $0x38] sm:$0xff] %v2499
  %v2502 = vld [vmem:[#allocation2 + $0x8] sm:$0xff]
  %v2503 = vld [vmem:[#allocation2 + $0x10] sm:$0xff]
  %v2504 = vld [vmem:[#allocation2 + $0x38] sm:$0xff]
  %v2505 = vld [vmem:[#allocation2 + $0x40] sm:$0xff]
  %2510 = vrot.lane.b32.xlu0 %v2502, 127
  %v2511 = vpop.permute.xlu0 %2510
  %2512 = vrot.lane.b32.xlu0 %v2503, 127
  %v2513 = vpop.permute.xlu0 %2512
  %2514 = vrot.lane.b32.xlu0 %v2504, 127
  %v2515 = vpop.permute.xlu0 %2514
  %2516 = vrot.lane.b32.xlu0 %v2505, 127
  %v2517 = vpop.permute.xlu0 %2516
  %v2518 = vsel %vm329, %v2511, %v2513
  %v2519 = vsel %vm329, %v2515, %v2517
  %v2522 = vmax.f32 %v2498, %v2518
  %v2523 = vmax.f32 %v2499, %v2519
  %v2526 = vmax.f32 %v2502, %v2518
  %v2527 = vmax.f32 %v2503, %v2513
  %v2528 = vmax.f32 %v2504, %v2519
  %v2529 = vmax.f32 %v2505, %v2517
  %2534 = vrot.lane.b32.xlu0 %v2526, 120
  %v2535 = vpop.permute.xlu0 %2534
  %2536 = vrot.lane.b32.xlu0 %v2527, 120
  %v2537 = vpop.permute.xlu0 %2536
  %2538 = vrot.lane.b32.xlu0 %v2528, 120
  %v2539 = vpop.permute.xlu0 %2538
  %2540 = vrot.lane.b32.xlu0 %v2529, 120
  %v2541 = vpop.permute.xlu0 %2540
  %v2542 = vsel %vm1880, %v2535, %v2537
  %v2543 = vsel %vm1880, %v2539, %v2541
  %v2546 = vmax.f32 %v2522, %v2542
  %v2547 = vmax.f32 %v2523, %v2543
  %v2548 = vld [vmem:[%s89] sm:$0xff]
  %v2549 = vld [vmem:[%s89 + $0x8] sm:$0xff]
  %v2550 = vld [vmem:[%s89 + $0x10] sm:$0xff]
  %v2551 = vld [vmem:[%s89 + $0x18] sm:$0xff]
  %v2552 = vld [vmem:[%s89 + $0x20] sm:$0xff]
  %v2553 = vld [vmem:[%s89 + $0x28] sm:$0xff]
  %v2554 = vld [vmem:[%s89 + $0x30] sm:$0xff]
  %v2555 = vld [vmem:[%s89 + $0x38] sm:$0xff]
  %v2557 = vsel %vm1643, %v2546, 0
  %v2560 = vsel %vm1643, %v2547, 0
  %2562 = vmatprep.subr.mxu0 0.0
  %2563 = vmatpush1.msra.mxu0 %v2548
  %2564 = vmatprep.subr.mxu0 0.0
  %2565 = vmatpush1.msra.mxu0 %v2549
  %2566 = vmatprep.subr.mxu0 0.0
  %2567 = vmatpush1.msra.mxu0 %v2550
  %2568 = vmatprep.subr.mxu0 0.0
  %2569 = vmatpush1.msra.mxu0 %v2551
  %2570 = vmatprep.subr.mxu0 0.0
  %2571 = vmatpush1.msra.mxu0 %v2552
  %2572 = vmatprep.subr.mxu0 0.0
  %2573 = vmatpush1.msra.mxu0 %v2553
  %2574 = vmatprep.subr.mxu0 0.0
  %2575 = vmatpush1.msra.mxu0 %v2554
  %2576 = vmatprep.subr.mxu0 0.0
  %2577 = vmatpush1.msra.mxu0 %v2555
  %2578 = vmatprep.subr.mxu0 0.0
  %2579 = vmatpush1.msra.mxu0 0.0
  %2580 = vmatprep.subr.mxu0 0.0
  %2581 = vmatpush1.msra.mxu0 0.0
  %2582 = vmatprep.subr.mxu0 0.0
  %2583 = vmatpush1.msra.mxu0 0.0
  %2584 = vmatprep.subr.mxu0 0.0
  %2585 = vmatpush1.msra.mxu0 0.0
  %2586 = vmatprep.subr.mxu0 0.0
  %2587 = vmatpush1.msra.mxu0 0.0
  %2588 = vmatprep.subr.mxu0 0.0
  %2589 = vmatpush1.msra.mxu0 0.0
  %2590 = vmatprep.subr.mxu0 0.0
  %2591 = vmatpush1.msra.mxu0 0.0
  %2592 = vmatprep.subr.mxu0 0.0
  %2593 = vmatpush1.msra.mxu0 0.0
  %2594 = vmatprep.subr.mxu0 0.0
  %2595 = vmatpush1.msra.mxu0 0.0
  %2596 = vmatprep.subr.mxu0 0.0
  %2597 = vmatpush1.msra.mxu0 0.0
  %2598 = vmatprep.subr.mxu0 0.0
  %2599 = vmatpush1.msra.mxu0 0.0
  %2600 = vmatprep.subr.mxu0 0.0
  %2601 = vmatpush1.msra.mxu0 0.0
  %2602 = vmatprep.subr.mxu0 0.0
  %2603 = vmatpush1.msra.mxu0 0.0
  %2604 = vmatprep.subr.mxu0 0.0
  %2605 = vmatpush1.msra.mxu0 0.0
  %2606 = vmatprep.subr.mxu0 0.0
  %2607 = vmatpush1.msra.mxu0 0.0
  %2608 = vmatprep.subr.mxu0 0.0
  %2609 = vmatpush1.msra.mxu0 0.0
  %2610 = vmatprep.subr.mxu0 0.0
  %2611 = vmatpush1.msra.mxu0 0.0
  %2612 = vmatprep.subr.mxu0 0.0
  %2613 = vmatpush1.msra.mxu0 0.0
  %2614 = vmatprep.subr.mxu0 0.0
  %2615 = vmatpush1.msra.mxu0 0.0
  %2616 = vmatprep.subr.mxu0 0.0
  %2617 = vmatpush1.msra.mxu0 0.0
  %2618 = vmatprep.subr.mxu0 0.0
  %2619 = vmatpush1.msra.mxu0 0.0
  %2620 = vmatprep.subr.mxu0 0.0
  %2621 = vmatpush1.msra.mxu0 0.0
  %2622 = vmatprep.subr.mxu0 0.0
  %2623 = vmatpush1.msra.mxu0 0.0
  %2624 = vmatprep.subr.mxu0 0.0
  %2625 = vmatpush1.msra.mxu0 0.0
  %2626 = vmatprep.mubr.f32.mxu0 0.0
  %2627 = vmatmul.mubr.f32.gmra.mrb[0].mxu0 %v2557
  %v2628 = vpop.f32.mrb[0].mxu0
  %v2629 = vadd.f32 0.0, %v2628
  %v2630 = vpop.f32.mrb[0].mxu0
  %2631 = vmatprep.mubr.f32.mxu0 0.0
  %2632 = vmatmul.mubr.f32.gmra.mrb[0].mxu0 %v2560
  %v2633 = vpop.f32.mrb[0].mxu0
  %v2634 = vadd.f32 0.0, %v2633
  %v2635 = vpop.f32.mrb[0].mxu0
  %2636 = vdwg.mxu0
  %2637 = vst.msk [vmem:[#allocation3] sm:$0xff] %vm291, %v2629
  %2638 = vst.msk [vmem:[#allocation3 + $0x20] sm:$0xff] %vm291, %v2634
  %2639 = vrot.lane.b32.xlu0 %v2546, 64
  %v2640 = vpop.permute.xlu0 %2639
  %2641 = vrot.lane.b32.xlu0 %v2547, 64
  %v2642 = vpop.permute.xlu0 %2641
  %v2643 = vsel %vm1643, %v2640, 0
  %v2645 = vsel %vm1643, %v2642, 0
  %2647 = vmatprep.subr.mxu0 0.0
  %2648 = vmatpush1.msra.mxu0 %v2548
  %2649 = vmatprep.subr.mxu0 0.0
  %2650 = vmatpush1.msra.mxu0 %v2549
  %2651 = vmatprep.subr.mxu0 0.0
  %2652 = vmatpush1.msra.mxu0 %v2550
  %2653 = vmatprep.subr.mxu0 0.0
  %2654 = vmatpush1.msra.mxu0 %v2551
  %2655 = vmatprep.subr.mxu0 0.0
  %2656 = vmatpush1.msra.mxu0 %v2552
  %2657 = vmatprep.subr.mxu0 0.0
  %2658 = vmatpush1.msra.mxu0 %v2553
  %2659 = vmatprep.subr.mxu0 0.0
  %2660 = vmatpush1.msra.mxu0 %v2554
  %2661 = vmatprep.subr.mxu0 0.0
  %2662 = vmatpush1.msra.mxu0 %v2555
  %2663 = vmatprep.subr.mxu0 0.0
  %2664 = vmatpush1.msra.mxu0 0.0
  %2665 = vmatprep.subr.mxu0 0.0
  %2666 = vmatpush1.msra.mxu0 0.0
  %2667 = vmatprep.subr.mxu0 0.0
  %2668 = vmatpush1.msra.mxu0 0.0
  %2669 = vmatprep.subr.mxu0 0.0
  %2670 = vmatpush1.msra.mxu0 0.0
  %2671 = vmatprep.subr.mxu0 0.0
  %2672 = vmatpush1.msra.mxu0 0.0
  %2673 = vmatprep.subr.mxu0 0.0
  %2674 = vmatpush1.msra.mxu0 0.0
  %2675 = vmatprep.subr.mxu0 0.0
  %2676 = vmatpush1.msra.mxu0 0.0
  %2677 = vmatprep.subr.mxu0 0.0
  %2678 = vmatpush1.msra.mxu0 0.0
  %2679 = vmatprep.subr.mxu0 0.0
  %2680 = vmatpush1.msra.mxu0 0.0
  %2681 = vmatprep.subr.mxu0 0.0
  %2682 = vmatpush1.msra.mxu0 0.0
  %2683 = vmatprep.subr.mxu0 0.0
  %2684 = vmatpush1.msra.mxu0 0.0
  %2685 = vmatprep.subr.mxu0 0.0
  %2686 = vmatpush1.msra.mxu0 0.0
  %2687 = vmatprep.subr.mxu0 0.0
  %2688 = vmatpush1.msra.mxu0 0.0
  %2689 = vmatprep.subr.mxu0 0.0
  %2690 = vmatpush1.msra.mxu0 0.0
  %2691 = vmatprep.subr.mxu0 0.0
  %2692 = vmatpush1.msra.mxu0 0.0
  %2693 = vmatprep.subr.mxu0 0.0
  %2694 = vmatpush1.msra.mxu0 0.0
  %2695 = vmatprep.subr.mxu0 0.0
  %2696 = vmatpush1.msra.mxu0 0.0
  %2697 = vmatprep.subr.mxu0 0.0
  %2698 = vmatpush1.msra.mxu0 0.0
  %2699 = vmatprep.subr.mxu0 0.0
  %2700 = vmatpush1.msra.mxu0 0.0
  %2701 = vmatprep.subr.mxu0 0.0
  %2702 = vmatpush1.msra.mxu0 0.0
  %2703 = vmatprep.subr.mxu0 0.0
  %2704 = vmatpush1.msra.mxu0 0.0
  %2705 = vmatprep.subr.mxu0 0.0
  %2706 = vmatpush1.msra.mxu0 0.0
  %2707 = vmatprep.subr.mxu0 0.0
  %2708 = vmatpush1.msra.mxu0 0.0
  %2709 = vmatprep.subr.mxu0 0.0
  %2710 = vmatpush1.msra.mxu0 0.0
  %2711 = vmatprep.mubr.f32.mxu0 0.0
  %2712 = vmatmul.mubr.f32.gmra.mrb[0].mxu0 %v2643
  %v2713 = vpop.f32.mrb[0].mxu0
  %v2714 = vadd.f32 0.0, %v2713
  %v2715 = vpop.f32.mrb[0].mxu0
  %2716 = vmatprep.mubr.f32.mxu0 0.0
  %2717 = vmatmul.mubr.f32.gmra.mrb[0].mxu0 %v2645
  %v2718 = vpop.f32.mrb[0].mxu0
  %v2719 = vadd.f32 0.0, %v2718
  %v2720 = vpop.f32.mrb[0].mxu0
  %2721 = vdwg.mxu0
  %2724 = vrot.lane.b32.xlu0 %v2714, 16
  %v2725 = vpop.permute.xlu0 %2724
  %2726 = vrot.lane.b32.xlu0 %v2719, 16
  %v2727 = vpop.permute.xlu0 %2726
  %vm2730 = vcmask 261248
  %2731 = vst.msk [vmem:[#allocation3] sm:$0xff] %vm2730, %v2725
  %2732 = vst.msk [vmem:[#allocation3 + $0x20] sm:$0xff] %vm2730, %v2727
  %v2733 = vld [vmem:[#allocation3] sm:$0xff]
  %v2734 = vld [vmem:[#allocation3 + $0x20] sm:$0xff]
  %vm2735 = vcmask 261120
  %2736 = vst.msk [vmem:[%s101] sm:$0xff] %vm2735, %v2733
  %2737 = vst.msk [vmem:[%s101 + $0x8] sm:$0xff] %vm2735, %v2734
  %2738 = vst.msk [vmem:[#allocation2 + $0x8] sm:$0xff] %vm2735, %v2733
  %2739 = vst.msk [vmem:[#allocation2 + $0x38] sm:$0xff] %vm2735, %v2734
  %v2740 = vld [vmem:[#allocation2] sm:$0xff]
  %v2741 = vld [vmem:[#allocation2 + $0x8] sm:$0xff]
  %v2742 = vld [vmem:[#allocation2 + $0x30] sm:$0xff]
  %v2743 = vld [vmem:[#allocation2 + $0x38] sm:$0xff]
  %v2744 = vld [vmem:[%s83] sm:$0x1]
  %v2745 = vlaneseq
  %v2746 = vshrl.u32 %v2745, 7
  %v2747 = vsub.s32 0, %v2746
  %v2748 = vrot.slane %v2744, %v2747
  %2750 = vrot.lane.b32.xlu0 %v2748, 123
  %v2751 = vpop.permute.xlu0 %2750
  %v2753 = vmul.f32 %v2740, %v2751
  %v2754 = vmul.f32 %v2741, %v2751
  %v2755 = vmul.f32 %v2742, %v2751
  %v2756 = vmul.f32 %v2743, %v2751
  %2761 = vrot.lane.b32.xlu0 %v2753, 5
  %v2762 = vpop.permute.xlu0 %2761
  %2763 = vrot.lane.b32.xlu0 %v2754, 5
  %v2764 = vpop.permute.xlu0 %2763
  %2765 = vrot.lane.b32.xlu0 %v2755, 5
  %v2766 = vpop.permute.xlu0 %2765
  %2767 = vrot.lane.b32.xlu0 %v2756, 5
  %v2768 = vpop.permute.xlu0 %2767
  %vm2769 = vcmask 39936
  %v2770 = vsel %vm2769, %v2762, %v2764
  %v2771 = vsel %vm2769, %v2766, %v2768
  %2774 = vst.msk [vmem:[#allocation3] sm:$0xff] %vm2735, %v2770
  %2775 = vst.msk [vmem:[#allocation3 + $0x20] sm:$0xff] %vm2735, %v2771
  %v2776 = vld [vmem:[#allocation2] sm:$0xff]
  %v2777 = vld [vmem:[#allocation2 + $0x8] sm:$0xff]
  %v2778 = vld [vmem:[#allocation2 + $0x30] sm:$0xff]
  %v2779 = vld [vmem:[#allocation2 + $0x38] sm:$0xff]
  %v2780 = vld [vmem:[%s83 + $0x1] sm:$0x1]
  %v2781 = vlaneseq
  %v2782 = vshrl.u32 %v2781, 7
  %v2783 = vsub.s32 0, %v2782
  %v2784 = vrot.slane %v2780, %v2783
  %2786 = vrot.lane.b32.xlu0 %v2784, 124
  %v2787 = vpop.permute.xlu0 %2786
  %v2789 = vmul.f32 %v2776, %v2787
  %v2790 = vmul.f32 %v2777, %v2787
  %v2791 = vmul.f32 %v2778, %v2787
  %v2792 = vmul.f32 %v2779, %v2787
  %2797 = vrot.lane.b32.xlu0 %v2789, 4
  %v2798 = vpop.permute.xlu0 %2797
  %2799 = vrot.lane.b32.xlu0 %v2790, 4
  %v2800 = vpop.permute.xlu0 %2799
  %2801 = vrot.lane.b32.xlu0 %v2791, 4
  %v2802 = vpop.permute.xlu0 %2801
  %2803 = vrot.lane.b32.xlu0 %v2792, 4
  %v2804 = vpop.permute.xlu0 %2803
  %vm2805 = vcmask 31744
  %v2806 = vsel %vm2805, %v2798, %v2800
  %v2807 = vsel %vm2805, %v2802, %v2804
  %2810 = vst.msk [vmem:[#allocation3 + $0x40] sm:$0xff] %vm2735, %v2806
  %2811 = vst.msk [vmem:[#allocation3 + $0x60] sm:$0xff] %vm2735, %v2807
  %v2812 = vld [vmem:[#allocation2] sm:$0xff]
  %v2813 = vld [vmem:[#allocation2 + $0x8] sm:$0xff]
  %v2814 = vld [vmem:[#allocation2 + $0x30] sm:$0xff]
  %v2815 = vld [vmem:[#allocation2 + $0x38] sm:$0xff]
  %v2816 = vld [vmem:[%s83 + $0x2] sm:$0x1]
  %v2817 = vlaneseq
  %v2818 = vshrl.u32 %v2817, 7
  %v2819 = vsub.s32 0, %v2818
  %v2820 = vrot.slane %v2816, %v2819
  %2822 = vrot.lane.b32.xlu0 %v2820, 125
  %v2823 = vpop.permute.xlu0 %2822
  %v2825 = vmul.f32 %v2812, %v2823
  %v2826 = vmul.f32 %v2813, %v2823
  %v2827 = vmul.f32 %v2814, %v2823
  %v2828 = vmul.f32 %v2815, %v2823
  %2833 = vrot.lane.b32.xlu0 %v2825, 3
  %v2834 = vpop.permute.xlu0 %2833
  %2835 = vrot.lane.b32.xlu0 %v2826, 3
  %v2836 = vpop.permute.xlu0 %2835
  %2837 = vrot.lane.b32.xlu0 %v2827, 3
  %v2838 = vpop.permute.xlu0 %2837
  %2839 = vrot.lane.b32.xlu0 %v2828, 3
  %v2840 = vpop.permute.xlu0 %2839
  %vm2841 = vcmask 23552
  %v2842 = vsel %vm2841, %v2834, %v2836
  %v2843 = vsel %vm2841, %v2838, %v2840
  %2846 = vst.msk [vmem:[#allocation3 + $0x80] sm:$0xff] %vm2735, %v2842
  %2847 = vst.msk [vmem:[#allocation3 + $0xa0] sm:$0xff] %vm2735, %v2843
  %v2848 = vld [vmem:[#allocation2] sm:$0xff]
  %v2849 = vld [vmem:[#allocation2 + $0x8] sm:$0xff]
  %v2850 = vld [vmem:[#allocation2 + $0x30] sm:$0xff]
  %v2851 = vld [vmem:[#allocation2 + $0x38] sm:$0xff]
  %v2852 = vld [vmem:[%s83 + $0x3] sm:$0x1]
  %v2853 = vlaneseq
  %v2854 = vshrl.u32 %v2853, 7
  %v2855 = vsub.s32 0, %v2854
  %v2856 = vrot.slane %v2852, %v2855
  %2858 = vrot.lane.b32.xlu0 %v2856, 127
  %v2859 = vpop.permute.xlu0 %2858
  %v2861 = vmul.f32 %v2848, %v2859
  %v2862 = vmul.f32 %v2849, %v2859
  %v2863 = vmul.f32 %v2850, %v2859
  %v2864 = vmul.f32 %v2851, %v2859
  %2869 = vrot.lane.b32.xlu0 %v2861, 1
  %v2870 = vpop.permute.xlu0 %2869
  %2871 = vrot.lane.b32.xlu0 %v2862, 1
  %v2872 = vpop.permute.xlu0 %2871
  %2873 = vrot.lane.b32.xlu0 %v2863, 1
  %v2874 = vpop.permute.xlu0 %2873
  %2875 = vrot.lane.b32.xlu0 %v2864, 1
  %v2876 = vpop.permute.xlu0 %2875
  %v2877 = vsel %vm337, %v2870, %v2872
  %v2878 = vsel %vm337, %v2874, %v2876
  %2881 = vst.msk [vmem:[#allocation3 + $0xc0] sm:$0xff] %vm2735, %v2877
  %2882 = vst.msk [vmem:[#allocation3 + $0xe0] sm:$0xff] %vm2735, %v2878
  %v2883 = vld [vmem:[#allocation2 + $0x8] sm:$0xff]
  %v2884 = vld [vmem:[#allocation2 + $0x38] sm:$0xff]
  %2885 = vst.msk [vmem:[#allocation3 + $0x100] sm:$0xff] %vm2735, %v2883
  %2886 = vst.msk [vmem:[#allocation3 + $0x120] sm:$0xff] %vm2735, %v2884
  %v2887 = vld [vmem:[#allocation2 + $0x8] sm:$0xff]
  %v2888 = vld [vmem:[#allocation2 + $0x38] sm:$0xff]
  %v2889 = vld [vmem:[%s83 + $0x4] sm:$0x1]
  %v2890 = vlaneseq
  %v2891 = vshrl.u32 %v2890, 7
  %v2892 = vsub.s32 0, %v2891
  %v2893 = vrot.slane %v2889, %v2892
  %2895 = vrot.lane.b32.xlu0 %v2893, 1
  %v2896 = vpop.permute.xlu0 %2895
  %v2898 = vmul.f32 %v2887, %v2896
  %v2899 = vmul.f32 %v2888, %v2896
  %2902 = vrot.lane.b32.xlu0 %v2898, 127
  %v2903 = vpop.permute.xlu0 %2902
  %2904 = vrot.lane.b32.xlu0 %v2899, 127
  %v2905 = vpop.permute.xlu0 %2904
  %2908 = vst.msk [vmem:[#allocation3 + $0x140] sm:$0xff] %vm2735, %v2903
  %2909 = vst.msk [vmem:[#allocation3 + $0x160] sm:$0xff] %vm2735, %v2905
  %v2910 = vld [vmem:[#allocation2 + $0x8] sm:$0xff]
  %v2911 = vld [vmem:[#allocation2 + $0x38] sm:$0xff]
  %v2912 = vld [vmem:[%s83 + $0x5] sm:$0x1]
  %v2913 = vlaneseq
  %v2914 = vshrl.u32 %v2913, 7
  %v2915 = vsub.s32 0, %v2914
  %v2916 = vrot.slane %v2912, %v2915
  %2918 = vrot.lane.b32.xlu0 %v2916, 3
  %v2919 = vpop.permute.xlu0 %2918
  %v2921 = vmul.f32 %v2910, %v2919
  %v2922 = vmul.f32 %v2911, %v2919
  %2925 = vrot.lane.b32.xlu0 %v2921, 125
  %v2926 = vpop.permute.xlu0 %2925
  %2927 = vrot.lane.b32.xlu0 %v2922, 125
  %v2928 = vpop.permute.xlu0 %2927
  %2931 = vst.msk [vmem:[#allocation3 + $0x180] sm:$0xff] %vm2735, %v2926
  %2932 = vst.msk [vmem:[#allocation3 + $0x1a0] sm:$0xff] %vm2735, %v2928
  %v2933 = vld [vmem:[#allocation2 + $0x8] sm:$0xff]
  %v2934 = vld [vmem:[#allocation2 + $0x38] sm:$0xff]
  %v2935 = vld [vmem:[%s83 + $0x6] sm:$0x1]
  %v2936 = vlaneseq
  %v2937 = vshrl.u32 %v2936, 7
  %v2938 = vsub.s32 0, %v2937
  %v2939 = vrot.slane %v2935, %v2938
  %2941 = vrot.lane.b32.xlu0 %v2939, 4
  %v2942 = vpop.permute.xlu0 %2941
  %v2944 = vmul.f32 %v2933, %v2942
  %v2945 = vmul.f32 %v2934, %v2942
  %2948 = vrot.lane.b32.xlu0 %v2944, 124
  %v2949 = vpop.permute.xlu0 %2948
  %2950 = vrot.lane.b32.xlu0 %v2945, 124
  %v2951 = vpop.permute.xlu0 %2950
  %2954 = vst.msk [vmem:[#allocation3 + $0x1c0] sm:$0xff] %vm2735, %v2949
  %2955 = vst.msk [vmem:[#allocation3 + $0x1e0] sm:$0xff] %vm2735, %v2951
  %v2956 = vld [vmem:[#allocation2 + $0x8] sm:$0xff]
  %v2957 = vld [vmem:[#allocation2 + $0x38] sm:$0xff]
  %v2958 = vld [vmem:[%s83 + $0x7] sm:$0x1]
  %v2959 = vlaneseq
  %v2960 = vshrl.u32 %v2959, 7
  %v2961 = vsub.s32 0, %v2960
  %v2962 = vrot.slane %v2958, %v2961
  %2964 = vrot.lane.b32.xlu0 %v2962, 5
  %v2965 = vpop.permute.xlu0 %2964
  %v2967 = vmul.f32 %v2956, %v2965
  %v2968 = vmul.f32 %v2957, %v2965
  %2971 = vrot.lane.b32.xlu0 %v2967, 123
  %v2972 = vpop.permute.xlu0 %2971
  %2973 = vrot.lane.b32.xlu0 %v2968, 123
  %v2974 = vpop.permute.xlu0 %2973
  %2977 = vst.msk [vmem:[#allocation3 + $0x200] sm:$0xff] %vm2735, %v2972
  %2978 = vst.msk [vmem:[#allocation3 + $0x220] sm:$0xff] %vm2735, %v2974
  %v2979 = vld [vmem:[%s27] sm:$0xff]
  %v2980 = vld [vmem:[%s27 + $0x8] sm:$0xff]
  %v2981 = vld [vmem:[%s27 + $0x10] sm:$0xff]
  %v2982 = vld [vmem:[%s27 + $0x18] sm:$0xff]
  %v2983 = vld [vmem:[%s27 + $0x20] sm:$0xff]
  %v2984 = vld [vmem:[%s27 + $0x28] sm:$0xff]
  %v2985 = vld [vmem:[%s27 + $0x30] sm:$0xff]
  %v2986 = vld [vmem:[%s27 + $0x38] sm:$0xff]
  %v2987 = vld [vmem:[#allocation3] sm:$0xff]
  %v2988 = vld [vmem:[#allocation3 + $0x20] sm:$0xff]
  %v2989 = vld [vmem:[#allocation3 + $0x40] sm:$0xff]
  %v2990 = vld [vmem:[#allocation3 + $0x60] sm:$0xff]
  %v2991 = vld [vmem:[#allocation3 + $0x80] sm:$0xff]
  %v2992 = vld [vmem:[#allocation3 + $0xa0] sm:$0xff]
  %v2993 = vld [vmem:[#allocation3 + $0xc0] sm:$0xff]
  %v2994 = vld [vmem:[#allocation3 + $0xe0] sm:$0xff]
  %v2995 = vld [vmem:[#allocation3 + $0x100] sm:$0xff]
  %v2996 = vld [vmem:[#allocation3 + $0x120] sm:$0xff]
  %v2997 = vld [vmem:[#allocation3 + $0x140] sm:$0xff]
  %v2998 = vld [vmem:[#allocation3 + $0x160] sm:$0xff]
  %v2999 = vld [vmem:[#allocation3 + $0x180] sm:$0xff]
  %v3000 = vld [vmem:[#allocation3 + $0x1a0] sm:$0xff]
  %v3001 = vld [vmem:[#allocation3 + $0x1c0] sm:$0xff]
  %v3002 = vld [vmem:[#allocation3 + $0x1e0] sm:$0xff]
  %v3003 = vld [vmem:[#allocation3 + $0x200] sm:$0xff]
  %v3004 = vld [vmem:[#allocation3 + $0x220] sm:$0xff]
  %v3006 = vsel %vm291, %v2980, 0
  %v3009 = vsel %vm291, %v2982, 0
  %v3012 = vsel %vm291, %v2984, 0
  %v3015 = vsel %vm291, %v2986, 0
  %3017 = vmatprep.subr.mxu0 0.0
  %3018 = vmatpush1.msra.mxu0 %v2987
  %3019 = vmatprep.subr.mxu0 0.0
  %3020 = vmatpush1.msra.mxu0 %v2988
  %3021 = vmatprep.subr.mxu0 0.0
  %3022 = vmatpush1.msra.mxu0 %v2989
  %3023 = vmatprep.subr.mxu0 0.0
  %3024 = vmatpush1.msra.mxu0 %v2990
  %3025 = vmatprep.subr.mxu0 0.0
  %3026 = vmatpush1.msra.mxu0 %v2991
  %3027 = vmatprep.subr.mxu0 0.0
  %3028 = vmatpush1.msra.mxu0 %v2992
  %3029 = vmatprep.subr.mxu0 0.0
  %3030 = vmatpush1.msra.mxu0 %v2993
  %3031 = vmatprep.subr.mxu0 0.0
  %3032 = vmatpush1.msra.mxu0 %v2994
  %3033 = vmatprep.subr.mxu0 0.0
  %3034 = vmatpush1.msra.mxu0 %v2995
  %3035 = vmatprep.subr.mxu0 0.0
  %3036 = vmatpush1.msra.mxu0 %v2996
  %3037 = vmatprep.subr.mxu0 0.0
  %3038 = vmatpush1.msra.mxu0 %v2997
  %3039 = vmatprep.subr.mxu0 0.0
  %3040 = vmatpush1.msra.mxu0 %v2998
  %3041 = vmatprep.subr.mxu0 0.0
  %3042 = vmatpush1.msra.mxu0 %v2999
  %3043 = vmatprep.subr.mxu0 0.0
  %3044 = vmatpush1.msra.mxu0 %v3000
  %3045 = vmatprep.subr.mxu0 0.0
  %3046 = vmatpush1.msra.mxu0 %v3001
  %3047 = vmatprep.subr.mxu0 0.0
  %3048 = vmatpush1.msra.mxu0 %v3002
  %3049 = vmatprep.subr.mxu0 0.0
  %3050 = vmatpush1.msra.mxu0 %v3003
  %3051 = vmatprep.subr.mxu0 0.0
  %3052 = vmatpush1.msra.mxu0 %v3004
  %3053 = vmatprep.subr.mxu0 0.0
  %3054 = vmatpush1.msra.mxu0 0.0
  %3055 = vmatprep.subr.mxu0 0.0
  %3056 = vmatpush1.msra.mxu0 0.0
  %3057 = vmatprep.subr.mxu0 0.0
  %3058 = vmatpush1.msra.mxu0 0.0
  %3059 = vmatprep.subr.mxu0 0.0
  %3060 = vmatpush1.msra.mxu0 0.0
  %3061 = vmatprep.subr.mxu0 0.0
  %3062 = vmatpush1.msra.mxu0 0.0
  %3063 = vmatprep.subr.mxu0 0.0
  %3064 = vmatpush1.msra.mxu0 0.0
  %3065 = vmatprep.subr.mxu0 0.0
  %3066 = vmatpush1.msra.mxu0 0.0
  %3067 = vmatprep.subr.mxu0 0.0
  %3068 = vmatpush1.msra.mxu0 0.0
  %3069 = vmatprep.subr.mxu0 0.0
  %3070 = vmatpush1.msra.mxu0 0.0
  %3071 = vmatprep.subr.mxu0 0.0
  %3072 = vmatpush1.msra.mxu0 0.0
  %3073 = vmatprep.subr.mxu0 0.0
  %3074 = vmatpush1.msra.mxu0 0.0
  %3075 = vmatprep.subr.mxu0 0.0
  %3076 = vmatpush1.msra.mxu0 0.0
  %3077 = vmatprep.subr.mxu0 0.0
  %3078 = vmatpush1.msra.mxu0 0.0
  %3079 = vmatprep.subr.mxu0 0.0
  %3080 = vmatpush1.msra.mxu0 0.0
  %3081 = vmatprep.mubr.f32.mxu0 %v3006
  %3082 = vmatmul.mubr.f32.gmra.mrb[0].mxu0 %v2979
  %v3083 = vpop.f32.mrb[0].mxu0
  %v3084 = vadd.f32 0.0, %v3083
  %v3085 = vpop.f32.mrb[0].mxu0
  %3086 = vmatprep.mubr.f32.mxu0 %v3009
  %3087 = vmatmul.mubr.f32.gmra.mrb[0].mxu0 %v2981
  %v3088 = vpop.f32.mrb[0].mxu0
  %v3089 = vadd.f32 0.0, %v3088
  %v3090 = vpop.f32.mrb[0].mxu0
  %3091 = vmatprep.mubr.f32.mxu0 %v3012
  %3092 = vmatmul.mubr.f32.gmra.mrb[0].mxu0 %v2983
  %v3093 = vpop.f32.mrb[0].mxu0
  %v3094 = vadd.f32 0.0, %v3093
  %v3095 = vpop.f32.mrb[0].mxu0
  %3096 = vmatprep.mubr.f32.mxu0 %v3015
  %3097 = vmatmul.mubr.f32.gmra.mrb[0].mxu0 %v2985
  %v3098 = vpop.f32.mrb[0].mxu0
  %v3099 = vadd.f32 0.0, %v3098
  %v3100 = vpop.f32.mrb[0].mxu0
  %3101 = vdwg.mxu0
  %v3102 = vsel %vm2735, %v3084, 0.0
  %3103 = vadd.xlane.f32.xlu0 %v3102
  %v3104 = vpop.xlane.xlu0 %3103
  %v3105 = vsel %vm2735, %v3089, 0.0
  %3106 = vadd.xlane.f32.xlu0 %v3105
  %v3107 = vpop.xlane.xlu0 %3106
  %v3108 = vsel %vm2735, %v3094, 0.0
  %3109 = vadd.xlane.f32.xlu0 %v3108
  %v3110 = vpop.xlane.xlu0 %3109
  %v3111 = vsel %vm2735, %v3099, 0.0
  %3112 = vadd.xlane.f32.xlu0 %v3111
  %v3113 = vpop.xlane.xlu0 %3112
  %v3114 = vmul.f32 %v3104, 0.03125
  %v3115 = vmul.f32 %v3107, 0.03125
  %v3116 = vmul.f32 %v3110, 0.03125
  %v3117 = vmul.f32 %v3113, 0.03125
  %v3118 = vsub.f32 %v3084, %v3114
  %v3119 = vsub.f32 %v3089, %v3115
  %v3120 = vsub.f32 %v3094, %v3116
  %v3121 = vsub.f32 %v3099, %v3117
  %v3122 = vmul.f32 %v3118, %v3118
  %v3123 = vmul.f32 %v3119, %v3119
  %v3124 = vmul.f32 %v3120, %v3120
  %v3125 = vmul.f32 %v3121, %v3121
  %v3126 = vsel %vm2735, %v3122, 0.0
  %3127 = vadd.xlane.f32.xlu0 %v3126
  %v3128 = vpop.xlane.xlu0 %3127
  %v3129 = vsel %vm2735, %v3123, 0.0
  %3130 = vadd.xlane.f32.xlu0 %v3129
  %v3131 = vpop.xlane.xlu0 %3130
  %v3132 = vsel %vm2735, %v3124, 0.0
  %3133 = vadd.xlane.f32.xlu0 %v3132
  %v3134 = vpop.xlane.xlu0 %3133
  %v3135 = vsel %vm2735, %v3125, 0.0
  %3136 = vadd.xlane.f32.xlu0 %v3135
  %v3137 = vpop.xlane.xlu0 %3136
  %v3138 = vmul.f32 %v3128, 0.03125
  %v3139 = vmul.f32 %v3131, 0.03125
  %v3140 = vmul.f32 %v3134, 0.03125
  %v3141 = vmul.f32 %v3137, 0.03125
  %v3142 = vld [vmem:[%s29] sm:$0xff]
  %v3143 = vld [vmem:[%s29 + $0x8] sm:$0xff]
  %v3144 = vld [vmem:[%s29 + $0x10] sm:$0xff]
  %v3145 = vld [vmem:[%s29 + $0x18] sm:$0xff]
  %v3146 = vadd.f32 %v3138, 1e-05
  %v3147 = vadd.f32 %v3139, 1e-05
  %v3148 = vadd.f32 %v3140, 1e-05
  %v3149 = vadd.f32 %v3141, 1e-05
  %v3150 = vrsqrt.pop %v3146
  %v3151 = vrsqrt.pop %v3147
  %v3152 = vrsqrt.pop %v3148
  %v3153 = vrsqrt.pop %v3149
  %v3154 = vmul.f32 %v3142, %v3150
  %v3155 = vmul.f32 %v3143, %v3151
  %v3156 = vmul.f32 %v3144, %v3152
  %v3157 = vmul.f32 %v3145, %v3153
  %3159 = vset.pattern.permute.xlu0 0
  %3160 = vperm.xlu0 %3159, %v3154
  %v3161 = vpop.permute.xlu0 %3160
  %3164 = vset.pattern.permute.xlu0 0
  %3165 = vperm.xlu0 %3164, %v3155
  %v3166 = vpop.permute.xlu0 %3165
  %3169 = vset.pattern.permute.xlu0 0
  %3170 = vperm.xlu0 %3169, %v3156
  %v3171 = vpop.permute.xlu0 %3170
  %3174 = vset.pattern.permute.xlu0 0
  %3175 = vperm.xlu0 %3174, %v3157
  %v3176 = vpop.permute.xlu0 %3175
  %v3178 = vmul.f32 %v3118, %v3161
  %v3179 = vmul.f32 %v3119, %v3166
  %v3180 = vmul.f32 %v3120, %v3171
  %v3181 = vmul.f32 %v3121, %v3176
  %v3182 = vld [vmem:[%s31] sm:$0xff]
  %v3183 = vld [vmem:[%s31 + $0x8] sm:$0xff]
  %v3184 = vld [vmem:[%s31 + $0x10] sm:$0xff]
  %v3185 = vld [vmem:[%s31 + $0x18] sm:$0xff]
  %3187 = vset.pattern.permute.xlu0 0
  %3188 = vperm.xlu0 %3187, %v3182
  %v3189 = vpop.permute.xlu0 %3188
  %3192 = vset.pattern.permute.xlu0 0
  %3193 = vperm.xlu0 %3192, %v3183
  %v3194 = vpop.permute.xlu0 %3193
  %3197 = vset.pattern.permute.xlu0 0
  %3198 = vperm.xlu0 %3197, %v3184
  %v3199 = vpop.permute.xlu0 %3198
  %3202 = vset.pattern.permute.xlu0 0
  %3203 = vperm.xlu0 %3202, %v3185
  %v3204 = vpop.permute.xlu0 %3203
  %v3206 = vadd.f32 %v3178, %v3189
  %v3207 = vadd.f32 %v3179, %v3194
  %v3208 = vadd.f32 %v3180, %v3199
  %v3209 = vadd.f32 %v3181, %v3204
  %vm3210 = vcmp.gt.f32.partialorder %v3206, 0.0
  %vm3211 = vcmp.gt.f32.partialorder %v3207, 0.0
  %vm3212 = vcmp.gt.f32.partialorder %v3208, 0.0
  %vm3213 = vcmp.gt.f32.partialorder %v3209, 0.0
  %v3214 = vmul.f32 %v3206, 0.01
  %v3215 = vmul.f32 %v3207, 0.01
  %v3216 = vmul.f32 %v3208, 0.01
  %v3217 = vmul.f32 %v3209, 0.01
  %v3218 = vsel %vm3210, %v3206, %v3214
  %v3219 = vsel %vm3211, %v3207, %v3215
  %v3220 = vsel %vm3212, %v3208, %v3216
  %v3221 = vsel %vm3213, %v3209, %v3217
  %3222 = vst.msk [vmem:[#allocation2 + $0x8] sm:$0xff] %vm2735, %v3218
  %3223 = vst.msk [vmem:[#allocation2 + $0x38] sm:$0xff] %vm2735, %v3219
  %3224 = vst.msk [vmem:[#allocation2 + $0x68] sm:$0xff] %vm2735, %v3220
  %3225 = vst.msk [vmem:[#allocation2 + $0x98] sm:$0xff] %vm2735, %v3221
  %v3226 = vld [vmem:[#allocation2] sm:$0xff]
  %v3227 = vld [vmem:[#allocation2 + $0x8] sm:$0xff]
  %v3228 = vld [vmem:[#allocation2 + $0x30] sm:$0xff]
  %v3229 = vld [vmem:[#allocation2 + $0x38] sm:$0xff]
  %v3230 = vld [vmem:[#allocation2 + $0x60] sm:$0xff]
  %v3231 = vld [vmem:[#allocation2 + $0x68] sm:$0xff]
  %v3232 = vld [vmem:[#allocation2 + $0x90] sm:$0xff]
  %v3233 = vld [vmem:[#allocation2 + $0x98] sm:$0xff]
  %v3234 = vld [vmem:[%s83] sm:$0x1]
  %v3235 = vlaneseq
  %v3236 = vshrl.u32 %v3235, 7
  %v3237 = vsub.s32 0, %v3236
  %v3238 = vrot.slane %v3234, %v3237
  %3240 = vrot.lane.b32.xlu0 %v3238, 123
  %v3241 = vpop.permute.xlu0 %3240
  %v3243 = vmul.f32 %v3226, %v3241
  %v3244 = vmul.f32 %v3227, %v3241
  %v3245 = vmul.f32 %v3228, %v3241
  %v3246 = vmul.f32 %v3229, %v3241
  %v3247 = vmul.f32 %v3230, %v3241
  %v3248 = vmul.f32 %v3231, %v3241
  %v3249 = vmul.f32 %v3232, %v3241
  %v3250 = vmul.f32 %v3233, %v3241
  %3259 = vrot.lane.b32.xlu0 %v3243, 5
  %v3260 = vpop.permute.xlu0 %3259
  %3261 = vrot.lane.b32.xlu0 %v3244, 5
  %v3262 = vpop.permute.xlu0 %3261
  %3263 = vrot.lane.b32.xlu0 %v3245, 5
  %v3264 = vpop.permute.xlu0 %3263
  %3265 = vrot.lane.b32.xlu0 %v3246, 5
  %v3266 = vpop.permute.xlu0 %3265
  %3267 = vrot.lane.b32.xlu0 %v3247, 5
  %v3268 = vpop.permute.xlu0 %3267
  %3269 = vrot.lane.b32.xlu0 %v3248, 5
  %v3270 = vpop.permute.xlu0 %3269
  %3271 = vrot.lane.b32.xlu0 %v3249, 5
  %v3272 = vpop.permute.xlu0 %3271
  %3273 = vrot.lane.b32.xlu0 %v3250, 5
  %v3274 = vpop.permute.xlu0 %3273
  %v3275 = vsel %vm2769, %v3260, %v3262
  %v3276 = vsel %vm2769, %v3264, %v3266
  %v3277 = vsel %vm2769, %v3268, %v3270
  %v3278 = vsel %vm2769, %v3272, %v3274
  %3283 = vst.msk [vmem:[#allocation3] sm:$0xff] %vm2735, %v3275
  %3284 = vst.msk [vmem:[#allocation3 + $0x20] sm:$0xff] %vm2735, %v3276
  %3285 = vst.msk [vmem:[#allocation3 + $0x40] sm:$0xff] %vm2735, %v3277
  %3286 = vst.msk [vmem:[#allocation3 + $0x60] sm:$0xff] %vm2735, %v3278
  %v3287 = vld [vmem:[#allocation2] sm:$0xff]
  %v3288 = vld [vmem:[#allocation2 + $0x8] sm:$0xff]
  %v3289 = vld [vmem:[#allocation2 + $0x30] sm:$0xff]
  %v3290 = vld [vmem:[#allocation2 + $0x38] sm:$0xff]
  %v3291 = vld [vmem:[#allocation2 + $0x60] sm:$0xff]
  %v3292 = vld [vmem:[#allocation2 + $0x68] sm:$0xff]
  %v3293 = vld [vmem:[#allocation2 + $0x90] sm:$0xff]
  %v3294 = vld [vmem:[#allocation2 + $0x98] sm:$0xff]
  %v3295 = vld [vmem:[%s83 + $0x1] sm:$0x1]
  %v3296 = vlaneseq
  %v3297 = vshrl.u32 %v3296, 7
  %v3298 = vsub.s32 0, %v3297
  %v3299 = vrot.slane %v3295, %v3298
  %3301 = vrot.lane.b32.xlu0 %v3299, 124
  %v3302 = vpop.permute.xlu0 %3301
  %v3304 = vmul.f32 %v3287, %v3302
  %v3305 = vmul.f32 %v3288, %v3302
  %v3306 = vmul.f32 %v3289, %v3302
  %v3307 = vmul.f32 %v3290, %v3302
  %v3308 = vmul.f32 %v3291, %v3302
  %v3309 = vmul.f32 %v3292, %v3302
  %v3310 = vmul.f32 %v3293, %v3302
  %v3311 = vmul.f32 %v3294, %v3302
  %3320 = vrot.lane.b32.xlu0 %v3304, 4
  %v3321 = vpop.permute.xlu0 %3320
  %3322 = vrot.lane.b32.xlu0 %v3305, 4
  %v3323 = vpop.permute.xlu0 %3322
  %3324 = vrot.lane.b32.xlu0 %v3306, 4
  %v3325 = vpop.permute.xlu0 %3324
  %3326 = vrot.lane.b32.xlu0 %v3307, 4
  %v3327 = vpop.permute.xlu0 %3326
  %3328 = vrot.lane.b32.xlu0 %v3308, 4
  %v3329 = vpop.permute.xlu0 %3328
  %3330 = vrot.lane.b32.xlu0 %v3309, 4
  %v3331 = vpop.permute.xlu0 %3330
  %3332 = vrot.lane.b32.xlu0 %v3310, 4
  %v3333 = vpop.permute.xlu0 %3332
  %3334 = vrot.lane.b32.xlu0 %v3311, 4
  %v3335 = vpop.permute.xlu0 %3334
  %v3336 = vsel %vm2805, %v3321, %v3323
  %v3337 = vsel %vm2805, %v3325, %v3327
  %v3338 = vsel %vm2805, %v3329, %v3331
  %v3339 = vsel %vm2805, %v3333, %v3335
  %3344 = vst.msk [vmem:[#allocation3 + $0x80] sm:$0xff] %vm2735, %v3336
  %3345 = vst.msk [vmem:[#allocation3 + $0xa0] sm:$0xff] %vm2735, %v3337
  %3346 = vst.msk [vmem:[#allocation3 + $0xc0] sm:$0xff] %vm2735, %v3338
  %3347 = vst.msk [vmem:[#allocation3 + $0xe0] sm:$0xff] %vm2735, %v3339
  %v3348 = vld [vmem:[#allocation2] sm:$0xff]
  %v3349 = vld [vmem:[#allocation2 + $0x8] sm:$0xff]
  %v3350 = vld [vmem:[#allocation2 + $0x30] sm:$0xff]
  %v3351 = vld [vmem:[#allocation2 + $0x38] sm:$0xff]
  %v3352 = vld [vmem:[#allocation2 + $0x60] sm:$0xff]
  %v3353 = vld [vmem:[#allocation2 + $0x68] sm:$0xff]
  %v3354 = vld [vmem:[#allocation2 + $0x90] sm:$0xff]
  %v3355 = vld [vmem:[#allocation2 + $0x98] sm:$0xff]
  %v3356 = vld [vmem:[%s83 + $0x2] sm:$0x1]
  %v3357 = vlaneseq
  %v3358 = vshrl.u32 %v3357, 7
  %v3359 = vsub.s32 0, %v3358
  %v3360 = vrot.slane %v3356, %v3359
  %3362 = vrot.lane.b32.xlu0 %v3360, 125
  %v3363 = vpop.permute.xlu0 %3362
  %v3365 = vmul.f32 %v3348, %v3363
  %v3366 = vmul.f32 %v3349, %v3363
  %v3367 = vmul.f32 %v3350, %v3363
  %v3368 = vmul.f32 %v3351, %v3363
  %v3369 = vmul.f32 %v3352, %v3363
  %v3370 = vmul.f32 %v3353, %v3363
  %v3371 = vmul.f32 %v3354, %v3363
  %v3372 = vmul.f32 %v3355, %v3363
  %3381 = vrot.lane.b32.xlu0 %v3365, 3
  %v3382 = vpop.permute.xlu0 %3381
  %3383 = vrot.lane.b32.xlu0 %v3366, 3
  %v3384 = vpop.permute.xlu0 %3383
  %3385 = vrot.lane.b32.xlu0 %v3367, 3
  %v3386 = vpop.permute.xlu0 %3385
  %3387 = vrot.lane.b32.xlu0 %v3368, 3
  %v3388 = vpop.permute.xlu0 %3387
  %3389 = vrot.lane.b32.xlu0 %v3369, 3
  %v3390 = vpop.permute.xlu0 %3389
  %3391 = vrot.lane.b32.xlu0 %v3370, 3
  %v3392 = vpop.permute.xlu0 %3391
  %3393 = vrot.lane.b32.xlu0 %v3371, 3
  %v3394 = vpop.permute.xlu0 %3393
  %3395 = vrot.lane.b32.xlu0 %v3372, 3
  %v3396 = vpop.permute.xlu0 %3395
  %v3397 = vsel %vm2841, %v3382, %v3384
  %v3398 = vsel %vm2841, %v3386, %v3388
  %v3399 = vsel %vm2841, %v3390, %v3392
  %v3400 = vsel %vm2841, %v3394, %v3396
  %3405 = vst.msk [vmem:[#allocation3 + $0x100] sm:$0xff] %vm2735, %v3397
  %3406 = vst.msk [vmem:[#allocation3 + $0x120] sm:$0xff] %vm2735, %v3398
  %3407 = vst.msk [vmem:[#allocation3 + $0x140] sm:$0xff] %vm2735, %v3399
  %3408 = vst.msk [vmem:[#allocation3 + $0x160] sm:$0xff] %vm2735, %v3400
  %v3409 = vld [vmem:[#allocation2] sm:$0xff]
  %v3410 = vld [vmem:[#allocation2 + $0x8] sm:$0xff]
  %v3411 = vld [vmem:[#allocation2 + $0x30] sm:$0xff]
  %v3412 = vld [vmem:[#allocation2 + $0x38] sm:$0xff]
  %v3413 = vld [vmem:[#allocation2 + $0x60] sm:$0xff]
  %v3414 = vld [vmem:[#allocation2 + $0x68] sm:$0xff]
  %v3415 = vld [vmem:[#allocation2 + $0x90] sm:$0xff]
  %v3416 = vld [vmem:[#allocation2 + $0x98] sm:$0xff]
  %v3417 = vld [vmem:[%s83 + $0x3] sm:$0x1]
  %v3418 = vlaneseq
  %v3419 = vshrl.u32 %v3418, 7
  %v3420 = vsub.s32 0, %v3419
  %v3421 = vrot.slane %v3417, %v3420
  %3423 = vrot.lane.b32.xlu0 %v3421, 127
  %v3424 = vpop.permute.xlu0 %3423
  %v3426 = vmul.f32 %v3409, %v3424
  %v3427 = vmul.f32 %v3410, %v3424
  %v3428 = vmul.f32 %v3411, %v3424
  %v3429 = vmul.f32 %v3412, %v3424
  %v3430 = vmul.f32 %v3413, %v3424
  %v3431 = vmul.f32 %v3414, %v3424
  %v3432 = vmul.f32 %v3415, %v3424
  %v3433 = vmul.f32 %v3416, %v3424
  %3442 = vrot.lane.b32.xlu0 %v3426, 1
  %v3443 = vpop.permute.xlu0 %3442
  %3444 = vrot.lane.b32.xlu0 %v3427, 1
  %v3445 = vpop.permute.xlu0 %3444
  %3446 = vrot.lane.b32.xlu0 %v3428, 1
  %v3447 = vpop.permute.xlu0 %3446
  %3448 = vrot.lane.b32.xlu0 %v3429, 1
  %v3449 = vpop.permute.xlu0 %3448
  %3450 = vrot.lane.b32.xlu0 %v3430, 1
  %v3451 = vpop.permute.xlu0 %3450
  %3452 = vrot.lane.b32.xlu0 %v3431, 1
  %v3453 = vpop.permute.xlu0 %3452
  %3454 = vrot.lane.b32.xlu0 %v3432, 1
  %v3455 = vpop.permute.xlu0 %3454
  %3456 = vrot.lane.b32.xlu0 %v3433, 1
  %v3457 = vpop.permute.xlu0 %3456
  %v3458 = vsel %vm337, %v3443, %v3445
  %v3459 = vsel %vm337, %v3447, %v3449
  %v3460 = vsel %vm337, %v3451, %v3453
  %v3461 = vsel %vm337, %v3455, %v3457
  %3466 = vst.msk [vmem:[#allocation3 + $0x180] sm:$0xff] %vm2735, %v3458
  %3467 = vst.msk [vmem:[#allocation3 + $0x1a0] sm:$0xff] %vm2735, %v3459
  %3468 = vst.msk [vmem:[#allocation3 + $0x1c0] sm:$0xff] %vm2735, %v3460
  %3469 = vst.msk [vmem:[#allocation3 + $0x1e0] sm:$0xff] %vm2735, %v3461
  %v3470 = vld [vmem:[#allocation2 + $0x8] sm:$0xff]
  %v3471 = vld [vmem:[#allocation2 + $0x38] sm:$0xff]
  %v3472 = vld [vmem:[#allocation2 + $0x68] sm:$0xff]
  %v3473 = vld [vmem:[#allocation2 + $0x98] sm:$0xff]
  %3474 = vst.msk [vmem:[#allocation3 + $0x200] sm:$0xff] %vm2735, %v3470
  %3475 = vst.msk [vmem:[#allocation3 + $0x220] sm:$0xff] %vm2735, %v3471
  %3476 = vst.msk [vmem:[#allocation3 + $0x240] sm:$0xff] %vm2735, %v3472
  %3477 = vst.msk [vmem:[#allocation3 + $0x260] sm:$0xff] %vm2735, %v3473
  %v3478 = vld [vmem:[#allocation2 + $0x8] sm:$0xff]
  %v3479 = vld [vmem:[#allocation2 + $0x38] sm:$0xff]
  %v3480 = vld [vmem:[#allocation2 + $0x68] sm:$0xff]
  %v3481 = vld [vmem:[#allocation2 + $0x98] sm:$0xff]
  %v3482 = vld [vmem:[%s83 + $0x4] sm:$0x1]
  %v3483 = vlaneseq
  %v3484 = vshrl.u32 %v3483, 7
  %v3485 = vsub.s32 0, %v3484
  %v3486 = vrot.slane %v3482, %v3485
  %3488 = vrot.lane.b32.xlu0 %v3486, 1
  %v3489 = vpop.permute.xlu0 %3488
  %v3491 = vmul.f32 %v3478, %v3489
  %v3492 = vmul.f32 %v3479, %v3489
  %v3493 = vmul.f32 %v3480, %v3489
  %v3494 = vmul.f32 %v3481, %v3489
  %3499 = vrot.lane.b32.xlu0 %v3491, 127
  %v3500 = vpop.permute.xlu0 %3499
  %3501 = vrot.lane.b32.xlu0 %v3492, 127
  %v3502 = vpop.permute.xlu0 %3501
  %3503 = vrot.lane.b32.xlu0 %v3493, 127
  %v3504 = vpop.permute.xlu0 %3503
  %3505 = vrot.lane.b32.xlu0 %v3494, 127
  %v3506 = vpop.permute.xlu0 %3505
  %3511 = vst.msk [vmem:[#allocation3 + $0x280] sm:$0xff] %vm2735, %v3500
  %3512 = vst.msk [vmem:[#allocation3 + $0x2a0] sm:$0xff] %vm2735, %v3502
  %3513 = vst.msk [vmem:[#allocation3 + $0x2c0] sm:$0xff] %vm2735, %v3504
  %3514 = vst.msk [vmem:[#allocation3 + $0x2e0] sm:$0xff] %vm2735, %v3506
  %v3515 = vld [vmem:[#allocation2 + $0x8] sm:$0xff]
  %v3516 = vld [vmem:[#allocation2 + $0x38] sm:$0xff]
  %v3517 = vld [vmem:[#allocation2 + $0x68] sm:$0xff]
  %v3518 = vld [vmem:[#allocation2 + $0x98] sm:$0xff]
  %v3519 = vld [vmem:[%s83 + $0x5] sm:$0x1]
  %v3520 = vlaneseq
  %v3521 = vshrl.u32 %v3520, 7
  %v3522 = vsub.s32 0, %v3521
  %v3523 = vrot.slane %v3519, %v3522
  %3525 = vrot.lane.b32.xlu0 %v3523, 3
  %v3526 = vpop.permute.xlu0 %3525
  %v3528 = vmul.f32 %v3515, %v3526
  %v3529 = vmul.f32 %v3516, %v3526
  %v3530 = vmul.f32 %v3517, %v3526
  %v3531 = vmul.f32 %v3518, %v3526
  %3536 = vrot.lane.b32.xlu0 %v3528, 125
  %v3537 = vpop.permute.xlu0 %3536
  %3538 = vrot.lane.b32.xlu0 %v3529, 125
  %v3539 = vpop.permute.xlu0 %3538
  %3540 = vrot.lane.b32.xlu0 %v3530, 125
  %v3541 = vpop.permute.xlu0 %3540
  %3542 = vrot.lane.b32.xlu0 %v3531, 125
  %v3543 = vpop.permute.xlu0 %3542
  %3548 = vst.msk [vmem:[#allocation3 + $0x300] sm:$0xff] %vm2735, %v3537
  %3549 = vst.msk [vmem:[#allocation3 + $0x320] sm:$0xff] %vm2735, %v3539
  %3550 = vst.msk [vmem:[#allocation3 + $0x340] sm:$0xff] %vm2735, %v3541
  %3551 = vst.msk [vmem:[#allocation3 + $0x360] sm:$0xff] %vm2735, %v3543
  %v3552 = vld [vmem:[#allocation2 + $0x8] sm:$0xff]
  %v3553 = vld [vmem:[#allocation2 + $0x38] sm:$0xff]
  %v3554 = vld [vmem:[#allocation2 + $0x68] sm:$0xff]
  %v3555 = vld [vmem:[#allocation2 + $0x98] sm:$0xff]
  %v3556 = vld [vmem:[%s83 + $0x6] sm:$0x1]
  %v3557 = vlaneseq
  %v3558 = vshrl.u32 %v3557, 7
  %v3559 = vsub.s32 0, %v3558
  %v3560 = vrot.slane %v3556, %v3559
  %3562 = vrot.lane.b32.xlu0 %v3560, 4
  %v3563 = vpop.permute.xlu0 %3562
  %v3565 = vmul.f32 %v3552, %v3563
  %v3566 = vmul.f32 %v3553, %v3563
  %v3567 = vmul.f32 %v3554, %v3563
  %v3568 = vmul.f32 %v3555, %v3563
  %3573 = vrot.lane.b32.xlu0 %v3565, 124
  %v3574 = vpop.permute.xlu0 %3573
  %3575 = vrot.lane.b32.xlu0 %v3566, 124
  %v3576 = vpop.permute.xlu0 %3575
  %3577 = vrot.lane.b32.xlu0 %v3567, 124
  %v3578 = vpop.permute.xlu0 %3577
  %3579 = vrot.lane.b32.xlu0 %v3568, 124
  %v3580 = vpop.permute.xlu0 %3579
  %3585 = vst.msk [vmem:[#allocation3 + $0x380] sm:$0xff] %vm2735, %v3574
  %3586 = vst.msk [vmem:[#allocation3 + $0x3a0] sm:$0xff] %vm2735, %v3576
  %3587 = vst.msk [vmem:[#allocation3 + $0x3c0] sm:$0xff] %vm2735, %v3578
  %3588 = vst.msk [vmem:[#allocation3 + $0x3e0] sm:$0xff] %vm2735, %v3580
  %v3589 = vld [vmem:[#allocation2 + $0x8] sm:$0xff]
  %v3590 = vld [vmem:[#allocation2 + $0x38] sm:$0xff]
  %v3591 = vld [vmem:[#allocation2 + $0x68] sm:$0xff]
  %v3592 = vld [vmem:[#allocation2 + $0x98] sm:$0xff]
  %v3593 = vld [vmem:[%s83 + $0x7] sm:$0x1]
  %v3594 = vlaneseq
  %v3595 = vshrl.u32 %v3594, 7
  %v3596 = vsub.s32 0, %v3595
  %v3597 = vrot.slane %v3593, %v3596
  %3599 = vrot.lane.b32.xlu0 %v3597, 5
  %v3600 = vpop.permute.xlu0 %3599
  %v3602 = vmul.f32 %v3589, %v3600
  %v3603 = vmul.f32 %v3590, %v3600
  %v3604 = vmul.f32 %v3591, %v3600
  %v3605 = vmul.f32 %v3592, %v3600
  %3610 = vrot.lane.b32.xlu0 %v3602, 123
  %v3611 = vpop.permute.xlu0 %3610
  %3612 = vrot.lane.b32.xlu0 %v3603, 123
  %v3613 = vpop.permute.xlu0 %3612
  %3614 = vrot.lane.b32.xlu0 %v3604, 123
  %v3615 = vpop.permute.xlu0 %3614
  %3616 = vrot.lane.b32.xlu0 %v3605, 123
  %v3617 = vpop.permute.xlu0 %3616
  %3622 = vst.msk [vmem:[#allocation3 + $0x400] sm:$0xff] %vm2735, %v3611
  %3623 = vst.msk [vmem:[#allocation3 + $0x420] sm:$0xff] %vm2735, %v3613
  %3624 = vst.msk [vmem:[#allocation3 + $0x440] sm:$0xff] %vm2735, %v3615
  %3625 = vst.msk [vmem:[#allocation3 + $0x460] sm:$0xff] %vm2735, %v3617
  %v3626 = vld [vmem:[%s33] sm:$0xff]
  %v3627 = vld [vmem:[%s33 + $0x8] sm:$0xff]
  %v3628 = vld [vmem:[%s33 + $0x10] sm:$0xff]
  %v3629 = vld [vmem:[%s33 + $0x18] sm:$0xff]
  %v3630 = vld [vmem:[%s33 + $0x20] sm:$0xff]
  %v3631 = vld [vmem:[%s33 + $0x28] sm:$0xff]
  %v3632 = vld [vmem:[%s33 + $0x30] sm:$0xff]
  %v3633 = vld [vmem:[%s33 + $0x38] sm:$0xff]
  %v3634 = vld [vmem:[%s33 + $0x40] sm:$0xff]
  %v3635 = vld [vmem:[%s33 + $0x48] sm:$0xff]
  %v3636 = vld [vmem:[%s33 + $0x50] sm:$0xff]
  %v3637 = vld [vmem:[%s33 + $0x58] sm:$0xff]
  %v3638 = vld [vmem:[#allocation3] sm:$0xff]
  %v3639 = vld [vmem:[#allocation3 + $0x20] sm:$0xff]
  %v3640 = vld [vmem:[#allocation3 + $0x40] sm:$0xff]
  %v3641 = vld [vmem:[#allocation3 + $0x60] sm:$0xff]
  %v3642 = vld [vmem:[#allocation3 + $0x80] sm:$0xff]
  %v3643 = vld [vmem:[#allocation3 + $0xa0] sm:$0xff]
  %v3644 = vld [vmem:[#allocation3 + $0xc0] sm:$0xff]
  %v3645 = vld [vmem:[#allocation3 + $0xe0] sm:$0xff]
  %v3646 = vld [vmem:[#allocation3 + $0x100] sm:$0xff]
  %v3647 = vld [vmem:[#allocation3 + $0x120] sm:$0xff]
  %v3648 = vld [vmem:[#allocation3 + $0x140] sm:$0xff]
  %v3649 = vld [vmem:[#allocation3 + $0x160] sm:$0xff]
  %v3650 = vld [vmem:[#allocation3 + $0x180] sm:$0xff]
  %v3651 = vld [vmem:[#allocation3 + $0x1a0] sm:$0xff]
  %v3652 = vld [vmem:[#allocation3 + $0x1c0] sm:$0xff]
  %v3653 = vld [vmem:[#allocation3 + $0x1e0] sm:$0xff]
  %v3654 = vld [vmem:[#allocation3 + $0x200] sm:$0xff]
  %v3655 = vld [vmem:[#allocation3 + $0x220] sm:$0xff]
  %v3656 = vld [vmem:[#allocation3 + $0x240] sm:$0xff]
  %v3657 = vld [vmem:[#allocation3 + $0x260] sm:$0xff]
  %v3658 = vld [vmem:[#allocation3 + $0x280] sm:$0xff]
  %v3659 = vld [vmem:[#allocation3 + $0x2a0] sm:$0xff]
  %v3660 = vld [vmem:[#allocation3 + $0x2c0] sm:$0xff]
  %v3661 = vld [vmem:[#allocation3 + $0x2e0] sm:$0xff]
  %v3662 = vld [vmem:[#allocation3 + $0x300] sm:$0xff]
  %v3663 = vld [vmem:[#allocation3 + $0x320] sm:$0xff]
  %v3664 = vld [vmem:[#allocation3 + $0x340] sm:$0xff]
  %v3665 = vld [vmem:[#allocation3 + $0x360] sm:$0xff]
  %v3666 = vld [vmem:[#allocation3 + $0x380] sm:$0xff]
  %v3667 = vld [vmem:[#allocation3 + $0x3a0] sm:$0xff]
  %v3668 = vld [vmem:[#allocation3 + $0x3c0] sm:$0xff]
  %v3669 = vld [vmem:[#allocation3 + $0x3e0] sm:$0xff]
  %v3670 = vld [vmem:[#allocation3 + $0x400] sm:$0xff]
  %v3671 = vld [vmem:[#allocation3 + $0x420] sm:$0xff]
  %v3672 = vld [vmem:[#allocation3 + $0x440] sm:$0xff]
  %v3673 = vld [vmem:[#allocation3 + $0x460] sm:$0xff]
  %v3675 = vsel %vm2735, %v3628, 0
  %v3678 = vsel %vm2735, %v3631, 0
  %v3681 = vsel %vm2735, %v3634, 0
  %v3684 = vsel %vm2735, %v3637, 0
  %3686 = vmatprep.subr.mxu0 0.0
  %3687 = vmatpush1.msra.mxu0 %v3638
  %3688 = vmatprep.subr.mxu0 0.0
  %3689 = vmatpush1.msra.mxu0 %v3639
  %3690 = vmatprep.subr.mxu0 0.0
  %3691 = vmatpush1.msra.mxu0 %v3640
  %3692 = vmatprep.subr.mxu0 0.0
  %3693 = vmatpush1.msra.mxu0 %v3641
  %3694 = vmatprep.subr.mxu0 0.0
  %3695 = vmatpush1.msra.mxu0 %v3642
  %3696 = vmatprep.subr.mxu0 0.0
  %3697 = vmatpush1.msra.mxu0 %v3643
  %3698 = vmatprep.subr.mxu0 0.0
  %3699 = vmatpush1.msra.mxu0 %v3644
  %3700 = vmatprep.subr.mxu0 0.0
  %3701 = vmatpush1.msra.mxu0 %v3645
  %3702 = vmatprep.subr.mxu0 0.0
  %3703 = vmatpush1.msra.mxu0 %v3646
  %3704 = vmatprep.subr.mxu0 0.0
  %3705 = vmatpush1.msra.mxu0 %v3647
  %3706 = vmatprep.subr.mxu0 0.0
  %3707 = vmatpush1.msra.mxu0 %v3648
  %3708 = vmatprep.subr.mxu0 0.0
  %3709 = vmatpush1.msra.mxu0 %v3649
  %3710 = vmatprep.subr.mxu0 0.0
  %3711 = vmatpush1.msra.mxu0 %v3650
  %3712 = vmatprep.subr.mxu0 0.0
  %3713 = vmatpush1.msra.mxu0 %v3651
  %3714 = vmatprep.subr.mxu0 0.0
  %3715 = vmatpush1.msra.mxu0 %v3652
  %3716 = vmatprep.subr.mxu0 0.0
  %3717 = vmatpush1.msra.mxu0 %v3653
  %3718 = vmatprep.subr.mxu0 0.0
  %3719 = vmatpush1.msra.mxu0 %v3654
  %3720 = vmatprep.subr.mxu0 0.0
  %3721 = vmatpush1.msra.mxu0 %v3655
  %3722 = vmatprep.subr.mxu0 0.0
  %3723 = vmatpush1.msra.mxu0 %v3656
  %3724 = vmatprep.subr.mxu0 0.0
  %3725 = vmatpush1.msra.mxu0 %v3657
  %3726 = vmatprep.subr.mxu0 0.0
  %3727 = vmatpush1.msra.mxu0 %v3658
  %3728 = vmatprep.subr.mxu0 0.0
  %3729 = vmatpush1.msra.mxu0 %v3659
  %3730 = vmatprep.subr.mxu0 0.0
  %3731 = vmatpush1.msra.mxu0 %v3660
  %3732 = vmatprep.subr.mxu0 0.0
  %3733 = vmatpush1.msra.mxu0 %v3661
  %3734 = vmatprep.subr.mxu0 0.0
  %3735 = vmatpush1.msra.mxu0 %v3662
  %3736 = vmatprep.subr.mxu0 0.0
  %3737 = vmatpush1.msra.mxu0 %v3663
  %3738 = vmatprep.subr.mxu0 0.0
  %3739 = vmatpush1.msra.mxu0 %v3664
  %3740 = vmatprep.subr.mxu0 0.0
  %3741 = vmatpush1.msra.mxu0 %v3665
  %3742 = vmatprep.subr.mxu0 0.0
  %3743 = vmatpush1.msra.mxu0 %v3666
  %3744 = vmatprep.subr.mxu0 0.0
  %3745 = vmatpush1.msra.mxu0 %v3667
  %3746 = vmatprep.subr.mxu0 0.0
  %3747 = vmatpush1.msra.mxu0 %v3668
  %3748 = vmatprep.subr.mxu0 0.0
  %3749 = vmatpush1.msra.mxu0 %v3669
  %3750 = vmatprep.mubr.f32.mxu0 %v3627
  %3751 = vmatmul.mubr.f32.gmra.mrb[0].mxu0 %v3626
  %v3752 = vpop.f32.mrb[0].mxu0
  %v3753 = vadd.f32 0.0, %v3752
  %v3754 = vpop.f32.mrb[0].mxu0
  %3755 = vmatprep.mubr.f32.mxu0 %v3630
  %3756 = vmatmul.mubr.f32.gmra.mrb[0].mxu0 %v3629
  %v3757 = vpop.f32.mrb[0].mxu0
  %v3758 = vadd.f32 0.0, %v3757
  %v3759 = vpop.f32.mrb[0].mxu0
  %3760 = vmatprep.mubr.f32.mxu0 %v3633
  %3761 = vmatmul.mubr.f32.gmra.mrb[0].mxu0 %v3632
  %v3762 = vpop.f32.mrb[0].mxu0
  %v3763 = vadd.f32 0.0, %v3762
  %v3764 = vpop.f32.mrb[0].mxu0
  %3765 = vmatprep.mubr.f32.mxu0 %v3636
  %3766 = vmatmul.mubr.f32.gmra.mrb[0].mxu0 %v3635
  %v3767 = vpop.f32.mrb[0].mxu0
  %v3768 = vadd.f32 0.0, %v3767
  %v3769 = vpop.f32.mrb[0].mxu0
  %3770 = vdwg.mxu0
  %3771 = vmatprep.subr.mxu0 0.0
  %3772 = vmatpush1.msra.mxu0 %v3670
  %3773 = vmatprep.subr.mxu0 0.0
  %3774 = vmatpush1.msra.mxu0 %v3671
  %3775 = vmatprep.subr.mxu0 0.0
  %3776 = vmatpush1.msra.mxu0 %v3672
  %3777 = vmatprep.subr.mxu0 0.0
  %3778 = vmatpush1.msra.mxu0 %v3673
  %3779 = vmatprep.subr.mxu0 0.0
  %3780 = vmatpush1.msra.mxu0 0.0
  %3781 = vmatprep.subr.mxu0 0.0
  %3782 = vmatpush1.msra.mxu0 0.0
  %3783 = vmatprep.subr.mxu0 0.0
  %3784 = vmatpush1.msra.mxu0 0.0
  %3785 = vmatprep.subr.mxu0 0.0
  %3786 = vmatpush1.msra.mxu0 0.0
  %3787 = vmatprep.subr.mxu0 0.0
  %3788 = vmatpush1.msra.mxu0 0.0
  %3789 = vmatprep.subr.mxu0 0.0
  %3790 = vmatpush1.msra.mxu0 0.0
  %3791 = vmatprep.subr.mxu0 0.0
  %3792 = vmatpush1.msra.mxu0 0.0
  %3793 = vmatprep.subr.mxu0 0.0
  %3794 = vmatpush1.msra.mxu0 0.0
  %3795 = vmatprep.subr.mxu0 0.0
  %3796 = vmatpush1.msra.mxu0 0.0
  %3797 = vmatprep.subr.mxu0 0.0
  %3798 = vmatpush1.msra.mxu0 0.0
  %3799 = vmatprep.subr.mxu0 0.0
  %3800 = vmatpush1.msra.mxu0 0.0
  %3801 = vmatprep.subr.mxu0 0.0
  %3802 = vmatpush1.msra.mxu0 0.0
  %3803 = vmatprep.subr.mxu0 0.0
  %3804 = vmatpush1.msra.mxu0 0.0
  %3805 = vmatprep.subr.mxu0 0.0
  %3806 = vmatpush1.msra.mxu0 0.0
  %3807 = vmatprep.subr.mxu0 0.0
  %3808 = vmatpush1.msra.mxu0 0.0
  %3809 = vmatprep.subr.mxu0 0.0
  %3810 = vmatpush1.msra.mxu0 0.0
  %3811 = vmatprep.subr.mxu0 0.0
  %3812 = vmatpush1.msra.mxu0 0.0
  %3813 = vmatprep.subr.mxu0 0.0
  %3814 = vmatpush1.msra.mxu0 0.0
  %3815 = vmatprep.subr.mxu0 0.0
  %3816 = vmatpush1.msra.mxu0 0.0
  %3817 = vmatprep.subr.mxu0 0.0
  %3818 = vmatpush1.msra.mxu0 0.0
  %3819 = vmatprep.subr.mxu0 0.0
  %3820 = vmatpush1.msra.mxu0 0.0
  %3821 = vmatprep.subr.mxu0 0.0
  %3822 = vmatpush1.msra.mxu0 0.0
  %3823 = vmatprep.subr.mxu0 0.0
  %3824 = vmatpush1.msra.mxu0 0.0
  %3825 = vmatprep.subr.mxu0 0.0
  %3826 = vmatpush1.msra.mxu0 0.0
  %3827 = vmatprep.subr.mxu0 0.0
  %3828 = vmatpush1.msra.mxu0 0.0
  %3829 = vmatprep.subr.mxu0 0.0
  %3830 = vmatpush1.msra.mxu0 0.0
  %3831 = vmatprep.subr.mxu0 0.0
  %3832 = vmatpush1.msra.mxu0 0.0
  %3833 = vmatprep.subr.mxu0 0.0
  %3834 = vmatpush1.msra.mxu0 0.0
  %3835 = vmatprep.mubr.f32.mxu0 0.0
  %3836 = vmatmul.mubr.f32.gmra.mrb[0].mxu0 %v3675
  %v3837 = vpop.f32.mrb[0].mxu0
  %v3838 = vadd.f32 %v3753, %v3837
  %v3839 = vpop.f32.mrb[0].mxu0
  %3840 = vmatprep.mubr.f32.mxu0 0.0
  %3841 = vmatmul.mubr.f32.gmra.mrb[0].mxu0 %v3678
  %v3842 = vpop.f32.mrb[0].mxu0
  %v3843 = vadd.f32 %v3758, %v3842
  %v3844 = vpop.f32.mrb[0].mxu0
  %3845 = vmatprep.mubr.f32.mxu0 0.0
  %3846 = vmatmul.mubr.f32.gmra.mrb[0].mxu0 %v3681
  %v3847 = vpop.f32.mrb[0].mxu0
  %v3848 = vadd.f32 %v3763, %v3847
  %v3849 = vpop.f32.mrb[0].mxu0
  %3850 = vmatprep.mubr.f32.mxu0 0.0
  %3851 = vmatmul.mubr.f32.gmra.mrb[0].mxu0 %v3684
  %v3852 = vpop.f32.mrb[0].mxu0
  %v3853 = vadd.f32 %v3768, %v3852
  %v3854 = vpop.f32.mrb[0].mxu0
  %3855 = vdwg.mxu0
  %v3856 = vsel %vm2735, %v3838, 0.0
  %3857 = vadd.xlane.f32.xlu0 %v3856
  %v3858 = vpop.xlane.xlu0 %3857
  %v3859 = vsel %vm2735, %v3843, 0.0
  %3860 = vadd.xlane.f32.xlu0 %v3859
  %v3861 = vpop.xlane.xlu0 %3860
  %v3862 = vsel %vm2735, %v3848, 0.0
  %3863 = vadd.xlane.f32.xlu0 %v3862
  %v3864 = vpop.xlane.xlu0 %3863
  %v3865 = vsel %vm2735, %v3853, 0.0
  %3866 = vadd.xlane.f32.xlu0 %v3865
  %v3867 = vpop.xlane.xlu0 %3866
  %v3868 = vmul.f32 %v3858, 0.03125
  %v3869 = vmul.f32 %v3861, 0.03125
  %v3870 = vmul.f32 %v3864, 0.03125
  %v3871 = vmul.f32 %v3867, 0.03125
  %v3872 = vsub.f32 %v3838, %v3868
  %v3873 = vsub.f32 %v3843, %v3869
  %v3874 = vsub.f32 %v3848, %v3870
  %v3875 = vsub.f32 %v3853, %v3871
  %v3876 = vmul.f32 %v3872, %v3872
  %v3877 = vmul.f32 %v3873, %v3873
  %v3878 = vmul.f32 %v3874, %v3874
  %v3879 = vmul.f32 %v3875, %v3875
  %v3880 = vsel %vm2735, %v3876, 0.0
  %3881 = vadd.xlane.f32.xlu0 %v3880
  %v3882 = vpop.xlane.xlu0 %3881
  %v3883 = vsel %vm2735, %v3877, 0.0
  %3884 = vadd.xlane.f32.xlu0 %v3883
  %v3885 = vpop.xlane.xlu0 %3884
  %v3886 = vsel %vm2735, %v3878, 0.0
  %3887 = vadd.xlane.f32.xlu0 %v3886
  %v3888 = vpop.xlane.xlu0 %3887
  %v3889 = vsel %vm2735, %v3879, 0.0
  %3890 = vadd.xlane.f32.xlu0 %v3889
  %v3891 = vpop.xlane.xlu0 %3890
  %v3892 = vmul.f32 %v3882, 0.03125
  %v3893 = vmul.f32 %v3885, 0.03125
  %v3894 = vmul.f32 %v3888, 0.03125
  %v3895 = vmul.f32 %v3891, 0.03125
  %v3896 = vld [vmem:[%s35] sm:$0xff]
  %v3897 = vld [vmem:[%s35 + $0x8] sm:$0xff]
  %v3898 = vld [vmem:[%s35 + $0x10] sm:$0xff]
  %v3899 = vld [vmem:[%s35 + $0x18] sm:$0xff]
  %v3900 = vadd.f32 %v3892, 1e-05
  %v3901 = vadd.f32 %v3893, 1e-05
  %v3902 = vadd.f32 %v3894, 1e-05
  %v3903 = vadd.f32 %v3895, 1e-05
  %v3904 = vrsqrt.pop %v3900
  %v3905 = vrsqrt.pop %v3901
  %v3906 = vrsqrt.pop %v3902
  %v3907 = vrsqrt.pop %v3903
  %v3908 = vmul.f32 %v3896, %v3904
  %v3909 = vmul.f32 %v3897, %v3905
  %v3910 = vmul.f32 %v3898, %v3906
  %v3911 = vmul.f32 %v3899, %v3907
  %3913 = vset.pattern.permute.xlu0 0
  %3914 = vperm.xlu0 %3913, %v3908
  %v3915 = vpop.permute.xlu0 %3914
  %3918 = vset.pattern.permute.xlu0 0
  %3919 = vperm.xlu0 %3918, %v3909
  %v3920 = vpop.permute.xlu0 %3919
  %3923 = vset.pattern.permute.xlu0 0
  %3924 = vperm.xlu0 %3923, %v3910
  %v3925 = vpop.permute.xlu0 %3924
  %3928 = vset.pattern.permute.xlu0 0
  %3929 = vperm.xlu0 %3928, %v3911
  %v3930 = vpop.permute.xlu0 %3929
  %v3932 = vmul.f32 %v3872, %v3915
  %v3933 = vmul.f32 %v3873, %v3920
  %v3934 = vmul.f32 %v3874, %v3925
  %v3935 = vmul.f32 %v3875, %v3930
  %v3936 = vld [vmem:[%s37] sm:$0xff]
  %v3937 = vld [vmem:[%s37 + $0x8] sm:$0xff]
  %v3938 = vld [vmem:[%s37 + $0x10] sm:$0xff]
  %v3939 = vld [vmem:[%s37 + $0x18] sm:$0xff]
  %3941 = vset.pattern.permute.xlu0 0
  %3942 = vperm.xlu0 %3941, %v3936
  %v3943 = vpop.permute.xlu0 %3942
  %3946 = vset.pattern.permute.xlu0 0
  %3947 = vperm.xlu0 %3946, %v3937
  %v3948 = vpop.permute.xlu0 %3947
  %3951 = vset.pattern.permute.xlu0 0
  %3952 = vperm.xlu0 %3951, %v3938
  %v3953 = vpop.permute.xlu0 %3952
  %3956 = vset.pattern.permute.xlu0 0
  %3957 = vperm.xlu0 %3956, %v3939
  %v3958 = vpop.permute.xlu0 %3957
  %v3960 = vadd.f32 %v3932, %v3943
  %v3961 = vadd.f32 %v3933, %v3948
  %v3962 = vadd.f32 %v3934, %v3953
  %v3963 = vadd.f32 %v3935, %v3958
  %vm3964 = vcmp.gt.f32.partialorder %v3960, 0.0
  %vm3965 = vcmp.gt.f32.partialorder %v3961, 0.0
  %vm3966 = vcmp.gt.f32.partialorder %v3962, 0.0
  %vm3967 = vcmp.gt.f32.partialorder %v3963, 0.0
  %v3968 = vmul.f32 %v3960, 0.01
  %v3969 = vmul.f32 %v3961, 0.01
  %v3970 = vmul.f32 %v3962, 0.01
  %v3971 = vmul.f32 %v3963, 0.01
  %v3972 = vsel %vm3964, %v3960, %v3968
  %v3973 = vsel %vm3965, %v3961, %v3969
  %v3974 = vsel %vm3966, %v3962, %v3970
  %v3975 = vsel %vm3967, %v3963, %v3971
  %3976 = vst.msk [vmem:[#allocation2 + $0x8] sm:$0xff] %vm2735, %v3972
  %3977 = vst.msk [vmem:[#allocation2 + $0x38] sm:$0xff] %vm2735, %v3973
  %3978 = vst.msk [vmem:[#allocation2 + $0x68] sm:$0xff] %vm2735, %v3974
  %3979 = vst.msk [vmem:[#allocation2 + $0x98] sm:$0xff] %vm2735, %v3975
  %v3980 = vld [vmem:[#allocation2 + $0x8] sm:$0xff]
  %v3981 = vld [vmem:[#allocation2 + $0x38] sm:$0xff]
  %v3982 = vld [vmem:[#allocation2 + $0x68] sm:$0xff]
  %v3983 = vld [vmem:[#allocation2 + $0x98] sm:$0xff]
  %3988 = vrot.lane.b32.xlu0 %v3980, 127
  %v3989 = vpop.permute.xlu0 %3988
  %3990 = vrot.lane.b32.xlu0 %v3981, 127
  %v3991 = vpop.permute.xlu0 %3990
  %3992 = vrot.lane.b32.xlu0 %v3982, 127
  %v3993 = vpop.permute.xlu0 %3992
  %3994 = vrot.lane.b32.xlu0 %v3983, 127
  %v3995 = vpop.permute.xlu0 %3994
  %v4000 = vmax.f32 %v3972, %v3989
  %v4001 = vmax.f32 %v3973, %v3991
  %v4002 = vmax.f32 %v3974, %v3993
  %v4003 = vmax.f32 %v3975, %v3995
  %v4004 = vmax.f32 %v3980, %v3989
  %v4005 = vmax.f32 %v3981, %v3991
  %v4006 = vmax.f32 %v3982, %v3993
  %v4007 = vmax.f32 %v3983, %v3995
  %4012 = vrot.lane.b32.xlu0 %v4004, 124
  %v4013 = vpop.permute.xlu0 %4012
  %4014 = vrot.lane.b32.xlu0 %v4005, 124
  %v4015 = vpop.permute.xlu0 %4014
  %4016 = vrot.lane.b32.xlu0 %v4006, 124
  %v4017 = vpop.permute.xlu0 %4016
  %4018 = vrot.lane.b32.xlu0 %v4007, 124
  %v4019 = vpop.permute.xlu0 %4018
  %v4024 = vmax.f32 %v4000, %v4013
  %v4025 = vmax.f32 %v4001, %v4015
  %v4026 = vmax.f32 %v4002, %v4017
  %v4027 = vmax.f32 %v4003, %v4019
  %v4028 = vld [vmem:[%s91] sm:$0xff]
  %v4029 = vld [vmem:[%s91 + $0x8] sm:$0xff]
  %v4031 = vsel %vm291, %v4024, 0
  %v4034 = vsel %vm291, %v4025, 0
  %v4037 = vsel %vm291, %v4026, 0
  %v4040 = vsel %vm291, %v4027, 0
  %4042 = vmatprep.subr.mxu0 0.0
  %4043 = vmatpush1.msra.mxu0 %v4028
  %4044 = vmatprep.subr.mxu0 0.0
  %4045 = vmatpush1.msra.mxu0 %v4029
  %4046 = vmatprep.subr.mxu0 0.0
  %4047 = vmatpush1.msra.mxu0 0.0
  %4048 = vmatprep.subr.mxu0 0.0
  %4049 = vmatpush1.msra.mxu0 0.0
  %4050 = vmatprep.subr.mxu0 0.0
  %4051 = vmatpush1.msra.mxu0 0.0
  %4052 = vmatprep.subr.mxu0 0.0
  %4053 = vmatpush1.msra.mxu0 0.0
  %4054 = vmatprep.subr.mxu0 0.0
  %4055 = vmatpush1.msra.mxu0 0.0
  %4056 = vmatprep.subr.mxu0 0.0
  %4057 = vmatpush1.msra.mxu0 0.0
  %4058 = vmatprep.subr.mxu0 0.0
  %4059 = vmatpush1.msra.mxu0 0.0
  %4060 = vmatprep.subr.mxu0 0.0
  %4061 = vmatpush1.msra.mxu0 0.0
  %4062 = vmatprep.subr.mxu0 0.0
  %4063 = vmatpush1.msra.mxu0 0.0
  %4064 = vmatprep.subr.mxu0 0.0
  %4065 = vmatpush1.msra.mxu0 0.0
  %4066 = vmatprep.subr.mxu0 0.0
  %4067 = vmatpush1.msra.mxu0 0.0
  %4068 = vmatprep.subr.mxu0 0.0
  %4069 = vmatpush1.msra.mxu0 0.0
  %4070 = vmatprep.subr.mxu0 0.0
  %4071 = vmatpush1.msra.mxu0 0.0
  %4072 = vmatprep.subr.mxu0 0.0
  %4073 = vmatpush1.msra.mxu0 0.0
  %4074 = vmatprep.subr.mxu0 0.0
  %4075 = vmatpush1.msra.mxu0 0.0
  %4076 = vmatprep.subr.mxu0 0.0
  %4077 = vmatpush1.msra.mxu0 0.0
  %4078 = vmatprep.subr.mxu0 0.0
  %4079 = vmatpush1.msra.mxu0 0.0
  %4080 = vmatprep.subr.mxu0 0.0
  %4081 = vmatpush1.msra.mxu0 0.0
  %4082 = vmatprep.subr.mxu0 0.0
  %4083 = vmatpush1.msra.mxu0 0.0
  %4084 = vmatprep.subr.mxu0 0.0
  %4085 = vmatpush1.msra.mxu0 0.0
  %4086 = vmatprep.subr.mxu0 0.0
  %4087 = vmatpush1.msra.mxu0 0.0
  %4088 = vmatprep.subr.mxu0 0.0
  %4089 = vmatpush1.msra.mxu0 0.0
  %4090 = vmatprep.subr.mxu0 0.0
  %4091 = vmatpush1.msra.mxu0 0.0
  %4092 = vmatprep.subr.mxu0 0.0
  %4093 = vmatpush1.msra.mxu0 0.0
  %4094 = vmatprep.subr.mxu0 0.0
  %4095 = vmatpush1.msra.mxu0 0.0
  %4096 = vmatprep.subr.mxu0 0.0
  %4097 = vmatpush1.msra.mxu0 0.0
  %4098 = vmatprep.subr.mxu0 0.0
  %4099 = vmatpush1.msra.mxu0 0.0
  %4100 = vmatprep.subr.mxu0 0.0
  %4101 = vmatpush1.msra.mxu0 0.0
  %4102 = vmatprep.subr.mxu0 0.0
  %4103 = vmatpush1.msra.mxu0 0.0
  %4104 = vmatprep.subr.mxu0 0.0
  %4105 = vmatpush1.msra.mxu0 0.0
  %4106 = vmatprep.mubr.f32.mxu0 0.0
  %4107 = vmatmul.mubr.f32.gmra.mrb[0].mxu0 %v4031
  %v4108 = vpop.f32.mrb[0].mxu0
  %v4109 = vadd.f32 0.0, %v4108
  %v4110 = vpop.f32.mrb[0].mxu0
  %4111 = vmatprep.mubr.f32.mxu0 0.0
  %4112 = vmatmul.mubr.f32.gmra.mrb[0].mxu0 %v4034
  %v4113 = vpop.f32.mrb[0].mxu0
  %v4114 = vadd.f32 0.0, %v4113
  %v4115 = vpop.f32.mrb[0].mxu0
  %4116 = vmatprep.mubr.f32.mxu0 0.0
  %4117 = vmatmul.mubr.f32.gmra.mrb[0].mxu0 %v4037
  %v4118 = vpop.f32.mrb[0].mxu0
  %v4119 = vadd.f32 0.0, %v4118
  %v4120 = vpop.f32.mrb[0].mxu0
  %4121 = vmatprep.mubr.f32.mxu0 0.0
  %4122 = vmatmul.mubr.f32.gmra.mrb[0].mxu0 %v4040
  %v4123 = vpop.f32.mrb[0].mxu0
  %v4124 = vadd.f32 0.0, %v4123
  %v4125 = vpop.f32.mrb[0].mxu0
  %4126 = vdwg.mxu0
  %4127 = vst.msk [vmem:[#allocation3] sm:$0xff] %vm2805, %v4109
  %4128 = vst.msk [vmem:[#allocation3 + $0x20] sm:$0xff] %vm2805, %v4114
  %4129 = vst.msk [vmem:[#allocation3 + $0x40] sm:$0xff] %vm2805, %v4119
  %4130 = vst.msk [vmem:[#allocation3 + $0x60] sm:$0xff] %vm2805, %v4124
  %4131 = vrot.lane.b32.xlu0 %v4024, 112
  %v4132 = vpop.permute.xlu0 %4131
  %4133 = vrot.lane.b32.xlu0 %v4025, 112
  %v4134 = vpop.permute.xlu0 %4133
  %4135 = vrot.lane.b32.xlu0 %v4026, 112
  %v4136 = vpop.permute.xlu0 %4135
  %4137 = vrot.lane.b32.xlu0 %v4027, 112
  %v4138 = vpop.permute.xlu0 %4137
  %v4139 = vsel %vm291, %v4132, 0
  %v4141 = vsel %vm291, %v4134, 0
  %v4143 = vsel %vm291, %v4136, 0
  %v4145 = vsel %vm291, %v4138, 0
  %4147 = vmatprep.subr.mxu0 0.0
  %4148 = vmatpush1.msra.mxu0 %v4028
  %4149 = vmatprep.subr.mxu0 0.0
  %4150 = vmatpush1.msra.mxu0 %v4029
  %4151 = vmatprep.subr.mxu0 0.0
  %4152 = vmatpush1.msra.mxu0 0.0
  %4153 = vmatprep.subr.mxu0 0.0
  %4154 = vmatpush1.msra.mxu0 0.0
  %4155 = vmatprep.subr.mxu0 0.0
  %4156 = vmatpush1.msra.mxu0 0.0
  %4157 = vmatprep.subr.mxu0 0.0
  %4158 = vmatpush1.msra.mxu0 0.0
  %4159 = vmatprep.subr.mxu0 0.0
  %4160 = vmatpush1.msra.mxu0 0.0
  %4161 = vmatprep.subr.mxu0 0.0
  %4162 = vmatpush1.msra.mxu0 0.0
  %4163 = vmatprep.subr.mxu0 0.0
  %4164 = vmatpush1.msra.mxu0 0.0
  %4165 = vmatprep.subr.mxu0 0.0
  %4166 = vmatpush1.msra.mxu0 0.0
  %4167 = vmatprep.subr.mxu0 0.0
  %4168 = vmatpush1.msra.mxu0 0.0
  %4169 = vmatprep.subr.mxu0 0.0
  %4170 = vmatpush1.msra.mxu0 0.0
  %4171 = vmatprep.subr.mxu0 0.0
  %4172 = vmatpush1.msra.mxu0 0.0
  %4173 = vmatprep.subr.mxu0 0.0
  %4174 = vmatpush1.msra.mxu0 0.0
  %4175 = vmatprep.subr.mxu0 0.0
  %4176 = vmatpush1.msra.mxu0 0.0
  %4177 = vmatprep.subr.mxu0 0.0
  %4178 = vmatpush1.msra.mxu0 0.0
  %4179 = vmatprep.subr.mxu0 0.0
  %4180 = vmatpush1.msra.mxu0 0.0
  %4181 = vmatprep.subr.mxu0 0.0
  %4182 = vmatpush1.msra.mxu0 0.0
  %4183 = vmatprep.subr.mxu0 0.0
  %4184 = vmatpush1.msra.mxu0 0.0
  %4185 = vmatprep.subr.mxu0 0.0
  %4186 = vmatpush1.msra.mxu0 0.0
  %4187 = vmatprep.subr.mxu0 0.0
  %4188 = vmatpush1.msra.mxu0 0.0
  %4189 = vmatprep.subr.mxu0 0.0
  %4190 = vmatpush1.msra.mxu0 0.0
  %4191 = vmatprep.subr.mxu0 0.0
  %4192 = vmatpush1.msra.mxu0 0.0
  %4193 = vmatprep.subr.mxu0 0.0
  %4194 = vmatpush1.msra.mxu0 0.0
  %4195 = vmatprep.subr.mxu0 0.0
  %4196 = vmatpush1.msra.mxu0 0.0
  %4197 = vmatprep.subr.mxu0 0.0
  %4198 = vmatpush1.msra.mxu0 0.0
  %4199 = vmatprep.subr.mxu0 0.0
  %4200 = vmatpush1.msra.mxu0 0.0
  %4201 = vmatprep.subr.mxu0 0.0
  %4202 = vmatpush1.msra.mxu0 0.0
  %4203 = vmatprep.subr.mxu0 0.0
  %4204 = vmatpush1.msra.mxu0 0.0
  %4205 = vmatprep.subr.mxu0 0.0
  %4206 = vmatpush1.msra.mxu0 0.0
  %4207 = vmatprep.subr.mxu0 0.0
  %4208 = vmatpush1.msra.mxu0 0.0
  %4209 = vmatprep.subr.mxu0 0.0
  %4210 = vmatpush1.msra.mxu0 0.0
  %4211 = vmatprep.mubr.f32.mxu0 0.0
  %4212 = vmatmul.mubr.f32.gmra.mrb[0].mxu0 %v4139
  %v4213 = vpop.f32.mrb[0].mxu0
  %v4214 = vadd.f32 0.0, %v4213
  %v4215 = vpop.f32.mrb[0].mxu0
  %4216 = vmatprep.mubr.f32.mxu0 0.0
  %4217 = vmatmul.mubr.f32.gmra.mrb[0].mxu0 %v4141
  %v4218 = vpop.f32.mrb[0].mxu0
  %v4219 = vadd.f32 0.0, %v4218
  %v4220 = vpop.f32.mrb[0].mxu0
  %4221 = vmatprep.mubr.f32.mxu0 0.0
  %4222 = vmatmul.mubr.f32.gmra.mrb[0].mxu0 %v4143
  %v4223 = vpop.f32.mrb[0].mxu0
  %v4224 = vadd.f32 0.0, %v4223
  %v4225 = vpop.f32.mrb[0].mxu0
  %4226 = vmatprep.mubr.f32.mxu0 0.0
  %4227 = vmatmul.mubr.f32.gmra.mrb[0].mxu0 %v4145
  %v4228 = vpop.f32.mrb[0].mxu0
  %v4229 = vadd.f32 0.0, %v4228
  %v4230 = vpop.f32.mrb[0].mxu0
  %4231 = vdwg.mxu0
  %4236 = vrot.lane.b32.xlu0 %v4214, 4
  %v4237 = vpop.permute.xlu0 %4236
  %4238 = vrot.lane.b32.xlu0 %v4219, 4
  %v4239 = vpop.permute.xlu0 %4238
  %4240 = vrot.lane.b32.xlu0 %v4224, 4
  %v4241 = vpop.permute.xlu0 %4240
  %4242 = vrot.lane.b32.xlu0 %v4229, 4
  %v4243 = vpop.permute.xlu0 %4242
  %vm4248 = vcmask 64544
  %4249 = vst.msk [vmem:[#allocation3] sm:$0xff] %vm4248, %v4237
  %4250 = vst.msk [vmem:[#allocation3 + $0x20] sm:$0xff] %vm4248, %v4239
  %4251 = vst.msk [vmem:[#allocation3 + $0x40] sm:$0xff] %vm4248, %v4241
  %4252 = vst.msk [vmem:[#allocation3 + $0x60] sm:$0xff] %vm4248, %v4243
  %v4253 = vld [vmem:[#allocation3] sm:$0xff]
  %v4254 = vld [vmem:[#allocation3 + $0x20] sm:$0xff]
  %v4255 = vld [vmem:[#allocation3 + $0x40] sm:$0xff]
  %v4256 = vld [vmem:[#allocation3 + $0x60] sm:$0xff]
  %4257 = vst.msk [vmem:[%s103] sm:$0xff] %vm1765, %v4253
  %4258 = vst.msk [vmem:[%s103 + $0x8] sm:$0xff] %vm1765, %v4254
  %4259 = vst.msk [vmem:[%s103 + $0x10] sm:$0xff] %vm1765, %v4255
  %4260 = vst.msk [vmem:[%s103 + $0x18] sm:$0xff] %vm1765, %v4256
  %4261 = vst.msk [vmem:[#allocation2 + $0x8] sm:$0xff] %vm1765, %v4253
  %4262 = vst.msk [vmem:[#allocation2 + $0x38] sm:$0xff] %vm1765, %v4254
  %4263 = vst.msk [vmem:[#allocation2 + $0x68] sm:$0xff] %vm1765, %v4255
  %4264 = vst.msk [vmem:[#allocation2 + $0x98] sm:$0xff] %vm1765, %v4256
  %v4265 = vld [vmem:[#allocation2] sm:$0xff]
  %v4266 = vld [vmem:[#allocation2 + $0x8] sm:$0xff]
  %v4267 = vld [vmem:[#allocation2 + $0x30] sm:$0xff]
  %v4268 = vld [vmem:[#allocation2 + $0x38] sm:$0xff]
  %v4269 = vld [vmem:[#allocation2 + $0x60] sm:$0xff]
  %v4270 = vld [vmem:[#allocation2 + $0x68] sm:$0xff]
  %v4271 = vld [vmem:[#allocation2 + $0x90] sm:$0xff]
  %v4272 = vld [vmem:[#allocation2 + $0x98] sm:$0xff]
  %v4273 = vld [vmem:[%s85] sm:$0x1]
  %v4274 = vlaneseq
  %v4275 = vshrl.u32 %v4274, 7
  %v4276 = vsub.s32 0, %v4275
  %v4277 = vrot.slane %v4273, %v4276
  %4279 = vrot.lane.b32.xlu0 %v4277, 125
  %v4280 = vpop.permute.xlu0 %4279
  %v4282 = vmul.f32 %v4265, %v4280
  %v4283 = vmul.f32 %v4266, %v4280
  %v4284 = vmul.f32 %v4267, %v4280
  %v4285 = vmul.f32 %v4268, %v4280
  %v4286 = vmul.f32 %v4269, %v4280
  %v4287 = vmul.f32 %v4270, %v4280
  %v4288 = vmul.f32 %v4271, %v4280
  %v4289 = vmul.f32 %v4272, %v4280
  %4298 = vrot.lane.b32.xlu0 %v4282, 3
  %v4299 = vpop.permute.xlu0 %4298
  %4300 = vrot.lane.b32.xlu0 %v4283, 3
  %v4301 = vpop.permute.xlu0 %4300
  %4302 = vrot.lane.b32.xlu0 %v4284, 3
  %v4303 = vpop.permute.xlu0 %4302
  %4304 = vrot.lane.b32.xlu0 %v4285, 3
  %v4305 = vpop.permute.xlu0 %4304
  %4306 = vrot.lane.b32.xlu0 %v4286, 3
  %v4307 = vpop.permute.xlu0 %4306
  %4308 = vrot.lane.b32.xlu0 %v4287, 3
  %v4309 = vpop.permute.xlu0 %4308
  %4310 = vrot.lane.b32.xlu0 %v4288, 3
  %v4311 = vpop.permute.xlu0 %4310
  %4312 = vrot.lane.b32.xlu0 %v4289, 3
  %v4313 = vpop.permute.xlu0 %4312
  %v4314 = vsel %vm2841, %v4299, %v4301
  %v4315 = vsel %vm2841, %v4303, %v4305
  %v4316 = vsel %vm2841, %v4307, %v4309
  %v4317 = vsel %vm2841, %v4311, %v4313
  %4322 = vst.msk [vmem:[#allocation3] sm:$0xff] %vm1765, %v4314
  %4323 = vst.msk [vmem:[#allocation3 + $0x20] sm:$0xff] %vm1765, %v4315
  %4324 = vst.msk [vmem:[#allocation3 + $0x40] sm:$0xff] %vm1765, %v4316
  %4325 = vst.msk [vmem:[#allocation3 + $0x60] sm:$0xff] %vm1765, %v4317
  %v4326 = vld [vmem:[#allocation2] sm:$0xff]
  %v4327 = vld [vmem:[#allocation2 + $0x8] sm:$0xff]
  %v4328 = vld [vmem:[#allocation2 + $0x30] sm:$0xff]
  %v4329 = vld [vmem:[#allocation2 + $0x38] sm:$0xff]
  %v4330 = vld [vmem:[#allocation2 + $0x60] sm:$0xff]
  %v4331 = vld [vmem:[#allocation2 + $0x68] sm:$0xff]
  %v4332 = vld [vmem:[#allocation2 + $0x90] sm:$0xff]
  %v4333 = vld [vmem:[#allocation2 + $0x98] sm:$0xff]
  %v4334 = vld [vmem:[%s85 + $0x1] sm:$0x1]
  %v4335 = vlaneseq
  %v4336 = vshrl.u32 %v4335, 7
  %v4337 = vsub.s32 0, %v4336
  %v4338 = vrot.slane %v4334, %v4337
  %4340 = vrot.lane.b32.xlu0 %v4338, 126
  %v4341 = vpop.permute.xlu0 %4340
  %v4343 = vmul.f32 %v4326, %v4341
  %v4344 = vmul.f32 %v4327, %v4341
  %v4345 = vmul.f32 %v4328, %v4341
  %v4346 = vmul.f32 %v4329, %v4341
  %v4347 = vmul.f32 %v4330, %v4341
  %v4348 = vmul.f32 %v4331, %v4341
  %v4349 = vmul.f32 %v4332, %v4341
  %v4350 = vmul.f32 %v4333, %v4341
  %4359 = vrot.lane.b32.xlu0 %v4343, 2
  %v4360 = vpop.permute.xlu0 %4359
  %4361 = vrot.lane.b32.xlu0 %v4344, 2
  %v4362 = vpop.permute.xlu0 %4361
  %4363 = vrot.lane.b32.xlu0 %v4345, 2
  %v4364 = vpop.permute.xlu0 %4363
  %4365 = vrot.lane.b32.xlu0 %v4346, 2
  %v4366 = vpop.permute.xlu0 %4365
  %4367 = vrot.lane.b32.xlu0 %v4347, 2
  %v4368 = vpop.permute.xlu0 %4367
  %4369 = vrot.lane.b32.xlu0 %v4348, 2
  %v4370 = vpop.permute.xlu0 %4369
  %4371 = vrot.lane.b32.xlu0 %v4349, 2
  %v4372 = vpop.permute.xlu0 %4371
  %4373 = vrot.lane.b32.xlu0 %v4350, 2
  %v4374 = vpop.permute.xlu0 %4373
  %vm4375 = vcmask 15360
  %v4376 = vsel %vm4375, %v4360, %v4362
  %v4377 = vsel %vm4375, %v4364, %v4366
  %v4378 = vsel %vm4375, %v4368, %v4370
  %v4379 = vsel %vm4375, %v4372, %v4374
  %4384 = vst.msk [vmem:[#allocation3 + $0x80] sm:$0xff] %vm1765, %v4376
  %4385 = vst.msk [vmem:[#allocation3 + $0xa0] sm:$0xff] %vm1765, %v4377
  %4386 = vst.msk [vmem:[#allocation3 + $0xc0] sm:$0xff] %vm1765, %v4378
  %4387 = vst.msk [vmem:[#allocation3 + $0xe0] sm:$0xff] %vm1765, %v4379
  %v4388 = vld [vmem:[#allocation2] sm:$0xff]
  %v4389 = vld [vmem:[#allocation2 + $0x8] sm:$0xff]
  %v4390 = vld [vmem:[#allocation2 + $0x30] sm:$0xff]
  %v4391 = vld [vmem:[#allocation2 + $0x38] sm:$0xff]
  %v4392 = vld [vmem:[#allocation2 + $0x60] sm:$0xff]
  %v4393 = vld [vmem:[#allocation2 + $0x68] sm:$0xff]
  %v4394 = vld [vmem:[#allocation2 + $0x90] sm:$0xff]
  %v4395 = vld [vmem:[#allocation2 + $0x98] sm:$0xff]
  %v4396 = vld [vmem:[%s85 + $0x2] sm:$0x1]
  %v4397 = vlaneseq
  %v4398 = vshrl.u32 %v4397, 7
  %v4399 = vsub.s32 0, %v4398
  %v4400 = vrot.slane %v4396, %v4399
  %4402 = vrot.lane.b32.xlu0 %v4400, 127
  %v4403 = vpop.permute.xlu0 %4402
  %v4405 = vmul.f32 %v4388, %v4403
  %v4406 = vmul.f32 %v4389, %v4403
  %v4407 = vmul.f32 %v4390, %v4403
  %v4408 = vmul.f32 %v4391, %v4403
  %v4409 = vmul.f32 %v4392, %v4403
  %v4410 = vmul.f32 %v4393, %v4403
  %v4411 = vmul.f32 %v4394, %v4403
  %v4412 = vmul.f32 %v4395, %v4403
  %4421 = vrot.lane.b32.xlu0 %v4405, 1
  %v4422 = vpop.permute.xlu0 %4421
  %4423 = vrot.lane.b32.xlu0 %v4406, 1
  %v4424 = vpop.permute.xlu0 %4423
  %4425 = vrot.lane.b32.xlu0 %v4407, 1
  %v4426 = vpop.permute.xlu0 %4425
  %4427 = vrot.lane.b32.xlu0 %v4408, 1
  %v4428 = vpop.permute.xlu0 %4427
  %4429 = vrot.lane.b32.xlu0 %v4409, 1
  %v4430 = vpop.permute.xlu0 %4429
  %4431 = vrot.lane.b32.xlu0 %v4410, 1
  %v4432 = vpop.permute.xlu0 %4431
  %4433 = vrot.lane.b32.xlu0 %v4411, 1
  %v4434 = vpop.permute.xlu0 %4433
  %4435 = vrot.lane.b32.xlu0 %v4412, 1
  %v4436 = vpop.permute.xlu0 %4435
  %v4437 = vsel %vm337, %v4422, %v4424
  %v4438 = vsel %vm337, %v4426, %v4428
  %v4439 = vsel %vm337, %v4430, %v4432
  %v4440 = vsel %vm337, %v4434, %v4436
  %4445 = vst.msk [vmem:[#allocation3 + $0x100] sm:$0xff] %vm1765, %v4437
  %4446 = vst.msk [vmem:[#allocation3 + $0x120] sm:$0xff] %vm1765, %v4438
  %4447 = vst.msk [vmem:[#allocation3 + $0x140] sm:$0xff] %vm1765, %v4439
  %4448 = vst.msk [vmem:[#allocation3 + $0x160] sm:$0xff] %vm1765, %v4440
  %v4449 = vld [vmem:[#allocation2] sm:$0xff]
  %v4450 = vld [vmem:[#allocation2 + $0x8] sm:$0xff]
  %v4451 = vld [vmem:[#allocation2 + $0x30] sm:$0xff]
  %v4452 = vld [vmem:[#allocation2 + $0x38] sm:$0xff]
  %v4453 = vld [vmem:[#allocation2 + $0x60] sm:$0xff]
  %v4454 = vld [vmem:[#allocation2 + $0x68] sm:$0xff]
  %v4455 = vld [vmem:[#allocation2 + $0x90] sm:$0xff]
  %v4456 = vld [vmem:[#allocation2 + $0x98] sm:$0xff]
  %v4457 = vld [vmem:[%s85 + $0x3] sm:$0x1]
  %v4458 = vlaneseq
  %v4459 = vshrl.u32 %v4458, 7
  %v4460 = vsub.s32 0, %v4459
  %v4461 = vrot.slane %v4457, %v4460
  %4463 = vrot.lane.b32.xlu0 %v4461, 127
  %v4464 = vpop.permute.xlu0 %4463
  %v4466 = vmul.f32 %v4449, %v4464
  %v4467 = vmul.f32 %v4450, %v4464
  %v4468 = vmul.f32 %v4451, %v4464
  %v4469 = vmul.f32 %v4452, %v4464
  %v4470 = vmul.f32 %v4453, %v4464
  %v4471 = vmul.f32 %v4454, %v4464
  %v4472 = vmul.f32 %v4455, %v4464
  %v4473 = vmul.f32 %v4456, %v4464
  %4482 = vrot.lane.b32.xlu0 %v4466, 1
  %v4483 = vpop.permute.xlu0 %4482
  %4484 = vrot.lane.b32.xlu0 %v4467, 1
  %v4485 = vpop.permute.xlu0 %4484
  %4486 = vrot.lane.b32.xlu0 %v4468, 1
  %v4487 = vpop.permute.xlu0 %4486
  %4488 = vrot.lane.b32.xlu0 %v4469, 1
  %v4489 = vpop.permute.xlu0 %4488
  %4490 = vrot.lane.b32.xlu0 %v4470, 1
  %v4491 = vpop.permute.xlu0 %4490
  %4492 = vrot.lane.b32.xlu0 %v4471, 1
  %v4493 = vpop.permute.xlu0 %4492
  %4494 = vrot.lane.b32.xlu0 %v4472, 1
  %v4495 = vpop.permute.xlu0 %4494
  %4496 = vrot.lane.b32.xlu0 %v4473, 1
  %v4497 = vpop.permute.xlu0 %4496
  %v4498 = vsel %vm337, %v4483, %v4485
  %v4499 = vsel %vm337, %v4487, %v4489
  %v4500 = vsel %vm337, %v4491, %v4493
  %v4501 = vsel %vm337, %v4495, %v4497
  %4506 = vst.msk [vmem:[#allocation3 + $0x180] sm:$0xff] %vm1765, %v4498
  %4507 = vst.msk [vmem:[#allocation3 + $0x1a0] sm:$0xff] %vm1765, %v4499
  %4508 = vst.msk [vmem:[#allocation3 + $0x1c0] sm:$0xff] %vm1765, %v4500
  %4509 = vst.msk [vmem:[#allocation3 + $0x1e0] sm:$0xff] %vm1765, %v4501
  %v4510 = vld [vmem:[#allocation2 + $0x8] sm:$0xff]
  %v4511 = vld [vmem:[#allocation2 + $0x38] sm:$0xff]
  %v4512 = vld [vmem:[#allocation2 + $0x68] sm:$0xff]
  %v4513 = vld [vmem:[#allocation2 + $0x98] sm:$0xff]
  %4514 = vst.msk [vmem:[#allocation3 + $0x200] sm:$0xff] %vm1765, %v4510
  %4515 = vst.msk [vmem:[#allocation3 + $0x220] sm:$0xff] %vm1765, %v4511
  %4516 = vst.msk [vmem:[#allocation3 + $0x240] sm:$0xff] %vm1765, %v4512
  %4517 = vst.msk [vmem:[#allocation3 + $0x260] sm:$0xff] %vm1765, %v4513
  %v4518 = vld [vmem:[#allocation2 + $0x8] sm:$0xff]
  %v4519 = vld [vmem:[#allocation2 + $0x38] sm:$0xff]
  %v4520 = vld [vmem:[#allocation2 + $0x68] sm:$0xff]
  %v4521 = vld [vmem:[#allocation2 + $0x98] sm:$0xff]
  %v4522 = vld [vmem:[%s85 + $0x4] sm:$0x1]
  %v4523 = vlaneseq
  %v4524 = vshrl.u32 %v4523, 7
  %v4525 = vsub.s32 0, %v4524
  %v4526 = vrot.slane %v4522, %v4525
  %4528 = vrot.lane.b32.xlu0 %v4526, 1
  %v4529 = vpop.permute.xlu0 %4528
  %v4531 = vmul.f32 %v4518, %v4529
  %v4532 = vmul.f32 %v4519, %v4529
  %v4533 = vmul.f32 %v4520, %v4529
  %v4534 = vmul.f32 %v4521, %v4529
  %4539 = vrot.lane.b32.xlu0 %v4531, 127
  %v4540 = vpop.permute.xlu0 %4539
  %4541 = vrot.lane.b32.xlu0 %v4532, 127
  %v4542 = vpop.permute.xlu0 %4541
  %4543 = vrot.lane.b32.xlu0 %v4533, 127
  %v4544 = vpop.permute.xlu0 %4543
  %4545 = vrot.lane.b32.xlu0 %v4534, 127
  %v4546 = vpop.permute.xlu0 %4545
  %4551 = vst.msk [vmem:[#allocation3 + $0x280] sm:$0xff] %vm1765, %v4540
  %4552 = vst.msk [vmem:[#allocation3 + $0x2a0] sm:$0xff] %vm1765, %v4542
  %4553 = vst.msk [vmem:[#allocation3 + $0x2c0] sm:$0xff] %vm1765, %v4544
  %4554 = vst.msk [vmem:[#allocation3 + $0x2e0] sm:$0xff] %vm1765, %v4546
  %v4555 = vld [vmem:[#allocation2 + $0x8] sm:$0xff]
  %v4556 = vld [vmem:[#allocation2 + $0x38] sm:$0xff]
  %v4557 = vld [vmem:[#allocation2 + $0x68] sm:$0xff]
  %v4558 = vld [vmem:[#allocation2 + $0x98] sm:$0xff]
  %v4559 = vld [vmem:[%s85 + $0x5] sm:$0x1]
  %v4560 = vlaneseq
  %v4561 = vshrl.u32 %v4560, 7
  %v4562 = vsub.s32 0, %v4561
  %v4563 = vrot.slane %v4559, %v4562
  %4565 = vrot.lane.b32.xlu0 %v4563, 1
  %v4566 = vpop.permute.xlu0 %4565
  %v4568 = vmul.f32 %v4555, %v4566
  %v4569 = vmul.f32 %v4556, %v4566
  %v4570 = vmul.f32 %v4557, %v4566
  %v4571 = vmul.f32 %v4558, %v4566
  %4576 = vrot.lane.b32.xlu0 %v4568, 127
  %v4577 = vpop.permute.xlu0 %4576
  %4578 = vrot.lane.b32.xlu0 %v4569, 127
  %v4579 = vpop.permute.xlu0 %4578
  %4580 = vrot.lane.b32.xlu0 %v4570, 127
  %v4581 = vpop.permute.xlu0 %4580
  %4582 = vrot.lane.b32.xlu0 %v4571, 127
  %v4583 = vpop.permute.xlu0 %4582
  %4588 = vst.msk [vmem:[#allocation3 + $0x300] sm:$0xff] %vm1765, %v4577
  %4589 = vst.msk [vmem:[#allocation3 + $0x320] sm:$0xff] %vm1765, %v4579
  %4590 = vst.msk [vmem:[#allocation3 + $0x340] sm:$0xff] %vm1765, %v4581
  %4591 = vst.msk [vmem:[#allocation3 + $0x360] sm:$0xff] %vm1765, %v4583
  %v4592 = vld [vmem:[#allocation2 + $0x8] sm:$0xff]
  %v4593 = vld [vmem:[#allocation2 + $0x38] sm:$0xff]
  %v4594 = vld [vmem:[#allocation2 + $0x68] sm:$0xff]
  %v4595 = vld [vmem:[#allocation2 + $0x98] sm:$0xff]
  %v4596 = vld [vmem:[%s85 + $0x6] sm:$0x1]
  %v4597 = vlaneseq
  %v4598 = vshrl.u32 %v4597, 7
  %v4599 = vsub.s32 0, %v4598
  %v4600 = vrot.slane %v4596, %v4599
  %4602 = vrot.lane.b32.xlu0 %v4600, 2
  %v4603 = vpop.permute.xlu0 %4602
  %v4605 = vmul.f32 %v4592, %v4603
  %v4606 = vmul.f32 %v4593, %v4603
  %v4607 = vmul.f32 %v4594, %v4603
  %v4608 = vmul.f32 %v4595, %v4603
  %4613 = vrot.lane.b32.xlu0 %v4605, 126
  %v4614 = vpop.permute.xlu0 %4613
  %4615 = vrot.lane.b32.xlu0 %v4606, 126
  %v4616 = vpop.permute.xlu0 %4615
  %4617 = vrot.lane.b32.xlu0 %v4607, 126
  %v4618 = vpop.permute.xlu0 %4617
  %4619 = vrot.lane.b32.xlu0 %v4608, 126
  %v4620 = vpop.permute.xlu0 %4619
  %4625 = vst.msk [vmem:[#allocation3 + $0x380] sm:$0xff] %vm1765, %v4614
  %4626 = vst.msk [vmem:[#allocation3 + $0x3a0] sm:$0xff] %vm1765, %v4616
  %4627 = vst.msk [vmem:[#allocation3 + $0x3c0] sm:$0xff] %vm1765, %v4618
  %4628 = vst.msk [vmem:[#allocation3 + $0x3e0] sm:$0xff] %vm1765, %v4620
  %v4629 = vld [vmem:[#allocation2 + $0x8] sm:$0xff]
  %v4630 = vld [vmem:[#allocation2 + $0x38] sm:$0xff]
  %v4631 = vld [vmem:[#allocation2 + $0x68] sm:$0xff]
  %v4632 = vld [vmem:[#allocation2 + $0x98] sm:$0xff]
  %v4633 = vld [vmem:[%s85 + $0x7] sm:$0x1]
  %v4634 = vlaneseq
  %v4635 = vshrl.u32 %v4634, 7
  %v4636 = vsub.s32 0, %v4635
  %v4637 = vrot.slane %v4633, %v4636
  %4639 = vrot.lane.b32.xlu0 %v4637, 3
  %v4640 = vpop.permute.xlu0 %4639
  %v4642 = vmul.f32 %v4629, %v4640
  %v4643 = vmul.f32 %v4630, %v4640
  %v4644 = vmul.f32 %v4631, %v4640
  %v4645 = vmul.f32 %v4632, %v4640
  %4650 = vrot.lane.b32.xlu0 %v4642, 125
  %v4651 = vpop.permute.xlu0 %4650
  %4652 = vrot.lane.b32.xlu0 %v4643, 125
  %v4653 = vpop.permute.xlu0 %4652
  %4654 = vrot.lane.b32.xlu0 %v4644, 125
  %v4655 = vpop.permute.xlu0 %4654
  %4656 = vrot.lane.b32.xlu0 %v4645, 125
  %v4657 = vpop.permute.xlu0 %4656
  %4662 = vst.msk [vmem:[#allocation3 + $0x400] sm:$0xff] %vm1765, %v4651
  %4663 = vst.msk [vmem:[#allocation3 + $0x420] sm:$0xff] %vm1765, %v4653
  %4664 = vst.msk [vmem:[#allocation3 + $0x440] sm:$0xff] %vm1765, %v4655
  %4665 = vst.msk [vmem:[#allocation3 + $0x460] sm:$0xff] %vm1765, %v4657
  %v4666 = vld [vmem:[%s39] sm:$0xff]
  %v4667 = vld [vmem:[%s39 + $0x8] sm:$0xff]
  %v4668 = vld [vmem:[%s39 + $0x10] sm:$0xff]
  %v4669 = vld [vmem:[%s39 + $0x18] sm:$0xff]
  %v4670 = vld [vmem:[%s39 + $0x20] sm:$0xff]
  %v4671 = vld [vmem:[%s39 + $0x28] sm:$0xff]
  %v4672 = vld [vmem:[#allocation3] sm:$0xff]
  %v4673 = vld [vmem:[#allocation3 + $0x20] sm:$0xff]
  %v4674 = vld [vmem:[#allocation3 + $0x40] sm:$0xff]
  %v4675 = vld [vmem:[#allocation3 + $0x60] sm:$0xff]
  %v4676 = vld [vmem:[#allocation3 + $0x80] sm:$0xff]
  %v4677 = vld [vmem:[#allocation3 + $0xa0] sm:$0xff]
  %v4678 = vld [vmem:[#allocation3 + $0xc0] sm:$0xff]
  %v4679 = vld [vmem:[#allocation3 + $0xe0] sm:$0xff]
  %v4680 = vld [vmem:[#allocation3 + $0x100] sm:$0xff]
  %v4681 = vld [vmem:[#allocation3 + $0x120] sm:$0xff]
  %v4682 = vld [vmem:[#allocation3 + $0x140] sm:$0xff]
  %v4683 = vld [vmem:[#allocation3 + $0x160] sm:$0xff]
  %v4684 = vld [vmem:[#allocation3 + $0x180] sm:$0xff]
  %v4685 = vld [vmem:[#allocation3 + $0x1a0] sm:$0xff]
  %v4686 = vld [vmem:[#allocation3 + $0x1c0] sm:$0xff]
  %v4687 = vld [vmem:[#allocation3 + $0x1e0] sm:$0xff]
  %v4688 = vld [vmem:[#allocation3 + $0x200] sm:$0xff]
  %v4689 = vld [vmem:[#allocation3 + $0x220] sm:$0xff]
  %v4690 = vld [vmem:[#allocation3 + $0x240] sm:$0xff]
  %v4691 = vld [vmem:[#allocation3 + $0x260] sm:$0xff]
  %v4692 = vld [vmem:[#allocation3 + $0x280] sm:$0xff]
  %v4693 = vld [vmem:[#allocation3 + $0x2a0] sm:$0xff]
  %v4694 = vld [vmem:[#allocation3 + $0x2c0] sm:$0xff]
  %v4695 = vld [vmem:[#allocation3 + $0x2e0] sm:$0xff]
  %v4696 = vld [vmem:[#allocation3 + $0x300] sm:$0xff]
  %v4697 = vld [vmem:[#allocation3 + $0x320] sm:$0xff]
  %v4698 = vld [vmem:[#allocation3 + $0x340] sm:$0xff]
  %v4699 = vld [vmem:[#allocation3 + $0x360] sm:$0xff]
  %v4700 = vld [vmem:[#allocation3 + $0x380] sm:$0xff]
  %v4701 = vld [vmem:[#allocation3 + $0x3a0] sm:$0xff]
  %v4702 = vld [vmem:[#allocation3 + $0x3c0] sm:$0xff]
  %v4703 = vld [vmem:[#allocation3 + $0x3e0] sm:$0xff]
  %v4704 = vld [vmem:[#allocation3 + $0x400] sm:$0xff]
  %v4705 = vld [vmem:[#allocation3 + $0x420] sm:$0xff]
  %v4706 = vld [vmem:[#allocation3 + $0x440] sm:$0xff]
  %v4707 = vld [vmem:[#allocation3 + $0x460] sm:$0xff]
  %v4709 = vsel %vm2735, %v4668, 0
  %v4712 = vsel %vm2735, %v4671, 0
  %4714 = vmatprep.subr.mxu0 0.0
  %4715 = vmatpush1.msra.mxu0 %v4672
  %4716 = vmatprep.subr.mxu0 0.0
  %4717 = vmatpush1.msra.mxu0 %v4673
  %4718 = vmatprep.subr.mxu0 0.0
  %4719 = vmatpush1.msra.mxu0 %v4674
  %4720 = vmatprep.subr.mxu0 0.0
  %4721 = vmatpush1.msra.mxu0 %v4675
  %4722 = vmatprep.subr.mxu0 0.0
  %4723 = vmatpush1.msra.mxu0 %v4676
  %4724 = vmatprep.subr.mxu0 0.0
  %4725 = vmatpush1.msra.mxu0 %v4677
  %4726 = vmatprep.subr.mxu0 0.0
  %4727 = vmatpush1.msra.mxu0 %v4678
  %4728 = vmatprep.subr.mxu0 0.0
  %4729 = vmatpush1.msra.mxu0 %v4679
  %4730 = vmatprep.subr.mxu0 0.0
  %4731 = vmatpush1.msra.mxu0 %v4680
  %4732 = vmatprep.subr.mxu0 0.0
  %4733 = vmatpush1.msra.mxu0 %v4681
  %4734 = vmatprep.subr.mxu0 0.0
  %4735 = vmatpush1.msra.mxu0 %v4682
  %4736 = vmatprep.subr.mxu0 0.0
  %4737 = vmatpush1.msra.mxu0 %v4683
  %4738 = vmatprep.subr.mxu0 0.0
  %4739 = vmatpush1.msra.mxu0 %v4684
  %4740 = vmatprep.subr.mxu0 0.0
  %4741 = vmatpush1.msra.mxu0 %v4685
  %4742 = vmatprep.subr.mxu0 0.0
  %4743 = vmatpush1.msra.mxu0 %v4686
  %4744 = vmatprep.subr.mxu0 0.0
  %4745 = vmatpush1.msra.mxu0 %v4687
  %4746 = vmatprep.subr.mxu0 0.0
  %4747 = vmatpush1.msra.mxu0 %v4688
  %4748 = vmatprep.subr.mxu0 0.0
  %4749 = vmatpush1.msra.mxu0 %v4689
  %4750 = vmatprep.subr.mxu0 0.0
  %4751 = vmatpush1.msra.mxu0 %v4690
  %4752 = vmatprep.subr.mxu0 0.0
  %4753 = vmatpush1.msra.mxu0 %v4691
  %4754 = vmatprep.subr.mxu0 0.0
  %4755 = vmatpush1.msra.mxu0 %v4692
  %4756 = vmatprep.subr.mxu0 0.0
  %4757 = vmatpush1.msra.mxu0 %v4693
  %4758 = vmatprep.subr.mxu0 0.0
  %4759 = vmatpush1.msra.mxu0 %v4694
  %4760 = vmatprep.subr.mxu0 0.0
  %4761 = vmatpush1.msra.mxu0 %v4695
  %4762 = vmatprep.subr.mxu0 0.0
  %4763 = vmatpush1.msra.mxu0 %v4696
  %4764 = vmatprep.subr.mxu0 0.0
  %4765 = vmatpush1.msra.mxu0 %v4697
  %4766 = vmatprep.subr.mxu0 0.0
  %4767 = vmatpush1.msra.mxu0 %v4698
  %4768 = vmatprep.subr.mxu0 0.0
  %4769 = vmatpush1.msra.mxu0 %v4699
  %4770 = vmatprep.subr.mxu0 0.0
  %4771 = vmatpush1.msra.mxu0 %v4700
  %4772 = vmatprep.subr.mxu0 0.0
  %4773 = vmatpush1.msra.mxu0 %v4701
  %4774 = vmatprep.subr.mxu0 0.0
  %4775 = vmatpush1.msra.mxu0 %v4702
  %4776 = vmatprep.subr.mxu0 0.0
  %4777 = vmatpush1.msra.mxu0 %v4703
  %4778 = vmatprep.mubr.f32.mxu0 %v4667
  %4779 = vmatmul.mubr.f32.gmra.mrb[0].mxu0 %v4666
  %v4780 = vpop.f32.mrb[0].mxu0
  %v4781 = vadd.f32 0.0, %v4780
  %v4782 = vpop.f32.mrb[0].mxu0
  %4783 = vmatprep.mubr.f32.mxu0 %v4670
  %4784 = vmatmul.mubr.f32.gmra.mrb[0].mxu0 %v4669
  %v4785 = vpop.f32.mrb[0].mxu0
  %v4786 = vadd.f32 0.0, %v4785
  %v4787 = vpop.f32.mrb[0].mxu0
  %4788 = vdwg.mxu0
  %4789 = vmatprep.subr.mxu0 0.0
  %4790 = vmatpush1.msra.mxu0 %v4704
  %4791 = vmatprep.subr.mxu0 0.0
  %4792 = vmatpush1.msra.mxu0 %v4705
  %4793 = vmatprep.subr.mxu0 0.0
  %4794 = vmatpush1.msra.mxu0 %v4706
  %4795 = vmatprep.subr.mxu0 0.0
  %4796 = vmatpush1.msra.mxu0 %v4707
  %4797 = vmatprep.subr.mxu0 0.0
  %4798 = vmatpush1.msra.mxu0 0.0
  %4799 = vmatprep.subr.mxu0 0.0
  %4800 = vmatpush1.msra.mxu0 0.0
  %4801 = vmatprep.subr.mxu0 0.0
  %4802 = vmatpush1.msra.mxu0 0.0
  %4803 = vmatprep.subr.mxu0 0.0
  %4804 = vmatpush1.msra.mxu0 0.0
  %4805 = vmatprep.subr.mxu0 0.0
  %4806 = vmatpush1.msra.mxu0 0.0
  %4807 = vmatprep.subr.mxu0 0.0
  %4808 = vmatpush1.msra.mxu0 0.0
  %4809 = vmatprep.subr.mxu0 0.0
  %4810 = vmatpush1.msra.mxu0 0.0
  %4811 = vmatprep.subr.mxu0 0.0
  %4812 = vmatpush1.msra.mxu0 0.0
  %4813 = vmatprep.subr.mxu0 0.0
  %4814 = vmatpush1.msra.mxu0 0.0
  %4815 = vmatprep.subr.mxu0 0.0
  %4816 = vmatpush1.msra.mxu0 0.0
  %4817 = vmatprep.subr.mxu0 0.0
  %4818 = vmatpush1.msra.mxu0 0.0
  %4819 = vmatprep.subr.mxu0 0.0
  %4820 = vmatpush1.msra.mxu0 0.0
  %4821 = vmatprep.subr.mxu0 0.0
  %4822 = vmatpush1.msra.mxu0 0.0
  %4823 = vmatprep.subr.mxu0 0.0
  %4824 = vmatpush1.msra.mxu0 0.0
  %4825 = vmatprep.subr.mxu0 0.0
  %4826 = vmatpush1.msra.mxu0 0.0
  %4827 = vmatprep.subr.mxu0 0.0
  %4828 = vmatpush1.msra.mxu0 0.0
  %4829 = vmatprep.subr.mxu0 0.0
  %4830 = vmatpush1.msra.mxu0 0.0
  %4831 = vmatprep.subr.mxu0 0.0
  %4832 = vmatpush1.msra.mxu0 0.0
  %4833 = vmatprep.subr.mxu0 0.0
  %4834 = vmatpush1.msra.mxu0 0.0
  %4835 = vmatprep.subr.mxu0 0.0
  %4836 = vmatpush1.msra.mxu0 0.0
  %4837 = vmatprep.subr.mxu0 0.0
  %4838 = vmatpush1.msra.mxu0 0.0
  %4839 = vmatprep.subr.mxu0 0.0
  %4840 = vmatpush1.msra.mxu0 0.0
  %4841 = vmatprep.subr.mxu0 0.0
  %4842 = vmatpush1.msra.mxu0 0.0
  %4843 = vmatprep.subr.mxu0 0.0
  %4844 = vmatpush1.msra.mxu0 0.0
  %4845 = vmatprep.subr.mxu0 0.0
  %4846 = vmatpush1.msra.mxu0 0.0
  %4847 = vmatprep.subr.mxu0 0.0
  %4848 = vmatpush1.msra.mxu0 0.0
  %4849 = vmatprep.subr.mxu0 0.0
  %4850 = vmatpush1.msra.mxu0 0.0
  %4851 = vmatprep.subr.mxu0 0.0
  %4852 = vmatpush1.msra.mxu0 0.0
  %4853 = vmatprep.mubr.f32.mxu0 0.0
  %4854 = vmatmul.mubr.f32.gmra.mrb[0].mxu0 %v4709
  %v4855 = vpop.f32.mrb[0].mxu0
  %v4856 = vadd.f32 %v4781, %v4855
  %v4857 = vpop.f32.mrb[0].mxu0
  %4858 = vmatprep.mubr.f32.mxu0 0.0
  %4859 = vmatmul.mubr.f32.gmra.mrb[0].mxu0 %v4712
  %v4860 = vpop.f32.mrb[0].mxu0
  %v4861 = vadd.f32 %v4786, %v4860
  %v4862 = vpop.f32.mrb[0].mxu0
  %4863 = vdwg.mxu0
  %v4864 = vsel %vm1765, %v4856, 0.0
  %4865 = vadd.xlane.f32.xlu0 %v4864
  %v4866 = vpop.xlane.xlu0 %4865
  %v4867 = vsel %vm1765, %v4861, 0.0
  %4868 = vadd.xlane.f32.xlu0 %v4867
  %v4869 = vpop.xlane.xlu0 %4868
  %v4870 = vmul.f32 %v4866, 0.125
  %v4871 = vmul.f32 %v4869, 0.125
  %v4872 = vsub.f32 %v4856, %v4870
  %v4873 = vsub.f32 %v4861, %v4871
  %v4874 = vmul.f32 %v4872, %v4872
  %v4875 = vmul.f32 %v4873, %v4873
  %v4876 = vsel %vm1765, %v4874, 0.0
  %4877 = vadd.xlane.f32.xlu0 %v4876
  %v4878 = vpop.xlane.xlu0 %4877
  %v4879 = vsel %vm1765, %v4875, 0.0
  %4880 = vadd.xlane.f32.xlu0 %v4879
  %v4881 = vpop.xlane.xlu0 %4880
  %v4882 = vmul.f32 %v4878, 0.125
  %v4883 = vmul.f32 %v4881, 0.125
  %v4884 = vld [vmem:[%s41] sm:$0xff]
  %v4885 = vld [vmem:[%s41 + $0x8] sm:$0xff]
  %v4886 = vadd.f32 %v4882, 1e-05
  %v4887 = vadd.f32 %v4883, 1e-05
  %v4888 = vrsqrt.pop %v4886
  %v4889 = vrsqrt.pop %v4887
  %v4890 = vmul.f32 %v4884, %v4888
  %v4891 = vmul.f32 %v4885, %v4889
  %4893 = vset.pattern.permute.xlu0 0
  %4894 = vperm.xlu0 %4893, %v4890
  %v4895 = vpop.permute.xlu0 %4894
  %4898 = vset.pattern.permute.xlu0 0
  %4899 = vperm.xlu0 %4898, %v4891
  %v4900 = vpop.permute.xlu0 %4899
  %v4902 = vmul.f32 %v4872, %v4895
  %v4903 = vmul.f32 %v4873, %v4900
  %v4904 = vld [vmem:[%s43] sm:$0xff]
  %v4905 = vld [vmem:[%s43 + $0x8] sm:$0xff]
  %4907 = vset.pattern.permute.xlu0 0
  %4908 = vperm.xlu0 %4907, %v4904
  %v4909 = vpop.permute.xlu0 %4908
  %4912 = vset.pattern.permute.xlu0 0
  %4913 = vperm.xlu0 %4912, %v4905
  %v4914 = vpop.permute.xlu0 %4913
  %v4916 = vadd.f32 %v4902, %v4909
  %v4917 = vadd.f32 %v4903, %v4914
  %v4918 = vmax.f32 %v4916, 0.0
  %v4919 = vmax.f32 %v4917, 0.0
  %4920 = vst.msk [vmem:[#allocation2 + $0x8] sm:$0xff] %vm1765, %v4918
  %4921 = vst.msk [vmem:[#allocation2 + $0x38] sm:$0xff] %vm1765, %v4919
  %v4922 = vld [vmem:[#allocation2] sm:$0xff]
  %v4923 = vld [vmem:[#allocation2 + $0x8] sm:$0xff]
  %v4924 = vld [vmem:[#allocation2 + $0x30] sm:$0xff]
  %v4925 = vld [vmem:[#allocation2 + $0x38] sm:$0xff]
  %v4926 = vld [vmem:[%s85] sm:$0x1]
  %v4927 = vlaneseq
  %v4928 = vshrl.u32 %v4927, 7
  %v4929 = vsub.s32 0, %v4928
  %v4930 = vrot.slane %v4926, %v4929
  %4932 = vrot.lane.b32.xlu0 %v4930, 125
  %v4933 = vpop.permute.xlu0 %4932
  %v4935 = vmul.f32 %v4922, %v4933
  %v4936 = vmul.f32 %v4923, %v4933
  %v4937 = vmul.f32 %v4924, %v4933
  %v4938 = vmul.f32 %v4925, %v4933
  %4943 = vrot.lane.b32.xlu0 %v4935, 3
  %v4944 = vpop.permute.xlu0 %4943
  %4945 = vrot.lane.b32.xlu0 %v4936, 3
  %v4946 = vpop.permute.xlu0 %4945
  %4947 = vrot.lane.b32.xlu0 %v4937, 3
  %v4948 = vpop.permute.xlu0 %4947
  %4949 = vrot.lane.b32.xlu0 %v4938, 3
  %v4950 = vpop.permute.xlu0 %4949
  %v4951 = vsel %vm2841, %v4944, %v4946
  %v4952 = vsel %vm2841, %v4948, %v4950
  %4955 = vst.msk [vmem:[#allocation3] sm:$0xff] %vm1765, %v4951
  %4956 = vst.msk [vmem:[#allocation3 + $0x20] sm:$0xff] %vm1765, %v4952
  %v4957 = vld [vmem:[#allocation2] sm:$0xff]
  %v4958 = vld [vmem:[#allocation2 + $0x8] sm:$0xff]
  %v4959 = vld [vmem:[#allocation2 + $0x30] sm:$0xff]
  %v4960 = vld [vmem:[#allocation2 + $0x38] sm:$0xff]
  %v4961 = vld [vmem:[%s85 + $0x1] sm:$0x1]
  %v4962 = vlaneseq
  %v4963 = vshrl.u32 %v4962, 7
  %v4964 = vsub.s32 0, %v4963
  %v4965 = vrot.slane %v4961, %v4964
  %4967 = vrot.lane.b32.xlu0 %v4965, 126
  %v4968 = vpop.permute.xlu0 %4967
  %v4970 = vmul.f32 %v4957, %v4968
  %v4971 = vmul.f32 %v4958, %v4968
  %v4972 = vmul.f32 %v4959, %v4968
  %v4973 = vmul.f32 %v4960, %v4968
  %4978 = vrot.lane.b32.xlu0 %v4970, 2
  %v4979 = vpop.permute.xlu0 %4978
  %4980 = vrot.lane.b32.xlu0 %v4971, 2
  %v4981 = vpop.permute.xlu0 %4980
  %4982 = vrot.lane.b32.xlu0 %v4972, 2
  %v4983 = vpop.permute.xlu0 %4982
  %4984 = vrot.lane.b32.xlu0 %v4973, 2
  %v4985 = vpop.permute.xlu0 %4984
  %v4986 = vsel %vm4375, %v4979, %v4981
  %v4987 = vsel %vm4375, %v4983, %v4985
  %4990 = vst.msk [vmem:[#allocation3 + $0x40] sm:$0xff] %vm1765, %v4986
  %4991 = vst.msk [vmem:[#allocation3 + $0x60] sm:$0xff] %vm1765, %v4987
  %v4992 = vld [vmem:[#allocation2] sm:$0xff]
  %v4993 = vld [vmem:[#allocation2 + $0x8] sm:$0xff]
  %v4994 = vld [vmem:[#allocation2 + $0x30] sm:$0xff]
  %v4995 = vld [vmem:[#allocation2 + $0x38] sm:$0xff]
  %v4996 = vld [vmem:[%s85 + $0x2] sm:$0x1]
  %v4997 = vlaneseq
  %v4998 = vshrl.u32 %v4997, 7
  %v4999 = vsub.s32 0, %v4998
  %v5000 = vrot.slane %v4996, %v4999
  %5002 = vrot.lane.b32.xlu0 %v5000, 127
  %v5003 = vpop.permute.xlu0 %5002
  %v5005 = vmul.f32 %v4992, %v5003
  %v5006 = vmul.f32 %v4993, %v5003
  %v5007 = vmul.f32 %v4994, %v5003
  %v5008 = vmul.f32 %v4995, %v5003
  %5013 = vrot.lane.b32.xlu0 %v5005, 1
  %v5014 = vpop.permute.xlu0 %5013
  %5015 = vrot.lane.b32.xlu0 %v5006, 1
  %v5016 = vpop.permute.xlu0 %5015
  %5017 = vrot.lane.b32.xlu0 %v5007, 1
  %v5018 = vpop.permute.xlu0 %5017
  %5019 = vrot.lane.b32.xlu0 %v5008, 1
  %v5020 = vpop.permute.xlu0 %5019
  %v5021 = vsel %vm337, %v5014, %v5016
  %v5022 = vsel %vm337, %v5018, %v5020
  %5025 = vst.msk [vmem:[#allocation3 + $0x80] sm:$0xff] %vm1765, %v5021
  %5026 = vst.msk [vmem:[#allocation3 + $0xa0] sm:$0xff] %vm1765, %v5022
  %v5027 = vld [vmem:[#allocation2] sm:$0xff]
  %v5028 = vld [vmem:[#allocation2 + $0x8] sm:$0xff]
  %v5029 = vld [vmem:[#allocation2 + $0x30] sm:$0xff]
  %v5030 = vld [vmem:[#allocation2 + $0x38] sm:$0xff]
  %v5031 = vld [vmem:[%s85 + $0x3] sm:$0x1]
  %v5032 = vlaneseq
  %v5033 = vshrl.u32 %v5032, 7
  %v5034 = vsub.s32 0, %v5033
  %v5035 = vrot.slane %v5031, %v5034
  %5037 = vrot.lane.b32.xlu0 %v5035, 127
  %v5038 = vpop.permute.xlu0 %5037
  %v5040 = vmul.f32 %v5027, %v5038
  %v5041 = vmul.f32 %v5028, %v5038
  %v5042 = vmul.f32 %v5029, %v5038
  %v5043 = vmul.f32 %v5030, %v5038
  %5048 = vrot.lane.b32.xlu0 %v5040, 1
  %v5049 = vpop.permute.xlu0 %5048
  %5050 = vrot.lane.b32.xlu0 %v5041, 1
  %v5051 = vpop.permute.xlu0 %5050
  %5052 = vrot.lane.b32.xlu0 %v5042, 1
  %v5053 = vpop.permute.xlu0 %5052
  %5054 = vrot.lane.b32.xlu0 %v5043, 1
  %v5055 = vpop.permute.xlu0 %5054
  %v5056 = vsel %vm337, %v5049, %v5051
  %v5057 = vsel %vm337, %v5053, %v5055
  %5060 = vst.msk [vmem:[#allocation3 + $0xc0] sm:$0xff] %vm1765, %v5056
  %5061 = vst.msk [vmem:[#allocation3 + $0xe0] sm:$0xff] %vm1765, %v5057
  %v5062 = vld [vmem:[#allocation2 + $0x8] sm:$0xff]
  %v5063 = vld [vmem:[#allocation2 + $0x38] sm:$0xff]
  %5064 = vst.msk [vmem:[#allocation3 + $0x100] sm:$0xff] %vm1765, %v5062
  %5065 = vst.msk [vmem:[#allocation3 + $0x120] sm:$0xff] %vm1765, %v5063
  %v5066 = vld [vmem:[#allocation2 + $0x8] sm:$0xff]
  %v5067 = vld [vmem:[#allocation2 + $0x38] sm:$0xff]
  %v5068 = vld [vmem:[%s85 + $0x4] sm:$0x1]
  %v5069 = vlaneseq
  %v5070 = vshrl.u32 %v5069, 7
  %v5071 = vsub.s32 0, %v5070
  %v5072 = vrot.slane %v5068, %v5071
  %5074 = vrot.lane.b32.xlu0 %v5072, 1
  %v5075 = vpop.permute.xlu0 %5074
  %v5077 = vmul.f32 %v5066, %v5075
  %v5078 = vmul.f32 %v5067, %v5075
  %5081 = vrot.lane.b32.xlu0 %v5077, 127
  %v5082 = vpop.permute.xlu0 %5081
  %5083 = vrot.lane.b32.xlu0 %v5078, 127
  %v5084 = vpop.permute.xlu0 %5083
  %5087 = vst.msk [vmem:[#allocation3 + $0x140] sm:$0xff] %vm1765, %v5082
  %5088 = vst.msk [vmem:[#allocation3 + $0x160] sm:$0xff] %vm1765, %v5084
  %v5089 = vld [vmem:[#allocation2 + $0x8] sm:$0xff]
  %v5090 = vld [vmem:[#allocation2 + $0x38] sm:$0xff]
  %v5091 = vld [vmem:[%s85 + $0x5] sm:$0x1]
  %v5092 = vlaneseq
  %v5093 = vshrl.u32 %v5092, 7
  %v5094 = vsub.s32 0, %v5093
  %v5095 = vrot.slane %v5091, %v5094
  %5097 = vrot.lane.b32.xlu0 %v5095, 1
  %v5098 = vpop.permute.xlu0 %5097
  %v5100 = vmul.f32 %v5089, %v5098
  %v5101 = vmul.f32 %v5090, %v5098
  %5104 = vrot.lane.b32.xlu0 %v5100, 127
  %v5105 = vpop.permute.xlu0 %5104
  %5106 = vrot.lane.b32.xlu0 %v5101, 127
  %v5107 = vpop.permute.xlu0 %5106
  %5110 = vst.msk [vmem:[#allocation3 + $0x180] sm:$0xff] %vm1765, %v5105
  %5111 = vst.msk [vmem:[#allocation3 + $0x1a0] sm:$0xff] %vm1765, %v5107
  %v5112 = vld [vmem:[#allocation2 + $0x8] sm:$0xff]
  %v5113 = vld [vmem:[#allocation2 + $0x38] sm:$0xff]
  %v5114 = vld [vmem:[%s85 + $0x6] sm:$0x1]
  %v5115 = vlaneseq
  %v5116 = vshrl.u32 %v5115, 7
  %v5117 = vsub.s32 0, %v5116
  %v5118 = vrot.slane %v5114, %v5117
  %5120 = vrot.lane.b32.xlu0 %v5118, 2
  %v5121 = vpop.permute.xlu0 %5120
  %v5123 = vmul.f32 %v5112, %v5121
  %v5124 = vmul.f32 %v5113, %v5121
  %5127 = vrot.lane.b32.xlu0 %v5123, 126
  %v5128 = vpop.permute.xlu0 %5127
  %5129 = vrot.lane.b32.xlu0 %v5124, 126
  %v5130 = vpop.permute.xlu0 %5129
  %5133 = vst.msk [vmem:[#allocation3 + $0x1c0] sm:$0xff] %vm1765, %v5128
  %5134 = vst.msk [vmem:[#allocation3 + $0x1e0] sm:$0xff] %vm1765, %v5130
  %v5135 = vld [vmem:[#allocation2 + $0x8] sm:$0xff]
  %v5136 = vld [vmem:[#allocation2 + $0x38] sm:$0xff]
  %v5137 = vld [vmem:[%s85 + $0x7] sm:$0x1]
  %v5138 = vlaneseq
  %v5139 = vshrl.u32 %v5138, 7
  %v5140 = vsub.s32 0, %v5139
  %v5141 = vrot.slane %v5137, %v5140
  %5143 = vrot.lane.b32.xlu0 %v5141, 3
  %v5144 = vpop.permute.xlu0 %5143
  %v5146 = vmul.f32 %v5135, %v5144
  %v5147 = vmul.f32 %v5136, %v5144
  %5150 = vrot.lane.b32.xlu0 %v5146, 125
  %v5151 = vpop.permute.xlu0 %5150
  %5152 = vrot.lane.b32.xlu0 %v5147, 125
  %v5153 = vpop.permute.xlu0 %5152
  %5156 = vst.msk [vmem:[#allocation3 + $0x200] sm:$0xff] %vm1765, %v5151
  %5157 = vst.msk [vmem:[#allocation3 + $0x220] sm:$0xff] %vm1765, %v5153
  %v5158 = vld [vmem:[%s45] sm:$0xff]
  %v5159 = vld [vmem:[%s45 + $0x8] sm:$0xff]
  %v5160 = vld [vmem:[%s45 + $0x10] sm:$0xff]
  %v5161 = vld [vmem:[%s45 + $0x18] sm:$0xff]
  %v5162 = vld [vmem:[#allocation3] sm:$0xff]
  %v5163 = vld [vmem:[#allocation3 + $0x20] sm:$0xff]
  %v5164 = vld [vmem:[#allocation3 + $0x40] sm:$0xff]
  %v5165 = vld [vmem:[#allocation3 + $0x60] sm:$0xff]
  %v5166 = vld [vmem:[#allocation3 + $0x80] sm:$0xff]
  %v5167 = vld [vmem:[#allocation3 + $0xa0] sm:$0xff]
  %v5168 = vld [vmem:[#allocation3 + $0xc0] sm:$0xff]
  %v5169 = vld [vmem:[#allocation3 + $0xe0] sm:$0xff]
  %v5170 = vld [vmem:[#allocation3 + $0x100] sm:$0xff]
  %v5171 = vld [vmem:[#allocation3 + $0x120] sm:$0xff]
  %v5172 = vld [vmem:[#allocation3 + $0x140] sm:$0xff]
  %v5173 = vld [vmem:[#allocation3 + $0x160] sm:$0xff]
  %v5174 = vld [vmem:[#allocation3 + $0x180] sm:$0xff]
  %v5175 = vld [vmem:[#allocation3 + $0x1a0] sm:$0xff]
  %v5176 = vld [vmem:[#allocation3 + $0x1c0] sm:$0xff]
  %v5177 = vld [vmem:[#allocation3 + $0x1e0] sm:$0xff]
  %v5178 = vld [vmem:[#allocation3 + $0x200] sm:$0xff]
  %v5179 = vld [vmem:[#allocation3 + $0x220] sm:$0xff]
  %v5181 = vsel %vm291, %v5159, 0
  %v5184 = vsel %vm291, %v5161, 0
  %5186 = vmatprep.subr.mxu0 0.0
  %5187 = vmatpush1.msra.mxu0 %v5162
  %5188 = vmatprep.subr.mxu0 0.0
  %5189 = vmatpush1.msra.mxu0 %v5163
  %5190 = vmatprep.subr.mxu0 0.0
  %5191 = vmatpush1.msra.mxu0 %v5164
  %5192 = vmatprep.subr.mxu0 0.0
  %5193 = vmatpush1.msra.mxu0 %v5165
  %5194 = vmatprep.subr.mxu0 0.0
  %5195 = vmatpush1.msra.mxu0 %v5166
  %5196 = vmatprep.subr.mxu0 0.0
  %5197 = vmatpush1.msra.mxu0 %v5167
  %5198 = vmatprep.subr.mxu0 0.0
  %5199 = vmatpush1.msra.mxu0 %v5168
  %5200 = vmatprep.subr.mxu0 0.0
  %5201 = vmatpush1.msra.mxu0 %v5169
  %5202 = vmatprep.subr.mxu0 0.0
  %5203 = vmatpush1.msra.mxu0 %v5170
  %5204 = vmatprep.subr.mxu0 0.0
  %5205 = vmatpush1.msra.mxu0 %v5171
  %5206 = vmatprep.subr.mxu0 0.0
  %5207 = vmatpush1.msra.mxu0 %v5172
  %5208 = vmatprep.subr.mxu0 0.0
  %5209 = vmatpush1.msra.mxu0 %v5173
  %5210 = vmatprep.subr.mxu0 0.0
  %5211 = vmatpush1.msra.mxu0 %v5174
  %5212 = vmatprep.subr.mxu0 0.0
  %5213 = vmatpush1.msra.mxu0 %v5175
  %5214 = vmatprep.subr.mxu0 0.0
  %5215 = vmatpush1.msra.mxu0 %v5176
  %5216 = vmatprep.subr.mxu0 0.0
  %5217 = vmatpush1.msra.mxu0 %v5177
  %5218 = vmatprep.subr.mxu0 0.0
  %5219 = vmatpush1.msra.mxu0 %v5178
  %5220 = vmatprep.subr.mxu0 0.0
  %5221 = vmatpush1.msra.mxu0 %v5179
  %5222 = vmatprep.subr.mxu0 0.0
  %5223 = vmatpush1.msra.mxu0 0.0
  %5224 = vmatprep.subr.mxu0 0.0
  %5225 = vmatpush1.msra.mxu0 0.0
  %5226 = vmatprep.subr.mxu0 0.0
  %5227 = vmatpush1.msra.mxu0 0.0
  %5228 = vmatprep.subr.mxu0 0.0
  %5229 = vmatpush1.msra.mxu0 0.0
  %5230 = vmatprep.subr.mxu0 0.0
  %5231 = vmatpush1.msra.mxu0 0.0
  %5232 = vmatprep.subr.mxu0 0.0
  %5233 = vmatpush1.msra.mxu0 0.0
  %5234 = vmatprep.subr.mxu0 0.0
  %5235 = vmatpush1.msra.mxu0 0.0
  %5236 = vmatprep.subr.mxu0 0.0
  %5237 = vmatpush1.msra.mxu0 0.0
  %5238 = vmatprep.subr.mxu0 0.0
  %5239 = vmatpush1.msra.mxu0 0.0
  %5240 = vmatprep.subr.mxu0 0.0
  %5241 = vmatpush1.msra.mxu0 0.0
  %5242 = vmatprep.subr.mxu0 0.0
  %5243 = vmatpush1.msra.mxu0 0.0
  %5244 = vmatprep.subr.mxu0 0.0
  %5245 = vmatpush1.msra.mxu0 0.0
  %5246 = vmatprep.subr.mxu0 0.0
  %5247 = vmatpush1.msra.mxu0 0.0
  %5248 = vmatprep.subr.mxu0 0.0
  %5249 = vmatpush1.msra.mxu0 0.0
  %5250 = vmatprep.mubr.f32.mxu0 %v5181
  %5251 = vmatmul.mubr.f32.gmra.mrb[0].mxu0 %v5158
  %v5252 = vpop.f32.mrb[0].mxu0
  %v5253 = vadd.f32 0.0, %v5252
  %v5254 = vpop.f32.mrb[0].mxu0
  %5255 = vmatprep.mubr.f32.mxu0 %v5184
  %5256 = vmatmul.mubr.f32.gmra.mrb[0].mxu0 %v5160
  %v5257 = vpop.f32.mrb[0].mxu0
  %v5258 = vadd.f32 0.0, %v5257
  %v5259 = vpop.f32.mrb[0].mxu0
  %5260 = vdwg.mxu0
  %v5261 = vsel %vm1765, %v5253, 0.0
  %5262 = vadd.xlane.f32.xlu0 %v5261
  %v5263 = vpop.xlane.xlu0 %5262
  %v5264 = vsel %vm1765, %v5258, 0.0
  %5265 = vadd.xlane.f32.xlu0 %v5264
  %v5266 = vpop.xlane.xlu0 %5265
  %v5267 = vmul.f32 %v5263, 0.125
  %v5268 = vmul.f32 %v5266, 0.125
  %v5269 = vsub.f32 %v5253, %v5267
  %v5270 = vsub.f32 %v5258, %v5268
  %v5271 = vmul.f32 %v5269, %v5269
  %v5272 = vmul.f32 %v5270, %v5270
  %v5273 = vsel %vm1765, %v5271, 0.0
  %5274 = vadd.xlane.f32.xlu0 %v5273
  %v5275 = vpop.xlane.xlu0 %5274
  %v5276 = vsel %vm1765, %v5272, 0.0
  %5277 = vadd.xlane.f32.xlu0 %v5276
  %v5278 = vpop.xlane.xlu0 %5277
  %v5279 = vmul.f32 %v5275, 0.125
  %v5280 = vmul.f32 %v5278, 0.125
  %v5281 = vld [vmem:[%s47] sm:$0xff]
  %v5282 = vld [vmem:[%s47 + $0x8] sm:$0xff]
  %v5283 = vadd.f32 %v5279, 1e-05
  %v5284 = vadd.f32 %v5280, 1e-05
  %v5285 = vrsqrt.pop %v5283
  %v5286 = vrsqrt.pop %v5284
  %v5287 = vmul.f32 %v5281, %v5285
  %v5288 = vmul.f32 %v5282, %v5286
  %5290 = vset.pattern.permute.xlu0 0
  %5291 = vperm.xlu0 %5290, %v5287
  %v5292 = vpop.permute.xlu0 %5291
  %5295 = vset.pattern.permute.xlu0 0
  %5296 = vperm.xlu0 %5295, %v5288
  %v5297 = vpop.permute.xlu0 %5296
  %v5299 = vmul.f32 %v5269, %v5292
  %v5300 = vmul.f32 %v5270, %v5297
  %v5301 = vld [vmem:[%s49] sm:$0xff]
  %v5302 = vld [vmem:[%s49 + $0x8] sm:$0xff]
  %5304 = vset.pattern.permute.xlu0 0
  %5305 = vperm.xlu0 %5304, %v5301
  %v5306 = vpop.permute.xlu0 %5305
  %5309 = vset.pattern.permute.xlu0 0
  %5310 = vperm.xlu0 %5309, %v5302
  %v5311 = vpop.permute.xlu0 %5310
  %v5313 = vadd.f32 %v5299, %v5306
  %v5314 = vadd.f32 %v5300, %v5311
  %v5315 = vmax.f32 %v5313, 0.0
  %v5316 = vmax.f32 %v5314, 0.0
  %v5317 = vld [vmem:[%s93] sm:$0xf]
  %v5319 = vsel %vm2805, %v5315, 0
  %v5322 = vsel %vm2805, %v5316, 0
  %vm5324 = vcmask 1043456
  %v5326 = vsel %vm5324, %v5317, 0
  %5328 = vmatprep.subr.mxu0 0.0
  %5329 = vmatpush1.msra.mxu0 %v5326
  %5330 = vmatprep.subr.mxu0 0.0
  %5331 = vmatpush1.msra.mxu0 0.0
  %5332 = vmatprep.subr.mxu0 0.0
  %5333 = vmatpush1.msra.mxu0 0.0
  %5334 = vmatprep.subr.mxu0 0.0
  %5335 = vmatpush1.msra.mxu0 0.0
  %5336 = vmatprep.subr.mxu0 0.0
  %5337 = vmatpush1.msra.mxu0 0.0
  %5338 = vmatprep.subr.mxu0 0.0
  %5339 = vmatpush1.msra.mxu0 0.0
  %5340 = vmatprep.subr.mxu0 0.0
  %5341 = vmatpush1.msra.mxu0 0.0
  %5342 = vmatprep.subr.mxu0 0.0
  %5343 = vmatpush1.msra.mxu0 0.0
  %5344 = vmatprep.subr.mxu0 0.0
  %5345 = vmatpush1.msra.mxu0 0.0
  %5346 = vmatprep.subr.mxu0 0.0
  %5347 = vmatpush1.msra.mxu0 0.0
  %5348 = vmatprep.subr.mxu0 0.0
  %5349 = vmatpush1.msra.mxu0 0.0
  %5350 = vmatprep.subr.mxu0 0.0
  %5351 = vmatpush1.msra.mxu0 0.0
  %5352 = vmatprep.subr.mxu0 0.0
  %5353 = vmatpush1.msra.mxu0 0.0
  %5354 = vmatprep.subr.mxu0 0.0
  %5355 = vmatpush1.msra.mxu0 0.0
  %5356 = vmatprep.subr.mxu0 0.0
  %5357 = vmatpush1.msra.mxu0 0.0
  %5358 = vmatprep.subr.mxu0 0.0
  %5359 = vmatpush1.msra.mxu0 0.0
  %5360 = vmatprep.subr.mxu0 0.0
  %5361 = vmatpush1.msra.mxu0 0.0
  %5362 = vmatprep.subr.mxu0 0.0
  %5363 = vmatpush1.msra.mxu0 0.0
  %5364 = vmatprep.subr.mxu0 0.0
  %5365 = vmatpush1.msra.mxu0 0.0
  %5366 = vmatprep.subr.mxu0 0.0
  %5367 = vmatpush1.msra.mxu0 0.0
  %5368 = vmatprep.subr.mxu0 0.0
  %5369 = vmatpush1.msra.mxu0 0.0
  %5370 = vmatprep.subr.mxu0 0.0
  %5371 = vmatpush1.msra.mxu0 0.0
  %5372 = vmatprep.subr.mxu0 0.0
  %5373 = vmatpush1.msra.mxu0 0.0
  %5374 = vmatprep.subr.mxu0 0.0
  %5375 = vmatpush1.msra.mxu0 0.0
  %5376 = vmatprep.subr.mxu0 0.0
  %5377 = vmatpush1.msra.mxu0 0.0
  %5378 = vmatprep.subr.mxu0 0.0
  %5379 = vmatpush1.msra.mxu0 0.0
  %5380 = vmatprep.subr.mxu0 0.0
  %5381 = vmatpush1.msra.mxu0 0.0
  %5382 = vmatprep.subr.mxu0 0.0
  %5383 = vmatpush1.msra.mxu0 0.0
  %5384 = vmatprep.subr.mxu0 0.0
  %5385 = vmatpush1.msra.mxu0 0.0
  %5386 = vmatprep.subr.mxu0 0.0
  %5387 = vmatpush1.msra.mxu0 0.0
  %5388 = vmatprep.subr.mxu0 0.0
  %5389 = vmatpush1.msra.mxu0 0.0
  %5390 = vmatprep.subr.mxu0 0.0
  %5391 = vmatpush1.msra.mxu0 0.0
  %5392 = vmatprep.mubr.f32.mxu0 0.0
  %5393 = vmatmul.mubr.f32.gmra.mrb[0].mxu0 %v5319
  %v5394 = vpop.f32.mrb[0].mxu0
  %v5395 = vadd.f32 0.0, %v5394
  %v5396 = vpop.f32.mrb[0].mxu0
  %5397 = vmatprep.mubr.f32.mxu0 0.0
  %5398 = vmatmul.mubr.f32.gmra.mrb[0].mxu0 %v5322
  %v5399 = vpop.f32.mrb[0].mxu0
  %v5400 = vadd.f32 0.0, %v5399
  %v5401 = vpop.f32.mrb[0].mxu0
  %5402 = vdwg.mxu0
  %5403 = vst.msk [vmem:[#allocation3] sm:$0xff] %vm291, %v5395
  %5404 = vst.msk [vmem:[#allocation3 + $0x20] sm:$0xff] %vm291, %v5400
  %5405 = vrot.lane.b32.xlu0 %v5315, 124
  %v5406 = vpop.permute.xlu0 %5405
  %5407 = vrot.lane.b32.xlu0 %v5316, 124
  %v5408 = vpop.permute.xlu0 %5407
  %v5409 = vsel %vm2805, %v5406, 0
  %v5411 = vsel %vm2805, %v5408, 0
  %5413 = vmatprep.subr.mxu0 0.0
  %5414 = vmatpush1.msra.mxu0 %v5326
  %5415 = vmatprep.subr.mxu0 0.0
  %5416 = vmatpush1.msra.mxu0 0.0
  %5417 = vmatprep.subr.mxu0 0.0
  %5418 = vmatpush1.msra.mxu0 0.0
  %5419 = vmatprep.subr.mxu0 0.0
  %5420 = vmatpush1.msra.mxu0 0.0
  %5421 = vmatprep.subr.mxu0 0.0
  %5422 = vmatpush1.msra.mxu0 0.0
  %5423 = vmatprep.subr.mxu0 0.0
  %5424 = vmatpush1.msra.mxu0 0.0
  %5425 = vmatprep.subr.mxu0 0.0
  %5426 = vmatpush1.msra.mxu0 0.0
  %5427 = vmatprep.subr.mxu0 0.0
  %5428 = vmatpush1.msra.mxu0 0.0
  %5429 = vmatprep.subr.mxu0 0.0
  %5430 = vmatpush1.msra.mxu0 0.0
  %5431 = vmatprep.subr.mxu0 0.0
  %5432 = vmatpush1.msra.mxu0 0.0
  %5433 = vmatprep.subr.mxu0 0.0
  %5434 = vmatpush1.msra.mxu0 0.0
  %5435 = vmatprep.subr.mxu0 0.0
  %5436 = vmatpush1.msra.mxu0 0.0
  %5437 = vmatprep.subr.mxu0 0.0
  %5438 = vmatpush1.msra.mxu0 0.0
  %5439 = vmatprep.subr.mxu0 0.0
  %5440 = vmatpush1.msra.mxu0 0.0
  %5441 = vmatprep.subr.mxu0 0.0
  %5442 = vmatpush1.msra.mxu0 0.0
  %5443 = vmatprep.subr.mxu0 0.0
  %5444 = vmatpush1.msra.mxu0 0.0
  %5445 = vmatprep.subr.mxu0 0.0
  %5446 = vmatpush1.msra.mxu0 0.0
  %5447 = vmatprep.subr.mxu0 0.0
  %5448 = vmatpush1.msra.mxu0 0.0
  %5449 = vmatprep.subr.mxu0 0.0
  %5450 = vmatpush1.msra.mxu0 0.0
  %5451 = vmatprep.subr.mxu0 0.0
  %5452 = vmatpush1.msra.mxu0 0.0
  %5453 = vmatprep.subr.mxu0 0.0
  %5454 = vmatpush1.msra.mxu0 0.0
  %5455 = vmatprep.subr.mxu0 0.0
  %5456 = vmatpush1.msra.mxu0 0.0
  %5457 = vmatprep.subr.mxu0 0.0
  %5458 = vmatpush1.msra.mxu0 0.0
  %5459 = vmatprep.subr.mxu0 0.0
  %5460 = vmatpush1.msra.mxu0 0.0
  %5461 = vmatprep.subr.mxu0 0.0
  %5462 = vmatpush1.msra.mxu0 0.0
  %5463 = vmatprep.subr.mxu0 0.0
  %5464 = vmatpush1.msra.mxu0 0.0
  %5465 = vmatprep.subr.mxu0 0.0
  %5466 = vmatpush1.msra.mxu0 0.0
  %5467 = vmatprep.subr.mxu0 0.0
  %5468 = vmatpush1.msra.mxu0 0.0
  %5469 = vmatprep.subr.mxu0 0.0
  %5470 = vmatpush1.msra.mxu0 0.0
  %5471 = vmatprep.subr.mxu0 0.0
  %5472 = vmatpush1.msra.mxu0 0.0
  %5473 = vmatprep.subr.mxu0 0.0
  %5474 = vmatpush1.msra.mxu0 0.0
  %5475 = vmatprep.subr.mxu0 0.0
  %5476 = vmatpush1.msra.mxu0 0.0
  %5477 = vmatprep.mubr.f32.mxu0 0.0
  %5478 = vmatmul.mubr.f32.gmra.mrb[0].mxu0 %v5409
  %v5479 = vpop.f32.mrb[0].mxu0
  %v5480 = vadd.f32 0.0, %v5479
  %v5481 = vpop.f32.mrb[0].mxu0
  %5482 = vmatprep.mubr.f32.mxu0 0.0
  %5483 = vmatmul.mubr.f32.gmra.mrb[0].mxu0 %v5411
  %v5484 = vpop.f32.mrb[0].mxu0
  %v5485 = vadd.f32 0.0, %v5484
  %v5486 = vpop.f32.mrb[0].mxu0
  %5487 = vdwg.mxu0
  %5490 = vrot.lane.b32.xlu0 %v5480, 16
  %v5491 = vpop.permute.xlu0 %5490
  %5492 = vrot.lane.b32.xlu0 %v5485, 16
  %v5493 = vpop.permute.xlu0 %5492
  %5496 = vst.msk [vmem:[#allocation3] sm:$0xff] %vm2730, %v5491
  %5497 = vst.msk [vmem:[#allocation3 + $0x20] sm:$0xff] %vm2730, %v5493
  %v5498 = vld [vmem:[#allocation3] sm:$0xff]
  %v5499 = vld [vmem:[#allocation3 + $0x20] sm:$0xff]
  %5500 = vst.msk [vmem:[%s105] sm:$0xff] %vm2735, %v5498
  %5501 = vst.msk [vmem:[%s105 + $0x8] sm:$0xff] %vm2735, %v5499
  %5502 = vst.msk [vmem:[#allocation2 + $0x8] sm:$0xff] %vm2735, %v5498
  %5503 = vst.msk [vmem:[#allocation2 + $0x38] sm:$0xff] %vm2735, %v5499
  %v5504 = vld [vmem:[#allocation2] sm:$0xff]
  %v5505 = vld [vmem:[#allocation2 + $0x8] sm:$0xff]
  %v5506 = vld [vmem:[#allocation2 + $0x30] sm:$0xff]
  %v5507 = vld [vmem:[#allocation2 + $0x38] sm:$0xff]
  %v5508 = vld [vmem:[%s83] sm:$0x1]
  %v5509 = vlaneseq
  %v5510 = vshrl.u32 %v5509, 7
  %v5511 = vsub.s32 0, %v5510
  %v5512 = vrot.slane %v5508, %v5511
  %5514 = vrot.lane.b32.xlu0 %v5512, 123
  %v5515 = vpop.permute.xlu0 %5514
  %v5517 = vmul.f32 %v5504, %v5515
  %v5518 = vmul.f32 %v5505, %v5515
  %v5519 = vmul.f32 %v5506, %v5515
  %v5520 = vmul.f32 %v5507, %v5515
  %5525 = vrot.lane.b32.xlu0 %v5517, 5
  %v5526 = vpop.permute.xlu0 %5525
  %5527 = vrot.lane.b32.xlu0 %v5518, 5
  %v5528 = vpop.permute.xlu0 %5527
  %5529 = vrot.lane.b32.xlu0 %v5519, 5
  %v5530 = vpop.permute.xlu0 %5529
  %5531 = vrot.lane.b32.xlu0 %v5520, 5
  %v5532 = vpop.permute.xlu0 %5531
  %v5533 = vsel %vm2769, %v5526, %v5528
  %v5534 = vsel %vm2769, %v5530, %v5532
  %5537 = vst.msk [vmem:[#allocation3] sm:$0xff] %vm2735, %v5533
  %5538 = vst.msk [vmem:[#allocation3 + $0x20] sm:$0xff] %vm2735, %v5534
  %v5539 = vld [vmem:[#allocation2] sm:$0xff]
  %v5540 = vld [vmem:[#allocation2 + $0x8] sm:$0xff]
  %v5541 = vld [vmem:[#allocation2 + $0x30] sm:$0xff]
  %v5542 = vld [vmem:[#allocation2 + $0x38] sm:$0xff]
  %v5543 = vld [vmem:[%s83 + $0x1] sm:$0x1]
  %v5544 = vlaneseq
  %v5545 = vshrl.u32 %v5544, 7
  %v5546 = vsub.s32 0, %v5545
  %v5547 = vrot.slane %v5543, %v5546
  %5549 = vrot.lane.b32.xlu0 %v5547, 124
  %v5550 = vpop.permute.xlu0 %5549
  %v5552 = vmul.f32 %v5539, %v5550
  %v5553 = vmul.f32 %v5540, %v5550
  %v5554 = vmul.f32 %v5541, %v5550
  %v5555 = vmul.f32 %v5542, %v5550
  %5560 = vrot.lane.b32.xlu0 %v5552, 4
  %v5561 = vpop.permute.xlu0 %5560
  %5562 = vrot.lane.b32.xlu0 %v5553, 4
  %v5563 = vpop.permute.xlu0 %5562
  %5564 = vrot.lane.b32.xlu0 %v5554, 4
  %v5565 = vpop.permute.xlu0 %5564
  %5566 = vrot.lane.b32.xlu0 %v5555, 4
  %v5567 = vpop.permute.xlu0 %5566
  %v5568 = vsel %vm2805, %v5561, %v5563
  %v5569 = vsel %vm2805, %v5565, %v5567
  %5572 = vst.msk [vmem:[#allocation3 + $0x40] sm:$0xff] %vm2735, %v5568
  %5573 = vst.msk [vmem:[#allocation3 + $0x60] sm:$0xff] %vm2735, %v5569
  %v5574 = vld [vmem:[#allocation2] sm:$0xff]
  %v5575 = vld [vmem:[#allocation2 + $0x8] sm:$0xff]
  %v5576 = vld [vmem:[#allocation2 + $0x30] sm:$0xff]
  %v5577 = vld [vmem:[#allocation2 + $0x38] sm:$0xff]
  %v5578 = vld [vmem:[%s83 + $0x2] sm:$0x1]
  %v5579 = vlaneseq
  %v5580 = vshrl.u32 %v5579, 7
  %v5581 = vsub.s32 0, %v5580
  %v5582 = vrot.slane %v5578, %v5581
  %5584 = vrot.lane.b32.xlu0 %v5582, 125
  %v5585 = vpop.permute.xlu0 %5584
  %v5587 = vmul.f32 %v5574, %v5585
  %v5588 = vmul.f32 %v5575, %v5585
  %v5589 = vmul.f32 %v5576, %v5585
  %v5590 = vmul.f32 %v5577, %v5585
  %5595 = vrot.lane.b32.xlu0 %v5587, 3
  %v5596 = vpop.permute.xlu0 %5595
  %5597 = vrot.lane.b32.xlu0 %v5588, 3
  %v5598 = vpop.permute.xlu0 %5597
  %5599 = vrot.lane.b32.xlu0 %v5589, 3
  %v5600 = vpop.permute.xlu0 %5599
  %5601 = vrot.lane.b32.xlu0 %v5590, 3
  %v5602 = vpop.permute.xlu0 %5601
  %v5603 = vsel %vm2841, %v5596, %v5598
  %v5604 = vsel %vm2841, %v5600, %v5602
  %5607 = vst.msk [vmem:[#allocation3 + $0x80] sm:$0xff] %vm2735, %v5603
  %5608 = vst.msk [vmem:[#allocation3 + $0xa0] sm:$0xff] %vm2735, %v5604
  %v5609 = vld [vmem:[#allocation2] sm:$0xff]
  %v5610 = vld [vmem:[#allocation2 + $0x8] sm:$0xff]
  %v5611 = vld [vmem:[#allocation2 + $0x30] sm:$0xff]
  %v5612 = vld [vmem:[#allocation2 + $0x38] sm:$0xff]
  %v5613 = vld [vmem:[%s83 + $0x3] sm:$0x1]
  %v5614 = vlaneseq
  %v5615 = vshrl.u32 %v5614, 7
  %v5616 = vsub.s32 0, %v5615
  %v5617 = vrot.slane %v5613, %v5616
  %5619 = vrot.lane.b32.xlu0 %v5617, 127
  %v5620 = vpop.permute.xlu0 %5619
  %v5622 = vmul.f32 %v5609, %v5620
  %v5623 = vmul.f32 %v5610, %v5620
  %v5624 = vmul.f32 %v5611, %v5620
  %v5625 = vmul.f32 %v5612, %v5620
  %5630 = vrot.lane.b32.xlu0 %v5622, 1
  %v5631 = vpop.permute.xlu0 %5630
  %5632 = vrot.lane.b32.xlu0 %v5623, 1
  %v5633 = vpop.permute.xlu0 %5632
  %5634 = vrot.lane.b32.xlu0 %v5624, 1
  %v5635 = vpop.permute.xlu0 %5634
  %5636 = vrot.lane.b32.xlu0 %v5625, 1
  %v5637 = vpop.permute.xlu0 %5636
  %v5638 = vsel %vm337, %v5631, %v5633
  %v5639 = vsel %vm337, %v5635, %v5637
  %5642 = vst.msk [vmem:[#allocation3 + $0xc0] sm:$0xff] %vm2735, %v5638
  %5643 = vst.msk [vmem:[#allocation3 + $0xe0] sm:$0xff] %vm2735, %v5639
  %v5644 = vld [vmem:[#allocation2 + $0x8] sm:$0xff]
  %v5645 = vld [vmem:[#allocation2 + $0x38] sm:$0xff]
  %5646 = vst.msk [vmem:[#allocation3 + $0x100] sm:$0xff] %vm2735, %v5644
  %5647 = vst.msk [vmem:[#allocation3 + $0x120] sm:$0xff] %vm2735, %v5645
  %v5648 = vld [vmem:[#allocation2 + $0x8] sm:$0xff]
  %v5649 = vld [vmem:[#allocation2 + $0x38] sm:$0xff]
  %v5650 = vld [vmem:[%s83 + $0x4] sm:$0x1]
  %v5651 = vlaneseq
  %v5652 = vshrl.u32 %v5651, 7
  %v5653 = vsub.s32 0, %v5652
  %v5654 = vrot.slane %v5650, %v5653
  %5656 = vrot.lane.b32.xlu0 %v5654, 1
  %v5657 = vpop.permute.xlu0 %5656
  %v5659 = vmul.f32 %v5648, %v5657
  %v5660 = vmul.f32 %v5649, %v5657
  %5663 = vrot.lane.b32.xlu0 %v5659, 127
  %v5664 = vpop.permute.xlu0 %5663
  %5665 = vrot.lane.b32.xlu0 %v5660, 127
  %v5666 = vpop.permute.xlu0 %5665
  %5669 = vst.msk [vmem:[#allocation3 + $0x140] sm:$0xff] %vm2735, %v5664
  %5670 = vst.msk [vmem:[#allocation3 + $0x160] sm:$0xff] %vm2735, %v5666
  %v5671 = vld [vmem:[#allocation2 + $0x8] sm:$0xff]
  %v5672 = vld [vmem:[#allocation2 + $0x38] sm:$0xff]
  %v5673 = vld [vmem:[%s83 + $0x5] sm:$0x1]
  %v5674 = vlaneseq
  %v5675 = vshrl.u32 %v5674, 7
  %v5676 = vsub.s32 0, %v5675
  %v5677 = vrot.slane %v5673, %v5676
  %5679 = vrot.lane.b32.xlu0 %v5677, 3
  %v5680 = vpop.permute.xlu0 %5679
  %v5682 = vmul.f32 %v5671, %v5680
  %v5683 = vmul.f32 %v5672, %v5680
  %5686 = vrot.lane.b32.xlu0 %v5682, 125
  %v5687 = vpop.permute.xlu0 %5686
  %5688 = vrot.lane.b32.xlu0 %v5683, 125
  %v5689 = vpop.permute.xlu0 %5688
  %5692 = vst.msk [vmem:[#allocation3 + $0x180] sm:$0xff] %vm2735, %v5687
  %5693 = vst.msk [vmem:[#allocation3 + $0x1a0] sm:$0xff] %vm2735, %v5689
  %v5694 = vld [vmem:[#allocation2 + $0x8] sm:$0xff]
  %v5695 = vld [vmem:[#allocation2 + $0x38] sm:$0xff]
  %v5696 = vld [vmem:[%s83 + $0x6] sm:$0x1]
  %v5697 = vlaneseq
  %v5698 = vshrl.u32 %v5697, 7
  %v5699 = vsub.s32 0, %v5698
  %v5700 = vrot.slane %v5696, %v5699
  %5702 = vrot.lane.b32.xlu0 %v5700, 4
  %v5703 = vpop.permute.xlu0 %5702
  %v5705 = vmul.f32 %v5694, %v5703
  %v5706 = vmul.f32 %v5695, %v5703
  %5709 = vrot.lane.b32.xlu0 %v5705, 124
  %v5710 = vpop.permute.xlu0 %5709
  %5711 = vrot.lane.b32.xlu0 %v5706, 124
  %v5712 = vpop.permute.xlu0 %5711
  %5715 = vst.msk [vmem:[#allocation3 + $0x1c0] sm:$0xff] %vm2735, %v5710
  %5716 = vst.msk [vmem:[#allocation3 + $0x1e0] sm:$0xff] %vm2735, %v5712
  %v5717 = vld [vmem:[#allocation2 + $0x8] sm:$0xff]
  %v5718 = vld [vmem:[#allocation2 + $0x38] sm:$0xff]
  %v5719 = vld [vmem:[%s83 + $0x7] sm:$0x1]
  %v5720 = vlaneseq
  %v5721 = vshrl.u32 %v5720, 7
  %v5722 = vsub.s32 0, %v5721
  %v5723 = vrot.slane %v5719, %v5722
  %5725 = vrot.lane.b32.xlu0 %v5723, 5
  %v5726 = vpop.permute.xlu0 %5725
  %v5728 = vmul.f32 %v5717, %v5726
  %v5729 = vmul.f32 %v5718, %v5726
  %5732 = vrot.lane.b32.xlu0 %v5728, 123
  %v5733 = vpop.permute.xlu0 %5732
  %5734 = vrot.lane.b32.xlu0 %v5729, 123
  %v5735 = vpop.permute.xlu0 %5734
  %5738 = vst.msk [vmem:[#allocation3 + $0x200] sm:$0xff] %vm2735, %v5733
  %5739 = vst.msk [vmem:[#allocation3 + $0x220] sm:$0xff] %vm2735, %v5735
  %v5740 = vld [vmem:[%s51] sm:$0xff]
  %v5741 = vld [vmem:[%s51 + $0x8] sm:$0xff]
  %v5742 = vld [vmem:[#allocation3] sm:$0xff]
  %v5743 = vld [vmem:[#allocation3 + $0x20] sm:$0xff]
  %v5744 = vld [vmem:[#allocation3 + $0x40] sm:$0xff]
  %v5745 = vld [vmem:[#allocation3 + $0x60] sm:$0xff]
  %v5746 = vld [vmem:[#allocation3 + $0x80] sm:$0xff]
  %v5747 = vld [vmem:[#allocation3 + $0xa0] sm:$0xff]
  %v5748 = vld [vmem:[#allocation3 + $0xc0] sm:$0xff]
  %v5749 = vld [vmem:[#allocation3 + $0xe0] sm:$0xff]
  %v5750 = vld [vmem:[#allocation3 + $0x100] sm:$0xff]
  %v5751 = vld [vmem:[#allocation3 + $0x120] sm:$0xff]
  %v5752 = vld [vmem:[#allocation3 + $0x140] sm:$0xff]
  %v5753 = vld [vmem:[#allocation3 + $0x160] sm:$0xff]
  %v5754 = vld [vmem:[#allocation3 + $0x180] sm:$0xff]
  %v5755 = vld [vmem:[#allocation3 + $0x1a0] sm:$0xff]
  %v5756 = vld [vmem:[#allocation3 + $0x1c0] sm:$0xff]
  %v5757 = vld [vmem:[#allocation3 + $0x1e0] sm:$0xff]
  %v5758 = vld [vmem:[#allocation3 + $0x200] sm:$0xff]
  %v5759 = vld [vmem:[#allocation3 + $0x220] sm:$0xff]
  %v5761 = vsel %vm291, %v5741, 0
  %5763 = vmatprep.subr.mxu0 0.0
  %5764 = vmatpush1.msra.mxu0 %v5742
  %5765 = vmatprep.subr.mxu0 0.0
  %5766 = vmatpush1.msra.mxu0 %v5743
  %5767 = vmatprep.subr.mxu0 0.0
  %5768 = vmatpush1.msra.mxu0 %v5744
  %5769 = vmatprep.subr.mxu0 0.0
  %5770 = vmatpush1.msra.mxu0 %v5745
  %5771 = vmatprep.subr.mxu0 0.0
  %5772 = vmatpush1.msra.mxu0 %v5746
  %5773 = vmatprep.subr.mxu0 0.0
  %5774 = vmatpush1.msra.mxu0 %v5747
  %5775 = vmatprep.subr.mxu0 0.0
  %5776 = vmatpush1.msra.mxu0 %v5748
  %5777 = vmatprep.subr.mxu0 0.0
  %5778 = vmatpush1.msra.mxu0 %v5749
  %5779 = vmatprep.subr.mxu0 0.0
  %5780 = vmatpush1.msra.mxu0 %v5750
  %5781 = vmatprep.subr.mxu0 0.0
  %5782 = vmatpush1.msra.mxu0 %v5751
  %5783 = vmatprep.subr.mxu0 0.0
  %5784 = vmatpush1.msra.mxu0 %v5752
  %5785 = vmatprep.subr.mxu0 0.0
  %5786 = vmatpush1.msra.mxu0 %v5753
  %5787 = vmatprep.subr.mxu0 0.0
  %5788 = vmatpush1.msra.mxu0 %v5754
  %5789 = vmatprep.subr.mxu0 0.0
  %5790 = vmatpush1.msra.mxu0 %v5755
  %5791 = vmatprep.subr.mxu0 0.0
  %5792 = vmatpush1.msra.mxu0 %v5756
  %5793 = vmatprep.subr.mxu0 0.0
  %5794 = vmatpush1.msra.mxu0 %v5757
  %5795 = vmatprep.subr.mxu0 0.0
  %5796 = vmatpush1.msra.mxu0 %v5758
  %5797 = vmatprep.subr.mxu0 0.0
  %5798 = vmatpush1.msra.mxu0 %v5759
  %5799 = vmatprep.subr.mxu0 0.0
  %5800 = vmatpush1.msra.mxu0 0.0
  %5801 = vmatprep.subr.mxu0 0.0
  %5802 = vmatpush1.msra.mxu0 0.0
  %5803 = vmatprep.subr.mxu0 0.0
  %5804 = vmatpush1.msra.mxu0 0.0
  %5805 = vmatprep.subr.mxu0 0.0
  %5806 = vmatpush1.msra.mxu0 0.0
  %5807 = vmatprep.subr.mxu0 0.0
  %5808 = vmatpush1.msra.mxu0 0.0
  %5809 = vmatprep.subr.mxu0 0.0
  %5810 = vmatpush1.msra.mxu0 0.0
  %5811 = vmatprep.subr.mxu0 0.0
  %5812 = vmatpush1.msra.mxu0 0.0
  %5813 = vmatprep.subr.mxu0 0.0
  %5814 = vmatpush1.msra.mxu0 0.0
  %5815 = vmatprep.subr.mxu0 0.0
  %5816 = vmatpush1.msra.mxu0 0.0
  %5817 = vmatprep.subr.mxu0 0.0
  %5818 = vmatpush1.msra.mxu0 0.0
  %5819 = vmatprep.subr.mxu0 0.0
  %5820 = vmatpush1.msra.mxu0 0.0
  %5821 = vmatprep.subr.mxu0 0.0
  %5822 = vmatpush1.msra.mxu0 0.0
  %5823 = vmatprep.subr.mxu0 0.0
  %5824 = vmatpush1.msra.mxu0 0.0
  %5825 = vmatprep.subr.mxu0 0.0
  %5826 = vmatpush1.msra.mxu0 0.0
  %5827 = vmatprep.mubr.f32.mxu0 %v5761
  %5828 = vmatmul.mubr.f32.gmra.mrb[0].mxu0 %v5740
  %v5829 = vpop.f32.mrb[0].mxu0
  %v5830 = vadd.f32 0.0, %v5829
  %v5831 = vpop.f32.mrb[0].mxu0
  %5832 = vdwg.mxu0
  %v5833 = vsel %vm2735, %v5830, 0.0
  %5834 = vadd.xlane.f32.xlu0 %v5833
  %v5835 = vpop.xlane.xlu0 %5834
  %v5836 = vmul.f32 %v5835, 0.03125
  %v5837 = vsub.f32 %v5830, %v5836
  %v5838 = vmul.f32 %v5837, %v5837
  %v5839 = vsel %vm2735, %v5838, 0.0
  %5840 = vadd.xlane.f32.xlu0 %v5839
  %v5841 = vpop.xlane.xlu0 %5840
  %v5842 = vmul.f32 %v5841, 0.03125
  %v5843 = vld [vmem:[%s53] sm:$0xff]
  %v5844 = vadd.f32 %v5842, 1e-05
  %v5845 = vrsqrt.pop %v5844
  %v5846 = vmul.f32 %v5843, %v5845
  %5848 = vset.pattern.permute.xlu0 0
  %5849 = vperm.xlu0 %5848, %v5846
  %v5850 = vpop.permute.xlu0 %5849
  %v5852 = vmul.f32 %v5837, %v5850
  %v5853 = vld [vmem:[%s55] sm:$0xff]
  %5855 = vset.pattern.permute.xlu0 0
  %5856 = vperm.xlu0 %5855, %v5853
  %v5857 = vpop.permute.xlu0 %5856
  %v5859 = vadd.f32 %v5852, %v5857
  %v5860 = vmax.f32 %v5859, 0.0
  %5861 = vst.msk [vmem:[#allocation2 + $0x8] sm:$0xff] %vm2735, %v5860
  %v5862 = vld [vmem:[#allocation2] sm:$0xff]
  %v5863 = vld [vmem:[#allocation2 + $0x8] sm:$0xff]
  %v5864 = vld [vmem:[%s83] sm:$0x1]
  %v5865 = vlaneseq
  %v5866 = vshrl.u32 %v5865, 7
  %v5867 = vsub.s32 0, %v5866
  %v5868 = vrot.slane %v5864, %v5867
  %5870 = vrot.lane.b32.xlu0 %v5868, 123
  %v5871 = vpop.permute.xlu0 %5870
  %v5873 = vmul.f32 %v5862, %v5871
  %v5874 = vmul.f32 %v5863, %v5871
  %5877 = vrot.lane.b32.xlu0 %v5873, 5
  %v5878 = vpop.permute.xlu0 %5877
  %5879 = vrot.lane.b32.xlu0 %v5874, 5
  %v5880 = vpop.permute.xlu0 %5879
  %v5881 = vsel %vm2769, %v5878, %v5880
  %5883 = vst.msk [vmem:[#allocation3] sm:$0xff] %vm2735, %v5881
  %v5884 = vld [vmem:[#allocation2] sm:$0xff]
  %v5885 = vld [vmem:[#allocation2 + $0x8] sm:$0xff]
  %v5886 = vld [vmem:[%s83 + $0x1] sm:$0x1]
  %v5887 = vlaneseq
  %v5888 = vshrl.u32 %v5887, 7
  %v5889 = vsub.s32 0, %v5888
  %v5890 = vrot.slane %v5886, %v5889
  %5892 = vrot.lane.b32.xlu0 %v5890, 124
  %v5893 = vpop.permute.xlu0 %5892
  %v5895 = vmul.f32 %v5884, %v5893
  %v5896 = vmul.f32 %v5885, %v5893
  %5899 = vrot.lane.b32.xlu0 %v5895, 4
  %v5900 = vpop.permute.xlu0 %5899
  %5901 = vrot.lane.b32.xlu0 %v5896, 4
  %v5902 = vpop.permute.xlu0 %5901
  %v5903 = vsel %vm2805, %v5900, %v5902
  %5905 = vst.msk [vmem:[#allocation3 + $0x20] sm:$0xff] %vm2735, %v5903
  %v5906 = vld [vmem:[#allocation2] sm:$0xff]
  %v5907 = vld [vmem:[#allocation2 + $0x8] sm:$0xff]
  %v5908 = vld [vmem:[%s83 + $0x2] sm:$0x1]
  %v5909 = vlaneseq
  %v5910 = vshrl.u32 %v5909, 7
  %v5911 = vsub.s32 0, %v5910
  %v5912 = vrot.slane %v5908, %v5911
  %5914 = vrot.lane.b32.xlu0 %v5912, 125
  %v5915 = vpop.permute.xlu0 %5914
  %v5917 = vmul.f32 %v5906, %v5915
  %v5918 = vmul.f32 %v5907, %v5915
  %5921 = vrot.lane.b32.xlu0 %v5917, 3
  %v5922 = vpop.permute.xlu0 %5921
  %5923 = vrot.lane.b32.xlu0 %v5918, 3
  %v5924 = vpop.permute.xlu0 %5923
  %v5925 = vsel %vm2841, %v5922, %v5924
  %5927 = vst.msk [vmem:[#allocation3 + $0x40] sm:$0xff] %vm2735, %v5925
  %v5928 = vld [vmem:[#allocation2] sm:$0xff]
  %v5929 = vld [vmem:[#allocation2 + $0x8] sm:$0xff]
  %v5930 = vld [vmem:[%s83 + $0x3] sm:$0x1]
  %v5931 = vlaneseq
  %v5932 = vshrl.u32 %v5931, 7
  %v5933 = vsub.s32 0, %v5932
  %v5934 = vrot.slane %v5930, %v5933
  %5936 = vrot.lane.b32.xlu0 %v5934, 127
  %v5937 = vpop.permute.xlu0 %5936
  %v5939 = vmul.f32 %v5928, %v5937
  %v5940 = vmul.f32 %v5929, %v5937
  %5943 = vrot.lane.b32.xlu0 %v5939, 1
  %v5944 = vpop.permute.xlu0 %5943
  %5945 = vrot.lane.b32.xlu0 %v5940, 1
  %v5946 = vpop.permute.xlu0 %5945
  %v5947 = vsel %vm337, %v5944, %v5946
  %5949 = vst.msk [vmem:[#allocation3 + $0x60] sm:$0xff] %vm2735, %v5947
  %v5950 = vld [vmem:[#allocation2 + $0x8] sm:$0xff]
  %5951 = vst.msk [vmem:[#allocation3 + $0x80] sm:$0xff] %vm2735, %v5950
  %v5952 = vld [vmem:[#allocation2 + $0x8] sm:$0xff]
  %v5953 = vld [vmem:[%s83 + $0x4] sm:$0x1]
  %v5954 = vlaneseq
  %v5955 = vshrl.u32 %v5954, 7
  %v5956 = vsub.s32 0, %v5955
  %v5957 = vrot.slane %v5953, %v5956
  %5959 = vrot.lane.b32.xlu0 %v5957, 1
  %v5960 = vpop.permute.xlu0 %5959
  %v5962 = vmul.f32 %v5952, %v5960
  %5964 = vrot.lane.b32.xlu0 %v5962, 127
  %v5965 = vpop.permute.xlu0 %5964
  %5967 = vst.msk [vmem:[#allocation3 + $0xa0] sm:$0xff] %vm2735, %v5965
  %v5968 = vld [vmem:[#allocation2 + $0x8] sm:$0xff]
  %v5969 = vld [vmem:[%s83 + $0x5] sm:$0x1]
  %v5970 = vlaneseq
  %v5971 = vshrl.u32 %v5970, 7
  %v5972 = vsub.s32 0, %v5971
  %v5973 = vrot.slane %v5969, %v5972
  %5975 = vrot.lane.b32.xlu0 %v5973, 3
  %v5976 = vpop.permute.xlu0 %5975
  %v5978 = vmul.f32 %v5968, %v5976
  %5980 = vrot.lane.b32.xlu0 %v5978, 125
  %v5981 = vpop.permute.xlu0 %5980
  %5983 = vst.msk [vmem:[#allocation3 + $0xc0] sm:$0xff] %vm2735, %v5981
  %v5984 = vld [vmem:[#allocation2 + $0x8] sm:$0xff]
  %v5985 = vld [vmem:[%s83 + $0x6] sm:$0x1]
  %v5986 = vlaneseq
  %v5987 = vshrl.u32 %v5986, 7
  %v5988 = vsub.s32 0, %v5987
  %v5989 = vrot.slane %v5985, %v5988
  %5991 = vrot.lane.b32.xlu0 %v5989, 4
  %v5992 = vpop.permute.xlu0 %5991
  %v5994 = vmul.f32 %v5984, %v5992
  %5996 = vrot.lane.b32.xlu0 %v5994, 124
  %v5997 = vpop.permute.xlu0 %5996
  %5999 = vst.msk [vmem:[#allocation3 + $0xe0] sm:$0xff] %vm2735, %v5997
  %v6000 = vld [vmem:[#allocation2 + $0x8] sm:$0xff]
  %v6001 = vld [vmem:[%s83 + $0x7] sm:$0x1]
  %v6002 = vlaneseq
  %v6003 = vshrl.u32 %v6002, 7
  %v6004 = vsub.s32 0, %v6003
  %v6005 = vrot.slane %v6001, %v6004
  %6007 = vrot.lane.b32.xlu0 %v6005, 5
  %v6008 = vpop.permute.xlu0 %6007
  %v6010 = vmul.f32 %v6000, %v6008
  %6012 = vrot.lane.b32.xlu0 %v6010, 123
  %v6013 = vpop.permute.xlu0 %6012
  %6015 = vst.msk [vmem:[#allocation3 + $0x100] sm:$0xff] %vm2735, %v6013
  %v6016 = vld [vmem:[%s57] sm:$0xff]
  %v6017 = vld [vmem:[#allocation3] sm:$0xff]
  %v6018 = vld [vmem:[#allocation3 + $0x20] sm:$0xff]
  %v6019 = vld [vmem:[#allocation3 + $0x40] sm:$0xff]
  %v6020 = vld [vmem:[#allocation3 + $0x60] sm:$0xff]
  %v6021 = vld [vmem:[#allocation3 + $0x80] sm:$0xff]
  %v6022 = vld [vmem:[#allocation3 + $0xa0] sm:$0xff]
  %v6023 = vld [vmem:[#allocation3 + $0xc0] sm:$0xff]
  %v6024 = vld [vmem:[#allocation3 + $0xe0] sm:$0xff]
  %v6025 = vld [vmem:[#allocation3 + $0x100] sm:$0xff]
  %v6027 = vsel %vm1271, %v6016, 0
  %6029 = vmatprep.subr.mxu0 0.0
  %6030 = vmatpush1.msra.mxu0 %v6017
  %6031 = vmatprep.subr.mxu0 0.0
  %6032 = vmatpush1.msra.mxu0 %v6018
  %6033 = vmatprep.subr.mxu0 0.0
  %6034 = vmatpush1.msra.mxu0 %v6019
  %6035 = vmatprep.subr.mxu0 0.0
  %6036 = vmatpush1.msra.mxu0 %v6020
  %6037 = vmatprep.subr.mxu0 0.0
  %6038 = vmatpush1.msra.mxu0 %v6021
  %6039 = vmatprep.subr.mxu0 0.0
  %6040 = vmatpush1.msra.mxu0 %v6022
  %6041 = vmatprep.subr.mxu0 0.0
  %6042 = vmatpush1.msra.mxu0 %v6023
  %6043 = vmatprep.subr.mxu0 0.0
  %6044 = vmatpush1.msra.mxu0 %v6024
  %6045 = vmatprep.subr.mxu0 0.0
  %6046 = vmatpush1.msra.mxu0 %v6025
  %6047 = vmatprep.subr.mxu0 0.0
  %6048 = vmatpush1.msra.mxu0 0.0
  %6049 = vmatprep.subr.mxu0 0.0
  %6050 = vmatpush1.msra.mxu0 0.0
  %6051 = vmatprep.subr.mxu0 0.0
  %6052 = vmatpush1.msra.mxu0 0.0
  %6053 = vmatprep.subr.mxu0 0.0
  %6054 = vmatpush1.msra.mxu0 0.0
  %6055 = vmatprep.subr.mxu0 0.0
  %6056 = vmatpush1.msra.mxu0 0.0
  %6057 = vmatprep.subr.mxu0 0.0
  %6058 = vmatpush1.msra.mxu0 0.0
  %6059 = vmatprep.subr.mxu0 0.0
  %6060 = vmatpush1.msra.mxu0 0.0
  %6061 = vmatprep.subr.mxu0 0.0
  %6062 = vmatpush1.msra.mxu0 0.0
  %6063 = vmatprep.subr.mxu0 0.0
  %6064 = vmatpush1.msra.mxu0 0.0
  %6065 = vmatprep.subr.mxu0 0.0
  %6066 = vmatpush1.msra.mxu0 0.0
  %6067 = vmatprep.subr.mxu0 0.0
  %6068 = vmatpush1.msra.mxu0 0.0
  %6069 = vmatprep.subr.mxu0 0.0
  %6070 = vmatpush1.msra.mxu0 0.0
  %6071 = vmatprep.subr.mxu0 0.0
  %6072 = vmatpush1.msra.mxu0 0.0
  %6073 = vmatprep.subr.mxu0 0.0
  %6074 = vmatpush1.msra.mxu0 0.0
  %6075 = vmatprep.subr.mxu0 0.0
  %6076 = vmatpush1.msra.mxu0 0.0
  %6077 = vmatprep.subr.mxu0 0.0
  %6078 = vmatpush1.msra.mxu0 0.0
  %6079 = vmatprep.subr.mxu0 0.0
  %6080 = vmatpush1.msra.mxu0 0.0
  %6081 = vmatprep.subr.mxu0 0.0
  %6082 = vmatpush1.msra.mxu0 0.0
  %6083 = vmatprep.subr.mxu0 0.0
  %6084 = vmatpush1.msra.mxu0 0.0
  %6085 = vmatprep.subr.mxu0 0.0
  %6086 = vmatpush1.msra.mxu0 0.0
  %6087 = vmatprep.subr.mxu0 0.0
  %6088 = vmatpush1.msra.mxu0 0.0
  %6089 = vmatprep.subr.mxu0 0.0
  %6090 = vmatpush1.msra.mxu0 0.0
  %6091 = vmatprep.subr.mxu0 0.0
  %6092 = vmatpush1.msra.mxu0 0.0
  %6093 = vmatprep.mubr.f32.mxu0 0.0
  %6094 = vmatmul.mubr.f32.gmra.mrb[0].mxu0 %v6027
  %v6095 = vpop.f32.mrb[0].mxu0
  %v6096 = vadd.f32 0.0, %v6095
  %v6097 = vpop.f32.mrb[0].mxu0
  %6098 = vdwg.mxu0
  %v6099 = vsel %vm2735, %v6096, 0.0
  %6100 = vadd.xlane.f32.xlu0 %v6099
  %v6101 = vpop.xlane.xlu0 %6100
  %v6102 = vmul.f32 %v6101, 0.03125
  %v6103 = vsub.f32 %v6096, %v6102
  %v6104 = vmul.f32 %v6103, %v6103
  %v6105 = vsel %vm2735, %v6104, 0.0
  %6106 = vadd.xlane.f32.xlu0 %v6105
  %v6107 = vpop.xlane.xlu0 %6106
  %v6108 = vmul.f32 %v6107, 0.03125
  %v6109 = vld [vmem:[%s59] sm:$0xff]
  %v6110 = vadd.f32 %v6108, 1e-05
  %v6111 = vrsqrt.pop %v6110
  %v6112 = vmul.f32 %v6109, %v6111
  %6114 = vset.pattern.permute.xlu0 0
  %6115 = vperm.xlu0 %6114, %v6112
  %v6116 = vpop.permute.xlu0 %6115
  %v6118 = vmul.f32 %v6103, %v6116
  %v6119 = vld [vmem:[%s61] sm:$0xff]
  %6121 = vset.pattern.permute.xlu0 0
  %6122 = vperm.xlu0 %6121, %v6119
  %v6123 = vpop.permute.xlu0 %6122
  %v6125 = vadd.f32 %v6118, %v6123
  %v6126 = vmax.f32 %v6125, 0.0
  %v6127 = vld [vmem:[%s95] sm:$0xff]
  %v6128 = vld [vmem:[%s95 + $0x8] sm:$0xff]
  %v6130 = vsel %vm291, %v6126, 0
  %6132 = vmatprep.subr.mxu0 0.0
  %6133 = vmatpush1.msra.mxu0 %v6127
  %6134 = vmatprep.subr.mxu0 0.0
  %6135 = vmatpush1.msra.mxu0 %v6128
  %6136 = vmatprep.subr.mxu0 0.0
  %6137 = vmatpush1.msra.mxu0 0.0
  %6138 = vmatprep.subr.mxu0 0.0
  %6139 = vmatpush1.msra.mxu0 0.0
  %6140 = vmatprep.subr.mxu0 0.0
  %6141 = vmatpush1.msra.mxu0 0.0
  %6142 = vmatprep.subr.mxu0 0.0
  %6143 = vmatpush1.msra.mxu0 0.0
  %6144 = vmatprep.subr.mxu0 0.0
  %6145 = vmatpush1.msra.mxu0 0.0
  %6146 = vmatprep.subr.mxu0 0.0
  %6147 = vmatpush1.msra.mxu0 0.0
  %6148 = vmatprep.subr.mxu0 0.0
  %6149 = vmatpush1.msra.mxu0 0.0
  %6150 = vmatprep.subr.mxu0 0.0
  %6151 = vmatpush1.msra.mxu0 0.0
  %6152 = vmatprep.subr.mxu0 0.0
  %6153 = vmatpush1.msra.mxu0 0.0
  %6154 = vmatprep.subr.mxu0 0.0
  %6155 = vmatpush1.msra.mxu0 0.0
  %6156 = vmatprep.subr.mxu0 0.0
  %6157 = vmatpush1.msra.mxu0 0.0
  %6158 = vmatprep.subr.mxu0 0.0
  %6159 = vmatpush1.msra.mxu0 0.0
  %6160 = vmatprep.subr.mxu0 0.0
  %6161 = vmatpush1.msra.mxu0 0.0
  %6162 = vmatprep.subr.mxu0 0.0
  %6163 = vmatpush1.msra.mxu0 0.0
  %6164 = vmatprep.subr.mxu0 0.0
  %6165 = vmatpush1.msra.mxu0 0.0
  %6166 = vmatprep.subr.mxu0 0.0
  %6167 = vmatpush1.msra.mxu0 0.0
  %6168 = vmatprep.subr.mxu0 0.0
  %6169 = vmatpush1.msra.mxu0 0.0
  %6170 = vmatprep.subr.mxu0 0.0
  %6171 = vmatpush1.msra.mxu0 0.0
  %6172 = vmatprep.subr.mxu0 0.0
  %6173 = vmatpush1.msra.mxu0 0.0
  %6174 = vmatprep.subr.mxu0 0.0
  %6175 = vmatpush1.msra.mxu0 0.0
  %6176 = vmatprep.subr.mxu0 0.0
  %6177 = vmatpush1.msra.mxu0 0.0
  %6178 = vmatprep.subr.mxu0 0.0
  %6179 = vmatpush1.msra.mxu0 0.0
  %6180 = vmatprep.subr.mxu0 0.0
  %6181 = vmatpush1.msra.mxu0 0.0
  %6182 = vmatprep.subr.mxu0 0.0
  %6183 = vmatpush1.msra.mxu0 0.0
  %6184 = vmatprep.subr.mxu0 0.0
  %6185 = vmatpush1.msra.mxu0 0.0
  %6186 = vmatprep.subr.mxu0 0.0
  %6187 = vmatpush1.msra.mxu0 0.0
  %6188 = vmatprep.subr.mxu0 0.0
  %6189 = vmatpush1.msra.mxu0 0.0
  %6190 = vmatprep.subr.mxu0 0.0
  %6191 = vmatpush1.msra.mxu0 0.0
  %6192 = vmatprep.subr.mxu0 0.0
  %6193 = vmatpush1.msra.mxu0 0.0
  %6194 = vmatprep.subr.mxu0 0.0
  %6195 = vmatpush1.msra.mxu0 0.0
  %6196 = vmatprep.mubr.f32.mxu0 0.0
  %6197 = vmatmul.mubr.f32.gmra.mrb[0].mxu0 %v6130
  %v6198 = vpop.f32.mrb[0].mxu0
  %v6199 = vadd.f32 0.0, %v6198
  %v6200 = vpop.f32.mrb[0].mxu0
  %6201 = vdwg.mxu0
  %6202 = vst.msk [vmem:[#allocation3] sm:$0xff] %vm1643, %v6199
  %6203 = vrot.lane.b32.xlu0 %v6126, 112
  %v6204 = vpop.permute.xlu0 %6203
  %v6205 = vsel %vm291, %v6204, 0
  %6207 = vmatprep.subr.mxu0 0.0
  %6208 = vmatpush1.msra.mxu0 %v6127
  %6209 = vmatprep.subr.mxu0 0.0
  %6210 = vmatpush1.msra.mxu0 %v6128
  %6211 = vmatprep.subr.mxu0 0.0
  %6212 = vmatpush1.msra.mxu0 0.0
  %6213 = vmatprep.subr.mxu0 0.0
  %6214 = vmatpush1.msra.mxu0 0.0
  %6215 = vmatprep.subr.mxu0 0.0
  %6216 = vmatpush1.msra.mxu0 0.0
  %6217 = vmatprep.subr.mxu0 0.0
  %6218 = vmatpush1.msra.mxu0 0.0
  %6219 = vmatprep.subr.mxu0 0.0
  %6220 = vmatpush1.msra.mxu0 0.0
  %6221 = vmatprep.subr.mxu0 0.0
  %6222 = vmatpush1.msra.mxu0 0.0
  %6223 = vmatprep.subr.mxu0 0.0
  %6224 = vmatpush1.msra.mxu0 0.0
  %6225 = vmatprep.subr.mxu0 0.0
  %6226 = vmatpush1.msra.mxu0 0.0
  %6227 = vmatprep.subr.mxu0 0.0
  %6228 = vmatpush1.msra.mxu0 0.0
  %6229 = vmatprep.subr.mxu0 0.0
  %6230 = vmatpush1.msra.mxu0 0.0
  %6231 = vmatprep.subr.mxu0 0.0
  %6232 = vmatpush1.msra.mxu0 0.0
  %6233 = vmatprep.subr.mxu0 0.0
  %6234 = vmatpush1.msra.mxu0 0.0
  %6235 = vmatprep.subr.mxu0 0.0
  %6236 = vmatpush1.msra.mxu0 0.0
  %6237 = vmatprep.subr.mxu0 0.0
  %6238 = vmatpush1.msra.mxu0 0.0
  %6239 = vmatprep.subr.mxu0 0.0
  %6240 = vmatpush1.msra.mxu0 0.0
  %6241 = vmatprep.subr.mxu0 0.0
  %6242 = vmatpush1.msra.mxu0 0.0
  %6243 = vmatprep.subr.mxu0 0.0
  %6244 = vmatpush1.msra.mxu0 0.0
  %6245 = vmatprep.subr.mxu0 0.0
  %6246 = vmatpush1.msra.mxu0 0.0
  %6247 = vmatprep.subr.mxu0 0.0
  %6248 = vmatpush1.msra.mxu0 0.0
  %6249 = vmatprep.subr.mxu0 0.0
  %6250 = vmatpush1.msra.mxu0 0.0
  %6251 = vmatprep.subr.mxu0 0.0
  %6252 = vmatpush1.msra.mxu0 0.0
  %6253 = vmatprep.subr.mxu0 0.0
  %6254 = vmatpush1.msra.mxu0 0.0
  %6255 = vmatprep.subr.mxu0 0.0
  %6256 = vmatpush1.msra.mxu0 0.0
  %6257 = vmatprep.subr.mxu0 0.0
  %6258 = vmatpush1.msra.mxu0 0.0
  %6259 = vmatprep.subr.mxu0 0.0
  %6260 = vmatpush1.msra.mxu0 0.0
  %6261 = vmatprep.subr.mxu0 0.0
  %6262 = vmatpush1.msra.mxu0 0.0
  %6263 = vmatprep.subr.mxu0 0.0
  %6264 = vmatpush1.msra.mxu0 0.0
  %6265 = vmatprep.subr.mxu0 0.0
  %6266 = vmatpush1.msra.mxu0 0.0
  %6267 = vmatprep.subr.mxu0 0.0
  %6268 = vmatpush1.msra.mxu0 0.0
  %6269 = vmatprep.subr.mxu0 0.0
  %6270 = vmatpush1.msra.mxu0 0.0
  %6271 = vmatprep.mubr.f32.mxu0 0.0
  %6272 = vmatmul.mubr.f32.gmra.mrb[0].mxu0 %v6205
  %v6273 = vpop.f32.mrb[0].mxu0
  %v6274 = vadd.f32 0.0, %v6273
  %v6275 = vpop.f32.mrb[0].mxu0
  %6276 = vdwg.mxu0
  %6278 = vrot.lane.b32.xlu0 %v6274, 64
  %v6279 = vpop.permute.xlu0 %6278
  %6281 = vst.msk [vmem:[#allocation3] sm:$0xff] %vm1719, %v6279
  %v6282 = vld [vmem:[#allocation3] sm:$0xff]
  %6283 = vst [vmem:[%s107] sm:$0xff] %v6282
  %6284 = vst [vmem:[#allocation2 + $0x8] sm:$0xff] %v6282
  %v6285 = vld [vmem:[#allocation2] sm:$0xff]
  %v6286 = vld [vmem:[#allocation2 + $0x8] sm:$0xff]
  %v6287 = vld [vmem:[%s81] sm:$0x1]
  %v6288 = vlaneseq
  %v6289 = vshrl.u32 %v6288, 7
  %v6290 = vsub.s32 0, %v6289
  %v6291 = vrot.slane %v6287, %v6290
  %6293 = vrot.lane.b32.xlu0 %v6291, 119
  %v6294 = vpop.permute.xlu0 %6293
  %v6296 = vmul.f32 %v6285, %v6294
  %v6297 = vmul.f32 %v6286, %v6294
  %6300 = vrot.lane.b32.xlu0 %v6296, 9
  %v6301 = vpop.permute.xlu0 %6300
  %6302 = vrot.lane.b32.xlu0 %v6297, 9
  %v6303 = vpop.permute.xlu0 %6302
  %v6304 = vsel %vm440, %v6301, %v6303
  %6306 = vst [vmem:[#allocation3] sm:$0xff] %v6304
  %v6307 = vld [vmem:[#allocation2] sm:$0xff]
  %v6308 = vld [vmem:[#allocation2 + $0x8] sm:$0xff]
  %v6309 = vld [vmem:[%s81 + $0x1] sm:$0x1]
  %v6310 = vlaneseq
  %v6311 = vshrl.u32 %v6310, 7
  %v6312 = vsub.s32 0, %v6311
  %v6313 = vrot.slane %v6309, %v6312
  %6315 = vrot.lane.b32.xlu0 %v6313, 120
  %v6316 = vpop.permute.xlu0 %6315
  %v6318 = vmul.f32 %v6307, %v6316
  %v6319 = vmul.f32 %v6308, %v6316
  %6322 = vrot.lane.b32.xlu0 %v6318, 8
  %v6323 = vpop.permute.xlu0 %6322
  %6324 = vrot.lane.b32.xlu0 %v6319, 8
  %v6325 = vpop.permute.xlu0 %6324
  %v6326 = vsel %vm1765, %v6323, %v6325
  %6328 = vst [vmem:[#allocation3 + $0x20] sm:$0xff] %v6326
  %v6329 = vld [vmem:[#allocation2] sm:$0xff]
  %v6330 = vld [vmem:[#allocation2 + $0x8] sm:$0xff]
  %v6331 = vld [vmem:[%s81 + $0x2] sm:$0x1]
  %v6332 = vlaneseq
  %v6333 = vshrl.u32 %v6332, 7
  %v6334 = vsub.s32 0, %v6333
  %v6335 = vrot.slane %v6331, %v6334
  %6337 = vrot.lane.b32.xlu0 %v6335, 121
  %v6338 = vpop.permute.xlu0 %6337
  %v6340 = vmul.f32 %v6329, %v6338
  %v6341 = vmul.f32 %v6330, %v6338
  %6344 = vrot.lane.b32.xlu0 %v6340, 7
  %v6345 = vpop.permute.xlu0 %6344
  %6346 = vrot.lane.b32.xlu0 %v6341, 7
  %v6347 = vpop.permute.xlu0 %6346
  %v6348 = vsel %vm1788, %v6345, %v6347
  %6350 = vst [vmem:[#allocation3 + $0x40] sm:$0xff] %v6348
  %v6351 = vld [vmem:[#allocation2] sm:$0xff]
  %v6352 = vld [vmem:[#allocation2 + $0x8] sm:$0xff]
  %v6353 = vld [vmem:[%s81 + $0x3] sm:$0x1]
  %v6354 = vlaneseq
  %v6355 = vshrl.u32 %v6354, 7
  %v6356 = vsub.s32 0, %v6355
  %v6357 = vrot.slane %v6353, %v6356
  %6359 = vrot.lane.b32.xlu0 %v6357, 127
  %v6360 = vpop.permute.xlu0 %6359
  %v6362 = vmul.f32 %v6351, %v6360
  %v6363 = vmul.f32 %v6352, %v6360
  %6366 = vrot.lane.b32.xlu0 %v6362, 1
  %v6367 = vpop.permute.xlu0 %6366
  %6368 = vrot.lane.b32.xlu0 %v6363, 1
  %v6369 = vpop.permute.xlu0 %6368
  %v6370 = vsel %vm337, %v6367, %v6369
  %6372 = vst [vmem:[#allocation3 + $0x60] sm:$0xff] %v6370
  %v6373 = vld [vmem:[#allocation2 + $0x8] sm:$0xff]
  %6374 = vst [vmem:[#allocation3 + $0x80] sm:$0xff] %v6373
  %v6375 = vld [vmem:[#allocation2 + $0x8] sm:$0xff]
  %v6376 = vld [vmem:[#allocation2 + $0x10] sm:$0xff]
  %v6377 = vld [vmem:[%s81 + $0x4] sm:$0x1]
  %v6378 = vlaneseq
  %v6379 = vshrl.u32 %v6378, 7
  %v6380 = vsub.s32 0, %v6379
  %v6381 = vrot.slane %v6377, %v6380
  %6383 = vrot.lane.b32.xlu0 %v6381, 1
  %v6384 = vpop.permute.xlu0 %6383
  %v6386 = vmul.f32 %v6375, %v6384
  %v6387 = vmul.f32 %v6376, %v6384
  %6390 = vrot.lane.b32.xlu0 %v6386, 127
  %v6391 = vpop.permute.xlu0 %6390
  %6392 = vrot.lane.b32.xlu0 %v6387, 127
  %v6393 = vpop.permute.xlu0 %6392
  %v6394 = vsel %vm329, %v6391, %v6393
  %6396 = vst [vmem:[#allocation3 + $0xa0] sm:$0xff] %v6394
  %v6397 = vld [vmem:[#allocation2 + $0x8] sm:$0xff]
  %v6398 = vld [vmem:[#allocation2 + $0x10] sm:$0xff]
  %v6399 = vld [vmem:[%s81 + $0x5] sm:$0x1]
  %v6400 = vlaneseq
  %v6401 = vshrl.u32 %v6400, 7
  %v6402 = vsub.s32 0, %v6401
  %v6403 = vrot.slane %v6399, %v6402
  %6405 = vrot.lane.b32.xlu0 %v6403, 7
  %v6406 = vpop.permute.xlu0 %6405
  %v6408 = vmul.f32 %v6397, %v6406
  %v6409 = vmul.f32 %v6398, %v6406
  %6412 = vrot.lane.b32.xlu0 %v6408, 121
  %v6413 = vpop.permute.xlu0 %6412
  %6414 = vrot.lane.b32.xlu0 %v6409, 121
  %v6415 = vpop.permute.xlu0 %6414
  %v6416 = vsel %vm1857, %v6413, %v6415
  %6418 = vst [vmem:[#allocation3 + $0xc0] sm:$0xff] %v6416
  %v6419 = vld [vmem:[#allocation2 + $0x8] sm:$0xff]
  %v6420 = vld [vmem:[#allocation2 + $0x10] sm:$0xff]
  %v6421 = vld [vmem:[%s81 + $0x6] sm:$0x1]
  %v6422 = vlaneseq
  %v6423 = vshrl.u32 %v6422, 7
  %v6424 = vsub.s32 0, %v6423
  %v6425 = vrot.slane %v6421, %v6424
  %6427 = vrot.lane.b32.xlu0 %v6425, 8
  %v6428 = vpop.permute.xlu0 %6427
  %v6430 = vmul.f32 %v6419, %v6428
  %v6431 = vmul.f32 %v6420, %v6428
  %6434 = vrot.lane.b32.xlu0 %v6430, 120
  %v6435 = vpop.permute.xlu0 %6434
  %6436 = vrot.lane.b32.xlu0 %v6431, 120
  %v6437 = vpop.permute.xlu0 %6436
  %v6438 = vsel %vm1880, %v6435, %v6437
  %6440 = vst [vmem:[#allocation3 + $0xe0] sm:$0xff] %v6438
  %v6441 = vld [vmem:[#allocation2 + $0x8] sm:$0xff]
  %v6442 = vld [vmem:[#allocation2 + $0x10] sm:$0xff]
  %v6443 = vld [vmem:[%s81 + $0x7] sm:$0x1]
  %v6444 = vlaneseq
  %v6445 = vshrl.u32 %v6444, 7
  %v6446 = vsub.s32 0, %v6445
  %v6447 = vrot.slane %v6443, %v6446
  %6449 = vrot.lane.b32.xlu0 %v6447, 9
  %v6450 = vpop.permute.xlu0 %6449
  %v6452 = vmul.f32 %v6441, %v6450
  %v6453 = vmul.f32 %v6442, %v6450
  %6456 = vrot.lane.b32.xlu0 %v6452, 119
  %v6457 = vpop.permute.xlu0 %6456
  %6458 = vrot.lane.b32.xlu0 %v6453, 119
  %v6459 = vpop.permute.xlu0 %6458
  %v6460 = vsel %vm1903, %v6457, %v6459
  %6462 = vst [vmem:[#allocation3 + $0x100] sm:$0xff] %v6460
  %v6463 = vld [vmem:[%s63] sm:$0x1]
  %v6464 = vld [vmem:[#allocation3] sm:$0xff]
  %v6465 = vld [vmem:[#allocation3 + $0x20] sm:$0xff]
  %v6466 = vld [vmem:[#allocation3 + $0x40] sm:$0xff]
  %v6467 = vld [vmem:[#allocation3 + $0x60] sm:$0xff]
  %v6468 = vld [vmem:[#allocation3 + $0x80] sm:$0xff]
  %v6469 = vld [vmem:[#allocation3 + $0xa0] sm:$0xff]
  %v6470 = vld [vmem:[#allocation3 + $0xc0] sm:$0xff]
  %v6471 = vld [vmem:[#allocation3 + $0xe0] sm:$0xff]
  %v6472 = vld [vmem:[#allocation3 + $0x100] sm:$0xff]
  %v6474 = vsel %vm1271, %v6463, 0
  %6476 = vmatprep.subr.mxu0 0.0
  %6477 = vmatpush1.msra.mxu0 %v6464
  %6478 = vmatprep.subr.mxu0 0.0
  %6479 = vmatpush1.msra.mxu0 %v6465
  %6480 = vmatprep.subr.mxu0 0.0
  %6481 = vmatpush1.msra.mxu0 %v6466
  %6482 = vmatprep.subr.mxu0 0.0
  %6483 = vmatpush1.msra.mxu0 %v6467
  %6484 = vmatprep.subr.mxu0 0.0
  %6485 = vmatpush1.msra.mxu0 %v6468
  %6486 = vmatprep.subr.mxu0 0.0
  %6487 = vmatpush1.msra.mxu0 %v6469
  %6488 = vmatprep.subr.mxu0 0.0
  %6489 = vmatpush1.msra.mxu0 %v6470
  %6490 = vmatprep.subr.mxu0 0.0
  %6491 = vmatpush1.msra.mxu0 %v6471
  %6492 = vmatprep.subr.mxu0 0.0
  %6493 = vmatpush1.msra.mxu0 %v6472
  %6494 = vmatprep.subr.mxu0 0.0
  %6495 = vmatpush1.msra.mxu0 0.0
  %6496 = vmatprep.subr.mxu0 0.0
  %6497 = vmatpush1.msra.mxu0 0.0
  %6498 = vmatprep.subr.mxu0 0.0
  %6499 = vmatpush1.msra.mxu0 0.0
  %6500 = vmatprep.subr.mxu0 0.0
  %6501 = vmatpush1.msra.mxu0 0.0
  %6502 = vmatprep.subr.mxu0 0.0
  %6503 = vmatpush1.msra.mxu0 0.0
  %6504 = vmatprep.subr.mxu0 0.0
  %6505 = vmatpush1.msra.mxu0 0.0
  %6506 = vmatprep.subr.mxu0 0.0
  %6507 = vmatpush1.msra.mxu0 0.0
  %6508 = vmatprep.subr.mxu0 0.0
  %6509 = vmatpush1.msra.mxu0 0.0
  %6510 = vmatprep.subr.mxu0 0.0
  %6511 = vmatpush1.msra.mxu0 0.0
  %6512 = vmatprep.subr.mxu0 0.0
  %6513 = vmatpush1.msra.mxu0 0.0
  %6514 = vmatprep.subr.mxu0 0.0
  %6515 = vmatpush1.msra.mxu0 0.0
  %6516 = vmatprep.subr.mxu0 0.0
  %6517 = vmatpush1.msra.mxu0 0.0
  %6518 = vmatprep.subr.mxu0 0.0
  %6519 = vmatpush1.msra.mxu0 0.0
  %6520 = vmatprep.subr.mxu0 0.0
  %6521 = vmatpush1.msra.mxu0 0.0
  %6522 = vmatprep.subr.mxu0 0.0
  %6523 = vmatpush1.msra.mxu0 0.0
  %6524 = vmatprep.subr.mxu0 0.0
  %6525 = vmatpush1.msra.mxu0 0.0
  %6526 = vmatprep.subr.mxu0 0.0
  %6527 = vmatpush1.msra.mxu0 0.0
  %6528 = vmatprep.subr.mxu0 0.0
  %6529 = vmatpush1.msra.mxu0 0.0
  %6530 = vmatprep.subr.mxu0 0.0
  %6531 = vmatpush1.msra.mxu0 0.0
  %6532 = vmatprep.subr.mxu0 0.0
  %6533 = vmatpush1.msra.mxu0 0.0
  %6534 = vmatprep.subr.mxu0 0.0
  %6535 = vmatpush1.msra.mxu0 0.0
  %6536 = vmatprep.subr.mxu0 0.0
  %6537 = vmatpush1.msra.mxu0 0.0
  %6538 = vmatprep.subr.mxu0 0.0
  %6539 = vmatpush1.msra.mxu0 0.0
  %6540 = vmatprep.mubr.f32.mxu0 0.0
  %6541 = vmatmul.mubr.f32.gmra.mrb[0].mxu0 %v6474
  %v6542 = vpop.f32.mrb[0].mxu0
  %v6543 = vadd.f32 0.0, %v6542
  %v6544 = vpop.f32.mrb[0].mxu0
  %6545 = vdwg.mxu0
  %v6546 = vsel %vm444, %v6543, 0.0
  %6547 = vadd.xlane.f32.xlu0 %v6546
  %v6548 = vpop.xlane.xlu0 %6547
  %v6549 = vmul.f32 %v6548, 0.0078125
  %v6550 = vsub.f32 %v6543, %v6549
  %v6551 = vmul.f32 %v6550, %v6550
  %v6552 = vsel %vm444, %v6551, 0.0
  %6553 = vadd.xlane.f32.xlu0 %v6552
  %v6554 = vpop.xlane.xlu0 %6553
  %v6555 = vmul.f32 %v6554, 0.0078125
  %v6556 = vld [vmem:[#allocation4] sm:$0x1]
  %v6557 = vadd.f32 %v6555, 1e-05
  %v6558 = vrsqrt.pop %v6557
  %v6559 = vmul.f32 %v6556, %v6558
  %6561 = vset.pattern.permute.xlu0 0
  %6562 = vperm.xlu0 %6561, %v6559
  %v6563 = vpop.permute.xlu0 %6562
  %v6565 = vlaneseq
  %v6566 = vshrl.u32 %v6565, 7
  %v6567 = vsub.s32 0, %v6566
  %v6568 = vrot.slane %v6563, %v6567
  %v6569 = vmul.f32 %v6550, %v6568
  %v6570 = vld [vmem:[#allocation5] sm:$0x1]
  %6572 = vset.pattern.permute.xlu0 0
  %6573 = vperm.xlu0 %6572, %v6570
  %v6574 = vpop.permute.xlu0 %6573
  %v6576 = vlaneseq
  %v6577 = vshrl.u32 %v6576, 7
  %v6578 = vsub.s32 0, %v6577
  %v6579 = vrot.slane %v6574, %v6578
  %v6580 = vadd.f32 %v6569, %v6579
  %v6581 = vmax.f32 %v6580, 0.0
  %6582 = vst [vmem:[#allocation2 + $0x8] sm:$0x1] %v6581
  %v6583 = vld [vmem:[#allocation2] ss:$0 sm:$0xff]
  %v6584 = vld [vmem:[#allocation2 + $0x8] ss:$0 sm:$0xff]
  %v6585 = vld [vmem:[%s81] sm:$0x1]
  %6587 = vrot.lane.b32.xlu0 %v6585, 119
  %v6588 = vpop.permute.xlu0 %6587
  %v6590 = vmul.f32 %v6583, %v6588
  %v6591 = vmul.f32 %v6584, %v6588
  %6594 = vrot.lane.b32.xlu0 %v6590, 9
  %v6595 = vpop.permute.xlu0 %6594
  %6596 = vrot.lane.b32.xlu0 %v6591, 9
  %v6597 = vpop.permute.xlu0 %6596
  %v6598 = vsel %vm440, %v6595, %v6597
  %6600 = vst [vmem:[#allocation3] sm:$0x1] %v6598
  %v6601 = vld [vmem:[#allocation2] ss:$0 sm:$0xff]
  %v6602 = vld [vmem:[#allocation2 + $0x8] ss:$0 sm:$0xff]
  %v6603 = vld [vmem:[%s81 + $0x1] sm:$0x1]
  %6605 = vrot.lane.b32.xlu0 %v6603, 120
  %v6606 = vpop.permute.xlu0 %6605
  %v6608 = vmul.f32 %v6601, %v6606
  %v6609 = vmul.f32 %v6602, %v6606
  %6612 = vrot.lane.b32.xlu0 %v6608, 8
  %v6613 = vpop.permute.xlu0 %6612
  %6614 = vrot.lane.b32.xlu0 %v6609, 8
  %v6615 = vpop.permute.xlu0 %6614
  %v6616 = vsel %vm1765, %v6613, %v6615
  %6618 = vst [vmem:[#allocation3 + $0x1] sm:$0x1] %v6616
  %v6619 = vld [vmem:[#allocation2] ss:$0 sm:$0xff]
  %v6620 = vld [vmem:[#allocation2 + $0x8] ss:$0 sm:$0xff]
  %v6621 = vld [vmem:[%s81 + $0x2] sm:$0x1]
  %6623 = vrot.lane.b32.xlu0 %v6621, 121
  %v6624 = vpop.permute.xlu0 %6623
  %v6626 = vmul.f32 %v6619, %v6624
  %v6627 = vmul.f32 %v6620, %v6624
  %6630 = vrot.lane.b32.xlu0 %v6626, 7
  %v6631 = vpop.permute.xlu0 %6630
  %6632 = vrot.lane.b32.xlu0 %v6627, 7
  %v6633 = vpop.permute.xlu0 %6632
  %v6634 = vsel %vm1788, %v6631, %v6633
  %6636 = vst [vmem:[#allocation3 + $0x2] sm:$0x1] %v6634
  %v6637 = vld [vmem:[#allocation2] ss:$0 sm:$0xff]
  %v6638 = vld [vmem:[#allocation2 + $0x8] ss:$0 sm:$0xff]
  %v6639 = vld [vmem:[%s81 + $0x3] sm:$0x1]
  %6641 = vrot.lane.b32.xlu0 %v6639, 127
  %v6642 = vpop.permute.xlu0 %6641
  %v6644 = vmul.f32 %v6637, %v6642
  %v6645 = vmul.f32 %v6638, %v6642
  %6648 = vrot.lane.b32.xlu0 %v6644, 1
  %v6649 = vpop.permute.xlu0 %6648
  %6650 = vrot.lane.b32.xlu0 %v6645, 1
  %v6651 = vpop.permute.xlu0 %6650
  %v6652 = vsel %vm337, %v6649, %v6651
  %6654 = vst [vmem:[#allocation3 + $0x3] sm:$0x1] %v6652
  %v6655 = vld [vmem:[#allocation2 + $0x8] ss:$0 sm:$0xff]
  %6656 = vst [vmem:[#allocation3 + $0x4] sm:$0x1] %v6655
  %v6657 = vld [vmem:[#allocation2 + $0x8] ss:$0 sm:$0xff]
  %v6658 = vld [vmem:[#allocation2 + $0x10] ss:$0 sm:$0xff]
  %v6659 = vld [vmem:[%s81 + $0x4] sm:$0x1]
  %6661 = vrot.lane.b32.xlu0 %v6659, 1
  %v6662 = vpop.permute.xlu0 %6661
  %v6664 = vmul.f32 %v6657, %v6662
  %v6665 = vmul.f32 %v6658, %v6662
  %6668 = vrot.lane.b32.xlu0 %v6664, 127
  %v6669 = vpop.permute.xlu0 %6668
  %6670 = vrot.lane.b32.xlu0 %v6665, 127
  %v6671 = vpop.permute.xlu0 %6670
  %v6672 = vsel %vm329, %v6669, %v6671
  %6674 = vst [vmem:[#allocation3 + $0x5] sm:$0x1] %v6672
  %v6675 = vld [vmem:[#allocation2 + $0x8] ss:$0 sm:$0xff]
  %v6676 = vld [vmem:[#allocation2 + $0x10] ss:$0 sm:$0xff]
  %v6677 = vld [vmem:[%s81 + $0x5] sm:$0x1]
  %6679 = vrot.lane.b32.xlu0 %v6677, 7
  %v6680 = vpop.permute.xlu0 %6679
  %v6682 = vmul.f32 %v6675, %v6680
  %v6683 = vmul.f32 %v6676, %v6680
  %6686 = vrot.lane.b32.xlu0 %v6682, 121
  %v6687 = vpop.permute.xlu0 %6686
  %6688 = vrot.lane.b32.xlu0 %v6683, 121
  %v6689 = vpop.permute.xlu0 %6688
  %v6690 = vsel %vm1857, %v6687, %v6689
  %6692 = vst [vmem:[#allocation3 + $0x6] sm:$0x1] %v6690
  %v6693 = vld [vmem:[#allocation2 + $0x8] ss:$0 sm:$0xff]
  %v6694 = vld [vmem:[#allocation2 + $0x10] ss:$0 sm:$0xff]
  %v6695 = vld [vmem:[%s81 + $0x6] sm:$0x1]
  %6697 = vrot.lane.b32.xlu0 %v6695, 8
  %v6698 = vpop.permute.xlu0 %6697
  %v6700 = vmul.f32 %v6693, %v6698
  %v6701 = vmul.f32 %v6694, %v6698
  %6704 = vrot.lane.b32.xlu0 %v6700, 120
  %v6705 = vpop.permute.xlu0 %6704
  %6706 = vrot.lane.b32.xlu0 %v6701, 120
  %v6707 = vpop.permute.xlu0 %6706
  %v6708 = vsel %vm1880, %v6705, %v6707
  %6710 = vst [vmem:[#allocation3 + $0x7] sm:$0x1] %v6708
  %v6711 = vld [vmem:[#allocation2 + $0x8] ss:$0 sm:$0xff]
  %v6712 = vld [vmem:[#allocation2 + $0x10] ss:$0 sm:$0xff]
  %v6713 = vld [vmem:[%s81 + $0x7] sm:$0x1]
  %6715 = vrot.lane.b32.xlu0 %v6713, 9
  %v6716 = vpop.permute.xlu0 %6715
  %v6718 = vmul.f32 %v6711, %v6716
  %v6719 = vmul.f32 %v6712, %v6716
  %6722 = vrot.lane.b32.xlu0 %v6718, 119
  %v6723 = vpop.permute.xlu0 %6722
  %6724 = vrot.lane.b32.xlu0 %v6719, 119
  %v6725 = vpop.permute.xlu0 %6724
  %v6726 = vsel %vm1903, %v6723, %v6725
  %6728 = vst [vmem:[#allocation3 + $0x20] sm:$0x1] %v6726
  %v6729 = vld [vmem:[%s69] sm:$0x1]
  %v6730 = vld [vmem:[#allocation3] sm:$0xff]
  %v6731 = vld [vmem:[#allocation3 + $0x20] sm:$0x1]
  %v6733 = vsel %vm440, %v6729, 0
  %v6736 = vsel %vm444, %v6731, 0
  %6738 = vmatprep.subr.mxu0 0.0
  %6739 = vmatpush1.msra.mxu0 %v6730
  %6740 = vmatprep.subr.mxu0 0.0
  %6741 = vmatpush1.msra.mxu0 %v6736
  %6742 = vmatprep.subr.mxu0 0.0
  %6743 = vmatpush1.msra.mxu0 0.0
  %6744 = vmatprep.subr.mxu0 0.0
  %6745 = vmatpush1.msra.mxu0 0.0
  %6746 = vmatprep.subr.mxu0 0.0
  %6747 = vmatpush1.msra.mxu0 0.0
  %6748 = vmatprep.subr.mxu0 0.0
  %6749 = vmatpush1.msra.mxu0 0.0
  %6750 = vmatprep.subr.mxu0 0.0
  %6751 = vmatpush1.msra.mxu0 0.0
  %6752 = vmatprep.subr.mxu0 0.0
  %6753 = vmatpush1.msra.mxu0 0.0
  %6754 = vmatprep.subr.mxu0 0.0
  %6755 = vmatpush1.msra.mxu0 0.0
  %6756 = vmatprep.subr.mxu0 0.0
  %6757 = vmatpush1.msra.mxu0 0.0
  %6758 = vmatprep.subr.mxu0 0.0
  %6759 = vmatpush1.msra.mxu0 0.0
  %6760 = vmatprep.subr.mxu0 0.0
  %6761 = vmatpush1.msra.mxu0 0.0
  %6762 = vmatprep.subr.mxu0 0.0
  %6763 = vmatpush1.msra.mxu0 0.0
  %6764 = vmatprep.subr.mxu0 0.0
  %6765 = vmatpush1.msra.mxu0 0.0
  %6766 = vmatprep.subr.mxu0 0.0
  %6767 = vmatpush1.msra.mxu0 0.0
  %6768 = vmatprep.subr.mxu0 0.0
  %6769 = vmatpush1.msra.mxu0 0.0
  %6770 = vmatprep.subr.mxu0 0.0
  %6771 = vmatpush1.msra.mxu0 0.0
  %6772 = vmatprep.subr.mxu0 0.0
  %6773 = vmatpush1.msra.mxu0 0.0
  %6774 = vmatprep.subr.mxu0 0.0
  %6775 = vmatpush1.msra.mxu0 0.0
  %6776 = vmatprep.subr.mxu0 0.0
  %6777 = vmatpush1.msra.mxu0 0.0
  %6778 = vmatprep.subr.mxu0 0.0
  %6779 = vmatpush1.msra.mxu0 0.0
  %6780 = vmatprep.subr.mxu0 0.0
  %6781 = vmatpush1.msra.mxu0 0.0
  %6782 = vmatprep.subr.mxu0 0.0
  %6783 = vmatpush1.msra.mxu0 0.0
  %6784 = vmatprep.subr.mxu0 0.0
  %6785 = vmatpush1.msra.mxu0 0.0
  %6786 = vmatprep.subr.mxu0 0.0
  %6787 = vmatpush1.msra.mxu0 0.0
  %6788 = vmatprep.subr.mxu0 0.0
  %6789 = vmatpush1.msra.mxu0 0.0
  %6790 = vmatprep.subr.mxu0 0.0
  %6791 = vmatpush1.msra.mxu0 0.0
  %6792 = vmatprep.subr.mxu0 0.0
  %6793 = vmatpush1.msra.mxu0 0.0
  %6794 = vmatprep.subr.mxu0 0.0
  %6795 = vmatpush1.msra.mxu0 0.0
  %6796 = vmatprep.subr.mxu0 0.0
  %6797 = vmatpush1.msra.mxu0 0.0
  %6798 = vmatprep.subr.mxu0 0.0
  %6799 = vmatpush1.msra.mxu0 0.0
  %6800 = vmatprep.subr.mxu0 0.0
  %6801 = vmatpush1.msra.mxu0 0.0
  %6802 = vmatprep.mubr.f32.mxu0 0.0
  %6803 = vmatmul.mubr.f32.gmra.mrb[0].mxu0 %v6733
  %v6804 = vpop.f32.mrb[0].mxu0
  %v6805 = vadd.f32 0.0, %v6804
  %v6806 = vpop.f32.mrb[0].mxu0
  %6807 = vdwg.mxu0
  %v6808 = vsel %vm444, %v6805, 0.0
  %6809 = vadd.xlane.f32.xlu0 %v6808
  %v6810 = vpop.xlane.xlu0 %6809
  %v6811 = vmul.f32 %v6810, 0.0078125
  %v6812 = vsub.f32 %v6805, %v6811
  %v6813 = vmul.f32 %v6812, %v6812
  %v6814 = vsel %vm444, %v6813, 0.0
  %6815 = vadd.xlane.f32.xlu0 %v6814
  %v6816 = vpop.xlane.xlu0 %6815
  %v6817 = vmul.f32 %v6816, 0.0078125
  %v6818 = vld [vmem:[#allocation6] sm:$0x1]
  %v6819 = vadd.f32 %v6817, 1e-05
  %v6820 = vrsqrt.pop %v6819
  %v6821 = vmul.f32 %v6818, %v6820
  %6823 = vset.pattern.permute.xlu0 0
  %6824 = vperm.xlu0 %6823, %v6821
  %v6825 = vpop.permute.xlu0 %6824
  %v6827 = vlaneseq
  %v6828 = vshrl.u32 %v6827, 7
  %v6829 = vsub.s32 0, %v6828
  %v6830 = vrot.slane %v6825, %v6829
  %v6831 = vmul.f32 %v6812, %v6830
  %v6832 = vld [vmem:[#allocation7] sm:$0x1]
  %6834 = vset.pattern.permute.xlu0 0
  %6835 = vperm.xlu0 %6834, %v6832
  %v6836 = vpop.permute.xlu0 %6835
  %v6838 = vlaneseq
  %v6839 = vshrl.u32 %v6838, 7
  %v6840 = vsub.s32 0, %v6839
  %v6841 = vrot.slane %v6836, %v6840
  %v6842 = vadd.f32 %v6831, %v6841
  %v6843 = vmax.f32 %v6842, 0.0
  %v6844 = vld [vmem:[%s97] sm:$0xff]
  %v6845 = vld [vmem:[%s97 + $0x8] sm:$0xff]
  %v6846 = vld [vmem:[%s97 + $0x10] sm:$0xff]
  %v6847 = vld [vmem:[%s97 + $0x18] sm:$0xff]
  %v6848 = vld [vmem:[%s97 + $0x20] sm:$0xff]
  %v6849 = vld [vmem:[%s97 + $0x28] sm:$0xff]
  %v6850 = vld [vmem:[%s97 + $0x30] sm:$0xff]
  %v6851 = vld [vmem:[%s97 + $0x38] sm:$0xff]
  %v6852 = vld [vmem:[%s97 + $0x40] sm:$0xff]
  %v6853 = vld [vmem:[%s97 + $0x48] sm:$0xff]
  %v6854 = vld [vmem:[%s97 + $0x50] sm:$0xff]
  %v6855 = vld [vmem:[%s97 + $0x58] sm:$0xff]
  %v6856 = vld [vmem:[%s97 + $0x60] sm:$0xff]
  %v6857 = vld [vmem:[%s97 + $0x68] sm:$0xff]
  %v6858 = vld [vmem:[%s97 + $0x70] sm:$0xff]
  %v6859 = vld [vmem:[%s97 + $0x78] sm:$0xff]
  %v6861 = vsel %vm1643, %v6843, 0
  %6863 = vmatprep.subr.mxu0 %v6845
  %6864 = vmatpush1.msra.mxu0 %v6844
  %6865 = vmatprep.subr.mxu0 %v6847
  %6866 = vmatpush1.msra.mxu0 %v6846
  %6867 = vmatprep.subr.mxu0 %v6849
  %6868 = vmatpush1.msra.mxu0 %v6848
  %6869 = vmatprep.subr.mxu0 %v6851
  %6870 = vmatpush1.msra.mxu0 %v6850
  %6871 = vmatprep.subr.mxu0 %v6853
  %6872 = vmatpush1.msra.mxu0 %v6852
  %6873 = vmatprep.subr.mxu0 %v6855
  %6874 = vmatpush1.msra.mxu0 %v6854
  %6875 = vmatprep.subr.mxu0 %v6857
  %6876 = vmatpush1.msra.mxu0 %v6856
  %6877 = vmatprep.subr.mxu0 %v6859
  %6878 = vmatpush1.msra.mxu0 %v6858
  %6879 = vmatprep.subr.mxu0 0.0
  %6880 = vmatpush1.msra.mxu0 0.0
  %6881 = vmatprep.subr.mxu0 0.0
  %6882 = vmatpush1.msra.mxu0 0.0
  %6883 = vmatprep.subr.mxu0 0.0
  %6884 = vmatpush1.msra.mxu0 0.0
  %6885 = vmatprep.subr.mxu0 0.0
  %6886 = vmatpush1.msra.mxu0 0.0
  %6887 = vmatprep.subr.mxu0 0.0
  %6888 = vmatpush1.msra.mxu0 0.0
  %6889 = vmatprep.subr.mxu0 0.0
  %6890 = vmatpush1.msra.mxu0 0.0
  %6891 = vmatprep.subr.mxu0 0.0
  %6892 = vmatpush1.msra.mxu0 0.0
  %6893 = vmatprep.subr.mxu0 0.0
  %6894 = vmatpush1.msra.mxu0 0.0
  %6895 = vmatprep.subr.mxu0 0.0
  %6896 = vmatpush1.msra.mxu0 0.0
  %6897 = vmatprep.subr.mxu0 0.0
  %6898 = vmatpush1.msra.mxu0 0.0
  %6899 = vmatprep.subr.mxu0 0.0
  %6900 = vmatpush1.msra.mxu0 0.0
  %6901 = vmatprep.subr.mxu0 0.0
  %6902 = vmatpush1.msra.mxu0 0.0
  %6903 = vmatprep.subr.mxu0 0.0
  %6904 = vmatpush1.msra.mxu0 0.0
  %6905 = vmatprep.subr.mxu0 0.0
  %6906 = vmatpush1.msra.mxu0 0.0
  %6907 = vmatprep.subr.mxu0 0.0
  %6908 = vmatpush1.msra.mxu0 0.0
  %6909 = vmatprep.subr.mxu0 0.0
  %6910 = vmatpush1.msra.mxu0 0.0
  %6911 = vmatprep.subr.mxu0 0.0
  %6912 = vmatpush1.msra.mxu0 0.0
  %6913 = vmatprep.subr.mxu0 0.0
  %6914 = vmatpush1.msra.mxu0 0.0
  %6915 = vmatprep.subr.mxu0 0.0
  %6916 = vmatpush1.msra.mxu0 0.0
  %6917 = vmatprep.subr.mxu0 0.0
  %6918 = vmatpush1.msra.mxu0 0.0
  %6919 = vmatprep.subr.mxu0 0.0
  %6920 = vmatpush1.msra.mxu0 0.0
  %6921 = vmatprep.subr.mxu0 0.0
  %6922 = vmatpush1.msra.mxu0 0.0
  %6923 = vmatprep.subr.mxu0 0.0
  %6924 = vmatpush1.msra.mxu0 0.0
  %6925 = vmatprep.subr.mxu0 0.0
  %6926 = vmatpush1.msra.mxu0 0.0
  %6927 = vmatprep.mubr.f32.mxu0 0.0
  %6928 = vmatmul.mubr.f32.gmra.mrb[0].mxu0 %v6861
  %v6929 = vpop.f32.mrb[0].mxu0
  %v6930 = vadd.f32 0.0, %v6929
  %v6931 = vpop.f32.mrb[0].mxu0
  %v6932 = vadd.f32 0.0, %v6931
  %6933 = vdwg.mxu0
  %v6936 = vcombine.low %v6930, %v6932
  %v6938 = vunpack.c.l.s4 1966171168
  %v6939 = vunpack.c.0.s8 %v6938
  %v6940 = vlaneseq
  %v6941 = vshrl.u32 %v6940, 7
  %v6942 = vsub.s32 %v6939, %v6941
  %v6943 = vrot.slane %v6936, %v6942
  %v6945 = vunpack.c.l.s4 1966171168
  %v6946 = vunpack.c.0.s8 %v6945
  %v6947 = vlaneseq
  %v6948 = vshrl.u32 %v6947, 7
  %v6949 = vsub.s32 %v6946, %v6948
  %v6950 = vrot.slane %v6943, %v6949
  %vm6952 = vcmp.lt.s32.totalorder %v246, 256
  %vm6953 = vmand %vm247, %vm6952
  %6954 = vst.msk [vmem:[#allocation3] ss:$8 sm:$0x3] %vm6953, %v6950
  %6955 = vst.msk [vmem:[#allocation3] ss:$8 sm:$0x0] %vm6953, %v6950
  %6956 = vrot.lane.b32.xlu0 %v6843, 64
  %v6957 = vpop.permute.xlu0 %6956
  %v6958 = vsel %vm1643, %v6957, 0
  %6960 = vmatprep.subr.mxu0 %v6845
  %6961 = vmatpush1.msra.mxu0 %v6844
  %6962 = vmatprep.subr.mxu0 %v6847
  %6963 = vmatpush1.msra.mxu0 %v6846
  %6964 = vmatprep.subr.mxu0 %v6849
  %6965 = vmatpush1.msra.mxu0 %v6848
  %6966 = vmatprep.subr.mxu0 %v6851
  %6967 = vmatpush1.msra.mxu0 %v6850
  %6968 = vmatprep.subr.mxu0 %v6853
  %6969 = vmatpush1.msra.mxu0 %v6852
  %6970 = vmatprep.subr.mxu0 %v6855
  %6971 = vmatpush1.msra.mxu0 %v6854
  %6972 = vmatprep.subr.mxu0 %v6857
  %6973 = vmatpush1.msra.mxu0 %v6856
  %6974 = vmatprep.subr.mxu0 %v6859
  %6975 = vmatpush1.msra.mxu0 %v6858
  %6976 = vmatprep.subr.mxu0 0.0
  %6977 = vmatpush1.msra.mxu0 0.0
  %6978 = vmatprep.subr.mxu0 0.0
  %6979 = vmatpush1.msra.mxu0 0.0
  %6980 = vmatprep.subr.mxu0 0.0
  %6981 = vmatpush1.msra.mxu0 0.0
  %6982 = vmatprep.subr.mxu0 0.0
  %6983 = vmatpush1.msra.mxu0 0.0
  %6984 = vmatprep.subr.mxu0 0.0
  %6985 = vmatpush1.msra.mxu0 0.0
  %6986 = vmatprep.subr.mxu0 0.0
  %6987 = vmatpush1.msra.mxu0 0.0
  %6988 = vmatprep.subr.mxu0 0.0
  %6989 = vmatpush1.msra.mxu0 0.0
  %6990 = vmatprep.subr.mxu0 0.0
  %6991 = vmatpush1.msra.mxu0 0.0
  %6992 = vmatprep.subr.mxu0 0.0
  %6993 = vmatpush1.msra.mxu0 0.0
  %6994 = vmatprep.subr.mxu0 0.0
  %6995 = vmatpush1.msra.mxu0 0.0
  %6996 = vmatprep.subr.mxu0 0.0
  %6997 = vmatpush1.msra.mxu0 0.0
  %6998 = vmatprep.subr.mxu0 0.0
  %6999 = vmatpush1.msra.mxu0 0.0
  %7000 = vmatprep.subr.mxu0 0.0
  %7001 = vmatpush1.msra.mxu0 0.0
  %7002 = vmatprep.subr.mxu0 0.0
  %7003 = vmatpush1.msra.mxu0 0.0
  %7004 = vmatprep.subr.mxu0 0.0
  %7005 = vmatpush1.msra.mxu0 0.0
  %7006 = vmatprep.subr.mxu0 0.0
  %7007 = vmatpush1.msra.mxu0 0.0
  %7008 = vmatprep.subr.mxu0 0.0
  %7009 = vmatpush1.msra.mxu0 0.0
  %7010 = vmatprep.subr.mxu0 0.0
  %7011 = vmatpush1.msra.mxu0 0.0
  %7012 = vmatprep.subr.mxu0 0.0
  %7013 = vmatpush1.msra.mxu0 0.0
  %7014 = vmatprep.subr.mxu0 0.0
  %7015 = vmatpush1.msra.mxu0 0.0
  %7016 = vmatprep.subr.mxu0 0.0
  %7017 = vmatpush1.msra.mxu0 0.0
  %7018 = vmatprep.subr.mxu0 0.0
  %7019 = vmatpush1.msra.mxu0 0.0
  %7020 = vmatprep.subr.mxu0 0.0
  %7021 = vmatpush1.msra.mxu0 0.0
  %7022 = vmatprep.subr.mxu0 0.0
  %7023 = vmatpush1.msra.mxu0 0.0
  %7024 = vmatprep.mubr.f32.mxu0 0.0
  %7025 = vmatmul.mubr.f32.gmra.mrb[0].mxu0 %v6958
  %v7026 = vpop.f32.mrb[0].mxu0
  %v7027 = vadd.f32 0.0, %v7026
  %v7028 = vpop.f32.mrb[0].mxu0
  %v7029 = vadd.f32 0.0, %v7028
  %7030 = vdwg.mxu0
  %v7033 = vcombine.low %v7027, %v7029
  %v7035 = vunpack.c.l.s4 1966171168
  %v7036 = vunpack.c.0.s8 %v7035
  %v7037 = vlaneseq
  %v7038 = vshrl.u32 %v7037, 7
  %v7039 = vsub.s32 %v7036, %v7038
  %v7040 = vrot.slane %v7033, %v7039
  %v7042 = vunpack.c.l.s4 1966171168
  %v7043 = vunpack.c.0.s8 %v7042
  %v7044 = vlaneseq
  %v7045 = vshrl.u32 %v7044, 7
  %v7046 = vsub.s32 %v7043, %v7045
  %v7047 = vrot.slane %v7040, %v7046
  %s7049 = scalar_lea.vmem [#allocation3], 16
  %7050 = vst.msk [vmem:[%s7049] ss:$8 sm:$0x3] %vm6953, %v7047
  %7051 = vst.msk [vmem:[%s7049] ss:$8 sm:$0x0] %vm6953, %v7047
  %v7052 = vld [vmem:[#allocation3] ss:$8 sm:$0xf]
  %v7053 = vld [vmem:[%s75] sm:$0x3]
  %v7054 = vld [vmem:[%s77] sm:$0x3]
  %7056 = vset.pattern.permute.xlu0 0
  %7057 = vperm.xlu0 %7056, %v7053
  %v7058 = vpop.permute.xlu0 %7057
  %v7061 = vlaneseq
  %v7062 = vshrl.u32 %v7061, 7
  %v7063 = vsub.s32 0, %v7062
  %v7064 = vrot.slane %v7052, %v7063
  %v7065 = vlaneseq
  %v7066 = vshrl.u32 %v7065, 7
  %v7067 = vsub.s32 1, %v7066
  %v7068 = vrot.slane %v7052, %v7067
  %v7069 = vlaneseq
  %v7070 = vshrl.u32 %v7069, 7
  %v7071 = vsub.s32 2, %v7070
  %v7072 = vrot.slane %v7052, %v7071
  %v7073 = vlaneseq
  %v7074 = vshrl.u32 %v7073, 7
  %v7075 = vsub.s32 3, %v7074
  %v7076 = vrot.slane %v7052, %v7075
  %v7081 = vmul.f32 %v7058, %v7064
  %v7082 = vmul.f32 %v7058, %v7068
  %v7083 = vmul.f32 %v7058, %v7072
  %v7084 = vmul.f32 %v7058, %v7076
  %7086 = vset.pattern.permute.xlu0 0
  %7087 = vperm.xlu0 %7086, %v7054
  %v7088 = vpop.permute.xlu0 %7087
  %v7090 = vadd.f32 %v7081, %v7088
  %v7091 = vadd.f32 %v7082, %v7088
  %v7092 = vadd.f32 %v7083, %v7088
  %v7093 = vadd.f32 %v7084, %v7088
  %v7098 = vcombine.low %v7090, %v7091
  %v7099 = vcombine.low %v7092, %v7093
  %v7101 = vunpack.c.l.s4 1983009808
  %v7102 = vunpack.c.0.s8 %v7101
  %v7103 = vlaneseq
  %v7104 = vshrl.u32 %v7103, 7
  %v7105 = vsub.s32 %v7102, %v7104
  %v7106 = vrot.slane %v7098, %v7105
  %v7108 = vunpack.c.l.s4 1983009808
  %v7109 = vunpack.c.0.s8 %v7108
  %v7110 = vlaneseq
  %v7111 = vshrl.u32 %v7110, 7
  %v7112 = vsub.s32 %v7109, %v7111
  %v7113 = vrot.slane %v7099, %v7112
  %v7114 = vcombine.low %v7106, %v7113
  %7116 = vst [vmem:[%s109] sm:$0xff] %v7114
  // Predicated region
  $region198: #{encoder_decoder_branch.1} parent=0 // pred_check
    _
  $region199: #{encoder_decoder_branch.1} parent=0 // pred_check_branch
    %7118 = sbr.rel (0) target = $region201
  $region200: #{encoder_decoder_branch.1} parent=0 // pred_region
    _
  $region201: #{encoder_decoder_branch.1} parent=0 // pred_fallthru
    _
  // Predicated region
  $region202: #{encoder_decoder_branch.1} parent=0 // pred_check
    _
  $region203: #{encoder_decoder_branch.1} parent=0 // pred_check_branch
    %7120 = sbr.rel (0) target = $region205
  $region204: #{encoder_decoder_branch.1} parent=0 // pred_region
    _
  $region205: #{encoder_decoder_branch.1} parent=0 // pred_fallthru
    _
  // Predicated region
  $region206: #{encoder_decoder_branch.1} parent=0 // pred_check
    _
  $region207: #{encoder_decoder_branch.1} parent=0 // pred_check_branch
    %7122 = sbr.rel (0) target = $region209
  $region208: #{encoder_decoder_branch.1} parent=0 // pred_region
    _
  $region209: #{encoder_decoder_branch.1} parent=0 // pred_fallthru
    _
  // Predicated region
  $region210: #{encoder_decoder_branch.1} parent=0 // pred_check
    _
  $region211: #{encoder_decoder_branch.1} parent=0 // pred_check_branch
    %7124 = sbr.rel (0) target = $region213
  $region212: #{encoder_decoder_branch.1} parent=0 // pred_region
    _
  $region213: #{encoder_decoder_branch.1} parent=0 // pred_fallthru
    _
  // Predicated region
  $region214: #{encoder_decoder_branch.1} parent=0 // pred_check
    _
  $region215: #{encoder_decoder_branch.1} parent=0 // pred_check_branch
    %7126 = sbr.rel (0) target = $region217
  $region216: #{encoder_decoder_branch.1} parent=0 // pred_region
    _
  $region217: #{encoder_decoder_branch.1} parent=0 // pred_fallthru
    _
  // Predicated region
  $region218: #{encoder_decoder_branch.1} parent=0 // pred_check
    _
  $region219: #{encoder_decoder_branch.1} parent=0 // pred_check_branch
    %7128 = sbr.rel (0) target = $region221
  $region220: #{encoder_decoder_branch.1} parent=0 // pred_region
    _
  $region221: #{encoder_decoder_branch.1} parent=0 // pred_fallthru
    _
  // Predicated region
  $region222: #{encoder_decoder_branch.1} parent=0 // pred_check
    _
  $region223: #{encoder_decoder_branch.1} parent=0 // pred_check_branch
    %7130 = sbr.rel (0) target = $region225
  $region224: #{encoder_decoder_branch.1} parent=0 // pred_region
    _
  $region225: #{encoder_decoder_branch.1} parent=0 // pred_fallthru
    _
  // Predicated region
  $region226: #{encoder_decoder_branch.1} parent=0 // pred_check
    _
  $region227: #{encoder_decoder_branch.1} parent=0 // pred_check_branch
    %7132 = sbr.rel (0) target = $region229
  $region228: #{encoder_decoder_branch.1} parent=0 // pred_region
    _
  $region229: #{encoder_decoder_branch.1} parent=0 // pred_fallthru
    _
  // Predicated region
  $region230: #{encoder_decoder_branch.1} parent=0 // pred_check
    _
  $region231: #{encoder_decoder_branch.1} parent=0 // pred_check_branch
    %7134 = sbr.rel (0) target = $region233
  $region232: #{encoder_decoder_branch.1} parent=0 // pred_region
    _
  $region233: #{encoder_decoder_branch.1} parent=0 // pred_fallthru
    _
  // Predicated region
  $region234: #{encoder_decoder_branch.1} parent=0 // pred_check
    _
  $region235: #{encoder_decoder_branch.1} parent=0 // pred_check_branch
    %7136 = sbr.rel (0) target = $region237
  $region236: #{encoder_decoder_branch.1} parent=0 // pred_region
    _
  $region237: #{encoder_decoder_branch.1} parent=0 // pred_fallthru
    _
  // Predicated region
  $region238: #{encoder_decoder_branch.1} parent=0 // pred_check
    _
  $region239: #{encoder_decoder_branch.1} parent=0 // pred_check_branch
    %7138 = sbr.rel (0) target = $region241
  $region240: #{encoder_decoder_branch.1} parent=0 // pred_region
    _
  $region241: #{encoder_decoder_branch.1} parent=0 // pred_fallthru
    _
  // Predicated region
  $region242: #{encoder_decoder_branch.1} parent=0 // pred_check
    _
  $region243: #{encoder_decoder_branch.1} parent=0 // pred_check_branch
    %7140 = sbr.rel (0) target = $region245
  $region244: #{encoder_decoder_branch.1} parent=0 // pred_region
    _
  $region245: #{encoder_decoder_branch.1} parent=0 // pred_fallthru
    _

</llo_original>
